<compile_context>
chip_gen: v5e
topology: v5e:2x2
jax: 0.10.0
libtpu: 0.0.40
codegen_flags: <defaults>
</compile_context>

<pallas_src>
import jax
import jax.numpy as jnp
import numpy as np
from jax.experimental import pallas as pl
from jax.experimental.pallas import tpu as pltpu


def _round_up(x, m):
    return (x + m - 1) // m * m


def basic_block_kernel(x_ref, w1_ref, b1_ref, w2_ref, b2_ref, wsc_ref, bsc_ref,
                       out_ref, acc_ref, out1_pad_ref):
    # x_ref:        (1, H+2, W+2, Cinp)  zero-padded NHWC input slab (bf16)
    # w1_ref:       (3, 3, Cinp, Cp)     conv1 weights (HWIO, BN1 scale folded, bf16)
    # w2_ref:       (3, 3, Cp,   Cp)     conv2 weights (HWIO, BN2 scale folded, bf16)
    # wsc_ref:      (Cinp, Cp)           1x1 shortcut weights (BN scale folded, bf16)
    # b*_ref:       (1, Cp)              folded BN biases (f32)
    # out_ref:      (1, H, W, Cp)        f32 output slab
    # acc_ref:      (H*W, Cp) f32        shared conv accumulator (VMEM scratch)
    # out1_pad_ref: (1, H+2, W+2, Cp)    re-padded conv1 output (bf16 VMEM scratch)
    _, Hp, Wp, Cinp = x_ref.shape
    H, W = Hp - 2, Wp - 2
    Cp = out_ref.shape[-1]
    M = H * W

    # ---- conv1 (3x3, stride 1, pad 1; BN1 scale folded into w1) + bias + ReLU ----
    # TODO(synk): the 9 strided-slice+reshape tap patches are VMEM relayout
    #             copies; a pltpu.roll-based tap alignment would keep them off
    #             the load/store slots.
    acc_ref[...] = jnp.broadcast_to(b1_ref[...], (M, Cp))
    for di in range(3):
        for dj in range(3):
            patch = x_ref[:, di:di + H, dj:dj + W, :].reshape(M, Cinp)
            acc_ref[...] += jnp.dot(patch, w1_ref[di, dj, :, :],
                                    preferred_element_type=jnp.float32)
    out1 = jnp.maximum(acc_ref[...], 0.0)

    # Re-pad conv1 output for conv2's pad=1: zero only the 1-px border (the
    # interior is fully overwritten every grid step, so this is parallel-safe).
    zrow = jnp.zeros((1, 1, Wp, Cp), out1_pad_ref.dtype)
    out1_pad_ref[:, 0:1, :, :] = zrow
    out1_pad_ref[:, Hp - 1:Hp, :, :] = zrow
    zcol = jnp.zeros((1, Hp, 1, Cp), out1_pad_ref.dtype)
    out1_pad_ref[:, :, 0:1, :] = zcol
    out1_pad_ref[:, :, Wp - 1:Wp, :] = zcol
    out1_pad_ref[:, 1:H + 1, 1:W + 1, :] = (
        out1.reshape(1, H, W, Cp).astype(out1_pad_ref.dtype))

    # ---- conv2 (3x3, stride 1, pad 1; BN2 scale folded into w2) + bias ----
    acc_ref[...] = jnp.broadcast_to(b2_ref[...], (M, Cp))
    for di in range(3):
        for dj in range(3):
            patch = out1_pad_ref[:, di:di + H, dj:dj + W, :].reshape(M, Cp)
            acc_ref[...] += jnp.dot(patch, w2_ref[di, dj, :, :],
                                    preferred_element_type=jnp.float32)

    # ---- shortcut: 1x1 conv (identity weights if in_planes == planes) + bias ----
    xc = x_ref[:, 1:H + 1, 1:W + 1, :].reshape(M, Cinp)
    sc = jnp.dot(xc, wsc_ref[...], preferred_element_type=jnp.float32) + bsc_ref[...]

    out = jnp.maximum(acc_ref[...] + sc, 0.0)
    out_ref[...] = out.reshape(1, H, W, Cp).astype(out_ref.dtype)


def basic_block_forward(x_nchw, params, t=0, eps=1e-5):
    """Wrapper: NCHW in/out (PyTorch convention); kernel runs lane-dense NHWC."""
    N, Cin, H, W = x_nchw.shape
    C = params["conv1_w"].shape[0]
    LANE = 128
    Cinp = _round_up(Cin, LANE)
    Cp = _round_up(C, LANE)

    def bn_fold(name):
        g, b, m, v = (params[f"{name}_{k}"][t] for k in ("gamma", "beta", "mean", "var"))
        inv = g / jnp.sqrt(v + eps)
        return inv, b - m * inv

    s1, b1 = bn_fold("bn1")
    s2, b2 = bn_fold("bn2")

    # conv weights OIHW -> HWIO, with the BN scale folded into the output channel.
    w1 = jnp.transpose(params["conv1_w"], (2, 3, 1, 0)) * s1
    w2 = jnp.transpose(params["conv2_w"], (2, 3, 1, 0)) * s2

    if "sc_w" in params:                       # 1x1-conv shortcut (in_planes != planes)
        ssc, bsc = bn_fold("bnsc")
        wsc = jnp.transpose(params["sc_w"][:, :, 0, 0], (1, 0)) * ssc
    else:                                      # identity shortcut (in_planes == planes)
        wsc = jnp.eye(Cin, dtype=jnp.float32)
        bsc = jnp.zeros((C,), jnp.float32)

    # Channel-pad everything to the 128-lane width; bf16 MXU operands, f32 biases.
    def pad_w(w, ci, co):
        pads = [(0, 0)] * (w.ndim - 2) + [(0, ci - w.shape[-2]), (0, co - w.shape[-1])]
        return jnp.pad(w, pads).astype(jnp.bfloat16)

    w1p = pad_w(w1, Cinp, Cp)
    w2p = pad_w(w2, Cp, Cp)
    wscp = pad_w(wsc, Cinp, Cp)

    pad_b = lambda v: jnp.pad(v.reshape(1, C), ((0, 0), (0, Cp - C))).astype(jnp.float32)
    b1p, b2p, bscp = pad_b(b1), pad_b(b2), pad_b(bsc)

    # NCHW -> NHWC, spatial pad 1 (for both 3x3 convs via the kernel scratch),
    # channel pad to lane width, bf16.
    # TODO(synk): fold this transpose+pad into the pallas_call boundary to save
    #             an extra HBM pass over x.
    x = jnp.transpose(x_nchw, (0, 2, 3, 1))
    x_pad = jnp.pad(x, ((0, 0), (1, 1), (1, 1), (0, Cinp - Cin))).astype(jnp.bfloat16)

    Hp, Wp = H + 2, W + 2
    full = lambda shape: pl.BlockSpec(shape, lambda n: (0,) * len(shape))

    # TODO(synk): for production spatial sizes (e.g. 56x56, N=32), additionally
    #             tile over H row-bands (1-row halo) to bound per-step VMEM for
    #             v7x's 64 MiB.
    out_nhwc = pl.pallas_call(
        basic_block_kernel,
        grid=(N,),
        in_specs=[
            pl.BlockSpec((1, Hp, Wp, Cinp), lambda n: (n, 0, 0, 0)),
            full(w1p.shape), full(b1p.shape),
            full(w2p.shape), full(b2p.shape),
            full(wscp.shape), full(bscp.shape),
        ],
        out_specs=pl.BlockSpec((1, H, W, Cp), lambda n: (n, 0, 0, 0)),
        out_shape=jax.ShapeDtypeStruct((N, H, W, Cp), jnp.float32),
        scratch_shapes=[
            pltpu.VMEM((H * W, Cp), jnp.float32),        # shared conv accumulator
            pltpu.VMEM((1, Hp, Wp, Cp), jnp.bfloat16),   # re-padded conv1 output
        ],
        compiler_params=pltpu.CompilerParams(
            dimension_semantics=("parallel",),
            vmem_limit_bytes=32 * 1024 * 1024,
        ),
    )(x_pad, w1p, b1p, w2p, b2p, wscp, bscp)

    # drop padded channels, back to NCHW
    return jnp.transpose(out_nhwc[..., :C], (0, 3, 1, 2))


def ref_forward(x, params, t=0, eps=1e-5):
    """Pure-JAX f32 reference mirroring the PyTorch forward (p=None, eval BN)."""
    def conv(x, w, pad):
        return jax.lax.conv_general_dilated(
            x, w, (1, 1), [(pad, pad), (pad, pad)],
            dimension_numbers=("NCHW", "OIHW", "NCHW"))

    def bn(x, name):
        g, b, m, v = (params[f"{name}_{k}"][t] for k in ("gamma", "beta", "mean", "var"))
        inv = g / jnp.sqrt(v + eps)
        return x * inv[None, :, None, None] + (b - m * inv)[None, :, None, None]

    out = jax.nn.relu(bn(conv(x, params["conv1_w"], 1), "bn1"))
    out = bn(conv(out, params["conv2_w"], 1), "bn2")
    sc = bn(conv(x, params["sc_w"], 0), "bnsc") if "sc_w" in params else x
    return jax.nn.relu(out + sc)


if __name__ == "__main__":
    key = jax.random.PRNGKey(0)
    ks = jax.random.split(key, 32)

    # ---- config 1: in_planes != planes -> 1x1-conv + BN shortcut ----
    N, Cin, H, W, C = 2, 8, 16, 16, 16
    params = {
        "conv1_w": 0.1 * jax.random.normal(ks[0], (C, Cin, 3, 3), jnp.float32),
        "conv2_w": 0.1 * jax.random.normal(ks[1], (C, C, 3, 3), jnp.float32),
        "sc_w":    0.1 * jax.random.normal(ks[2], (C, Cin, 1, 1), jnp.float32),
    }
    # 5 task-specific BN copies per BN slot (module uses nn.ModuleList of 5)
    for i, name in enumerate(("bn1", "bn2", "bnsc")):
        params[f"{name}_gamma"] = 1.0 + 0.1 * jax.random.normal(ks[3 + 4 * i], (5, C), jnp.float32)
        params[f"{name}_beta"]  = 0.1 * jax.random.normal(ks[4 + 4 * i], (5, C), jnp.float32)
        params[f"{name}_mean"]  = 0.1 * jax.random.normal(ks[5 + 4 * i], (5, C), jnp.float32)
        params[f"{name}_var"]   = 0.5 + jax.nn.softplus(
            jax.random.normal(ks[6 + 4 * i], (5, C), jnp.float32))
    x = jax.random.normal(ks[15], (N, Cin, H, W), jnp.float32)

    y = jax.block_until_ready(basic_block_forward(x, params, t=0))
    y_ref = ref_forward(x, params, t=0)
    np.testing.assert_allclose(np.asarray(y), np.asarray(y_ref), atol=3e-2, rtol=3e-2)

    # ---- config 2: in_planes == planes, stride 1 -> identity shortcut ----
    params_id = {
        "conv1_w": 0.1 * jax.random.normal(ks[16], (C, C, 3, 3), jnp.float32),
        "conv2_w": 0.1 * jax.random.normal(ks[17], (C, C, 3, 3), jnp.float32),
    }
    for i, name in enumerate(("bn1", "bn2")):
        params_id[f"{name}_gamma"] = 1.0 + 0.1 * jax.random.normal(ks[18 + 4 * i], (5, C), jnp.float32)
        params_id[f"{name}_beta"]  = 0.1 * jax.random.normal(ks[19 + 4 * i], (5, C), jnp.float32)
        params_id[f"{name}_mean"]  = 0.1 * jax.random.normal(ks[20 + 4 * i], (5, C), jnp.float32)
        params_id[f"{name}_var"]   = 0.5 + jax.nn.softplus(
            jax.random.normal(ks[21 + 4 * i], (5, C), jnp.float32))
    x2 = jax.random.normal(ks[26], (N, C, H, W), jnp.float32)

    y2 = jax.block_until_ready(basic_block_forward(x2, params_id, t=3))
    y2_ref = ref_forward(x2, params_id, t=3)
    np.testing.assert_allclose(np.asarray(y2), np.asarray(y2_ref), atol=3e-2, rtol=3e-2)

    print("KERNEL_OK")
</pallas_src>

<mosaic_0001>
module attributes {stable_mosaic.version = 11 : i64} {
  func.func @basic_block_kernel(%arg0: i32, %arg1: memref<1x18x18x128xbf16, #tpu.memory_space<vmem>>, %arg2: memref<3x3x128x128xbf16, #tpu.memory_space<vmem>>, %arg3: memref<1x128xf32, #tpu.memory_space<vmem>>, %arg4: memref<3x3x128x128xbf16, #tpu.memory_space<vmem>>, %arg5: memref<1x128xf32, #tpu.memory_space<vmem>>, %arg6: memref<128x128xbf16, #tpu.memory_space<vmem>>, %arg7: memref<1x128xf32, #tpu.memory_space<vmem>>, %arg8: memref<1x16x16x128xf32, #tpu.memory_space<vmem>>, %arg9: memref<256x128xf32, #tpu.memory_space<vmem>>, %arg10: memref<1x18x18x128xbf16, #tpu.memory_space<vmem>>) attributes {dimension_semantics = [#tpu.dimension_semantics<parallel>], iteration_bounds = array<i64: 2>, scalar_prefetch = 0 : i64, scratch_operands = 2 : i64, tpu.core_type = #tpu.core_type<tc>, window_params = [{transform_indices = @transform_0, window_bounds = array<i64: 1, 18, 18, 128>}, {pipeline_mode = #tpu.pipeline_mode<synchronous>, transform_indices = @transform_1, window_bounds = array<i64: 3, 3, 128, 128>}, {pipeline_mode = #tpu.pipeline_mode<synchronous>, transform_indices = @transform_2, window_bounds = array<i64: 1, 128>}, {pipeline_mode = #tpu.pipeline_mode<synchronous>, transform_indices = @transform_3, window_bounds = array<i64: 3, 3, 128, 128>}, {pipeline_mode = #tpu.pipeline_mode<synchronous>, transform_indices = @transform_4, window_bounds = array<i64: 1, 128>}, {pipeline_mode = #tpu.pipeline_mode<synchronous>, transform_indices = @transform_5, window_bounds = array<i64: 128, 128>}, {pipeline_mode = #tpu.pipeline_mode<synchronous>, transform_indices = @transform_6, window_bounds = array<i64: 1, 128>}, {transform_indices = @transform_7, window_bounds = array<i64: 1, 16, 16, 128>}]} {
    %c0 = arith.constant 0 : index
    %c0_0 = arith.constant 0 : index
    %0 = vector.load %arg3[%c0, %c0_0] : memref<1x128xf32, #tpu.memory_space<vmem>>, vector<1x128xf32>
    %1 = vector.shape_cast %0 : vector<1x128xf32> to vector<1x128xf32>
    %2 = vector.broadcast %1 : vector<1x128xf32> to vector<256x128xf32>
    %c0_1 = arith.constant 0 : index
    %c0_2 = arith.constant 0 : index
    %3 = vector.load %arg9[%c0_1, %c0_2] : memref<256x128xf32, #tpu.memory_space<vmem>>, vector<256x128xf32>
    tpu.vector_store %arg9[%c0_1, %c0_2], %2 {strides = array<i32>} : memref<256x128xf32, #tpu.memory_space<vmem>>, vector<256x128xf32>,
    %c0_3 = arith.constant 0 : index
    %c0_4 = arith.constant 0 : index
    %c0_5 = arith.constant 0 : index
    %c0_6 = arith.constant 0 : index
    %4 = vector.load %arg1[%c0_3, %c0_4, %c0_5, %c0_6] : memref<1x18x18x128xbf16, #tpu.memory_space<vmem>>, vector<1x16x16x128xbf16>
    %5 = vector.shape_cast %4 : vector<1x16x16x128xbf16> to vector<256x128xbf16>
    %c0_7 = arith.constant 0 : index
    %c0_8 = arith.constant 0 : index
    %6 = vector.load %arg9[%c0_7, %c0_8] : memref<256x128xf32, #tpu.memory_space<vmem>>, vector<256x128xf32>
    %c0_9 = arith.constant 0 : index
    %c0_10 = arith.constant 0 : index
    %c0_11 = arith.constant 0 : index
    %c0_12 = arith.constant 0 : index
    %7 = vector.load %arg2[%c0_9, %c0_10, %c0_11, %c0_12] : memref<3x3x128x128xbf16, #tpu.memory_space<vmem>>, vector<1x1x128x128xbf16>
    %8 = vector.shape_cast %7 : vector<1x1x128x128xbf16> to vector<128x128xbf16>
    %cst = arith.constant dense<0.000000e+00> : vector<256x128xf32>
    %9 = tpu.matmul %5, %8, %cst {dimension_numbers = #tpu.dot_dimension_numbers<[1], [0], [0], [1], [0, 0, 1, 1], [], []>} : vector<256x128xbf16>, vector<128x128xbf16>, vector<256x128xf32> -> vector<256x128xf32>
    %10 = arith.addf %6, %9 : vector<256x128xf32>
    %c0_13 = arith.constant 0 : index
    %c0_14 = arith.constant 0 : index
    %11 = vector.load %arg9[%c0_13, %c0_14] : memref<256x128xf32, #tpu.memory_space<vmem>>, vector<256x128xf32>
    tpu.vector_store %arg9[%c0_13, %c0_14], %10 {strides = array<i32>} : memref<256x128xf32, #tpu.memory_space<vmem>>, vector<256x128xf32>,
    %c0_15 = arith.constant 0 : index
    %c0_16 = arith.constant 0 : index
    %c1 = arith.constant 1 : index
    %c0_17 = arith.constant 0 : index
    %12 = vector.load %arg1[%c0_15, %c0_16, %c1, %c0_17] : memref<1x18x18x128xbf16, #tpu.memory_space<vmem>>, vector<1x16x16x128xbf16>
    %13 = vector.shape_cast %12 : vector<1x16x16x128xbf16> to vector<256x128xbf16>
    %c0_18 = arith.constant 0 : index
    %c0_19 = arith.constant 0 : index
    %14 = vector.load %arg9[%c0_18, %c0_19] : memref<256x128xf32, #tpu.memory_space<vmem>>, vector<256x128xf32>
    %c0_20 = arith.constant 0 : index
    %c1_21 = arith.constant 1 : index
    %c0_22 = arith.constant 0 : index
    %c0_23 = arith.constant 0 : index
    %15 = vector.load %arg2[%c0_20, %c1_21, %c0_22, %c0_23] : memref<3x3x128x128xbf16, #tpu.memory_space<vmem>>, vector<1x1x128x128xbf16>
    %16 = vector.shape_cast %15 : vector<1x1x128x128xbf16> to vector<128x128xbf16>
    %cst_24 = arith.constant dense<0.000000e+00> : vector<256x128xf32>
    %17 = tpu.matmul %13, %16, %cst_24 {dimension_numbers = #tpu.dot_dimension_numbers<[1], [0], [0], [1], [0, 0, 1, 1], [], []>} : vector<256x128xbf16>, vector<128x128xbf16>, vector<256x128xf32> -> vector<256x128xf32>
    %18 = arith.addf %14, %17 : vector<256x128xf32>
    %c0_25 = arith.constant 0 : index
    %c0_26 = arith.constant 0 : index
    %19 = vector.load %arg9[%c0_25, %c0_26] : memref<256x128xf32, #tpu.memory_space<vmem>>, vector<256x128xf32>
    tpu.vector_store %arg9[%c0_25, %c0_26], %18 {strides = array<i32>} : memref<256x128xf32, #tpu.memory_space<vmem>>, vector<256x128xf32>,
    %c0_27 = arith.constant 0 : index
    %c0_28 = arith.constant 0 : index
    %c2 = arith.constant 2 : index
    %c0_29 = arith.constant 0 : index
    %20 = vector.load %arg1[%c0_27, %c0_28, %c2, %c0_29] : memref<1x18x18x128xbf16, #tpu.memory_space<vmem>>, vector<1x16x16x128xbf16>
    %21 = vector.shape_cast %20 : vector<1x16x16x128xbf16> to vector<256x128xbf16>
    %c0_30 = arith.constant 0 : index
    %c0_31 = arith.constant 0 : index
    %22 = vector.load %arg9[%c0_30, %c0_31] : memref<256x128xf32, #tpu.memory_space<vmem>>, vector<256x128xf32>
    %c0_32 = arith.constant 0 : index
    %c2_33 = arith.constant 2 : index
    %c0_34 = arith.constant 0 : index
    %c0_35 = arith.constant 0 : index
    %23 = vector.load %arg2[%c0_32, %c2_33, %c0_34, %c0_35] : memref<3x3x128x128xbf16, #tpu.memory_space<vmem>>, vector<1x1x128x128xbf16>
    %24 = vector.shape_cast %23 : vector<1x1x128x128xbf16> to vector<128x128xbf16>
    %cst_36 = arith.constant dense<0.000000e+00> : vector<256x128xf32>
    %25 = tpu.matmul %21, %24, %cst_36 {dimension_numbers = #tpu.dot_dimension_numbers<[1], [0], [0], [1], [0, 0, 1, 1], [], []>} : vector<256x128xbf16>, vector<128x128xbf16>, vector<256x128xf32> -> vector<256x128xf32>
    %26 = arith.addf %22, %25 : vector<256x128xf32>
    %c0_37 = arith.constant 0 : index
    %c0_38 = arith.constant 0 : index
    %27 = vector.load %arg9[%c0_37, %c0_38] : memref<256x128xf32, #tpu.memory_space<vmem>>, vector<256x128xf32>
    tpu.vector_store %arg9[%c0_37, %c0_38], %26 {strides = array<i32>} : memref<256x128xf32, #tpu.memory_space<vmem>>, vector<256x128xf32>,
    %c0_39 = arith.constant 0 : index
    %c1_40 = arith.constant 1 : index
    %c0_41 = arith.constant 0 : index
    %c0_42 = arith.constant 0 : index
    %28 = vector.load %arg1[%c0_39, %c1_40, %c0_41, %c0_42] : memref<1x18x18x128xbf16, #tpu.memory_space<vmem>>, vector<1x16x16x128xbf16>
    %29 = vector.shape_cast %28 : vector<1x16x16x128xbf16> to vector<256x128xbf16>
    %c0_43 = arith.constant 0 : index
    %c0_44 = arith.constant 0 : index
    %30 = vector.load %arg9[%c0_43, %c0_44] : memref<256x128xf32, #tpu.memory_space<vmem>>, vector<256x128xf32>
    %c1_45 = arith.constant 1 : index
    %c0_46 = arith.constant 0 : index
    %c0_47 = arith.constant 0 : index
    %c0_48 = arith.constant 0 : index
    %31 = vector.load %arg2[%c1_45, %c0_46, %c0_47, %c0_48] : memref<3x3x128x128xbf16, #tpu.memory_space<vmem>>, vector<1x1x128x128xbf16>
    %32 = vector.shape_cast %31 : vector<1x1x128x128xbf16> to vector<128x128xbf16>
    %cst_49 = arith.constant dense<0.000000e+00> : vector<256x128xf32>
    %33 = tpu.matmul %29, %32, %cst_49 {dimension_numbers = #tpu.dot_dimension_numbers<[1], [0], [0], [1], [0, 0, 1, 1], [], []>} : vector<256x128xbf16>, vector<128x128xbf16>, vector<256x128xf32> -> vector<256x128xf32>
    %34 = arith.addf %30, %33 : vector<256x128xf32>
    %c0_50 = arith.constant 0 : index
    %c0_51 = arith.constant 0 : index
    %35 = vector.load %arg9[%c0_50, %c0_51] : memref<256x128xf32, #tpu.memory_space<vmem>>, vector<256x128xf32>
    tpu.vector_store %arg9[%c0_50, %c0_51], %34 {strides = array<i32>} : memref<256x128xf32, #tpu.memory_space<vmem>>, vector<256x128xf32>,
    %c0_52 = arith.constant 0 : index
    %c1_53 = arith.constant 1 : index
    %c1_54 = arith.constant 1 : index
    %c0_55 = arith.constant 0 : index
    %36 = vector.load %arg1[%c0_52, %c1_53, %c1_54, %c0_55] : memref<1x18x18x128xbf16, #tpu.memory_space<vmem>>, vector<1x16x16x128xbf16>
    %37 = vector.shape_cast %36 : vector<1x16x16x128xbf16> to vector<256x128xbf16>
    %c0_56 = arith.constant 0 : index
    %c0_57 = arith.constant 0 : index
    %38 = vector.load %arg9[%c0_56, %c0_57] : memref<256x128xf32, #tpu.memory_space<vmem>>, vector<256x128xf32>
    %c1_58 = arith.constant 1 : index
    %c1_59 = arith.constant 1 : index
    %c0_60 = arith.constant 0 : index
    %c0_61 = arith.constant 0 : index
    %39 = vector.load %arg2[%c1_58, %c1_59, %c0_60, %c0_61] : memref<3x3x128x128xbf16, #tpu.memory_space<vmem>>, vector<1x1x128x128xbf16>
    %40 = vector.shape_cast %39 : vector<1x1x128x128xbf16> to vector<128x128xbf16>
    %cst_62 = arith.constant dense<0.000000e+00> : vector<256x128xf32>
    %41 = tpu.matmul %37, %40, %cst_62 {dimension_numbers = #tpu.dot_dimension_numbers<[1], [0], [0], [1], [0, 0, 1, 1], [], []>} : vector<256x128xbf16>, vector<128x128xbf16>, vector<256x128xf32> -> vector<256x128xf32>
    %42 = arith.addf %38, %41 : vector<256x128xf32>
    %c0_63 = arith.constant 0 : index
    %c0_64 = arith.constant 0 : index
    %43 = vector.load %arg9[%c0_63, %c0_64] : memref<256x128xf32, #tpu.memory_space<vmem>>, vector<256x128xf32>
    tpu.vector_store %arg9[%c0_63, %c0_64], %42 {strides = array<i32>} : memref<256x128xf32, #tpu.memory_space<vmem>>, vector<256x128xf32>,
    %c0_65 = arith.constant 0 : index
    %c1_66 = arith.constant 1 : index
    %c2_67 = arith.constant 2 : index
    %c0_68 = arith.constant 0 : index
    %44 = vector.load %arg1[%c0_65, %c1_66, %c2_67, %c0_68] : memref<1x18x18x128xbf16, #tpu.memory_space<vmem>>, vector<1x16x16x128xbf16>
    %45 = vector.shape_cast %44 : vector<1x16x16x128xbf16> to vector<256x128xbf16>
    %c0_69 = arith.constant 0 : index
    %c0_70 = arith.constant 0 : index
    %46 = vector.load %arg9[%c0_69, %c0_70] : memref<256x128xf32, #tpu.memory_space<vmem>>, vector<256x128xf32>
    %c1_71 = arith.constant 1 : index
    %c2_72 = arith.constant 2 : index
    %c0_73 = arith.constant 0 : index
    %c0_74 = arith.constant 0 : index
    %47 = vector.load %arg2[%c1_71, %c2_72, %c0_73, %c0_74] : memref<3x3x128x128xbf16, #tpu.memory_space<vmem>>, vector<1x1x128x128xbf16>
    %48 = vector.shape_cast %47 : vector<1x1x128x128xbf16> to vector<128x128xbf16>
    %cst_75 = arith.constant dense<0.000000e+00> : vector<256x128xf32>
    %49 = tpu.matmul %45, %48, %cst_75 {dimension_numbers = #tpu.dot_dimension_numbers<[1], [0], [0], [1], [0, 0, 1, 1], [], []>} : vector<256x128xbf16>, vector<128x128xbf16>, vector<256x128xf32> -> vector<256x128xf32>
    %50 = arith.addf %46, %49 : vector<256x128xf32>
    %c0_76 = arith.constant 0 : index
    %c0_77 = arith.constant 0 : index
    %51 = vector.load %arg9[%c0_76, %c0_77] : memref<256x128xf32, #tpu.memory_space<vmem>>, vector<256x128xf32>
    tpu.vector_store %arg9[%c0_76, %c0_77], %50 {strides = array<i32>} : memref<256x128xf32, #tpu.memory_space<vmem>>, vector<256x128xf32>,
    %c0_78 = arith.constant 0 : index
    %c2_79 = arith.constant 2 : index
    %c0_80 = arith.constant 0 : index
    %c0_81 = arith.constant 0 : index
    %52 = vector.load %arg1[%c0_78, %c2_79, %c0_80, %c0_81] : memref<1x18x18x128xbf16, #tpu.memory_space<vmem>>, vector<1x16x16x128xbf16>
    %53 = vector.shape_cast %52 : vector<1x16x16x128xbf16> to vector<256x128xbf16>
    %c0_82 = arith.constant 0 : index
    %c0_83 = arith.constant 0 : index
    %54 = vector.load %arg9[%c0_82, %c0_83] : memref<256x128xf32, #tpu.memory_space<vmem>>, vector<256x128xf32>
    %c2_84 = arith.constant 2 : index
    %c0_85 = arith.constant 0 : index
    %c0_86 = arith.constant 0 : index
    %c0_87 = arith.constant 0 : index
    %55 = vector.load %arg2[%c2_84, %c0_85, %c0_86, %c0_87] : memref<3x3x128x128xbf16, #tpu.memory_space<vmem>>, vector<1x1x128x128xbf16>
    %56 = vector.shape_cast %55 : vector<1x1x128x128xbf16> to vector<128x128xbf16>
    %cst_88 = arith.constant dense<0.000000e+00> : vector<256x128xf32>
    %57 = tpu.matmul %53, %56, %cst_88 {dimension_numbers = #tpu.dot_dimension_numbers<[1], [0], [0], [1], [0, 0, 1, 1], [], []>} : vector<256x128xbf16>, vector<128x128xbf16>, vector<256x128xf32> -> vector<256x128xf32>
    %58 = arith.addf %54, %57 : vector<256x128xf32>
    %c0_89 = arith.constant 0 : index
    %c0_90 = arith.constant 0 : index
    %59 = vector.load %arg9[%c0_89, %c0_90] : memref<256x128xf32, #tpu.memory_space<vmem>>, vector<256x128xf32>
    tpu.vector_store %arg9[%c0_89, %c0_90], %58 {strides = array<i32>} : memref<256x128xf32, #tpu.memory_space<vmem>>, vector<256x128xf32>,
    %c0_91 = arith.constant 0 : index
    %c2_92 = arith.constant 2 : index
    %c1_93 = arith.constant 1 : index
    %c0_94 = arith.constant 0 : index
    %60 = vector.load %arg1[%c0_91, %c2_92, %c1_93, %c0_94] : memref<1x18x18x128xbf16, #tpu.memory_space<vmem>>, vector<1x16x16x128xbf16>
    %61 = vector.shape_cast %60 : vector<1x16x16x128xbf16> to vector<256x128xbf16>
    %c0_95 = arith.constant 0 : index
    %c0_96 = arith.constant 0 : index
    %62 = vector.load %arg9[%c0_95, %c0_96] : memref<256x128xf32, #tpu.memory_space<vmem>>, vector<256x128xf32>
    %c2_97 = arith.constant 2 : index
    %c1_98 = arith.constant 1 : index
    %c0_99 = arith.constant 0 : index
    %c0_100 = arith.constant 0 : index
    %63 = vector.load %arg2[%c2_97, %c1_98, %c0_99, %c0_100] : memref<3x3x128x128xbf16, #tpu.memory_space<vmem>>, vector<1x1x128x128xbf16>
    %64 = vector.shape_cast %63 : vector<1x1x128x128xbf16> to vector<128x128xbf16>
    %cst_101 = arith.constant dense<0.000000e+00> : vector<256x128xf32>
    %65 = tpu.matmul %61, %64, %cst_101 {dimension_numbers = #tpu.dot_dimension_numbers<[1], [0], [0], [1], [0, 0, 1, 1], [], []>} : vector<256x128xbf16>, vector<128x128xbf16>, vector<256x128xf32> -> vector<256x128xf32>
    %66 = arith.addf %62, %65 : vector<256x128xf32>
    %c0_102 = arith.constant 0 : index
    %c0_103 = arith.constant 0 : index
    %67 = vector.load %arg9[%c0_102, %c0_103] : memref<256x128xf32, #tpu.memory_space<vmem>>, vector<256x128xf32>
    tpu.vector_store %arg9[%c0_102, %c0_103], %66 {strides = array<i32>} : memref<256x128xf32, #tpu.memory_space<vmem>>, vector<256x128xf32>,
    %c0_104 = arith.constant 0 : index
    %c2_105 = arith.constant 2 : index
    %c2_106 = arith.constant 2 : index
    %c0_107 = arith.constant 0 : index
    %68 = vector.load %arg1[%c0_104, %c2_105, %c2_106, %c0_107] : memref<1x18x18x128xbf16, #tpu.memory_space<vmem>>, vector<1x16x16x128xbf16>
    %69 = vector.shape_cast %68 : vector<1x16x16x128xbf16> to vector<256x128xbf16>
    %c0_108 = arith.constant 0 : index
    %c0_109 = arith.constant 0 : index
    %70 = vector.load %arg9[%c0_108, %c0_109] : memref<256x128xf32, #tpu.memory_space<vmem>>, vector<256x128xf32>
    %c2_110 = arith.constant 2 : index
    %c2_111 = arith.constant 2 : index
    %c0_112 = arith.constant 0 : index
    %c0_113 = arith.constant 0 : index
    %71 = vector.load %arg2[%c2_110, %c2_111, %c0_112, %c0_113] : memref<3x3x128x128xbf16, #tpu.memory_space<vmem>>, vector<1x1x128x128xbf16>
    %72 = vector.shape_cast %71 : vector<1x1x128x128xbf16> to vector<128x128xbf16>
    %cst_114 = arith.constant dense<0.000000e+00> : vector<256x128xf32>
    %73 = tpu.matmul %69, %72, %cst_114 {dimension_numbers = #tpu.dot_dimension_numbers<[1], [0], [0], [1], [0, 0, 1, 1], [], []>} : vector<256x128xbf16>, vector<128x128xbf16>, vector<256x128xf32> -> vector<256x128xf32>
    %74 = arith.addf %70, %73 : vector<256x128xf32>
    %c0_115 = arith.constant 0 : index
    %c0_116 = arith.constant 0 : index
    %75 = vector.load %arg9[%c0_115, %c0_116] : memref<256x128xf32, #tpu.memory_space<vmem>>, vector<256x128xf32>
    tpu.vector_store %arg9[%c0_115, %c0_116], %74 {strides = array<i32>} : memref<256x128xf32, #tpu.memory_space<vmem>>, vector<256x128xf32>,
    %c0_117 = arith.constant 0 : index
    %c0_118 = arith.constant 0 : index
    %76 = vector.load %arg9[%c0_117, %c0_118] : memref<256x128xf32, #tpu.memory_space<vmem>>, vector<256x128xf32>
    %cst_119 = arith.constant 0.000000e+00 : f32
    %77 = vector.broadcast %cst_119 : f32 to vector<256x128xf32>
    %78 = arith.maximumf %76, %77 : vector<256x128xf32>
    %cst_120 = arith.constant 0.000000e+00 : bf16
    %79 = vector.broadcast %cst_120 : bf16 to vector<1x1x18x128xbf16>
    %c0_121 = arith.constant 0 : index
    %c0_122 = arith.constant 0 : index
    %c0_123 = arith.constant 0 : index
    %c0_124 = arith.constant 0 : index
    %80 = vector.load %arg10[%c0_121, %c0_122, %c0_123, %c0_124] : memref<1x18x18x128xbf16, #tpu.memory_space<vmem>>, vector<1x1x18x128xbf16>
    tpu.vector_store %arg10[%c0_121, %c0_122, %c0_123, %c0_124], %79 {strides = array<i32>} : memref<1x18x18x128xbf16, #tpu.memory_space<vmem>>, vector<1x1x18x128xbf16>,
    %c0_125 = arith.constant 0 : index
    %c17 = arith.constant 17 : index
    %c0_126 = arith.constant 0 : index
    %c0_127 = arith.constant 0 : index
    %81 = vector.load %arg10[%c0_125, %c17, %c0_126, %c0_127] : memref<1x18x18x128xbf16, #tpu.memory_space<vmem>>, vector<1x1x18x128xbf16>
    tpu.vector_store %arg10[%c0_125, %c17, %c0_126, %c0_127], %79 {strides = array<i32>} : memref<1x18x18x128xbf16, #tpu.memory_space<vmem>>, vector<1x1x18x128xbf16>,
    %cst_128 = arith.constant 0.000000e+00 : bf16
    %82 = vector.broadcast %cst_128 : bf16 to vector<1x18x1x128xbf16>
    %c0_129 = arith.constant 0 : index
    %c0_130 = arith.constant 0 : index
    %c0_131 = arith.constant 0 : index
    %c0_132 = arith.constant 0 : index
    %83 = vector.load %arg10[%c0_129, %c0_130, %c0_131, %c0_132] : memref<1x18x18x128xbf16, #tpu.memory_space<vmem>>, vector<1x18x1x128xbf16>
    tpu.vector_store %arg10[%c0_129, %c0_130, %c0_131, %c0_132], %82 {strides = array<i32>} : memref<1x18x18x128xbf16, #tpu.memory_space<vmem>>, vector<1x18x1x128xbf16>,
    %c0_133 = arith.constant 0 : index
    %c0_134 = arith.constant 0 : index
    %c17_135 = arith.constant 17 : index
    %c0_136 = arith.constant 0 : index
    %84 = vector.load %arg10[%c0_133, %c0_134, %c17_135, %c0_136] : memref<1x18x18x128xbf16, #tpu.memory_space<vmem>>, vector<1x18x1x128xbf16>
    tpu.vector_store %arg10[%c0_133, %c0_134, %c17_135, %c0_136], %82 {strides = array<i32>} : memref<1x18x18x128xbf16, #tpu.memory_space<vmem>>, vector<1x18x1x128xbf16>,
    %85 = vector.shape_cast %78 : vector<256x128xf32> to vector<1x16x16x128xf32>
    %86 = arith.truncf %85 : vector<1x16x16x128xf32> to vector<1x16x16x128xbf16>
    %c0_137 = arith.constant 0 : index
    %c1_138 = arith.constant 1 : index
    %c1_139 = arith.constant 1 : index
    %c0_140 = arith.constant 0 : index
    %87 = vector.load %arg10[%c0_137, %c1_138, %c1_139, %c0_140] : memref<1x18x18x128xbf16, #tpu.memory_space<vmem>>, vector<1x16x16x128xbf16>
    tpu.vector_store %arg10[%c0_137, %c1_138, %c1_139, %c0_140], %86 {strides = array<i32>} : memref<1x18x18x128xbf16, #tpu.memory_space<vmem>>, vector<1x16x16x128xbf16>,
    %c0_141 = arith.constant 0 : index
    %c0_142 = arith.constant 0 : index
    %88 = vector.load %arg5[%c0_141, %c0_142] : memref<1x128xf32, #tpu.memory_space<vmem>>, vector<1x128xf32>
    %89 = vector.shape_cast %88 : vector<1x128xf32> to vector<1x128xf32>
    %90 = vector.broadcast %89 : vector<1x128xf32> to vector<256x128xf32>
    %c0_143 = arith.constant 0 : index
    %c0_144 = arith.constant 0 : index
    %91 = vector.load %arg9[%c0_143, %c0_144] : memref<256x128xf32, #tpu.memory_space<vmem>>, vector<256x128xf32>
    tpu.vector_store %arg9[%c0_143, %c0_144], %90 {strides = array<i32>} : memref<256x128xf32, #tpu.memory_space<vmem>>, vector<256x128xf32>,
    %c0_145 = arith.constant 0 : index
    %c0_146 = arith.constant 0 : index
    %c0_147 = arith.constant 0 : index
    %c0_148 = arith.constant 0 : index
    %92 = vector.load %arg10[%c0_145, %c0_146, %c0_147, %c0_148] : memref<1x18x18x128xbf16, #tpu.memory_space<vmem>>, vector<1x16x16x128xbf16>
    %93 = vector.shape_cast %92 : vector<1x16x16x128xbf16> to vector<256x128xbf16>
    %c0_149 = arith.constant 0 : index
    %c0_150 = arith.constant 0 : index
    %94 = vector.load %arg9[%c0_149, %c0_150] : memref<256x128xf32, #tpu.memory_space<vmem>>, vector<256x128xf32>
    %c0_151 = arith.constant 0 : index
    %c0_152 = arith.constant 0 : index
    %c0_153 = arith.constant 0 : index
    %c0_154 = arith.constant 0 : index
    %95 = vector.load %arg4[%c0_151, %c0_152, %c0_153, %c0_154] : memref<3x3x128x128xbf16, #tpu.memory_space<vmem>>, vector<1x1x128x128xbf16>
    %96 = vector.shape_cast %95 : vector<1x1x128x128xbf16> to vector<128x128xbf16>
    %cst_155 = arith.constant dense<0.000000e+00> : vector<256x128xf32>
    %97 = tpu.matmul %93, %96, %cst_155 {dimension_numbers = #tpu.dot_dimension_numbers<[1], [0], [0], [1], [0, 0, 1, 1], [], []>} : vector<256x128xbf16>, vector<128x128xbf16>, vector<256x128xf32> -> vector<256x128xf32>
    %98 = arith.addf %94, %97 : vector<256x128xf32>
    %c0_156 = arith.constant 0 : index
    %c0_157 = arith.constant 0 : index
    %99 = vector.load %arg9[%c0_156, %c0_157] : memref<256x128xf32, #tpu.memory_space<vmem>>, vector<256x128xf32>
    tpu.vector_store %arg9[%c0_156, %c0_157], %98 {strides = array<i32>} : memref<256x128xf32, #tpu.memory_space<vmem>>, vector<256x128xf32>,
    %c0_158 = arith.constant 0 : index
    %c0_159 = arith.constant 0 : index
    %c1_160 = arith.constant 1 : index
    %c0_161 = arith.constant 0 : index
    %100 = vector.load %arg10[%c0_158, %c0_159, %c1_160, %c0_161] : memref<1x18x18x128xbf16, #tpu.memory_space<vmem>>, vector<1x16x16x128xbf16>
    %101 = vector.shape_cast %100 : vector<1x16x16x128xbf16> to vector<256x128xbf16>
    %c0_162 = arith.constant 0 : index
    %c0_163 = arith.constant 0 : index
    %102 = vector.load %arg9[%c0_162, %c0_163] : memref<256x128xf32, #tpu.memory_space<vmem>>, vector<256x128xf32>
    %c0_164 = arith.constant 0 : index
    %c1_165 = arith.constant 1 : index
    %c0_166 = arith.constant 0 : index
    %c0_167 = arith.constant 0 : index
    %103 = vector.load %arg4[%c0_164, %c1_165, %c0_166, %c0_167] : memref<3x3x128x128xbf16, #tpu.memory_space<vmem>>, vector<1x1x128x128xbf16>
    %104 = vector.shape_cast %103 : vector<1x1x128x128xbf16> to vector<128x128xbf16>
    %cst_168 = arith.constant dense<0.000000e+00> : vector<256x128xf32>
    %105 = tpu.matmul %101, %104, %cst_168 {dimension_numbers = #tpu.dot_dimension_numbers<[1], [0], [0], [1], [0, 0, 1, 1], [], []>} : vector<256x128xbf16>, vector<128x128xbf16>, vector<256x128xf32> -> vector<256x128xf32>
    %106 = arith.addf %102, %105 : vector<256x128xf32>
    %c0_169 = arith.constant 0 : index
    %c0_170 = arith.constant 0 : index
    %107 = vector.load %arg9[%c0_169, %c0_170] : memref<256x128xf32, #tpu.memory_space<vmem>>, vector<256x128xf32>
    tpu.vector_store %arg9[%c0_169, %c0_170], %106 {strides = array<i32>} : memref<256x128xf32, #tpu.memory_space<vmem>>, vector<256x128xf32>,
    %c0_171 = arith.constant 0 : index
    %c0_172 = arith.constant 0 : index
    %c2_173 = arith.constant 2 : index
    %c0_174 = arith.constant 0 : index
    %108 = vector.load %arg10[%c0_171, %c0_172, %c2_173, %c0_174] : memref<1x18x18x128xbf16, #tpu.memory_space<vmem>>, vector<1x16x16x128xbf16>
    %109 = vector.shape_cast %108 : vector<1x16x16x128xbf16> to vector<256x128xbf16>
    %c0_175 = arith.constant 0 : index
    %c0_176 = arith.constant 0 : index
    %110 = vector.load %arg9[%c0_175, %c0_176] : memref<256x128xf32, #tpu.memory_space<vmem>>, vector<256x128xf32>
    %c0_177 = arith.constant 0 : index
    %c2_178 = arith.constant 2 : index
    %c0_179 = arith.constant 0 : index
    %c0_180 = arith.constant 0 : index
    %111 = vector.load %arg4[%c0_177, %c2_178, %c0_179, %c0_180] : memref<3x3x128x128xbf16, #tpu.memory_space<vmem>>, vector<1x1x128x128xbf16>
    %112 = vector.shape_cast %111 : vector<1x1x128x128xbf16> to vector<128x128xbf16>
    %cst_181 = arith.constant dense<0.000000e+00> : vector<256x128xf32>
    %113 = tpu.matmul %109, %112, %cst_181 {dimension_numbers = #tpu.dot_dimension_numbers<[1], [0], [0], [1], [0, 0, 1, 1], [], []>} : vector<256x128xbf16>, vector<128x128xbf16>, vector<256x128xf32> -> vector<256x128xf32>
    %114 = arith.addf %110, %113 : vector<256x128xf32>
    %c0_182 = arith.constant 0 : index
    %c0_183 = arith.constant 0 : index
    %115 = vector.load %arg9[%c0_182, %c0_183] : memref<256x128xf32, #tpu.memory_space<vmem>>, vector<256x128xf32>
    tpu.vector_store %arg9[%c0_182, %c0_183], %114 {strides = array<i32>} : memref<256x128xf32, #tpu.memory_space<vmem>>, vector<256x128xf32>,
    %c0_184 = arith.constant 0 : index
    %c1_185 = arith.constant 1 : index
    %c0_186 = arith.constant 0 : index
    %c0_187 = arith.constant 0 : index
    %116 = vector.load %arg10[%c0_184, %c1_185, %c0_186, %c0_187] : memref<1x18x18x128xbf16, #tpu.memory_space<vmem>>, vector<1x16x16x128xbf16>
    %117 = vector.shape_cast %116 : vector<1x16x16x128xbf16> to vector<256x128xbf16>
    %c0_188 = arith.constant 0 : index
    %c0_189 = arith.constant 0 : index
    %118 = vector.load %arg9[%c0_188, %c0_189] : memref<256x128xf32, #tpu.memory_space<vmem>>, vector<256x128xf32>
    %c1_190 = arith.constant 1 : index
    %c0_191 = arith.constant 0 : index
    %c0_192 = arith.constant 0 : index
    %c0_193 = arith.constant 0 : index
    %119 = vector.load %arg4[%c1_190, %c0_191, %c0_192, %c0_193] : memref<3x3x128x128xbf16, #tpu.memory_space<vmem>>, vector<1x1x128x128xbf16>
    %120 = vector.shape_cast %119 : vector<1x1x128x128xbf16> to vector<128x128xbf16>
    %cst_194 = arith.constant dense<0.000000e+00> : vector<256x128xf32>
    %121 = tpu.matmul %117, %120, %cst_194 {dimension_numbers = #tpu.dot_dimension_numbers<[1], [0], [0], [1], [0, 0, 1, 1], [], []>} : vector<256x128xbf16>, vector<128x128xbf16>, vector<256x128xf32> -> vector<256x128xf32>
    %122 = arith.addf %118, %121 : vector<256x128xf32>
    %c0_195 = arith.constant 0 : index
    %c0_196 = arith.constant 0 : index
    %123 = vector.load %arg9[%c0_195, %c0_196] : memref<256x128xf32, #tpu.memory_space<vmem>>, vector<256x128xf32>
    tpu.vector_store %arg9[%c0_195, %c0_196], %122 {strides = array<i32>} : memref<256x128xf32, #tpu.memory_space<vmem>>, vector<256x128xf32>,
    %c0_197 = arith.constant 0 : index
    %c1_198 = arith.constant 1 : index
    %c1_199 = arith.constant 1 : index
    %c0_200 = arith.constant 0 : index
    %124 = vector.load %arg10[%c0_197, %c1_198, %c1_199, %c0_200] : memref<1x18x18x128xbf16, #tpu.memory_space<vmem>>, vector<1x16x16x128xbf16>
    %125 = vector.shape_cast %124 : vector<1x16x16x128xbf16> to vector<256x128xbf16>
    %c0_201 = arith.constant 0 : index
    %c0_202 = arith.constant 0 : index
    %126 = vector.load %arg9[%c0_201, %c0_202] : memref<256x128xf32, #tpu.memory_space<vmem>>, vector<256x128xf32>
    %c1_203 = arith.constant 1 : index
    %c1_204 = arith.constant 1 : index
    %c0_205 = arith.constant 0 : index
    %c0_206 = arith.constant 0 : index
    %127 = vector.load %arg4[%c1_203, %c1_204, %c0_205, %c0_206] : memref<3x3x128x128xbf16, #tpu.memory_space<vmem>>, vector<1x1x128x128xbf16>
    %128 = vector.shape_cast %127 : vector<1x1x128x128xbf16> to vector<128x128xbf16>
    %cst_207 = arith.constant dense<0.000000e+00> : vector<256x128xf32>
    %129 = tpu.matmul %125, %128, %cst_207 {dimension_numbers = #tpu.dot_dimension_numbers<[1], [0], [0], [1], [0, 0, 1, 1], [], []>} : vector<256x128xbf16>, vector<128x128xbf16>, vector<256x128xf32> -> vector<256x128xf32>
    %130 = arith.addf %126, %129 : vector<256x128xf32>
    %c0_208 = arith.constant 0 : index
    %c0_209 = arith.constant 0 : index
    %131 = vector.load %arg9[%c0_208, %c0_209] : memref<256x128xf32, #tpu.memory_space<vmem>>, vector<256x128xf32>
    tpu.vector_store %arg9[%c0_208, %c0_209], %130 {strides = array<i32>} : memref<256x128xf32, #tpu.memory_space<vmem>>, vector<256x128xf32>,
    %c0_210 = arith.constant 0 : index
    %c1_211 = arith.constant 1 : index
    %c2_212 = arith.constant 2 : index
    %c0_213 = arith.constant 0 : index
    %132 = vector.load %arg10[%c0_210, %c1_211, %c2_212, %c0_213] : memref<1x18x18x128xbf16, #tpu.memory_space<vmem>>, vector<1x16x16x128xbf16>
    %133 = vector.shape_cast %132 : vector<1x16x16x128xbf16> to vector<256x128xbf16>
    %c0_214 = arith.constant 0 : index
    %c0_215 = arith.constant 0 : index
    %134 = vector.load %arg9[%c0_214, %c0_215] : memref<256x128xf32, #tpu.memory_space<vmem>>, vector<256x128xf32>
    %c1_216 = arith.constant 1 : index
    %c2_217 = arith.constant 2 : index
    %c0_218 = arith.constant 0 : index
    %c0_219 = arith.constant 0 : index
    %135 = vector.load %arg4[%c1_216, %c2_217, %c0_218, %c0_219] : memref<3x3x128x128xbf16, #tpu.memory_space<vmem>>, vector<1x1x128x128xbf16>
    %136 = vector.shape_cast %135 : vector<1x1x128x128xbf16> to vector<128x128xbf16>
    %cst_220 = arith.constant dense<0.000000e+00> : vector<256x128xf32>
    %137 = tpu.matmul %133, %136, %cst_220 {dimension_numbers = #tpu.dot_dimension_numbers<[1], [0], [0], [1], [0, 0, 1, 1], [], []>} : vector<256x128xbf16>, vector<128x128xbf16>, vector<256x128xf32> -> vector<256x128xf32>
    %138 = arith.addf %134, %137 : vector<256x128xf32>
    %c0_221 = arith.constant 0 : index
    %c0_222 = arith.constant 0 : index
    %139 = vector.load %arg9[%c0_221, %c0_222] : memref<256x128xf32, #tpu.memory_space<vmem>>, vector<256x128xf32>
    tpu.vector_store %arg9[%c0_221, %c0_222], %138 {strides = array<i32>} : memref<256x128xf32, #tpu.memory_space<vmem>>, vector<256x128xf32>,
    %c0_223 = arith.constant 0 : index
    %c2_224 = arith.constant 2 : index
    %c0_225 = arith.constant 0 : index
    %c0_226 = arith.constant 0 : index
    %140 = vector.load %arg10[%c0_223, %c2_224, %c0_225, %c0_226] : memref<1x18x18x128xbf16, #tpu.memory_space<vmem>>, vector<1x16x16x128xbf16>
    %141 = vector.shape_cast %140 : vector<1x16x16x128xbf16> to vector<256x128xbf16>
    %c0_227 = arith.constant 0 : index
    %c0_228 = arith.constant 0 : index
    %142 = vector.load %arg9[%c0_227, %c0_228] : memref<256x128xf32, #tpu.memory_space<vmem>>, vector<256x128xf32>
    %c2_229 = arith.constant 2 : index
    %c0_230 = arith.constant 0 : index
    %c0_231 = arith.constant 0 : index
    %c0_232 = arith.constant 0 : index
    %143 = vector.load %arg4[%c2_229, %c0_230, %c0_231, %c0_232] : memref<3x3x128x128xbf16, #tpu.memory_space<vmem>>, vector<1x1x128x128xbf16>
    %144 = vector.shape_cast %143 : vector<1x1x128x128xbf16> to vector<128x128xbf16>
    %cst_233 = arith.constant dense<0.000000e+00> : vector<256x128xf32>
    %145 = tpu.matmul %141, %144, %cst_233 {dimension_numbers = #tpu.dot_dimension_numbers<[1], [0], [0], [1], [0, 0, 1, 1], [], []>} : vector<256x128xbf16>, vector<128x128xbf16>, vector<256x128xf32> -> vector<256x128xf32>
    %146 = arith.addf %142, %145 : vector<256x128xf32>
    %c0_234 = arith.constant 0 : index
    %c0_235 = arith.constant 0 : index
    %147 = vector.load %arg9[%c0_234, %c0_235] : memref<256x128xf32, #tpu.memory_space<vmem>>, vector<256x128xf32>
    tpu.vector_store %arg9[%c0_234, %c0_235], %146 {strides = array<i32>} : memref<256x128xf32, #tpu.memory_space<vmem>>, vector<256x128xf32>,
    %c0_236 = arith.constant 0 : index
    %c2_237 = arith.constant 2 : index
    %c1_238 = arith.constant 1 : index
    %c0_239 = arith.constant 0 : index
    %148 = vector.load %arg10[%c0_236, %c2_237, %c1_238, %c0_239] : memref<1x18x18x128xbf16, #tpu.memory_space<vmem>>, vector<1x16x16x128xbf16>
    %149 = vector.shape_cast %148 : vector<1x16x16x128xbf16> to vector<256x128xbf16>
    %c0_240 = arith.constant 0 : index
    %c0_241 = arith.constant 0 : index
    %150 = vector.load %arg9[%c0_240, %c0_241] : memref<256x128xf32, #tpu.memory_space<vmem>>, vector<256x128xf32>
    %c2_242 = arith.constant 2 : index
    %c1_243 = arith.constant 1 : index
    %c0_244 = arith.constant 0 : index
    %c0_245 = arith.constant 0 : index
    %151 = vector.load %arg4[%c2_242, %c1_243, %c0_244, %c0_245] : memref<3x3x128x128xbf16, #tpu.memory_space<vmem>>, vector<1x1x128x128xbf16>
    %152 = vector.shape_cast %151 : vector<1x1x128x128xbf16> to vector<128x128xbf16>
    %cst_246 = arith.constant dense<0.000000e+00> : vector<256x128xf32>
    %153 = tpu.matmul %149, %152, %cst_246 {dimension_numbers = #tpu.dot_dimension_numbers<[1], [0], [0], [1], [0, 0, 1, 1], [], []>} : vector<256x128xbf16>, vector<128x128xbf16>, vector<256x128xf32> -> vector<256x128xf32>
    %154 = arith.addf %150, %153 : vector<256x128xf32>
    %c0_247 = arith.constant 0 : index
    %c0_248 = arith.constant 0 : index
    %155 = vector.load %arg9[%c0_247, %c0_248] : memref<256x128xf32, #tpu.memory_space<vmem>>, vector<256x128xf32>
    tpu.vector_store %arg9[%c0_247, %c0_248], %154 {strides = array<i32>} : memref<256x128xf32, #tpu.memory_space<vmem>>, vector<256x128xf32>,
    %c0_249 = arith.constant 0 : index
    %c2_250 = arith.constant 2 : index
    %c2_251 = arith.constant 2 : index
    %c0_252 = arith.constant 0 : index
    %156 = vector.load %arg10[%c0_249, %c2_250, %c2_251, %c0_252] : memref<1x18x18x128xbf16, #tpu.memory_space<vmem>>, vector<1x16x16x128xbf16>
    %157 = vector.shape_cast %156 : vector<1x16x16x128xbf16> to vector<256x128xbf16>
    %c0_253 = arith.constant 0 : index
    %c0_254 = arith.constant 0 : index
    %158 = vector.load %arg9[%c0_253, %c0_254] : memref<256x128xf32, #tpu.memory_space<vmem>>, vector<256x128xf32>
    %c2_255 = arith.constant 2 : index
    %c2_256 = arith.constant 2 : index
    %c0_257 = arith.constant 0 : index
    %c0_258 = arith.constant 0 : index
    %159 = vector.load %arg4[%c2_255, %c2_256, %c0_257, %c0_258] : memref<3x3x128x128xbf16, #tpu.memory_space<vmem>>, vector<1x1x128x128xbf16>
    %160 = vector.shape_cast %159 : vector<1x1x128x128xbf16> to vector<128x128xbf16>
    %cst_259 = arith.constant dense<0.000000e+00> : vector<256x128xf32>
    %161 = tpu.matmul %157, %160, %cst_259 {dimension_numbers = #tpu.dot_dimension_numbers<[1], [0], [0], [1], [0, 0, 1, 1], [], []>} : vector<256x128xbf16>, vector<128x128xbf16>, vector<256x128xf32> -> vector<256x128xf32>
    %162 = arith.addf %158, %161 : vector<256x128xf32>
    %c0_260 = arith.constant 0 : index
    %c0_261 = arith.constant 0 : index
    %163 = vector.load %arg9[%c0_260, %c0_261] : memref<256x128xf32, #tpu.memory_space<vmem>>, vector<256x128xf32>
    tpu.vector_store %arg9[%c0_260, %c0_261], %162 {strides = array<i32>} : memref<256x128xf32, #tpu.memory_space<vmem>>, vector<256x128xf32>,
    %c0_262 = arith.constant 0 : index
    %c1_263 = arith.constant 1 : index
    %c1_264 = arith.constant 1 : index
    %c0_265 = arith.constant 0 : index
    %164 = vector.load %arg1[%c0_262, %c1_263, %c1_264, %c0_265] : memref<1x18x18x128xbf16, #tpu.memory_space<vmem>>, vector<1x16x16x128xbf16>
    %165 = vector.shape_cast %164 : vector<1x16x16x128xbf16> to vector<256x128xbf16>
    %c0_266 = arith.constant 0 : index
    %c0_267 = arith.constant 0 : index
    %166 = vector.load %arg6[%c0_266, %c0_267] : memref<128x128xbf16, #tpu.memory_space<vmem>>, vector<128x128xbf16>
    %cst_268 = arith.constant dense<0.000000e+00> : vector<256x128xf32>
    %167 = tpu.matmul %165, %166, %cst_268 {dimension_numbers = #tpu.dot_dimension_numbers<[1], [0], [0], [1], [0, 0, 1, 1], [], []>} : vector<256x128xbf16>, vector<128x128xbf16>, vector<256x128xf32> -> vector<256x128xf32>
    %c0_269 = arith.constant 0 : index
    %c0_270 = arith.constant 0 : index
    %168 = vector.load %arg7[%c0_269, %c0_270] : memref<1x128xf32, #tpu.memory_space<vmem>>, vector<1x128xf32>
    %169 = vector.broadcast %168 : vector<1x128xf32> to vector<256x128xf32>
    %170 = arith.addf %167, %169 : vector<256x128xf32>
    %c0_271 = arith.constant 0 : index
    %c0_272 = arith.constant 0 : index
    %171 = vector.load %arg9[%c0_271, %c0_272] : memref<256x128xf32, #tpu.memory_space<vmem>>, vector<256x128xf32>
    %172 = arith.addf %171, %170 : vector<256x128xf32>
    %cst_273 = arith.constant 0.000000e+00 : f32
    %173 = vector.broadcast %cst_273 : f32 to vector<256x128xf32>
    %174 = arith.maximumf %172, %173 : vector<256x128xf32>
    %175 = vector.shape_cast %174 : vector<256x128xf32> to vector<1x16x16x128xf32>
    %c0_274 = arith.constant 0 : index
    %c0_275 = arith.constant 0 : index
    %c0_276 = arith.constant 0 : index
    %c0_277 = arith.constant 0 : index
    %176 = vector.load %arg8[%c0_274, %c0_275, %c0_276, %c0_277] : memref<1x16x16x128xf32, #tpu.memory_space<vmem>>, vector<1x16x16x128xf32>
    tpu.vector_store %arg8[%c0_274, %c0_275, %c0_276, %c0_277], %175 {strides = array<i32>} : memref<1x16x16x128xf32, #tpu.memory_space<vmem>>, vector<1x16x16x128xf32>,
    return
  }
  func.func @transform_0(%arg0: i32) -> (i32, i32, i32, i32) {
    %c0_i32 = arith.constant 0 : i32
    %c0_i32_0 = arith.constant 0 : i32
    %c0_i32_1 = arith.constant 0 : i32
    %c0_i32_2 = arith.constant 0 : i32
    return %arg0, %c0_i32, %c0_i32_0, %c0_i32_1 : i32, i32, i32, i32
  }
  func.func @transform_1(%arg0: i32) -> (i32, i32, i32, i32) {
    %c0_i32 = arith.constant 0 : i32
    %c0_i32_0 = arith.constant 0 : i32
    %c0_i32_1 = arith.constant 0 : i32
    %c0_i32_2 = arith.constant 0 : i32
    %c0_i32_3 = arith.constant 0 : i32
    return %c0_i32, %c0_i32_0, %c0_i32_1, %c0_i32_2 : i32, i32, i32, i32
  }
  func.func @transform_2(%arg0: i32) -> (i32, i32) {
    %c0_i32 = arith.constant 0 : i32
    %c0_i32_0 = arith.constant 0 : i32
    %c0_i32_1 = arith.constant 0 : i32
    return %c0_i32, %c0_i32_0 : i32, i32
  }
  func.func @transform_3(%arg0: i32) -> (i32, i32, i32, i32) {
    %c0_i32 = arith.constant 0 : i32
    %c0_i32_0 = arith.constant 0 : i32
    %c0_i32_1 = arith.constant 0 : i32
    %c0_i32_2 = arith.constant 0 : i32
    %c0_i32_3 = arith.constant 0 : i32
    return %c0_i32, %c0_i32_0, %c0_i32_1, %c0_i32_2 : i32, i32, i32, i32
  }
  func.func @transform_4(%arg0: i32) -> (i32, i32) {
    %c0_i32 = arith.constant 0 : i32
    %c0_i32_0 = arith.constant 0 : i32
    %c0_i32_1 = arith.constant 0 : i32
    return %c0_i32, %c0_i32_0 : i32, i32
  }
  func.func @transform_5(%arg0: i32) -> (i32, i32) {
    %c0_i32 = arith.constant 0 : i32
    %c0_i32_0 = arith.constant 0 : i32
    %c0_i32_1 = arith.constant 0 : i32
    return %c0_i32, %c0_i32_0 : i32, i32
  }
  func.func @transform_6(%arg0: i32) -> (i32, i32) {
    %c0_i32 = arith.constant 0 : i32
    %c0_i32_0 = arith.constant 0 : i32
    %c0_i32_1 = arith.constant 0 : i32
    return %c0_i32, %c0_i32_0 : i32, i32
  }
  func.func @transform_7(%arg0: i32) -> (i32, i32, i32, i32) {
    %c0_i32 = arith.constant 0 : i32
    %c0_i32_0 = arith.constant 0 : i32
    %c0_i32_1 = arith.constant 0 : i32
    %c0_i32_2 = arith.constant 0 : i32
    return %arg0, %c0_i32, %c0_i32_0, %c0_i32_1 : i32, i32, i32, i32
  }
}

</mosaic_0001>

<llo_original>
// kernel: tpu_custom_call.1
$region0: #{tpu_custom_call.1}
  #allocation0 [shape = 'u32[]', space=smem, size = 0x4, offset = 0x4, fixed_abs, tag = 'smem constant byte address 0x4 - core index']
  #allocation1 [shape = 'u32[72,128]{1,0:T(1,128)}', space=vmem, size = 0x9000, scoped, tag = 'internal scratch']
  #allocation2 [shape = 'f32[256,128]{1,0:T(8,128)}', space=vmem, size = 0x20000, scoped, tag = 'scratch operand']
  #allocation3 [shape = 'bf16[1,18,18,128]{3,2,1,0:T(8,128)(2,1)}', space=vmem, size = 0x1b000, scoped, tag = 'scratch operand']
  %s0 = inlined_call_operand.vmem [shape: bf16[2,18,18,128], index: 0, kind: input, shape index: {}]
  %s1 = inlined_call_operand.vmem [shape: bf16[3,3,128,128], index: 1, kind: input, shape index: {}]
  %s2 = inlined_call_operand.vmem [shape: f32[1,128], index: 2, kind: input, shape index: {}]
  %s3 = inlined_call_operand.hbm [shape: bf16[3,3,128,128], index: 3, kind: input, shape index: {}]
  %s4 = inlined_call_operand.vmem [shape: f32[1,128], index: 4, kind: input, shape index: {}]
  %s5 = inlined_call_operand.vmem [shape: bf16[128,128], index: 5, kind: input, shape index: {}]
  %s6 = inlined_call_operand.vmem [shape: f32[1,128], index: 6, kind: input, shape index: {}]
  %s7 = inlined_call_operand.hbm [shape: f32[2,16,16,128], index: 7, kind: output, shape index: {}]
  %s8 = sld [smem:[#allocation0]]
  $region65: #{tpu_custom_call.1} parent=0
    _
  %s10 = ssub.s32 1, %s8
  %s11 = scalar_select 0, %s10, %s8
  $region1: #{tpu_custom_call.1} parent=0
    #allocation4 [shape = 'u8[294912]{0}', space=vmem, size = 0x48000, scoped, tag = 'input window, operand 3, single buffered']
    #allocation5 [shape = 's32[2]{0}', space=sflag, size = 0x8, scoped, tag = 'scoped memory for tpu_custom_call.1']
    #allocation6 [shape = 's32[2]{0}', space=sflag, size = 0x8, scoped, tag = 'scoped memory for tpu_custom_call.1']
    #allocation7 [shape = 'u8[262144]{0}', space=vmem, size = 0x40000, scoped, tag = 'output window, operand 0']
    %12 = vsyncpa [#allocation5], 0
    %13 = vsyncpa [#allocation6], 0
    %s14 = scalar_lea.sflag [#allocation6], 1
    %15 = vsyncpa %s14, 0
    loop: start=0, step=1, limit=4
    $region2: #{tpu_custom_call.1} parent=1 // loop_pre_header
      _
    $region3: #{tpu_custom_call.1} parent=1 // loop_header
      %s17 = sphi 0, %s21
      %p18 = scmp.ge.s32.totalorder %s17, 4
      %s27 = sphi 0, %s29
      %s30 = sphi 0, %s27
      %s31 = sphi 0, %s30
      %s47 = sphi 0, %s31
      %s51 = sphi 0, %s51
      %s53 = sphi 0, %s51
      %s54 = sphi 0, %s53
      %s68 = sphi 0, %s54
      %s72 = sphi 0, %s72
      %s74 = sphi 0, %s72
      %s75 = sphi 0, %s74
      %s89 = sphi 0, %s75
      %s93 = sphi 0, %s93
      %s95 = sphi 0, %s93
      %s96 = sphi 0, %s95
      %s110 = sphi 0, %s96
      %s114 = sphi 0, %s114
      %s116 = sphi 0, %s114
      %s117 = sphi 0, %s116
      %s131 = sphi 0, %s117
      %s135 = sphi 0, %s135
      %s137 = sphi 0, %s135
      %s138 = sphi 0, %s137
      %s152 = sphi 0, %s138
      %s156 = sphi 0, %s156
      %s158 = sphi 0, %s156
      %s159 = sphi 0, %s158
      %s173 = sphi 0, %s159
      %s179 = sphi 0, %s181
      %s182 = sphi 0, %s179
      %s183 = sphi 0, %s182
      %s199 = sphi 0, %s183
    $region4: #{tpu_custom_call.1} parent=1 // loop_header_branch
      %20 = sbr.rel (%p18) target = $region8
    $region5: #{tpu_custom_call.1} parent=1 // loop_body
      %s22 = ssub.s32 %s17, 1
      %s23 = ssub.s32 %s17, 2
      %s24 = sadd.s32 %s17, 1
      %s25 = ssub.s32 %s17, %s24
      %p26 = scmp.eq.s32.totalorder %s25, 0
      %s28 = sadd.s32 %s27, 1
      %s29 = scalar_select %p26, %s27, %s28
      %p32 = pneg %p26
      %p33 = scmp.eq.s32.totalorder %s17, 1
      %p34 = por %p32, %p33
      %p35 = scmp.ne.s32.totalorder %s27, %s30
      %p36 = scmp.eq.s32.totalorder %s17, 0
      %p37 = por %p35, %p36
      %p38 = scmp.ne.s32.totalorder %s27, %s30
      %p39 = scmp.eq.s32.totalorder %s22, 1
      %p40 = por %p38, %p39
      %p41 = scmp.ne.s32.totalorder %s30, %s31
      %p42 = scmp.eq.s32.totalorder %s22, 0
      %p43 = por %p41, %p42
      %p44 = scmp.ne.s32.totalorder %s30, %s31
      %p45 = scmp.eq.s32.totalorder %s23, 1
      %p46 = por %p44, %p45
      %p48 = scmp.ne.s32.totalorder %s31, %s47
      %p49 = scmp.eq.s32.totalorder %s23, 0
      %p50 = por %p48, %p49
      %s52 = sadd.s32 %s51, 1
      %p55 = scmp.eq.s32.totalorder %s17, 1
      %p56 = scmp.ne.s32.totalorder %s51, %s53
      %p57 = scmp.eq.s32.totalorder %s17, 0
      %p58 = por %p56, %p57
      %p59 = scmp.ne.s32.totalorder %s51, %s53
      %p60 = scmp.eq.s32.totalorder %s22, 1
      %p61 = por %p59, %p60
      %p62 = scmp.ne.s32.totalorder %s53, %s54
      %p63 = scmp.eq.s32.totalorder %s22, 0
      %p64 = por %p62, %p63
      %p65 = scmp.ne.s32.totalorder %s53, %s54
      %p66 = scmp.eq.s32.totalorder %s23, 1
      %p67 = por %p65, %p66
      %p69 = scmp.ne.s32.totalorder %s54, %s68
      %p70 = scmp.eq.s32.totalorder %s23, 0
      %p71 = por %p69, %p70
      %s73 = sadd.s32 %s72, 1
      %p76 = scmp.eq.s32.totalorder %s17, 1
      %p77 = scmp.ne.s32.totalorder %s72, %s74
      %p78 = scmp.eq.s32.totalorder %s17, 0
      %p79 = por %p77, %p78
      %p80 = scmp.ne.s32.totalorder %s72, %s74
      %p81 = scmp.eq.s32.totalorder %s22, 1
      %p82 = por %p80, %p81
      %p83 = scmp.ne.s32.totalorder %s74, %s75
      %p84 = scmp.eq.s32.totalorder %s22, 0
      %p85 = por %p83, %p84
      %p86 = scmp.ne.s32.totalorder %s74, %s75
      %p87 = scmp.eq.s32.totalorder %s23, 1
      %p88 = por %p86, %p87
      %p90 = scmp.ne.s32.totalorder %s75, %s89
      %p91 = scmp.eq.s32.totalorder %s23, 0
      %p92 = por %p90, %p91
      %s94 = sadd.s32 %s93, 1
      %p97 = scmp.eq.s32.totalorder %s17, 1
      %p98 = scmp.ne.s32.totalorder %s93, %s95
      %p99 = scmp.eq.s32.totalorder %s17, 0
      %p100 = por %p98, %p99
      %p101 = scmp.ne.s32.totalorder %s93, %s95
      %p102 = scmp.eq.s32.totalorder %s22, 1
      %p103 = por %p101, %p102
      %p104 = scmp.ne.s32.totalorder %s95, %s96
      %p105 = scmp.eq.s32.totalorder %s22, 0
      %p106 = por %p104, %p105
      %p107 = scmp.ne.s32.totalorder %s95, %s96
      %p108 = scmp.eq.s32.totalorder %s23, 1
      %p109 = por %p107, %p108
      %p111 = scmp.ne.s32.totalorder %s96, %s110
      %p112 = scmp.eq.s32.totalorder %s23, 0
      %p113 = por %p111, %p112
      %s115 = sadd.s32 %s114, 1
      %p118 = scmp.eq.s32.totalorder %s17, 1
      %p119 = scmp.ne.s32.totalorder %s114, %s116
      %p120 = scmp.eq.s32.totalorder %s17, 0
      %p121 = por %p119, %p120
      %p122 = scmp.ne.s32.totalorder %s114, %s116
      %p123 = scmp.eq.s32.totalorder %s22, 1
      %p124 = por %p122, %p123
      %p125 = scmp.ne.s32.totalorder %s116, %s117
      %p126 = scmp.eq.s32.totalorder %s22, 0
      %p127 = por %p125, %p126
      %p128 = scmp.ne.s32.totalorder %s116, %s117
      %p129 = scmp.eq.s32.totalorder %s23, 1
      %p130 = por %p128, %p129
      %p132 = scmp.ne.s32.totalorder %s117, %s131
      %p133 = scmp.eq.s32.totalorder %s23, 0
      %p134 = por %p132, %p133
      %s136 = sadd.s32 %s135, 1
      %p139 = scmp.eq.s32.totalorder %s17, 1
      %p140 = scmp.ne.s32.totalorder %s135, %s137
      %p141 = scmp.eq.s32.totalorder %s17, 0
      %p142 = por %p140, %p141
      %p143 = scmp.ne.s32.totalorder %s135, %s137
      %p144 = scmp.eq.s32.totalorder %s22, 1
      %p145 = por %p143, %p144
      %p146 = scmp.ne.s32.totalorder %s137, %s138
      %p147 = scmp.eq.s32.totalorder %s22, 0
      %p148 = por %p146, %p147
      %p149 = scmp.ne.s32.totalorder %s137, %s138
      %p150 = scmp.eq.s32.totalorder %s23, 1
      %p151 = por %p149, %p150
      %p153 = scmp.ne.s32.totalorder %s138, %s152
      %p154 = scmp.eq.s32.totalorder %s23, 0
      %p155 = por %p153, %p154
      %s157 = sadd.s32 %s156, 1
      %p160 = scmp.eq.s32.totalorder %s17, 1
      %p161 = scmp.ne.s32.totalorder %s156, %s158
      %p162 = scmp.eq.s32.totalorder %s17, 0
      %p163 = por %p161, %p162
      %p164 = scmp.ne.s32.totalorder %s156, %s158
      %p165 = scmp.eq.s32.totalorder %s22, 1
      %p166 = por %p164, %p165
      %p167 = scmp.ne.s32.totalorder %s158, %s159
      %p168 = scmp.eq.s32.totalorder %s22, 0
      %p169 = por %p167, %p168
      %p170 = scmp.ne.s32.totalorder %s158, %s159
      %p171 = scmp.eq.s32.totalorder %s23, 1
      %p172 = por %p170, %p171
      %p174 = scmp.ne.s32.totalorder %s159, %s173
      %p175 = scmp.eq.s32.totalorder %s23, 0
      %p176 = por %p174, %p175
      %s177 = ssub.s32 %s17, %s24
      %p178 = scmp.eq.s32.totalorder %s177, 0
      %s180 = sadd.s32 %s179, 1
      %s181 = scalar_select %p178, %s179, %s180
      %p184 = pneg %p178
      %p185 = scmp.eq.s32.totalorder %s17, 1
      %p186 = por %p184, %p185
      %p187 = scmp.ne.s32.totalorder %s179, %s182
      %p188 = scmp.eq.s32.totalorder %s17, 0
      %p189 = por %p187, %p188
      %p190 = scmp.ne.s32.totalorder %s179, %s182
      %p191 = scmp.eq.s32.totalorder %s22, 1
      %p192 = por %p190, %p191
      %p193 = scmp.ne.s32.totalorder %s182, %s183
      %p194 = scmp.eq.s32.totalorder %s22, 0
      %p195 = por %p193, %p194
      %p196 = scmp.ne.s32.totalorder %s182, %s183
      %p197 = scmp.eq.s32.totalorder %s23, 1
      %p198 = por %p196, %p197
      %p200 = scmp.ne.s32.totalorder %s183, %s199
      %p201 = scmp.eq.s32.totalorder %s23, 0
      %p202 = por %p200, %p201
      %p203 = scmp.le.s32.totalorder 1, %s17
      %p204 = scmp.lt.s32.totalorder %s17, 3
      %p205 = pnand %p203, %p204
      %p206 = pneg %p205
      // Predicated region
      $region9: #{tpu_custom_call.1} parent=5 // pred_check
        _
      $region10: #{tpu_custom_call.1} parent=5 // pred_check_branch
        %208 = sbr.rel (%p205) target = $region12
      $region11: #{tpu_custom_call.1} parent=5 // pred_region
        %s209 = ssub.s32 %s17, 1
        // Predicated region
        $region13: #{tpu_custom_call.1} parent=11 // pred_check
          %p210 = pneg %p64
        $region14: #{tpu_custom_call.1} parent=11 // pred_check_branch
          %212 = sbr.rel (%p210) target = $region16
        $region15: #{tpu_custom_call.1} parent=11 // pred_region
          _
        $region16: #{tpu_custom_call.1} parent=11 // pred_fallthru
          _
        // Predicated region
        $region17: #{tpu_custom_call.1} parent=11 // pred_check
          %p213 = pneg %p85
        $region18: #{tpu_custom_call.1} parent=11 // pred_check_branch
          %215 = sbr.rel (%p213) target = $region20
        $region19: #{tpu_custom_call.1} parent=11 // pred_region
          _
        $region20: #{tpu_custom_call.1} parent=11 // pred_fallthru
          _
        // Predicated region
        $region21: #{tpu_custom_call.1} parent=11 // pred_check
          %p216 = pneg %p106
        $region22: #{tpu_custom_call.1} parent=11 // pred_check_branch
          %218 = sbr.rel (%p216) target = $region24
        $region23: #{tpu_custom_call.1} parent=11 // pred_region
          %220 = vsyncadd [#allocation5], 0
          %s221 = sshll.u32 %s3, 4
          %s222 = int_to_ptr.hbm [resolvable:$true] %s221
          %s223 = sshll.u32 [#allocation4], 4
          %s224 = int_to_ptr.vmem [resolvable:$true] %s223
          %229 = dma.hbm_to_vmem [thread:$0]  %s222, 9216, %s224, [#allocation5], 64, 64, 4
        $region24: #{tpu_custom_call.1} parent=11 // pred_fallthru
          _
        // Predicated region
        $region25: #{tpu_custom_call.1} parent=11 // pred_check
          %p230 = pneg %p127
        $region26: #{tpu_custom_call.1} parent=11 // pred_check_branch
          %232 = sbr.rel (%p230) target = $region28
        $region27: #{tpu_custom_call.1} parent=11 // pred_region
          _
        $region28: #{tpu_custom_call.1} parent=11 // pred_fallthru
          _
        // Predicated region
        $region29: #{tpu_custom_call.1} parent=11 // pred_check
          %p233 = pneg %p148
        $region30: #{tpu_custom_call.1} parent=11 // pred_check_branch
          %235 = sbr.rel (%p233) target = $region32
        $region31: #{tpu_custom_call.1} parent=11 // pred_region
          _
        $region32: #{tpu_custom_call.1} parent=11 // pred_fallthru
          _
        // Predicated region
        $region33: #{tpu_custom_call.1} parent=11 // pred_check
          %p236 = pneg %p169
        $region34: #{tpu_custom_call.1} parent=11 // pred_check_branch
          %238 = sbr.rel (%p236) target = $region36
        $region35: #{tpu_custom_call.1} parent=11 // pred_region
          _
        $region36: #{tpu_custom_call.1} parent=11 // pred_fallthru
          _
      $region12: #{tpu_custom_call.1} parent=5 // pred_fallthru
        _
      %p239 = scmp.lt.s32.totalorder %s17, 2
      // Predicated region
      $region37: #{tpu_custom_call.1} parent=5 // pred_check
        %p240 = pneg %p239
      $region38: #{tpu_custom_call.1} parent=5 // pred_check_branch
        %242 = sbr.rel (%p240) target = $region40
      $region39: #{tpu_custom_call.1} parent=5 // pred_region
        // Predicated region
        $region41: #{tpu_custom_call.1} parent=39 // pred_check
          %p243 = pneg %p37
        $region42: #{tpu_custom_call.1} parent=39 // pred_check_branch
          %245 = sbr.rel (%p243) target = $region44
        $region43: #{tpu_custom_call.1} parent=39 // pred_region
          %p246 = scmp.lt.s32.totalorder %s17, 1
          %s247 = scalar_select %p246, %s17, 1
          %s248 = smul.addr %s247, 54
          %s249 = smul.addr %s248, 4
          %s250 = scalar_lea.vmem %s0, %s249
        $region44: #{tpu_custom_call.1} parent=39 // pred_fallthru
          _
      $region40: #{tpu_custom_call.1} parent=5 // pred_fallthru
        _
      %p251 = scmp.le.s32.totalorder 1, %s17
      %p252 = scmp.lt.s32.totalorder %s17, 3
      %p253 = pnand %p251, %p252
      %p254 = pneg %p253
      // Predicated region
      $region45: #{tpu_custom_call.1} parent=5 // pred_check
        _
      $region46: #{tpu_custom_call.1} parent=5 // pred_check_branch
        %256 = sbr.rel (%p253) target = $region48
      $region47: #{tpu_custom_call.1} parent=5 // pred_region
        %s257 = ssub.s32 %s17, 1
        // Predicated region
        $region49: #{tpu_custom_call.1} parent=47 // pred_check
          %p258 = pneg %p106
        $region50: #{tpu_custom_call.1} parent=47 // pred_check_branch
          %260 = sbr.rel (%p258) target = $region52
        $region51: #{tpu_custom_call.1} parent=47 // pred_region
          %262 = dma.done [#allocation5], 9216
        $region52: #{tpu_custom_call.1} parent=47 // pred_fallthru
          _
        %p263 = scmp.lt.s32.totalorder %s22, 1
        %s264 = scalar_select %p263, %s22, 1
        %s265 = smul.addr %s264, 54
        %s266 = smul.addr %s265, 4
        %s267 = scalar_lea.vmem %s0, %s266
        %p268 = pneg %p43
        %p269 = pneg %p40
        %p270 = pneg %p64
        %p271 = pneg %p61
        %p272 = pneg %p85
        %p273 = pneg %p82
        %p274 = pneg %p106
        %p275 = pneg %p103
        %p276 = pneg %p127
        %p277 = pneg %p124
        %p278 = pneg %p148
        %p279 = pneg %p145
        %p280 = pneg %p169
        %p281 = pneg %p166
        %p282 = pneg %p195
        %p283 = pneg %p192
        %s284 = sand.u32 %s182, 1
        %s285 = scalar_lea.sflag [#allocation6], %s284
        %s286 = sand.u32 %s182, 1
        %s287 = smul.addr %s286, 256
        %s288 = scalar_lea.vmem [#allocation7], %s287
        %p289 = scmp.lt.s32.totalorder %s22, 1
        %s290 = scalar_select %p289, %s22, 1
        %s291 = smul.addr %s290, 54
        %s292 = smul.addr %s291, 4
        %s293 = scalar_lea.vmem %s0, %s292
        %v295 = vld [vmem:[%s2] sm:$0x1]
        %v297 = vperm.slane %v295, 0
        %299 = vst [vmem:[#allocation2] sm:$0xff] %v297
        %300 = vst [vmem:[#allocation2 + $0x8] sm:$0xff] %v297
        %301 = vst [vmem:[#allocation2 + $0x10] sm:$0xff] %v297
        %302 = vst [vmem:[#allocation2 + $0x18] sm:$0xff] %v297
        %303 = vst [vmem:[#allocation2 + $0x20] sm:$0xff] %v297
        %304 = vst [vmem:[#allocation2 + $0x28] sm:$0xff] %v297
        %305 = vst [vmem:[#allocation2 + $0x30] sm:$0xff] %v297
        %306 = vst [vmem:[#allocation2 + $0x38] sm:$0xff] %v297
        %307 = vst [vmem:[#allocation2 + $0x40] sm:$0xff] %v297
        %308 = vst [vmem:[#allocation2 + $0x48] sm:$0xff] %v297
        %309 = vst [vmem:[#allocation2 + $0x50] sm:$0xff] %v297
        %310 = vst [vmem:[#allocation2 + $0x58] sm:$0xff] %v297
        %311 = vst [vmem:[#allocation2 + $0x60] sm:$0xff] %v297
        %312 = vst [vmem:[#allocation2 + $0x68] sm:$0xff] %v297
        %313 = vst [vmem:[#allocation2 + $0x70] sm:$0xff] %v297
        %314 = vst [vmem:[#allocation2 + $0x78] sm:$0xff] %v297
        %315 = vst [vmem:[#allocation2 + $0x80] sm:$0xff] %v297
        %316 = vst [vmem:[#allocation2 + $0x88] sm:$0xff] %v297
        %317 = vst [vmem:[#allocation2 + $0x90] sm:$0xff] %v297
        %318 = vst [vmem:[#allocation2 + $0x98] sm:$0xff] %v297
        %319 = vst [vmem:[#allocation2 + $0xa0] sm:$0xff] %v297
        %320 = vst [vmem:[#allocation2 + $0xa8] sm:$0xff] %v297
        %321 = vst [vmem:[#allocation2 + $0xb0] sm:$0xff] %v297
        %322 = vst [vmem:[#allocation2 + $0xb8] sm:$0xff] %v297
        %323 = vst [vmem:[#allocation2 + $0xc0] sm:$0xff] %v297
        %324 = vst [vmem:[#allocation2 + $0xc8] sm:$0xff] %v297
        %325 = vst [vmem:[#allocation2 + $0xd0] sm:$0xff] %v297
        %326 = vst [vmem:[#allocation2 + $0xd8] sm:$0xff] %v297
        %327 = vst [vmem:[#allocation2 + $0xe0] sm:$0xff] %v297
        %328 = vst [vmem:[#allocation2 + $0xe8] sm:$0xff] %v297
        %329 = vst [vmem:[#allocation2 + $0xf0] sm:$0xff] %v297
        %330 = vst [vmem:[#allocation2 + $0xf8] sm:$0xff] %v297
        %v331 = vld [vmem:[%s293] sm:$0xf]
        %v332 = vld [vmem:[%s293 + $0x4] sm:$0xf]
        %v333 = vld [vmem:[%s293 + $0xc] sm:$0xf]
        %v334 = vld [vmem:[%s293 + $0x10] sm:$0xf]
        %v335 = vld [vmem:[%s293 + $0x18] sm:$0xf]
        %v336 = vld [vmem:[%s293 + $0x1c] sm:$0xf]
        %v337 = vld [vmem:[%s293 + $0x24] sm:$0xf]
        %v338 = vld [vmem:[%s293 + $0x28] sm:$0xf]
        %v339 = vld [vmem:[%s293 + $0x30] sm:$0xf]
        %v340 = vld [vmem:[%s293 + $0x34] sm:$0xf]
        %v341 = vld [vmem:[%s293 + $0x3c] sm:$0xf]
        %v342 = vld [vmem:[%s293 + $0x40] sm:$0xf]
        %v343 = vld [vmem:[%s293 + $0x48] sm:$0xf]
        %v344 = vld [vmem:[%s293 + $0x4c] sm:$0xf]
        %v345 = vld [vmem:[%s293 + $0x54] sm:$0xf]
        %v346 = vld [vmem:[%s293 + $0x58] sm:$0xf]
        %v347 = vld [vmem:[%s293 + $0x60] sm:$0xf]
        %v348 = vld [vmem:[%s293 + $0x64] sm:$0xf]
        %v349 = vld [vmem:[%s293 + $0x6c] sm:$0xf]
        %v350 = vld [vmem:[%s293 + $0x70] sm:$0xf]
        %v351 = vld [vmem:[%s293 + $0x78] sm:$0xf]
        %v352 = vld [vmem:[%s293 + $0x7c] sm:$0xf]
        %v353 = vld [vmem:[%s293 + $0x84] sm:$0xf]
        %v354 = vld [vmem:[%s293 + $0x88] sm:$0xf]
        %v355 = vld [vmem:[%s293 + $0x90] sm:$0xf]
        %v356 = vld [vmem:[%s293 + $0x94] sm:$0xf]
        %v357 = vld [vmem:[%s293 + $0x9c] sm:$0xf]
        %v358 = vld [vmem:[%s293 + $0xa0] sm:$0xf]
        %v359 = vld [vmem:[%s293 + $0xa8] sm:$0xf]
        %v360 = vld [vmem:[%s293 + $0xac] sm:$0xf]
        %v361 = vld [vmem:[%s293 + $0xb4] sm:$0xf]
        %v362 = vld [vmem:[%s293 + $0xb8] sm:$0xf]
        %v363 = vld [vmem:[#allocation2] sm:$0xff]
        %v364 = vld [vmem:[#allocation2 + $0x8] sm:$0xff]
        %v365 = vld [vmem:[#allocation2 + $0x10] sm:$0xff]
        %v366 = vld [vmem:[#allocation2 + $0x18] sm:$0xff]
        %v367 = vld [vmem:[#allocation2 + $0x20] sm:$0xff]
        %v368 = vld [vmem:[#allocation2 + $0x28] sm:$0xff]
        %v369 = vld [vmem:[#allocation2 + $0x30] sm:$0xff]
        %v370 = vld [vmem:[#allocation2 + $0x38] sm:$0xff]
        %v371 = vld [vmem:[#allocation2 + $0x40] sm:$0xff]
        %v372 = vld [vmem:[#allocation2 + $0x48] sm:$0xff]
        %v373 = vld [vmem:[#allocation2 + $0x50] sm:$0xff]
        %v374 = vld [vmem:[#allocation2 + $0x58] sm:$0xff]
        %v375 = vld [vmem:[#allocation2 + $0x60] sm:$0xff]
        %v376 = vld [vmem:[#allocation2 + $0x68] sm:$0xff]
        %v377 = vld [vmem:[#allocation2 + $0x70] sm:$0xff]
        %v378 = vld [vmem:[#allocation2 + $0x78] sm:$0xff]
        %v379 = vld [vmem:[#allocation2 + $0x80] sm:$0xff]
        %v380 = vld [vmem:[#allocation2 + $0x88] sm:$0xff]
        %v381 = vld [vmem:[#allocation2 + $0x90] sm:$0xff]
        %v382 = vld [vmem:[#allocation2 + $0x98] sm:$0xff]
        %v383 = vld [vmem:[#allocation2 + $0xa0] sm:$0xff]
        %v384 = vld [vmem:[#allocation2 + $0xa8] sm:$0xff]
        %v385 = vld [vmem:[#allocation2 + $0xb0] sm:$0xff]
        %v386 = vld [vmem:[#allocation2 + $0xb8] sm:$0xff]
        %v387 = vld [vmem:[#allocation2 + $0xc0] sm:$0xff]
        %v388 = vld [vmem:[#allocation2 + $0xc8] sm:$0xff]
        %v389 = vld [vmem:[#allocation2 + $0xd0] sm:$0xff]
        %v390 = vld [vmem:[#allocation2 + $0xd8] sm:$0xff]
        %v391 = vld [vmem:[#allocation2 + $0xe0] sm:$0xff]
        %v392 = vld [vmem:[#allocation2 + $0xe8] sm:$0xff]
        %v393 = vld [vmem:[#allocation2 + $0xf0] sm:$0xff]
        %v394 = vld [vmem:[#allocation2 + $0xf8] sm:$0xff]
        %v395 = vld [vmem:[%s1] sm:$0xf]
        %v396 = vld [vmem:[%s1 + $0x4] sm:$0xf]
        %v397 = vld [vmem:[%s1 + $0x8] sm:$0xf]
        %v398 = vld [vmem:[%s1 + $0xc] sm:$0xf]
        %v399 = vld [vmem:[%s1 + $0x10] sm:$0xf]
        %v400 = vld [vmem:[%s1 + $0x14] sm:$0xf]
        %v401 = vld [vmem:[%s1 + $0x18] sm:$0xf]
        %v402 = vld [vmem:[%s1 + $0x1c] sm:$0xf]
        %v403 = vld [vmem:[%s1 + $0x20] sm:$0xf]
        %v404 = vld [vmem:[%s1 + $0x24] sm:$0xf]
        %v405 = vld [vmem:[%s1 + $0x28] sm:$0xf]
        %v406 = vld [vmem:[%s1 + $0x2c] sm:$0xf]
        %v407 = vld [vmem:[%s1 + $0x30] sm:$0xf]
        %v408 = vld [vmem:[%s1 + $0x34] sm:$0xf]
        %v409 = vld [vmem:[%s1 + $0x38] sm:$0xf]
        %v410 = vld [vmem:[%s1 + $0x3c] sm:$0xf]
        %v443 = vunpack.c.l.b16 %v331
        %v444 = vunpack.c.l.b16 %v332
        %v445 = vunpack.c.l.b16 %v333
        %v446 = vunpack.c.l.b16 %v334
        %v447 = vunpack.c.l.b16 %v335
        %v448 = vunpack.c.l.b16 %v336
        %v449 = vunpack.c.l.b16 %v337
        %v450 = vunpack.c.l.b16 %v338
        %v451 = vunpack.c.l.b16 %v339
        %v452 = vunpack.c.l.b16 %v340
        %v453 = vunpack.c.l.b16 %v341
        %v454 = vunpack.c.l.b16 %v342
        %v455 = vunpack.c.l.b16 %v343
        %v456 = vunpack.c.l.b16 %v344
        %v457 = vunpack.c.l.b16 %v345
        %v458 = vunpack.c.l.b16 %v346
        %v459 = vunpack.c.l.b16 %v347
        %v460 = vunpack.c.l.b16 %v348
        %v461 = vunpack.c.l.b16 %v349
        %v462 = vunpack.c.l.b16 %v350
        %v463 = vunpack.c.l.b16 %v351
        %v464 = vunpack.c.l.b16 %v352
        %v465 = vunpack.c.l.b16 %v353
        %v466 = vunpack.c.l.b16 %v354
        %v467 = vunpack.c.l.b16 %v355
        %v468 = vunpack.c.l.b16 %v356
        %v469 = vunpack.c.l.b16 %v357
        %v470 = vunpack.c.l.b16 %v358
        %v471 = vunpack.c.l.b16 %v359
        %v472 = vunpack.c.l.b16 %v360
        %v473 = vunpack.c.l.b16 %v361
        %v474 = vunpack.c.l.b16 %v362
        %v475 = vpack.c.b16 %v444, %v443
        %v476 = vpack.c.b16 %v446, %v445
        %v477 = vpack.c.b16 %v448, %v447
        %v478 = vpack.c.b16 %v450, %v449
        %v479 = vpack.c.b16 %v452, %v451
        %v480 = vpack.c.b16 %v454, %v453
        %v481 = vpack.c.b16 %v456, %v455
        %v482 = vpack.c.b16 %v458, %v457
        %v483 = vpack.c.b16 %v460, %v459
        %v484 = vpack.c.b16 %v462, %v461
        %v485 = vpack.c.b16 %v464, %v463
        %v486 = vpack.c.b16 %v466, %v465
        %v487 = vpack.c.b16 %v468, %v467
        %v488 = vpack.c.b16 %v470, %v469
        %v489 = vpack.c.b16 %v472, %v471
        %v490 = vpack.c.b16 %v474, %v473
        %v523 = vunpack.c.l.b16 %v395
        %v524 = vunpack.c.l.b16 %v396
        %v525 = vunpack.c.l.b16 %v397
        %v526 = vunpack.c.l.b16 %v398
        %v527 = vunpack.c.l.b16 %v399
        %v528 = vunpack.c.l.b16 %v400
        %v529 = vunpack.c.l.b16 %v401
        %v530 = vunpack.c.l.b16 %v402
        %v531 = vunpack.c.l.b16 %v403
        %v532 = vunpack.c.l.b16 %v404
        %v533 = vunpack.c.l.b16 %v405
        %v534 = vunpack.c.l.b16 %v406
        %v535 = vunpack.c.l.b16 %v407
        %v536 = vunpack.c.l.b16 %v408
        %v537 = vunpack.c.l.b16 %v409
        %v538 = vunpack.c.l.b16 %v410
        %v539 = vpack.c.b16 %v524, %v523
        %v540 = vpack.c.b16 %v526, %v525
        %v541 = vpack.c.b16 %v528, %v527
        %v542 = vpack.c.b16 %v530, %v529
        %v543 = vpack.c.b16 %v532, %v531
        %v544 = vpack.c.b16 %v534, %v533
        %v545 = vpack.c.b16 %v536, %v535
        %v546 = vpack.c.b16 %v538, %v537
        %555 = vmatpush.bf16.msra.mxu0 %v546
        %556 = vmatpush.bf16.msra.mxu0 %v545
        %557 = vmatpush.bf16.msra.mxu0 %v544
        %558 = vmatpush.bf16.msra.mxu0 %v543
        %559 = vmatpush.bf16.msra.mxu0 %v542
        %560 = vmatpush.bf16.msra.mxu0 %v541
        %561 = vmatpush.bf16.msra.mxu0 %v540
        %562 = vmatpush.bf16.msra.mxu0 %v539
        %563 = vmatmul.bf16.gmra.mxu0 %v475
        %v564 = vpop.f32.mrf.mxu0
        %v565 = vadd.f32 0.0, %v564
        %v566 = vpop.f32.mrf.mxu0
        %v567 = vadd.f32 0.0, %v566
        %568 = vmatmul.bf16.gmra.mxu0 %v476
        %v569 = vpop.f32.mrf.mxu0
        %v570 = vadd.f32 0.0, %v569
        %v571 = vpop.f32.mrf.mxu0
        %v572 = vadd.f32 0.0, %v571
        %573 = vmatmul.bf16.gmra.mxu0 %v477
        %v574 = vpop.f32.mrf.mxu0
        %v575 = vadd.f32 0.0, %v574
        %v576 = vpop.f32.mrf.mxu0
        %v577 = vadd.f32 0.0, %v576
        %578 = vmatmul.bf16.gmra.mxu0 %v478
        %v579 = vpop.f32.mrf.mxu0
        %v580 = vadd.f32 0.0, %v579
        %v581 = vpop.f32.mrf.mxu0
        %v582 = vadd.f32 0.0, %v581
        %583 = vmatmul.bf16.gmra.mxu0 %v479
        %v584 = vpop.f32.mrf.mxu0
        %v585 = vadd.f32 0.0, %v584
        %v586 = vpop.f32.mrf.mxu0
        %v587 = vadd.f32 0.0, %v586
        %588 = vmatmul.bf16.gmra.mxu0 %v480
        %v589 = vpop.f32.mrf.mxu0
        %v590 = vadd.f32 0.0, %v589
        %v591 = vpop.f32.mrf.mxu0
        %v592 = vadd.f32 0.0, %v591
        %593 = vmatmul.bf16.gmra.mxu0 %v481
        %v594 = vpop.f32.mrf.mxu0
        %v595 = vadd.f32 0.0, %v594
        %v596 = vpop.f32.mrf.mxu0
        %v597 = vadd.f32 0.0, %v596
        %598 = vmatmul.bf16.gmra.mxu0 %v482
        %v599 = vpop.f32.mrf.mxu0
        %v600 = vadd.f32 0.0, %v599
        %v601 = vpop.f32.mrf.mxu0
        %v602 = vadd.f32 0.0, %v601
        %603 = vmatmul.bf16.gmra.mxu0 %v483
        %v604 = vpop.f32.mrf.mxu0
        %v605 = vadd.f32 0.0, %v604
        %v606 = vpop.f32.mrf.mxu0
        %v607 = vadd.f32 0.0, %v606
        %608 = vmatmul.bf16.gmra.mxu0 %v484
        %v609 = vpop.f32.mrf.mxu0
        %v610 = vadd.f32 0.0, %v609
        %v611 = vpop.f32.mrf.mxu0
        %v612 = vadd.f32 0.0, %v611
        %613 = vmatmul.bf16.gmra.mxu0 %v485
        %v614 = vpop.f32.mrf.mxu0
        %v615 = vadd.f32 0.0, %v614
        %v616 = vpop.f32.mrf.mxu0
        %v617 = vadd.f32 0.0, %v616
        %618 = vmatmul.bf16.gmra.mxu0 %v486
        %v619 = vpop.f32.mrf.mxu0
        %v620 = vadd.f32 0.0, %v619
        %v621 = vpop.f32.mrf.mxu0
        %v622 = vadd.f32 0.0, %v621
        %623 = vmatmul.bf16.gmra.mxu0 %v487
        %v624 = vpop.f32.mrf.mxu0
        %v625 = vadd.f32 0.0, %v624
        %v626 = vpop.f32.mrf.mxu0
        %v627 = vadd.f32 0.0, %v626
        %628 = vmatmul.bf16.gmra.mxu0 %v488
        %v629 = vpop.f32.mrf.mxu0
        %v630 = vadd.f32 0.0, %v629
        %v631 = vpop.f32.mrf.mxu0
        %v632 = vadd.f32 0.0, %v631
        %633 = vmatmul.bf16.gmra.mxu0 %v489
        %v634 = vpop.f32.mrf.mxu0
        %v635 = vadd.f32 0.0, %v634
        %v636 = vpop.f32.mrf.mxu0
        %v637 = vadd.f32 0.0, %v636
        %638 = vmatmul.bf16.gmra.mxu0 %v490
        %v639 = vpop.f32.mrf.mxu0
        %v640 = vadd.f32 0.0, %v639
        %v641 = vpop.f32.mrf.mxu0
        %v642 = vadd.f32 0.0, %v641
        %643 = vdwg.mxu0
        %v644 = vadd.f32 %v363, %v565
        %v645 = vadd.f32 %v364, %v567
        %v646 = vadd.f32 %v365, %v570
        %v647 = vadd.f32 %v366, %v572
        %v648 = vadd.f32 %v367, %v575
        %v649 = vadd.f32 %v368, %v577
        %v650 = vadd.f32 %v369, %v580
        %v651 = vadd.f32 %v370, %v582
        %v652 = vadd.f32 %v371, %v585
        %v653 = vadd.f32 %v372, %v587
        %v654 = vadd.f32 %v373, %v590
        %v655 = vadd.f32 %v374, %v592
        %v656 = vadd.f32 %v375, %v595
        %v657 = vadd.f32 %v376, %v597
        %v658 = vadd.f32 %v377, %v600
        %v659 = vadd.f32 %v378, %v602
        %v660 = vadd.f32 %v379, %v605
        %v661 = vadd.f32 %v380, %v607
        %v662 = vadd.f32 %v381, %v610
        %v663 = vadd.f32 %v382, %v612
        %v664 = vadd.f32 %v383, %v615
        %v665 = vadd.f32 %v384, %v617
        %v666 = vadd.f32 %v385, %v620
        %v667 = vadd.f32 %v386, %v622
        %v668 = vadd.f32 %v387, %v625
        %v669 = vadd.f32 %v388, %v627
        %v670 = vadd.f32 %v389, %v630
        %v671 = vadd.f32 %v390, %v632
        %v672 = vadd.f32 %v391, %v635
        %v673 = vadd.f32 %v392, %v637
        %v674 = vadd.f32 %v393, %v640
        %v675 = vadd.f32 %v394, %v642
        %676 = vst [vmem:[#allocation2] sm:$0xff] %v644
        %677 = vst [vmem:[#allocation2 + $0x8] sm:$0xff] %v645
        %678 = vst [vmem:[#allocation2 + $0x10] sm:$0xff] %v646
        %679 = vst [vmem:[#allocation2 + $0x18] sm:$0xff] %v647
        %680 = vst [vmem:[#allocation2 + $0x20] sm:$0xff] %v648
        %681 = vst [vmem:[#allocation2 + $0x28] sm:$0xff] %v649
        %682 = vst [vmem:[#allocation2 + $0x30] sm:$0xff] %v650
        %683 = vst [vmem:[#allocation2 + $0x38] sm:$0xff] %v651
        %684 = vst [vmem:[#allocation2 + $0x40] sm:$0xff] %v652
        %685 = vst [vmem:[#allocation2 + $0x48] sm:$0xff] %v653
        %686 = vst [vmem:[#allocation2 + $0x50] sm:$0xff] %v654
        %687 = vst [vmem:[#allocation2 + $0x58] sm:$0xff] %v655
        %688 = vst [vmem:[#allocation2 + $0x60] sm:$0xff] %v656
        %689 = vst [vmem:[#allocation2 + $0x68] sm:$0xff] %v657
        %690 = vst [vmem:[#allocation2 + $0x70] sm:$0xff] %v658
        %691 = vst [vmem:[#allocation2 + $0x78] sm:$0xff] %v659
        %692 = vst [vmem:[#allocation2 + $0x80] sm:$0xff] %v660
        %693 = vst [vmem:[#allocation2 + $0x88] sm:$0xff] %v661
        %694 = vst [vmem:[#allocation2 + $0x90] sm:$0xff] %v662
        %695 = vst [vmem:[#allocation2 + $0x98] sm:$0xff] %v663
        %696 = vst [vmem:[#allocation2 + $0xa0] sm:$0xff] %v664
        %697 = vst [vmem:[#allocation2 + $0xa8] sm:$0xff] %v665
        %698 = vst [vmem:[#allocation2 + $0xb0] sm:$0xff] %v666
        %699 = vst [vmem:[#allocation2 + $0xb8] sm:$0xff] %v667
        %700 = vst [vmem:[#allocation2 + $0xc0] sm:$0xff] %v668
        %701 = vst [vmem:[#allocation2 + $0xc8] sm:$0xff] %v669
        %702 = vst [vmem:[#allocation2 + $0xd0] sm:$0xff] %v670
        %703 = vst [vmem:[#allocation2 + $0xd8] sm:$0xff] %v671
        %704 = vst [vmem:[#allocation2 + $0xe0] sm:$0xff] %v672
        %705 = vst [vmem:[#allocation2 + $0xe8] sm:$0xff] %v673
        %706 = vst [vmem:[#allocation2 + $0xf0] sm:$0xff] %v674
        %707 = vst [vmem:[#allocation2 + $0xf8] sm:$0xff] %v675
        %v708 = vld [vmem:[%s293] sm:$0xf]
        %v709 = vld [vmem:[%s293 + $0x4] sm:$0xf]
        %v710 = vld [vmem:[%s293 + $0x8] sm:$0x1]
        %v711 = vld [vmem:[%s293 + $0xc] sm:$0xf]
        %v712 = vld [vmem:[%s293 + $0x10] sm:$0xf]
        %v713 = vld [vmem:[%s293 + $0x14] sm:$0x1]
        %v714 = vld [vmem:[%s293 + $0x18] sm:$0xf]
        %v715 = vld [vmem:[%s293 + $0x1c] sm:$0xf]
        %v716 = vld [vmem:[%s293 + $0x20] sm:$0x1]
        %v717 = vld [vmem:[%s293 + $0x24] sm:$0xf]
        %v718 = vld [vmem:[%s293 + $0x28] sm:$0xf]
        %v719 = vld [vmem:[%s293 + $0x2c] sm:$0x1]
        %v720 = vld [vmem:[%s293 + $0x30] sm:$0xf]
        %v721 = vld [vmem:[%s293 + $0x34] sm:$0xf]
        %v722 = vld [vmem:[%s293 + $0x38] sm:$0x1]
        %v723 = vld [vmem:[%s293 + $0x3c] sm:$0xf]
        %v724 = vld [vmem:[%s293 + $0x40] sm:$0xf]
        %v725 = vld [vmem:[%s293 + $0x44] sm:$0x1]
        %v726 = vld [vmem:[%s293 + $0x48] sm:$0xf]
        %v727 = vld [vmem:[%s293 + $0x4c] sm:$0xf]
        %v728 = vld [vmem:[%s293 + $0x50] sm:$0x1]
        %v729 = vld [vmem:[%s293 + $0x54] sm:$0xf]
        %v730 = vld [vmem:[%s293 + $0x58] sm:$0xf]
        %v731 = vld [vmem:[%s293 + $0x5c] sm:$0x1]
        %v732 = vld [vmem:[%s293 + $0x60] sm:$0xf]
        %v733 = vld [vmem:[%s293 + $0x64] sm:$0xf]
        %v734 = vld [vmem:[%s293 + $0x68] sm:$0x1]
        %v735 = vld [vmem:[%s293 + $0x6c] sm:$0xf]
        %v736 = vld [vmem:[%s293 + $0x70] sm:$0xf]
        %v737 = vld [vmem:[%s293 + $0x74] sm:$0x1]
        %v738 = vld [vmem:[%s293 + $0x78] sm:$0xf]
        %v739 = vld [vmem:[%s293 + $0x7c] sm:$0xf]
        %v740 = vld [vmem:[%s293 + $0x80] sm:$0x1]
        %v741 = vld [vmem:[%s293 + $0x84] sm:$0xf]
        %v742 = vld [vmem:[%s293 + $0x88] sm:$0xf]
        %v743 = vld [vmem:[%s293 + $0x8c] sm:$0x1]
        %v744 = vld [vmem:[%s293 + $0x90] sm:$0xf]
        %v745 = vld [vmem:[%s293 + $0x94] sm:$0xf]
        %v746 = vld [vmem:[%s293 + $0x98] sm:$0x1]
        %v747 = vld [vmem:[%s293 + $0x9c] sm:$0xf]
        %v748 = vld [vmem:[%s293 + $0xa0] sm:$0xf]
        %v749 = vld [vmem:[%s293 + $0xa4] sm:$0x1]
        %v750 = vld [vmem:[%s293 + $0xa8] sm:$0xf]
        %v751 = vld [vmem:[%s293 + $0xac] sm:$0xf]
        %v752 = vld [vmem:[%s293 + $0xb0] sm:$0x1]
        %v753 = vld [vmem:[%s293 + $0xb4] sm:$0xf]
        %v754 = vld [vmem:[%s293 + $0xb8] sm:$0xf]
        %v755 = vld [vmem:[%s293 + $0xbc] sm:$0x1]
        %vm756 = vsmask.f32 3328
        %vm757 = vsmask.f32 7440
        %vm758 = vmor %vm756, %vm757
        %v760 = vshrl.u32 %v708, 16
        %v762 = vrot.slane %v760, 4
        %v763 = vshll.u32 %v708, 16
        %v765 = vrot.slane %v763, 5
        %v766 = vor.u32 %v762, %v765
        %v767 = vrot.slane %v766, 4
        %v769 = vshll.u32 %v709, 16
        %v771 = vrot.slane %v769, 5
        %v772 = vsel %vm758, %v767, %v771
        %v773 = vshrl.u32 %v709, 16
        %v775 = vrot.slane %v773, 4
        %v776 = vor.u32 %v775, %v771
        %v777 = vrot.slane %v776, 4
        %v779 = vshll.u32 %v710, 16
        %v781 = vrot.slane %v779, 5
        %v782 = vsel %vm758, %v777, %v781
        %v784 = vshrl.u32 %v711, 16
        %v786 = vrot.slane %v784, 4
        %v787 = vshll.u32 %v711, 16
        %v789 = vrot.slane %v787, 5
        %v790 = vor.u32 %v786, %v789
        %v791 = vrot.slane %v790, 4
        %v793 = vshll.u32 %v712, 16
        %v795 = vrot.slane %v793, 5
        %v796 = vsel %vm758, %v791, %v795
        %v797 = vshrl.u32 %v712, 16
        %v799 = vrot.slane %v797, 4
        %v800 = vor.u32 %v799, %v795
        %v801 = vrot.slane %v800, 4
        %v803 = vshll.u32 %v713, 16
        %v805 = vrot.slane %v803, 5
        %v806 = vsel %vm758, %v801, %v805
        %v808 = vshrl.u32 %v714, 16
        %v810 = vrot.slane %v808, 4
        %v811 = vshll.u32 %v714, 16
        %v813 = vrot.slane %v811, 5
        %v814 = vor.u32 %v810, %v813
        %v815 = vrot.slane %v814, 4
        %v817 = vshll.u32 %v715, 16
        %v819 = vrot.slane %v817, 5
        %v820 = vsel %vm758, %v815, %v819
        %v821 = vshrl.u32 %v715, 16
        %v823 = vrot.slane %v821, 4
        %v824 = vor.u32 %v823, %v819
        %v825 = vrot.slane %v824, 4
        %v827 = vshll.u32 %v716, 16
        %v829 = vrot.slane %v827, 5
        %v830 = vsel %vm758, %v825, %v829
        %v832 = vshrl.u32 %v717, 16
        %v834 = vrot.slane %v832, 4
        %v835 = vshll.u32 %v717, 16
        %v837 = vrot.slane %v835, 5
        %v838 = vor.u32 %v834, %v837
        %v839 = vrot.slane %v838, 4
        %v841 = vshll.u32 %v718, 16
        %v843 = vrot.slane %v841, 5
        %v844 = vsel %vm758, %v839, %v843
        %v845 = vshrl.u32 %v718, 16
        %v847 = vrot.slane %v845, 4
        %v848 = vor.u32 %v847, %v843
        %v849 = vrot.slane %v848, 4
        %v851 = vshll.u32 %v719, 16
        %v853 = vrot.slane %v851, 5
        %v854 = vsel %vm758, %v849, %v853
        %v856 = vshrl.u32 %v720, 16
        %v858 = vrot.slane %v856, 4
        %v859 = vshll.u32 %v720, 16
        %v861 = vrot.slane %v859, 5
        %v862 = vor.u32 %v858, %v861
        %v863 = vrot.slane %v862, 4
        %v865 = vshll.u32 %v721, 16
        %v867 = vrot.slane %v865, 5
        %v868 = vsel %vm758, %v863, %v867
        %v869 = vshrl.u32 %v721, 16
        %v871 = vrot.slane %v869, 4
        %v872 = vor.u32 %v871, %v867
        %v873 = vrot.slane %v872, 4
        %v875 = vshll.u32 %v722, 16
        %v877 = vrot.slane %v875, 5
        %v878 = vsel %vm758, %v873, %v877
        %v880 = vshrl.u32 %v723, 16
        %v882 = vrot.slane %v880, 4
        %v883 = vshll.u32 %v723, 16
        %v885 = vrot.slane %v883, 5
        %v886 = vor.u32 %v882, %v885
        %v887 = vrot.slane %v886, 4
        %v889 = vshll.u32 %v724, 16
        %v891 = vrot.slane %v889, 5
        %v892 = vsel %vm758, %v887, %v891
        %v893 = vshrl.u32 %v724, 16
        %v895 = vrot.slane %v893, 4
        %v896 = vor.u32 %v895, %v891
        %v897 = vrot.slane %v896, 4
        %v899 = vshll.u32 %v725, 16
        %v901 = vrot.slane %v899, 5
        %v902 = vsel %vm758, %v897, %v901
        %v904 = vshrl.u32 %v726, 16
        %v906 = vrot.slane %v904, 4
        %v907 = vshll.u32 %v726, 16
        %v909 = vrot.slane %v907, 5
        %v910 = vor.u32 %v906, %v909
        %v911 = vrot.slane %v910, 4
        %v913 = vshll.u32 %v727, 16
        %v915 = vrot.slane %v913, 5
        %v916 = vsel %vm758, %v911, %v915
        %v917 = vshrl.u32 %v727, 16
        %v919 = vrot.slane %v917, 4
        %v920 = vor.u32 %v919, %v915
        %v921 = vrot.slane %v920, 4
        %v923 = vshll.u32 %v728, 16
        %v925 = vrot.slane %v923, 5
        %v926 = vsel %vm758, %v921, %v925
        %v928 = vshrl.u32 %v729, 16
        %v930 = vrot.slane %v928, 4
        %v931 = vshll.u32 %v729, 16
        %v933 = vrot.slane %v931, 5
        %v934 = vor.u32 %v930, %v933
        %v935 = vrot.slane %v934, 4
        %v937 = vshll.u32 %v730, 16
        %v939 = vrot.slane %v937, 5
        %v940 = vsel %vm758, %v935, %v939
        %v941 = vshrl.u32 %v730, 16
        %v943 = vrot.slane %v941, 4
        %v944 = vor.u32 %v943, %v939
        %v945 = vrot.slane %v944, 4
        %v947 = vshll.u32 %v731, 16
        %v949 = vrot.slane %v947, 5
        %v950 = vsel %vm758, %v945, %v949
        %v952 = vshrl.u32 %v732, 16
        %v954 = vrot.slane %v952, 4
        %v955 = vshll.u32 %v732, 16
        %v957 = vrot.slane %v955, 5
        %v958 = vor.u32 %v954, %v957
        %v959 = vrot.slane %v958, 4
        %v961 = vshll.u32 %v733, 16
        %v963 = vrot.slane %v961, 5
        %v964 = vsel %vm758, %v959, %v963
        %v965 = vshrl.u32 %v733, 16
        %v967 = vrot.slane %v965, 4
        %v968 = vor.u32 %v967, %v963
        %v969 = vrot.slane %v968, 4
        %v971 = vshll.u32 %v734, 16
        %v973 = vrot.slane %v971, 5
        %v974 = vsel %vm758, %v969, %v973
        %v976 = vshrl.u32 %v735, 16
        %v978 = vrot.slane %v976, 4
        %v979 = vshll.u32 %v735, 16
        %v981 = vrot.slane %v979, 5
        %v982 = vor.u32 %v978, %v981
        %v983 = vrot.slane %v982, 4
        %v985 = vshll.u32 %v736, 16
        %v987 = vrot.slane %v985, 5
        %v988 = vsel %vm758, %v983, %v987
        %v989 = vshrl.u32 %v736, 16
        %v991 = vrot.slane %v989, 4
        %v992 = vor.u32 %v991, %v987
        %v993 = vrot.slane %v992, 4
        %v995 = vshll.u32 %v737, 16
        %v997 = vrot.slane %v995, 5
        %v998 = vsel %vm758, %v993, %v997
        %v1000 = vshrl.u32 %v738, 16
        %v1002 = vrot.slane %v1000, 4
        %v1003 = vshll.u32 %v738, 16
        %v1005 = vrot.slane %v1003, 5
        %v1006 = vor.u32 %v1002, %v1005
        %v1007 = vrot.slane %v1006, 4
        %v1009 = vshll.u32 %v739, 16
        %v1011 = vrot.slane %v1009, 5
        %v1012 = vsel %vm758, %v1007, %v1011
        %v1013 = vshrl.u32 %v739, 16
        %v1015 = vrot.slane %v1013, 4
        %v1016 = vor.u32 %v1015, %v1011
        %v1017 = vrot.slane %v1016, 4
        %v1019 = vshll.u32 %v740, 16
        %v1021 = vrot.slane %v1019, 5
        %v1022 = vsel %vm758, %v1017, %v1021
        %v1024 = vshrl.u32 %v741, 16
        %v1026 = vrot.slane %v1024, 4
        %v1027 = vshll.u32 %v741, 16
        %v1029 = vrot.slane %v1027, 5
        %v1030 = vor.u32 %v1026, %v1029
        %v1031 = vrot.slane %v1030, 4
        %v1033 = vshll.u32 %v742, 16
        %v1035 = vrot.slane %v1033, 5
        %v1036 = vsel %vm758, %v1031, %v1035
        %v1037 = vshrl.u32 %v742, 16
        %v1039 = vrot.slane %v1037, 4
        %v1040 = vor.u32 %v1039, %v1035
        %v1041 = vrot.slane %v1040, 4
        %v1043 = vshll.u32 %v743, 16
        %v1045 = vrot.slane %v1043, 5
        %v1046 = vsel %vm758, %v1041, %v1045
        %v1048 = vshrl.u32 %v744, 16
        %v1050 = vrot.slane %v1048, 4
        %v1051 = vshll.u32 %v744, 16
        %v1053 = vrot.slane %v1051, 5
        %v1054 = vor.u32 %v1050, %v1053
        %v1055 = vrot.slane %v1054, 4
        %v1057 = vshll.u32 %v745, 16
        %v1059 = vrot.slane %v1057, 5
        %v1060 = vsel %vm758, %v1055, %v1059
        %v1061 = vshrl.u32 %v745, 16
        %v1063 = vrot.slane %v1061, 4
        %v1064 = vor.u32 %v1063, %v1059
        %v1065 = vrot.slane %v1064, 4
        %v1067 = vshll.u32 %v746, 16
        %v1069 = vrot.slane %v1067, 5
        %v1070 = vsel %vm758, %v1065, %v1069
        %v1072 = vshrl.u32 %v747, 16
        %v1074 = vrot.slane %v1072, 4
        %v1075 = vshll.u32 %v747, 16
        %v1077 = vrot.slane %v1075, 5
        %v1078 = vor.u32 %v1074, %v1077
        %v1079 = vrot.slane %v1078, 4
        %v1081 = vshll.u32 %v748, 16
        %v1083 = vrot.slane %v1081, 5
        %v1084 = vsel %vm758, %v1079, %v1083
        %v1085 = vshrl.u32 %v748, 16
        %v1087 = vrot.slane %v1085, 4
        %v1088 = vor.u32 %v1087, %v1083
        %v1089 = vrot.slane %v1088, 4
        %v1091 = vshll.u32 %v749, 16
        %v1093 = vrot.slane %v1091, 5
        %v1094 = vsel %vm758, %v1089, %v1093
        %v1096 = vshrl.u32 %v750, 16
        %v1098 = vrot.slane %v1096, 4
        %v1099 = vshll.u32 %v750, 16
        %v1101 = vrot.slane %v1099, 5
        %v1102 = vor.u32 %v1098, %v1101
        %v1103 = vrot.slane %v1102, 4
        %v1105 = vshll.u32 %v751, 16
        %v1107 = vrot.slane %v1105, 5
        %v1108 = vsel %vm758, %v1103, %v1107
        %v1109 = vshrl.u32 %v751, 16
        %v1111 = vrot.slane %v1109, 4
        %v1112 = vor.u32 %v1111, %v1107
        %v1113 = vrot.slane %v1112, 4
        %v1115 = vshll.u32 %v752, 16
        %v1117 = vrot.slane %v1115, 5
        %v1118 = vsel %vm758, %v1113, %v1117
        %v1120 = vshrl.u32 %v753, 16
        %v1122 = vrot.slane %v1120, 4
        %v1123 = vshll.u32 %v753, 16
        %v1125 = vrot.slane %v1123, 5
        %v1126 = vor.u32 %v1122, %v1125
        %v1127 = vrot.slane %v1126, 4
        %v1129 = vshll.u32 %v754, 16
        %v1131 = vrot.slane %v1129, 5
        %v1132 = vsel %vm758, %v1127, %v1131
        %v1133 = vshrl.u32 %v754, 16
        %v1135 = vrot.slane %v1133, 4
        %v1136 = vor.u32 %v1135, %v1131
        %v1137 = vrot.slane %v1136, 4
        %v1139 = vshll.u32 %v755, 16
        %v1141 = vrot.slane %v1139, 5
        %v1142 = vsel %vm758, %v1137, %v1141
        %v1143 = vld [vmem:[#allocation2] sm:$0xff]
        %v1144 = vld [vmem:[#allocation2 + $0x8] sm:$0xff]
        %v1145 = vld [vmem:[#allocation2 + $0x10] sm:$0xff]
        %v1146 = vld [vmem:[#allocation2 + $0x18] sm:$0xff]
        %v1147 = vld [vmem:[#allocation2 + $0x20] sm:$0xff]
        %v1148 = vld [vmem:[#allocation2 + $0x28] sm:$0xff]
        %v1149 = vld [vmem:[#allocation2 + $0x30] sm:$0xff]
        %v1150 = vld [vmem:[#allocation2 + $0x38] sm:$0xff]
        %v1151 = vld [vmem:[#allocation2 + $0x40] sm:$0xff]
        %v1152 = vld [vmem:[#allocation2 + $0x48] sm:$0xff]
        %v1153 = vld [vmem:[#allocation2 + $0x50] sm:$0xff]
        %v1154 = vld [vmem:[#allocation2 + $0x58] sm:$0xff]
        %v1155 = vld [vmem:[#allocation2 + $0x60] sm:$0xff]
        %v1156 = vld [vmem:[#allocation2 + $0x68] sm:$0xff]
        %v1157 = vld [vmem:[#allocation2 + $0x70] sm:$0xff]
        %v1158 = vld [vmem:[#allocation2 + $0x78] sm:$0xff]
        %v1159 = vld [vmem:[#allocation2 + $0x80] sm:$0xff]
        %v1160 = vld [vmem:[#allocation2 + $0x88] sm:$0xff]
        %v1161 = vld [vmem:[#allocation2 + $0x90] sm:$0xff]
        %v1162 = vld [vmem:[#allocation2 + $0x98] sm:$0xff]
        %v1163 = vld [vmem:[#allocation2 + $0xa0] sm:$0xff]
        %v1164 = vld [vmem:[#allocation2 + $0xa8] sm:$0xff]
        %v1165 = vld [vmem:[#allocation2 + $0xb0] sm:$0xff]
        %v1166 = vld [vmem:[#allocation2 + $0xb8] sm:$0xff]
        %v1167 = vld [vmem:[#allocation2 + $0xc0] sm:$0xff]
        %v1168 = vld [vmem:[#allocation2 + $0xc8] sm:$0xff]
        %v1169 = vld [vmem:[#allocation2 + $0xd0] sm:$0xff]
        %v1170 = vld [vmem:[#allocation2 + $0xd8] sm:$0xff]
        %v1171 = vld [vmem:[#allocation2 + $0xe0] sm:$0xff]
        %v1172 = vld [vmem:[#allocation2 + $0xe8] sm:$0xff]
        %v1173 = vld [vmem:[#allocation2 + $0xf0] sm:$0xff]
        %v1174 = vld [vmem:[#allocation2 + $0xf8] sm:$0xff]
        %s1175 = scalar_lea.vmem %s1, 64
        %v1176 = vld [vmem:[%s1175] sm:$0xf]
        %v1177 = vld [vmem:[%s1175 + $0x4] sm:$0xf]
        %v1178 = vld [vmem:[%s1175 + $0x8] sm:$0xf]
        %v1179 = vld [vmem:[%s1175 + $0xc] sm:$0xf]
        %v1180 = vld [vmem:[%s1175 + $0x10] sm:$0xf]
        %v1181 = vld [vmem:[%s1175 + $0x14] sm:$0xf]
        %v1182 = vld [vmem:[%s1175 + $0x18] sm:$0xf]
        %v1183 = vld [vmem:[%s1175 + $0x1c] sm:$0xf]
        %v1184 = vld [vmem:[%s1175 + $0x20] sm:$0xf]
        %v1185 = vld [vmem:[%s1175 + $0x24] sm:$0xf]
        %v1186 = vld [vmem:[%s1175 + $0x28] sm:$0xf]
        %v1187 = vld [vmem:[%s1175 + $0x2c] sm:$0xf]
        %v1188 = vld [vmem:[%s1175 + $0x30] sm:$0xf]
        %v1189 = vld [vmem:[%s1175 + $0x34] sm:$0xf]
        %v1190 = vld [vmem:[%s1175 + $0x38] sm:$0xf]
        %v1191 = vld [vmem:[%s1175 + $0x3c] sm:$0xf]
        %v1192 = vunpack.c.l.b16 %v772
        %v1193 = vunpack.c.l.b16 %v782
        %v1194 = vunpack.c.l.b16 %v796
        %v1195 = vunpack.c.l.b16 %v806
        %v1196 = vunpack.c.l.b16 %v820
        %v1197 = vunpack.c.l.b16 %v830
        %v1198 = vunpack.c.l.b16 %v844
        %v1199 = vunpack.c.l.b16 %v854
        %v1200 = vunpack.c.l.b16 %v868
        %v1201 = vunpack.c.l.b16 %v878
        %v1202 = vunpack.c.l.b16 %v892
        %v1203 = vunpack.c.l.b16 %v902
        %v1204 = vunpack.c.l.b16 %v916
        %v1205 = vunpack.c.l.b16 %v926
        %v1206 = vunpack.c.l.b16 %v940
        %v1207 = vunpack.c.l.b16 %v950
        %v1208 = vunpack.c.l.b16 %v964
        %v1209 = vunpack.c.l.b16 %v974
        %v1210 = vunpack.c.l.b16 %v988
        %v1211 = vunpack.c.l.b16 %v998
        %v1212 = vunpack.c.l.b16 %v1012
        %v1213 = vunpack.c.l.b16 %v1022
        %v1214 = vunpack.c.l.b16 %v1036
        %v1215 = vunpack.c.l.b16 %v1046
        %v1216 = vunpack.c.l.b16 %v1060
        %v1217 = vunpack.c.l.b16 %v1070
        %v1218 = vunpack.c.l.b16 %v1084
        %v1219 = vunpack.c.l.b16 %v1094
        %v1220 = vunpack.c.l.b16 %v1108
        %v1221 = vunpack.c.l.b16 %v1118
        %v1222 = vunpack.c.l.b16 %v1132
        %v1223 = vunpack.c.l.b16 %v1142
        %v1224 = vpack.c.b16 %v1193, %v1192
        %v1225 = vpack.c.b16 %v1195, %v1194
        %v1226 = vpack.c.b16 %v1197, %v1196
        %v1227 = vpack.c.b16 %v1199, %v1198
        %v1228 = vpack.c.b16 %v1201, %v1200
        %v1229 = vpack.c.b16 %v1203, %v1202
        %v1230 = vpack.c.b16 %v1205, %v1204
        %v1231 = vpack.c.b16 %v1207, %v1206
        %v1232 = vpack.c.b16 %v1209, %v1208
        %v1233 = vpack.c.b16 %v1211, %v1210
        %v1234 = vpack.c.b16 %v1213, %v1212
        %v1235 = vpack.c.b16 %v1215, %v1214
        %v1236 = vpack.c.b16 %v1217, %v1216
        %v1237 = vpack.c.b16 %v1219, %v1218
        %v1238 = vpack.c.b16 %v1221, %v1220
        %v1239 = vpack.c.b16 %v1223, %v1222
        %v1272 = vunpack.c.l.b16 %v1176
        %v1273 = vunpack.c.l.b16 %v1177
        %v1274 = vunpack.c.l.b16 %v1178
        %v1275 = vunpack.c.l.b16 %v1179
        %v1276 = vunpack.c.l.b16 %v1180
        %v1277 = vunpack.c.l.b16 %v1181
        %v1278 = vunpack.c.l.b16 %v1182
        %v1279 = vunpack.c.l.b16 %v1183
        %v1280 = vunpack.c.l.b16 %v1184
        %v1281 = vunpack.c.l.b16 %v1185
        %v1282 = vunpack.c.l.b16 %v1186
        %v1283 = vunpack.c.l.b16 %v1187
        %v1284 = vunpack.c.l.b16 %v1188
        %v1285 = vunpack.c.l.b16 %v1189
        %v1286 = vunpack.c.l.b16 %v1190
        %v1287 = vunpack.c.l.b16 %v1191
        %v1288 = vpack.c.b16 %v1273, %v1272
        %v1289 = vpack.c.b16 %v1275, %v1274
        %v1290 = vpack.c.b16 %v1277, %v1276
        %v1291 = vpack.c.b16 %v1279, %v1278
        %v1292 = vpack.c.b16 %v1281, %v1280
        %v1293 = vpack.c.b16 %v1283, %v1282
        %v1294 = vpack.c.b16 %v1285, %v1284
        %v1295 = vpack.c.b16 %v1287, %v1286
        %1304 = vmatpush.bf16.msra.mxu0 %v1295
        %1305 = vmatpush.bf16.msra.mxu0 %v1294
        %1306 = vmatpush.bf16.msra.mxu0 %v1293
        %1307 = vmatpush.bf16.msra.mxu0 %v1292
        %1308 = vmatpush.bf16.msra.mxu0 %v1291
        %1309 = vmatpush.bf16.msra.mxu0 %v1290
        %1310 = vmatpush.bf16.msra.mxu0 %v1289
        %1311 = vmatpush.bf16.msra.mxu0 %v1288
        %1312 = vmatmul.bf16.gmra.mxu0 %v1224
        %v1313 = vpop.f32.mrf.mxu0
        %v1314 = vadd.f32 0.0, %v1313
        %v1315 = vpop.f32.mrf.mxu0
        %v1316 = vadd.f32 0.0, %v1315
        %1317 = vmatmul.bf16.gmra.mxu0 %v1225
        %v1318 = vpop.f32.mrf.mxu0
        %v1319 = vadd.f32 0.0, %v1318
        %v1320 = vpop.f32.mrf.mxu0
        %v1321 = vadd.f32 0.0, %v1320
        %1322 = vmatmul.bf16.gmra.mxu0 %v1226
        %v1323 = vpop.f32.mrf.mxu0
        %v1324 = vadd.f32 0.0, %v1323
        %v1325 = vpop.f32.mrf.mxu0
        %v1326 = vadd.f32 0.0, %v1325
        %1327 = vmatmul.bf16.gmra.mxu0 %v1227
        %v1328 = vpop.f32.mrf.mxu0
        %v1329 = vadd.f32 0.0, %v1328
        %v1330 = vpop.f32.mrf.mxu0
        %v1331 = vadd.f32 0.0, %v1330
        %1332 = vmatmul.bf16.gmra.mxu0 %v1228
        %v1333 = vpop.f32.mrf.mxu0
        %v1334 = vadd.f32 0.0, %v1333
        %v1335 = vpop.f32.mrf.mxu0
        %v1336 = vadd.f32 0.0, %v1335
        %1337 = vmatmul.bf16.gmra.mxu0 %v1229
        %v1338 = vpop.f32.mrf.mxu0
        %v1339 = vadd.f32 0.0, %v1338
        %v1340 = vpop.f32.mrf.mxu0
        %v1341 = vadd.f32 0.0, %v1340
        %1342 = vmatmul.bf16.gmra.mxu0 %v1230
        %v1343 = vpop.f32.mrf.mxu0
        %v1344 = vadd.f32 0.0, %v1343
        %v1345 = vpop.f32.mrf.mxu0
        %v1346 = vadd.f32 0.0, %v1345
        %1347 = vmatmul.bf16.gmra.mxu0 %v1231
        %v1348 = vpop.f32.mrf.mxu0
        %v1349 = vadd.f32 0.0, %v1348
        %v1350 = vpop.f32.mrf.mxu0
        %v1351 = vadd.f32 0.0, %v1350
        %1352 = vmatmul.bf16.gmra.mxu0 %v1232
        %v1353 = vpop.f32.mrf.mxu0
        %v1354 = vadd.f32 0.0, %v1353
        %v1355 = vpop.f32.mrf.mxu0
        %v1356 = vadd.f32 0.0, %v1355
        %1357 = vmatmul.bf16.gmra.mxu0 %v1233
        %v1358 = vpop.f32.mrf.mxu0
        %v1359 = vadd.f32 0.0, %v1358
        %v1360 = vpop.f32.mrf.mxu0
        %v1361 = vadd.f32 0.0, %v1360
        %1362 = vmatmul.bf16.gmra.mxu0 %v1234
        %v1363 = vpop.f32.mrf.mxu0
        %v1364 = vadd.f32 0.0, %v1363
        %v1365 = vpop.f32.mrf.mxu0
        %v1366 = vadd.f32 0.0, %v1365
        %1367 = vmatmul.bf16.gmra.mxu0 %v1235
        %v1368 = vpop.f32.mrf.mxu0
        %v1369 = vadd.f32 0.0, %v1368
        %v1370 = vpop.f32.mrf.mxu0
        %v1371 = vadd.f32 0.0, %v1370
        %1372 = vmatmul.bf16.gmra.mxu0 %v1236
        %v1373 = vpop.f32.mrf.mxu0
        %v1374 = vadd.f32 0.0, %v1373
        %v1375 = vpop.f32.mrf.mxu0
        %v1376 = vadd.f32 0.0, %v1375
        %1377 = vmatmul.bf16.gmra.mxu0 %v1237
        %v1378 = vpop.f32.mrf.mxu0
        %v1379 = vadd.f32 0.0, %v1378
        %v1380 = vpop.f32.mrf.mxu0
        %v1381 = vadd.f32 0.0, %v1380
        %1382 = vmatmul.bf16.gmra.mxu0 %v1238
        %v1383 = vpop.f32.mrf.mxu0
        %v1384 = vadd.f32 0.0, %v1383
        %v1385 = vpop.f32.mrf.mxu0
        %v1386 = vadd.f32 0.0, %v1385
        %1387 = vmatmul.bf16.gmra.mxu0 %v1239
        %v1388 = vpop.f32.mrf.mxu0
        %v1389 = vadd.f32 0.0, %v1388
        %v1390 = vpop.f32.mrf.mxu0
        %v1391 = vadd.f32 0.0, %v1390
        %1392 = vdwg.mxu0
        %v1393 = vadd.f32 %v1143, %v1314
        %v1394 = vadd.f32 %v1144, %v1316
        %v1395 = vadd.f32 %v1145, %v1319
        %v1396 = vadd.f32 %v1146, %v1321
        %v1397 = vadd.f32 %v1147, %v1324
        %v1398 = vadd.f32 %v1148, %v1326
        %v1399 = vadd.f32 %v1149, %v1329
        %v1400 = vadd.f32 %v1150, %v1331
        %v1401 = vadd.f32 %v1151, %v1334
        %v1402 = vadd.f32 %v1152, %v1336
        %v1403 = vadd.f32 %v1153, %v1339
        %v1404 = vadd.f32 %v1154, %v1341
        %v1405 = vadd.f32 %v1155, %v1344
        %v1406 = vadd.f32 %v1156, %v1346
        %v1407 = vadd.f32 %v1157, %v1349
        %v1408 = vadd.f32 %v1158, %v1351
        %v1409 = vadd.f32 %v1159, %v1354
        %v1410 = vadd.f32 %v1160, %v1356
        %v1411 = vadd.f32 %v1161, %v1359
        %v1412 = vadd.f32 %v1162, %v1361
        %v1413 = vadd.f32 %v1163, %v1364
        %v1414 = vadd.f32 %v1164, %v1366
        %v1415 = vadd.f32 %v1165, %v1369
        %v1416 = vadd.f32 %v1166, %v1371
        %v1417 = vadd.f32 %v1167, %v1374
        %v1418 = vadd.f32 %v1168, %v1376
        %v1419 = vadd.f32 %v1169, %v1379
        %v1420 = vadd.f32 %v1170, %v1381
        %v1421 = vadd.f32 %v1171, %v1384
        %v1422 = vadd.f32 %v1172, %v1386
        %v1423 = vadd.f32 %v1173, %v1389
        %v1424 = vadd.f32 %v1174, %v1391
        %1425 = vst [vmem:[#allocation2] sm:$0xff] %v1393
        %1426 = vst [vmem:[#allocation2 + $0x8] sm:$0xff] %v1394
        %1427 = vst [vmem:[#allocation2 + $0x10] sm:$0xff] %v1395
        %1428 = vst [vmem:[#allocation2 + $0x18] sm:$0xff] %v1396
        %1429 = vst [vmem:[#allocation2 + $0x20] sm:$0xff] %v1397
        %1430 = vst [vmem:[#allocation2 + $0x28] sm:$0xff] %v1398
        %1431 = vst [vmem:[#allocation2 + $0x30] sm:$0xff] %v1399
        %1432 = vst [vmem:[#allocation2 + $0x38] sm:$0xff] %v1400
        %1433 = vst [vmem:[#allocation2 + $0x40] sm:$0xff] %v1401
        %1434 = vst [vmem:[#allocation2 + $0x48] sm:$0xff] %v1402
        %1435 = vst [vmem:[#allocation2 + $0x50] sm:$0xff] %v1403
        %1436 = vst [vmem:[#allocation2 + $0x58] sm:$0xff] %v1404
        %1437 = vst [vmem:[#allocation2 + $0x60] sm:$0xff] %v1405
        %1438 = vst [vmem:[#allocation2 + $0x68] sm:$0xff] %v1406
        %1439 = vst [vmem:[#allocation2 + $0x70] sm:$0xff] %v1407
        %1440 = vst [vmem:[#allocation2 + $0x78] sm:$0xff] %v1408
        %1441 = vst [vmem:[#allocation2 + $0x80] sm:$0xff] %v1409
        %1442 = vst [vmem:[#allocation2 + $0x88] sm:$0xff] %v1410
        %1443 = vst [vmem:[#allocation2 + $0x90] sm:$0xff] %v1411
        %1444 = vst [vmem:[#allocation2 + $0x98] sm:$0xff] %v1412
        %1445 = vst [vmem:[#allocation2 + $0xa0] sm:$0xff] %v1413
        %1446 = vst [vmem:[#allocation2 + $0xa8] sm:$0xff] %v1414
        %1447 = vst [vmem:[#allocation2 + $0xb0] sm:$0xff] %v1415
        %1448 = vst [vmem:[#allocation2 + $0xb8] sm:$0xff] %v1416
        %1449 = vst [vmem:[#allocation2 + $0xc0] sm:$0xff] %v1417
        %1450 = vst [vmem:[#allocation2 + $0xc8] sm:$0xff] %v1418
        %1451 = vst [vmem:[#allocation2 + $0xd0] sm:$0xff] %v1419
        %1452 = vst [vmem:[#allocation2 + $0xd8] sm:$0xff] %v1420
        %1453 = vst [vmem:[#allocation2 + $0xe0] sm:$0xff] %v1421
        %1454 = vst [vmem:[#allocation2 + $0xe8] sm:$0xff] %v1422
        %1455 = vst [vmem:[#allocation2 + $0xf0] sm:$0xff] %v1423
        %1456 = vst [vmem:[#allocation2 + $0xf8] sm:$0xff] %v1424
        %v1457 = vld [vmem:[%s293] sm:$0xe]
        %v1458 = vld [vmem:[%s293 + $0x4] sm:$0xf]
        %v1459 = vld [vmem:[%s293 + $0x8] sm:$0x1]
        %v1460 = vld [vmem:[%s293 + $0xc] sm:$0xe]
        %v1461 = vld [vmem:[%s293 + $0x10] sm:$0xf]
        %v1462 = vld [vmem:[%s293 + $0x14] sm:$0x1]
        %v1463 = vld [vmem:[%s293 + $0x18] sm:$0xe]
        %v1464 = vld [vmem:[%s293 + $0x1c] sm:$0xf]
        %v1465 = vld [vmem:[%s293 + $0x20] sm:$0x1]
        %v1466 = vld [vmem:[%s293 + $0x24] sm:$0xe]
        %v1467 = vld [vmem:[%s293 + $0x28] sm:$0xf]
        %v1468 = vld [vmem:[%s293 + $0x2c] sm:$0x1]
        %v1469 = vld [vmem:[%s293 + $0x30] sm:$0xe]
        %v1470 = vld [vmem:[%s293 + $0x34] sm:$0xf]
        %v1471 = vld [vmem:[%s293 + $0x38] sm:$0x1]
        %v1472 = vld [vmem:[%s293 + $0x3c] sm:$0xe]
        %v1473 = vld [vmem:[%s293 + $0x40] sm:$0xf]
        %v1474 = vld [vmem:[%s293 + $0x44] sm:$0x1]
        %v1475 = vld [vmem:[%s293 + $0x48] sm:$0xe]
        %v1476 = vld [vmem:[%s293 + $0x4c] sm:$0xf]
        %v1477 = vld [vmem:[%s293 + $0x50] sm:$0x1]
        %v1478 = vld [vmem:[%s293 + $0x54] sm:$0xe]
        %v1479 = vld [vmem:[%s293 + $0x58] sm:$0xf]
        %v1480 = vld [vmem:[%s293 + $0x5c] sm:$0x1]
        %v1481 = vld [vmem:[%s293 + $0x60] sm:$0xe]
        %v1482 = vld [vmem:[%s293 + $0x64] sm:$0xf]
        %v1483 = vld [vmem:[%s293 + $0x68] sm:$0x1]
        %v1484 = vld [vmem:[%s293 + $0x6c] sm:$0xe]
        %v1485 = vld [vmem:[%s293 + $0x70] sm:$0xf]
        %v1486 = vld [vmem:[%s293 + $0x74] sm:$0x1]
        %v1487 = vld [vmem:[%s293 + $0x78] sm:$0xe]
        %v1488 = vld [vmem:[%s293 + $0x7c] sm:$0xf]
        %v1489 = vld [vmem:[%s293 + $0x80] sm:$0x1]
        %v1490 = vld [vmem:[%s293 + $0x84] sm:$0xe]
        %v1491 = vld [vmem:[%s293 + $0x88] sm:$0xf]
        %v1492 = vld [vmem:[%s293 + $0x8c] sm:$0x1]
        %v1493 = vld [vmem:[%s293 + $0x90] sm:$0xe]
        %v1494 = vld [vmem:[%s293 + $0x94] sm:$0xf]
        %v1495 = vld [vmem:[%s293 + $0x98] sm:$0x1]
        %v1496 = vld [vmem:[%s293 + $0x9c] sm:$0xe]
        %v1497 = vld [vmem:[%s293 + $0xa0] sm:$0xf]
        %v1498 = vld [vmem:[%s293 + $0xa4] sm:$0x1]
        %v1499 = vld [vmem:[%s293 + $0xa8] sm:$0xe]
        %v1500 = vld [vmem:[%s293 + $0xac] sm:$0xf]
        %v1501 = vld [vmem:[%s293 + $0xb0] sm:$0x1]
        %v1502 = vld [vmem:[%s293 + $0xb4] sm:$0xe]
        %v1503 = vld [vmem:[%s293 + $0xb8] sm:$0xf]
        %v1504 = vld [vmem:[%s293 + $0xbc] sm:$0x1]
        %vm1553 = vcmask 1042432
        %vm1554 = vcmask 1046532
        %vm1555 = vmor %vm1553, %vm1554
        %v1556 = vrot.slane %v1457, 5
        %v1557 = vrot.slane %v1556, 4
        %v1558 = vrot.slane %v1458, 5
        %v1559 = vsel %vm1555, %v1557, %v1558
        %v1560 = vrot.slane %v1558, 4
        %v1561 = vrot.slane %v1459, 5
        %v1562 = vsel %vm1555, %v1560, %v1561
        %v1563 = vrot.slane %v1460, 5
        %v1564 = vrot.slane %v1563, 4
        %v1565 = vrot.slane %v1461, 5
        %v1566 = vsel %vm1555, %v1564, %v1565
        %v1567 = vrot.slane %v1565, 4
        %v1568 = vrot.slane %v1462, 5
        %v1569 = vsel %vm1555, %v1567, %v1568
        %v1570 = vrot.slane %v1463, 5
        %v1571 = vrot.slane %v1570, 4
        %v1572 = vrot.slane %v1464, 5
        %v1573 = vsel %vm1555, %v1571, %v1572
        %v1574 = vrot.slane %v1572, 4
        %v1575 = vrot.slane %v1465, 5
        %v1576 = vsel %vm1555, %v1574, %v1575
        %v1577 = vrot.slane %v1466, 5
        %v1578 = vrot.slane %v1577, 4
        %v1579 = vrot.slane %v1467, 5
        %v1580 = vsel %vm1555, %v1578, %v1579
        %v1581 = vrot.slane %v1579, 4
        %v1582 = vrot.slane %v1468, 5
        %v1583 = vsel %vm1555, %v1581, %v1582
        %v1584 = vrot.slane %v1469, 5
        %v1585 = vrot.slane %v1584, 4
        %v1586 = vrot.slane %v1470, 5
        %v1587 = vsel %vm1555, %v1585, %v1586
        %v1588 = vrot.slane %v1586, 4
        %v1589 = vrot.slane %v1471, 5
        %v1590 = vsel %vm1555, %v1588, %v1589
        %v1591 = vrot.slane %v1472, 5
        %v1592 = vrot.slane %v1591, 4
        %v1593 = vrot.slane %v1473, 5
        %v1594 = vsel %vm1555, %v1592, %v1593
        %v1595 = vrot.slane %v1593, 4
        %v1596 = vrot.slane %v1474, 5
        %v1597 = vsel %vm1555, %v1595, %v1596
        %v1598 = vrot.slane %v1475, 5
        %v1599 = vrot.slane %v1598, 4
        %v1600 = vrot.slane %v1476, 5
        %v1601 = vsel %vm1555, %v1599, %v1600
        %v1602 = vrot.slane %v1600, 4
        %v1603 = vrot.slane %v1477, 5
        %v1604 = vsel %vm1555, %v1602, %v1603
        %v1605 = vrot.slane %v1478, 5
        %v1606 = vrot.slane %v1605, 4
        %v1607 = vrot.slane %v1479, 5
        %v1608 = vsel %vm1555, %v1606, %v1607
        %v1609 = vrot.slane %v1607, 4
        %v1610 = vrot.slane %v1480, 5
        %v1611 = vsel %vm1555, %v1609, %v1610
        %v1612 = vrot.slane %v1481, 5
        %v1613 = vrot.slane %v1612, 4
        %v1614 = vrot.slane %v1482, 5
        %v1615 = vsel %vm1555, %v1613, %v1614
        %v1616 = vrot.slane %v1614, 4
        %v1617 = vrot.slane %v1483, 5
        %v1618 = vsel %vm1555, %v1616, %v1617
        %v1619 = vrot.slane %v1484, 5
        %v1620 = vrot.slane %v1619, 4
        %v1621 = vrot.slane %v1485, 5
        %v1622 = vsel %vm1555, %v1620, %v1621
        %v1623 = vrot.slane %v1621, 4
        %v1624 = vrot.slane %v1486, 5
        %v1625 = vsel %vm1555, %v1623, %v1624
        %v1626 = vrot.slane %v1487, 5
        %v1627 = vrot.slane %v1626, 4
        %v1628 = vrot.slane %v1488, 5
        %v1629 = vsel %vm1555, %v1627, %v1628
        %v1630 = vrot.slane %v1628, 4
        %v1631 = vrot.slane %v1489, 5
        %v1632 = vsel %vm1555, %v1630, %v1631
        %v1633 = vrot.slane %v1490, 5
        %v1634 = vrot.slane %v1633, 4
        %v1635 = vrot.slane %v1491, 5
        %v1636 = vsel %vm1555, %v1634, %v1635
        %v1637 = vrot.slane %v1635, 4
        %v1638 = vrot.slane %v1492, 5
        %v1639 = vsel %vm1555, %v1637, %v1638
        %v1640 = vrot.slane %v1493, 5
        %v1641 = vrot.slane %v1640, 4
        %v1642 = vrot.slane %v1494, 5
        %v1643 = vsel %vm1555, %v1641, %v1642
        %v1644 = vrot.slane %v1642, 4
        %v1645 = vrot.slane %v1495, 5
        %v1646 = vsel %vm1555, %v1644, %v1645
        %v1647 = vrot.slane %v1496, 5
        %v1648 = vrot.slane %v1647, 4
        %v1649 = vrot.slane %v1497, 5
        %v1650 = vsel %vm1555, %v1648, %v1649
        %v1651 = vrot.slane %v1649, 4
        %v1652 = vrot.slane %v1498, 5
        %v1653 = vsel %vm1555, %v1651, %v1652
        %v1654 = vrot.slane %v1499, 5
        %v1655 = vrot.slane %v1654, 4
        %v1656 = vrot.slane %v1500, 5
        %v1657 = vsel %vm1555, %v1655, %v1656
        %v1658 = vrot.slane %v1656, 4
        %v1659 = vrot.slane %v1501, 5
        %v1660 = vsel %vm1555, %v1658, %v1659
        %v1661 = vrot.slane %v1502, 5
        %v1662 = vrot.slane %v1661, 4
        %v1663 = vrot.slane %v1503, 5
        %v1664 = vsel %vm1555, %v1662, %v1663
        %v1665 = vrot.slane %v1663, 4
        %v1666 = vrot.slane %v1504, 5
        %v1667 = vsel %vm1555, %v1665, %v1666
        %v1668 = vld [vmem:[#allocation2] sm:$0xff]
        %v1669 = vld [vmem:[#allocation2 + $0x8] sm:$0xff]
        %v1670 = vld [vmem:[#allocation2 + $0x10] sm:$0xff]
        %v1671 = vld [vmem:[#allocation2 + $0x18] sm:$0xff]
        %v1672 = vld [vmem:[#allocation2 + $0x20] sm:$0xff]
        %v1673 = vld [vmem:[#allocation2 + $0x28] sm:$0xff]
        %v1674 = vld [vmem:[#allocation2 + $0x30] sm:$0xff]
        %v1675 = vld [vmem:[#allocation2 + $0x38] sm:$0xff]
        %v1676 = vld [vmem:[#allocation2 + $0x40] sm:$0xff]
        %v1677 = vld [vmem:[#allocation2 + $0x48] sm:$0xff]
        %v1678 = vld [vmem:[#allocation2 + $0x50] sm:$0xff]
        %v1679 = vld [vmem:[#allocation2 + $0x58] sm:$0xff]
        %v1680 = vld [vmem:[#allocation2 + $0x60] sm:$0xff]
        %v1681 = vld [vmem:[#allocation2 + $0x68] sm:$0xff]
        %v1682 = vld [vmem:[#allocation2 + $0x70] sm:$0xff]
        %v1683 = vld [vmem:[#allocation2 + $0x78] sm:$0xff]
        %v1684 = vld [vmem:[#allocation2 + $0x80] sm:$0xff]
        %v1685 = vld [vmem:[#allocation2 + $0x88] sm:$0xff]
        %v1686 = vld [vmem:[#allocation2 + $0x90] sm:$0xff]
        %v1687 = vld [vmem:[#allocation2 + $0x98] sm:$0xff]
        %v1688 = vld [vmem:[#allocation2 + $0xa0] sm:$0xff]
        %v1689 = vld [vmem:[#allocation2 + $0xa8] sm:$0xff]
        %v1690 = vld [vmem:[#allocation2 + $0xb0] sm:$0xff]
        %v1691 = vld [vmem:[#allocation2 + $0xb8] sm:$0xff]
        %v1692 = vld [vmem:[#allocation2 + $0xc0] sm:$0xff]
        %v1693 = vld [vmem:[#allocation2 + $0xc8] sm:$0xff]
        %v1694 = vld [vmem:[#allocation2 + $0xd0] sm:$0xff]
        %v1695 = vld [vmem:[#allocation2 + $0xd8] sm:$0xff]
        %v1696 = vld [vmem:[#allocation2 + $0xe0] sm:$0xff]
        %v1697 = vld [vmem:[#allocation2 + $0xe8] sm:$0xff]
        %v1698 = vld [vmem:[#allocation2 + $0xf0] sm:$0xff]
        %v1699 = vld [vmem:[#allocation2 + $0xf8] sm:$0xff]
        %s1700 = scalar_lea.vmem %s1, 128
        %v1701 = vld [vmem:[%s1700] sm:$0xf]
        %v1702 = vld [vmem:[%s1700 + $0x4] sm:$0xf]
        %v1703 = vld [vmem:[%s1700 + $0x8] sm:$0xf]
        %v1704 = vld [vmem:[%s1700 + $0xc] sm:$0xf]
        %v1705 = vld [vmem:[%s1700 + $0x10] sm:$0xf]
        %v1706 = vld [vmem:[%s1700 + $0x14] sm:$0xf]
        %v1707 = vld [vmem:[%s1700 + $0x18] sm:$0xf]
        %v1708 = vld [vmem:[%s1700 + $0x1c] sm:$0xf]
        %v1709 = vld [vmem:[%s1700 + $0x20] sm:$0xf]
        %v1710 = vld [vmem:[%s1700 + $0x24] sm:$0xf]
        %v1711 = vld [vmem:[%s1700 + $0x28] sm:$0xf]
        %v1712 = vld [vmem:[%s1700 + $0x2c] sm:$0xf]
        %v1713 = vld [vmem:[%s1700 + $0x30] sm:$0xf]
        %v1714 = vld [vmem:[%s1700 + $0x34] sm:$0xf]
        %v1715 = vld [vmem:[%s1700 + $0x38] sm:$0xf]
        %v1716 = vld [vmem:[%s1700 + $0x3c] sm:$0xf]
        %v1717 = vunpack.c.l.b16 %v1559
        %v1718 = vunpack.c.l.b16 %v1562
        %v1719 = vunpack.c.l.b16 %v1566
        %v1720 = vunpack.c.l.b16 %v1569
        %v1721 = vunpack.c.l.b16 %v1573
        %v1722 = vunpack.c.l.b16 %v1576
        %v1723 = vunpack.c.l.b16 %v1580
        %v1724 = vunpack.c.l.b16 %v1583
        %v1725 = vunpack.c.l.b16 %v1587
        %v1726 = vunpack.c.l.b16 %v1590
        %v1727 = vunpack.c.l.b16 %v1594
        %v1728 = vunpack.c.l.b16 %v1597
        %v1729 = vunpack.c.l.b16 %v1601
        %v1730 = vunpack.c.l.b16 %v1604
        %v1731 = vunpack.c.l.b16 %v1608
        %v1732 = vunpack.c.l.b16 %v1611
        %v1733 = vunpack.c.l.b16 %v1615
        %v1734 = vunpack.c.l.b16 %v1618
        %v1735 = vunpack.c.l.b16 %v1622
        %v1736 = vunpack.c.l.b16 %v1625
        %v1737 = vunpack.c.l.b16 %v1629
        %v1738 = vunpack.c.l.b16 %v1632
        %v1739 = vunpack.c.l.b16 %v1636
        %v1740 = vunpack.c.l.b16 %v1639
        %v1741 = vunpack.c.l.b16 %v1643
        %v1742 = vunpack.c.l.b16 %v1646
        %v1743 = vunpack.c.l.b16 %v1650
        %v1744 = vunpack.c.l.b16 %v1653
        %v1745 = vunpack.c.l.b16 %v1657
        %v1746 = vunpack.c.l.b16 %v1660
        %v1747 = vunpack.c.l.b16 %v1664
        %v1748 = vunpack.c.l.b16 %v1667
        %v1749 = vpack.c.b16 %v1718, %v1717
        %v1750 = vpack.c.b16 %v1720, %v1719
        %v1751 = vpack.c.b16 %v1722, %v1721
        %v1752 = vpack.c.b16 %v1724, %v1723
        %v1753 = vpack.c.b16 %v1726, %v1725
        %v1754 = vpack.c.b16 %v1728, %v1727
        %v1755 = vpack.c.b16 %v1730, %v1729
        %v1756 = vpack.c.b16 %v1732, %v1731
        %v1757 = vpack.c.b16 %v1734, %v1733
        %v1758 = vpack.c.b16 %v1736, %v1735
        %v1759 = vpack.c.b16 %v1738, %v1737
        %v1760 = vpack.c.b16 %v1740, %v1739
        %v1761 = vpack.c.b16 %v1742, %v1741
        %v1762 = vpack.c.b16 %v1744, %v1743
        %v1763 = vpack.c.b16 %v1746, %v1745
        %v1764 = vpack.c.b16 %v1748, %v1747
        %v1797 = vunpack.c.l.b16 %v1701
        %v1798 = vunpack.c.l.b16 %v1702
        %v1799 = vunpack.c.l.b16 %v1703
        %v1800 = vunpack.c.l.b16 %v1704
        %v1801 = vunpack.c.l.b16 %v1705
        %v1802 = vunpack.c.l.b16 %v1706
        %v1803 = vunpack.c.l.b16 %v1707
        %v1804 = vunpack.c.l.b16 %v1708
        %v1805 = vunpack.c.l.b16 %v1709
        %v1806 = vunpack.c.l.b16 %v1710
        %v1807 = vunpack.c.l.b16 %v1711
        %v1808 = vunpack.c.l.b16 %v1712
        %v1809 = vunpack.c.l.b16 %v1713
        %v1810 = vunpack.c.l.b16 %v1714
        %v1811 = vunpack.c.l.b16 %v1715
        %v1812 = vunpack.c.l.b16 %v1716
        %v1813 = vpack.c.b16 %v1798, %v1797
        %v1814 = vpack.c.b16 %v1800, %v1799
        %v1815 = vpack.c.b16 %v1802, %v1801
        %v1816 = vpack.c.b16 %v1804, %v1803
        %v1817 = vpack.c.b16 %v1806, %v1805
        %v1818 = vpack.c.b16 %v1808, %v1807
        %v1819 = vpack.c.b16 %v1810, %v1809
        %v1820 = vpack.c.b16 %v1812, %v1811
        %1829 = vmatpush.bf16.msra.mxu0 %v1820
        %1830 = vmatpush.bf16.msra.mxu0 %v1819
        %1831 = vmatpush.bf16.msra.mxu0 %v1818
        %1832 = vmatpush.bf16.msra.mxu0 %v1817
        %1833 = vmatpush.bf16.msra.mxu0 %v1816
        %1834 = vmatpush.bf16.msra.mxu0 %v1815
        %1835 = vmatpush.bf16.msra.mxu0 %v1814
        %1836 = vmatpush.bf16.msra.mxu0 %v1813
        %1837 = vmatmul.bf16.gmra.mxu0 %v1749
        %v1838 = vpop.f32.mrf.mxu0
        %v1839 = vadd.f32 0.0, %v1838
        %v1840 = vpop.f32.mrf.mxu0
        %v1841 = vadd.f32 0.0, %v1840
        %1842 = vmatmul.bf16.gmra.mxu0 %v1750
        %v1843 = vpop.f32.mrf.mxu0
        %v1844 = vadd.f32 0.0, %v1843
        %v1845 = vpop.f32.mrf.mxu0
        %v1846 = vadd.f32 0.0, %v1845
        %1847 = vmatmul.bf16.gmra.mxu0 %v1751
        %v1848 = vpop.f32.mrf.mxu0
        %v1849 = vadd.f32 0.0, %v1848
        %v1850 = vpop.f32.mrf.mxu0
        %v1851 = vadd.f32 0.0, %v1850
        %1852 = vmatmul.bf16.gmra.mxu0 %v1752
        %v1853 = vpop.f32.mrf.mxu0
        %v1854 = vadd.f32 0.0, %v1853
        %v1855 = vpop.f32.mrf.mxu0
        %v1856 = vadd.f32 0.0, %v1855
        %1857 = vmatmul.bf16.gmra.mxu0 %v1753
        %v1858 = vpop.f32.mrf.mxu0
        %v1859 = vadd.f32 0.0, %v1858
        %v1860 = vpop.f32.mrf.mxu0
        %v1861 = vadd.f32 0.0, %v1860
        %1862 = vmatmul.bf16.gmra.mxu0 %v1754
        %v1863 = vpop.f32.mrf.mxu0
        %v1864 = vadd.f32 0.0, %v1863
        %v1865 = vpop.f32.mrf.mxu0
        %v1866 = vadd.f32 0.0, %v1865
        %1867 = vmatmul.bf16.gmra.mxu0 %v1755
        %v1868 = vpop.f32.mrf.mxu0
        %v1869 = vadd.f32 0.0, %v1868
        %v1870 = vpop.f32.mrf.mxu0
        %v1871 = vadd.f32 0.0, %v1870
        %1872 = vmatmul.bf16.gmra.mxu0 %v1756
        %v1873 = vpop.f32.mrf.mxu0
        %v1874 = vadd.f32 0.0, %v1873
        %v1875 = vpop.f32.mrf.mxu0
        %v1876 = vadd.f32 0.0, %v1875
        %1877 = vmatmul.bf16.gmra.mxu0 %v1757
        %v1878 = vpop.f32.mrf.mxu0
        %v1879 = vadd.f32 0.0, %v1878
        %v1880 = vpop.f32.mrf.mxu0
        %v1881 = vadd.f32 0.0, %v1880
        %1882 = vmatmul.bf16.gmra.mxu0 %v1758
        %v1883 = vpop.f32.mrf.mxu0
        %v1884 = vadd.f32 0.0, %v1883
        %v1885 = vpop.f32.mrf.mxu0
        %v1886 = vadd.f32 0.0, %v1885
        %1887 = vmatmul.bf16.gmra.mxu0 %v1759
        %v1888 = vpop.f32.mrf.mxu0
        %v1889 = vadd.f32 0.0, %v1888
        %v1890 = vpop.f32.mrf.mxu0
        %v1891 = vadd.f32 0.0, %v1890
        %1892 = vmatmul.bf16.gmra.mxu0 %v1760
        %v1893 = vpop.f32.mrf.mxu0
        %v1894 = vadd.f32 0.0, %v1893
        %v1895 = vpop.f32.mrf.mxu0
        %v1896 = vadd.f32 0.0, %v1895
        %1897 = vmatmul.bf16.gmra.mxu0 %v1761
        %v1898 = vpop.f32.mrf.mxu0
        %v1899 = vadd.f32 0.0, %v1898
        %v1900 = vpop.f32.mrf.mxu0
        %v1901 = vadd.f32 0.0, %v1900
        %1902 = vmatmul.bf16.gmra.mxu0 %v1762
        %v1903 = vpop.f32.mrf.mxu0
        %v1904 = vadd.f32 0.0, %v1903
        %v1905 = vpop.f32.mrf.mxu0
        %v1906 = vadd.f32 0.0, %v1905
        %1907 = vmatmul.bf16.gmra.mxu0 %v1763
        %v1908 = vpop.f32.mrf.mxu0
        %v1909 = vadd.f32 0.0, %v1908
        %v1910 = vpop.f32.mrf.mxu0
        %v1911 = vadd.f32 0.0, %v1910
        %1912 = vmatmul.bf16.gmra.mxu0 %v1764
        %v1913 = vpop.f32.mrf.mxu0
        %v1914 = vadd.f32 0.0, %v1913
        %v1915 = vpop.f32.mrf.mxu0
        %v1916 = vadd.f32 0.0, %v1915
        %1917 = vdwg.mxu0
        %v1918 = vadd.f32 %v1668, %v1839
        %v1919 = vadd.f32 %v1669, %v1841
        %v1920 = vadd.f32 %v1670, %v1844
        %v1921 = vadd.f32 %v1671, %v1846
        %v1922 = vadd.f32 %v1672, %v1849
        %v1923 = vadd.f32 %v1673, %v1851
        %v1924 = vadd.f32 %v1674, %v1854
        %v1925 = vadd.f32 %v1675, %v1856
        %v1926 = vadd.f32 %v1676, %v1859
        %v1927 = vadd.f32 %v1677, %v1861
        %v1928 = vadd.f32 %v1678, %v1864
        %v1929 = vadd.f32 %v1679, %v1866
        %v1930 = vadd.f32 %v1680, %v1869
        %v1931 = vadd.f32 %v1681, %v1871
        %v1932 = vadd.f32 %v1682, %v1874
        %v1933 = vadd.f32 %v1683, %v1876
        %v1934 = vadd.f32 %v1684, %v1879
        %v1935 = vadd.f32 %v1685, %v1881
        %v1936 = vadd.f32 %v1686, %v1884
        %v1937 = vadd.f32 %v1687, %v1886
        %v1938 = vadd.f32 %v1688, %v1889
        %v1939 = vadd.f32 %v1689, %v1891
        %v1940 = vadd.f32 %v1690, %v1894
        %v1941 = vadd.f32 %v1691, %v1896
        %v1942 = vadd.f32 %v1692, %v1899
        %v1943 = vadd.f32 %v1693, %v1901
        %v1944 = vadd.f32 %v1694, %v1904
        %v1945 = vadd.f32 %v1695, %v1906
        %v1946 = vadd.f32 %v1696, %v1909
        %v1947 = vadd.f32 %v1697, %v1911
        %v1948 = vadd.f32 %v1698, %v1914
        %v1949 = vadd.f32 %v1699, %v1916
        %1950 = vst [vmem:[#allocation2] sm:$0xff] %v1918
        %1951 = vst [vmem:[#allocation2 + $0x8] sm:$0xff] %v1919
        %1952 = vst [vmem:[#allocation2 + $0x10] sm:$0xff] %v1920
        %1953 = vst [vmem:[#allocation2 + $0x18] sm:$0xff] %v1921
        %1954 = vst [vmem:[#allocation2 + $0x20] sm:$0xff] %v1922
        %1955 = vst [vmem:[#allocation2 + $0x28] sm:$0xff] %v1923
        %1956 = vst [vmem:[#allocation2 + $0x30] sm:$0xff] %v1924
        %1957 = vst [vmem:[#allocation2 + $0x38] sm:$0xff] %v1925
        %1958 = vst [vmem:[#allocation2 + $0x40] sm:$0xff] %v1926
        %1959 = vst [vmem:[#allocation2 + $0x48] sm:$0xff] %v1927
        %1960 = vst [vmem:[#allocation2 + $0x50] sm:$0xff] %v1928
        %1961 = vst [vmem:[#allocation2 + $0x58] sm:$0xff] %v1929
        %1962 = vst [vmem:[#allocation2 + $0x60] sm:$0xff] %v1930
        %1963 = vst [vmem:[#allocation2 + $0x68] sm:$0xff] %v1931
        %1964 = vst [vmem:[#allocation2 + $0x70] sm:$0xff] %v1932
        %1965 = vst [vmem:[#allocation2 + $0x78] sm:$0xff] %v1933
        %1966 = vst [vmem:[#allocation2 + $0x80] sm:$0xff] %v1934
        %1967 = vst [vmem:[#allocation2 + $0x88] sm:$0xff] %v1935
        %1968 = vst [vmem:[#allocation2 + $0x90] sm:$0xff] %v1936
        %1969 = vst [vmem:[#allocation2 + $0x98] sm:$0xff] %v1937
        %1970 = vst [vmem:[#allocation2 + $0xa0] sm:$0xff] %v1938
        %1971 = vst [vmem:[#allocation2 + $0xa8] sm:$0xff] %v1939
        %1972 = vst [vmem:[#allocation2 + $0xb0] sm:$0xff] %v1940
        %1973 = vst [vmem:[#allocation2 + $0xb8] sm:$0xff] %v1941
        %1974 = vst [vmem:[#allocation2 + $0xc0] sm:$0xff] %v1942
        %1975 = vst [vmem:[#allocation2 + $0xc8] sm:$0xff] %v1943
        %1976 = vst [vmem:[#allocation2 + $0xd0] sm:$0xff] %v1944
        %1977 = vst [vmem:[#allocation2 + $0xd8] sm:$0xff] %v1945
        %1978 = vst [vmem:[#allocation2 + $0xe0] sm:$0xff] %v1946
        %1979 = vst [vmem:[#allocation2 + $0xe8] sm:$0xff] %v1947
        %1980 = vst [vmem:[#allocation2 + $0xf0] sm:$0xff] %v1948
        %1981 = vst [vmem:[#allocation2 + $0xf8] sm:$0xff] %v1949
        %s1982 = scalar_lea.vmem %s293, 12
        %v1983 = vld [vmem:[%s1982] sm:$0xf]
        %v1984 = vld [vmem:[%s1982 + $0x4] sm:$0xf]
        %v1985 = vld [vmem:[%s1982 + $0xc] sm:$0xf]
        %v1986 = vld [vmem:[%s1982 + $0x10] sm:$0xf]
        %v1987 = vld [vmem:[%s1982 + $0x18] sm:$0xf]
        %v1988 = vld [vmem:[%s1982 + $0x1c] sm:$0xf]
        %v1989 = vld [vmem:[%s1982 + $0x24] sm:$0xf]
        %v1990 = vld [vmem:[%s1982 + $0x28] sm:$0xf]
        %v1991 = vld [vmem:[%s1982 + $0x30] sm:$0xf]
        %v1992 = vld [vmem:[%s1982 + $0x34] sm:$0xf]
        %v1993 = vld [vmem:[%s1982 + $0x3c] sm:$0xf]
        %v1994 = vld [vmem:[%s1982 + $0x40] sm:$0xf]
        %v1995 = vld [vmem:[%s1982 + $0x48] sm:$0xf]
        %v1996 = vld [vmem:[%s1982 + $0x4c] sm:$0xf]
        %v1997 = vld [vmem:[%s1982 + $0x54] sm:$0xf]
        %v1998 = vld [vmem:[%s1982 + $0x58] sm:$0xf]
        %v1999 = vld [vmem:[%s1982 + $0x60] sm:$0xf]
        %v2000 = vld [vmem:[%s1982 + $0x64] sm:$0xf]
        %v2001 = vld [vmem:[%s1982 + $0x6c] sm:$0xf]
        %v2002 = vld [vmem:[%s1982 + $0x70] sm:$0xf]
        %v2003 = vld [vmem:[%s1982 + $0x78] sm:$0xf]
        %v2004 = vld [vmem:[%s1982 + $0x7c] sm:$0xf]
        %v2005 = vld [vmem:[%s1982 + $0x84] sm:$0xf]
        %v2006 = vld [vmem:[%s1982 + $0x88] sm:$0xf]
        %v2007 = vld [vmem:[%s1982 + $0x90] sm:$0xf]
        %v2008 = vld [vmem:[%s1982 + $0x94] sm:$0xf]
        %v2009 = vld [vmem:[%s1982 + $0x9c] sm:$0xf]
        %v2010 = vld [vmem:[%s1982 + $0xa0] sm:$0xf]
        %v2011 = vld [vmem:[%s1982 + $0xa8] sm:$0xf]
        %v2012 = vld [vmem:[%s1982 + $0xac] sm:$0xf]
        %v2013 = vld [vmem:[%s1982 + $0xb4] sm:$0xf]
        %v2014 = vld [vmem:[%s1982 + $0xb8] sm:$0xf]
        %v2015 = vld [vmem:[#allocation2] sm:$0xff]
        %v2016 = vld [vmem:[#allocation2 + $0x8] sm:$0xff]
        %v2017 = vld [vmem:[#allocation2 + $0x10] sm:$0xff]
        %v2018 = vld [vmem:[#allocation2 + $0x18] sm:$0xff]
        %v2019 = vld [vmem:[#allocation2 + $0x20] sm:$0xff]
        %v2020 = vld [vmem:[#allocation2 + $0x28] sm:$0xff]
        %v2021 = vld [vmem:[#allocation2 + $0x30] sm:$0xff]
        %v2022 = vld [vmem:[#allocation2 + $0x38] sm:$0xff]
        %v2023 = vld [vmem:[#allocation2 + $0x40] sm:$0xff]
        %v2024 = vld [vmem:[#allocation2 + $0x48] sm:$0xff]
        %v2025 = vld [vmem:[#allocation2 + $0x50] sm:$0xff]
        %v2026 = vld [vmem:[#allocation2 + $0x58] sm:$0xff]
        %v2027 = vld [vmem:[#allocation2 + $0x60] sm:$0xff]
        %v2028 = vld [vmem:[#allocation2 + $0x68] sm:$0xff]
        %v2029 = vld [vmem:[#allocation2 + $0x70] sm:$0xff]
        %v2030 = vld [vmem:[#allocation2 + $0x78] sm:$0xff]
        %v2031 = vld [vmem:[#allocation2 + $0x80] sm:$0xff]
        %v2032 = vld [vmem:[#allocation2 + $0x88] sm:$0xff]
        %v2033 = vld [vmem:[#allocation2 + $0x90] sm:$0xff]
        %v2034 = vld [vmem:[#allocation2 + $0x98] sm:$0xff]
        %v2035 = vld [vmem:[#allocation2 + $0xa0] sm:$0xff]
        %v2036 = vld [vmem:[#allocation2 + $0xa8] sm:$0xff]
        %v2037 = vld [vmem:[#allocation2 + $0xb0] sm:$0xff]
        %v2038 = vld [vmem:[#allocation2 + $0xb8] sm:$0xff]
        %v2039 = vld [vmem:[#allocation2 + $0xc0] sm:$0xff]
        %v2040 = vld [vmem:[#allocation2 + $0xc8] sm:$0xff]
        %v2041 = vld [vmem:[#allocation2 + $0xd0] sm:$0xff]
        %v2042 = vld [vmem:[#allocation2 + $0xd8] sm:$0xff]
        %v2043 = vld [vmem:[#allocation2 + $0xe0] sm:$0xff]
        %v2044 = vld [vmem:[#allocation2 + $0xe8] sm:$0xff]
        %v2045 = vld [vmem:[#allocation2 + $0xf0] sm:$0xff]
        %v2046 = vld [vmem:[#allocation2 + $0xf8] sm:$0xff]
        %s2047 = scalar_lea.vmem %s1, 192
        %v2048 = vld [vmem:[%s2047] sm:$0xf]
        %v2049 = vld [vmem:[%s2047 + $0x4] sm:$0xf]
        %v2050 = vld [vmem:[%s2047 + $0x8] sm:$0xf]
        %v2051 = vld [vmem:[%s2047 + $0xc] sm:$0xf]
        %v2052 = vld [vmem:[%s2047 + $0x10] sm:$0xf]
        %v2053 = vld [vmem:[%s2047 + $0x14] sm:$0xf]
        %v2054 = vld [vmem:[%s2047 + $0x18] sm:$0xf]
        %v2055 = vld [vmem:[%s2047 + $0x1c] sm:$0xf]
        %v2056 = vld [vmem:[%s2047 + $0x20] sm:$0xf]
        %v2057 = vld [vmem:[%s2047 + $0x24] sm:$0xf]
        %v2058 = vld [vmem:[%s2047 + $0x28] sm:$0xf]
        %v2059 = vld [vmem:[%s2047 + $0x2c] sm:$0xf]
        %v2060 = vld [vmem:[%s2047 + $0x30] sm:$0xf]
        %v2061 = vld [vmem:[%s2047 + $0x34] sm:$0xf]
        %v2062 = vld [vmem:[%s2047 + $0x38] sm:$0xf]
        %v2063 = vld [vmem:[%s2047 + $0x3c] sm:$0xf]
        %v2096 = vunpack.c.l.b16 %v1983
        %v2097 = vunpack.c.l.b16 %v1984
        %v2098 = vunpack.c.l.b16 %v1985
        %v2099 = vunpack.c.l.b16 %v1986
        %v2100 = vunpack.c.l.b16 %v1987
        %v2101 = vunpack.c.l.b16 %v1988
        %v2102 = vunpack.c.l.b16 %v1989
        %v2103 = vunpack.c.l.b16 %v1990
        %v2104 = vunpack.c.l.b16 %v1991
        %v2105 = vunpack.c.l.b16 %v1992
        %v2106 = vunpack.c.l.b16 %v1993
        %v2107 = vunpack.c.l.b16 %v1994
        %v2108 = vunpack.c.l.b16 %v1995
        %v2109 = vunpack.c.l.b16 %v1996
        %v2110 = vunpack.c.l.b16 %v1997
        %v2111 = vunpack.c.l.b16 %v1998
        %v2112 = vunpack.c.l.b16 %v1999
        %v2113 = vunpack.c.l.b16 %v2000
        %v2114 = vunpack.c.l.b16 %v2001
        %v2115 = vunpack.c.l.b16 %v2002
        %v2116 = vunpack.c.l.b16 %v2003
        %v2117 = vunpack.c.l.b16 %v2004
        %v2118 = vunpack.c.l.b16 %v2005
        %v2119 = vunpack.c.l.b16 %v2006
        %v2120 = vunpack.c.l.b16 %v2007
        %v2121 = vunpack.c.l.b16 %v2008
        %v2122 = vunpack.c.l.b16 %v2009
        %v2123 = vunpack.c.l.b16 %v2010
        %v2124 = vunpack.c.l.b16 %v2011
        %v2125 = vunpack.c.l.b16 %v2012
        %v2126 = vunpack.c.l.b16 %v2013
        %v2127 = vunpack.c.l.b16 %v2014
        %v2128 = vpack.c.b16 %v2097, %v2096
        %v2129 = vpack.c.b16 %v2099, %v2098
        %v2130 = vpack.c.b16 %v2101, %v2100
        %v2131 = vpack.c.b16 %v2103, %v2102
        %v2132 = vpack.c.b16 %v2105, %v2104
        %v2133 = vpack.c.b16 %v2107, %v2106
        %v2134 = vpack.c.b16 %v2109, %v2108
        %v2135 = vpack.c.b16 %v2111, %v2110
        %v2136 = vpack.c.b16 %v2113, %v2112
        %v2137 = vpack.c.b16 %v2115, %v2114
        %v2138 = vpack.c.b16 %v2117, %v2116
        %v2139 = vpack.c.b16 %v2119, %v2118
        %v2140 = vpack.c.b16 %v2121, %v2120
        %v2141 = vpack.c.b16 %v2123, %v2122
        %v2142 = vpack.c.b16 %v2125, %v2124
        %v2143 = vpack.c.b16 %v2127, %v2126
        %v2176 = vunpack.c.l.b16 %v2048
        %v2177 = vunpack.c.l.b16 %v2049
        %v2178 = vunpack.c.l.b16 %v2050
        %v2179 = vunpack.c.l.b16 %v2051
        %v2180 = vunpack.c.l.b16 %v2052
        %v2181 = vunpack.c.l.b16 %v2053
        %v2182 = vunpack.c.l.b16 %v2054
        %v2183 = vunpack.c.l.b16 %v2055
        %v2184 = vunpack.c.l.b16 %v2056
        %v2185 = vunpack.c.l.b16 %v2057
        %v2186 = vunpack.c.l.b16 %v2058
        %v2187 = vunpack.c.l.b16 %v2059
        %v2188 = vunpack.c.l.b16 %v2060
        %v2189 = vunpack.c.l.b16 %v2061
        %v2190 = vunpack.c.l.b16 %v2062
        %v2191 = vunpack.c.l.b16 %v2063
        %v2192 = vpack.c.b16 %v2177, %v2176
        %v2193 = vpack.c.b16 %v2179, %v2178
        %v2194 = vpack.c.b16 %v2181, %v2180
        %v2195 = vpack.c.b16 %v2183, %v2182
        %v2196 = vpack.c.b16 %v2185, %v2184
        %v2197 = vpack.c.b16 %v2187, %v2186
        %v2198 = vpack.c.b16 %v2189, %v2188
        %v2199 = vpack.c.b16 %v2191, %v2190
        %2208 = vmatpush.bf16.msra.mxu0 %v2199
        %2209 = vmatpush.bf16.msra.mxu0 %v2198
        %2210 = vmatpush.bf16.msra.mxu0 %v2197
        %2211 = vmatpush.bf16.msra.mxu0 %v2196
        %2212 = vmatpush.bf16.msra.mxu0 %v2195
        %2213 = vmatpush.bf16.msra.mxu0 %v2194
        %2214 = vmatpush.bf16.msra.mxu0 %v2193
        %2215 = vmatpush.bf16.msra.mxu0 %v2192
        %2216 = vmatmul.bf16.gmra.mxu0 %v2128
        %v2217 = vpop.f32.mrf.mxu0
        %v2218 = vadd.f32 0.0, %v2217
        %v2219 = vpop.f32.mrf.mxu0
        %v2220 = vadd.f32 0.0, %v2219
        %2221 = vmatmul.bf16.gmra.mxu0 %v2129
        %v2222 = vpop.f32.mrf.mxu0
        %v2223 = vadd.f32 0.0, %v2222
        %v2224 = vpop.f32.mrf.mxu0
        %v2225 = vadd.f32 0.0, %v2224
        %2226 = vmatmul.bf16.gmra.mxu0 %v2130
        %v2227 = vpop.f32.mrf.mxu0
        %v2228 = vadd.f32 0.0, %v2227
        %v2229 = vpop.f32.mrf.mxu0
        %v2230 = vadd.f32 0.0, %v2229
        %2231 = vmatmul.bf16.gmra.mxu0 %v2131
        %v2232 = vpop.f32.mrf.mxu0
        %v2233 = vadd.f32 0.0, %v2232
        %v2234 = vpop.f32.mrf.mxu0
        %v2235 = vadd.f32 0.0, %v2234
        %2236 = vmatmul.bf16.gmra.mxu0 %v2132
        %v2237 = vpop.f32.mrf.mxu0
        %v2238 = vadd.f32 0.0, %v2237
        %v2239 = vpop.f32.mrf.mxu0
        %v2240 = vadd.f32 0.0, %v2239
        %2241 = vmatmul.bf16.gmra.mxu0 %v2133
        %v2242 = vpop.f32.mrf.mxu0
        %v2243 = vadd.f32 0.0, %v2242
        %v2244 = vpop.f32.mrf.mxu0
        %v2245 = vadd.f32 0.0, %v2244
        %2246 = vmatmul.bf16.gmra.mxu0 %v2134
        %v2247 = vpop.f32.mrf.mxu0
        %v2248 = vadd.f32 0.0, %v2247
        %v2249 = vpop.f32.mrf.mxu0
        %v2250 = vadd.f32 0.0, %v2249
        %2251 = vmatmul.bf16.gmra.mxu0 %v2135
        %v2252 = vpop.f32.mrf.mxu0
        %v2253 = vadd.f32 0.0, %v2252
        %v2254 = vpop.f32.mrf.mxu0
        %v2255 = vadd.f32 0.0, %v2254
        %2256 = vmatmul.bf16.gmra.mxu0 %v2136
        %v2257 = vpop.f32.mrf.mxu0
        %v2258 = vadd.f32 0.0, %v2257
        %v2259 = vpop.f32.mrf.mxu0
        %v2260 = vadd.f32 0.0, %v2259
        %2261 = vmatmul.bf16.gmra.mxu0 %v2137
        %v2262 = vpop.f32.mrf.mxu0
        %v2263 = vadd.f32 0.0, %v2262
        %v2264 = vpop.f32.mrf.mxu0
        %v2265 = vadd.f32 0.0, %v2264
        %2266 = vmatmul.bf16.gmra.mxu0 %v2138
        %v2267 = vpop.f32.mrf.mxu0
        %v2268 = vadd.f32 0.0, %v2267
        %v2269 = vpop.f32.mrf.mxu0
        %v2270 = vadd.f32 0.0, %v2269
        %2271 = vmatmul.bf16.gmra.mxu0 %v2139
        %v2272 = vpop.f32.mrf.mxu0
        %v2273 = vadd.f32 0.0, %v2272
        %v2274 = vpop.f32.mrf.mxu0
        %v2275 = vadd.f32 0.0, %v2274
        %2276 = vmatmul.bf16.gmra.mxu0 %v2140
        %v2277 = vpop.f32.mrf.mxu0
        %v2278 = vadd.f32 0.0, %v2277
        %v2279 = vpop.f32.mrf.mxu0
        %v2280 = vadd.f32 0.0, %v2279
        %2281 = vmatmul.bf16.gmra.mxu0 %v2141
        %v2282 = vpop.f32.mrf.mxu0
        %v2283 = vadd.f32 0.0, %v2282
        %v2284 = vpop.f32.mrf.mxu0
        %v2285 = vadd.f32 0.0, %v2284
        %2286 = vmatmul.bf16.gmra.mxu0 %v2142
        %v2287 = vpop.f32.mrf.mxu0
        %v2288 = vadd.f32 0.0, %v2287
        %v2289 = vpop.f32.mrf.mxu0
        %v2290 = vadd.f32 0.0, %v2289
        %2291 = vmatmul.bf16.gmra.mxu0 %v2143
        %v2292 = vpop.f32.mrf.mxu0
        %v2293 = vadd.f32 0.0, %v2292
        %v2294 = vpop.f32.mrf.mxu0
        %v2295 = vadd.f32 0.0, %v2294
        %2296 = vdwg.mxu0
        %v2297 = vadd.f32 %v2015, %v2218
        %v2298 = vadd.f32 %v2016, %v2220
        %v2299 = vadd.f32 %v2017, %v2223
        %v2300 = vadd.f32 %v2018, %v2225
        %v2301 = vadd.f32 %v2019, %v2228
        %v2302 = vadd.f32 %v2020, %v2230
        %v2303 = vadd.f32 %v2021, %v2233
        %v2304 = vadd.f32 %v2022, %v2235
        %v2305 = vadd.f32 %v2023, %v2238
        %v2306 = vadd.f32 %v2024, %v2240
        %v2307 = vadd.f32 %v2025, %v2243
        %v2308 = vadd.f32 %v2026, %v2245
        %v2309 = vadd.f32 %v2027, %v2248
        %v2310 = vadd.f32 %v2028, %v2250
        %v2311 = vadd.f32 %v2029, %v2253
        %v2312 = vadd.f32 %v2030, %v2255
        %v2313 = vadd.f32 %v2031, %v2258
        %v2314 = vadd.f32 %v2032, %v2260
        %v2315 = vadd.f32 %v2033, %v2263
        %v2316 = vadd.f32 %v2034, %v2265
        %v2317 = vadd.f32 %v2035, %v2268
        %v2318 = vadd.f32 %v2036, %v2270
        %v2319 = vadd.f32 %v2037, %v2273
        %v2320 = vadd.f32 %v2038, %v2275
        %v2321 = vadd.f32 %v2039, %v2278
        %v2322 = vadd.f32 %v2040, %v2280
        %v2323 = vadd.f32 %v2041, %v2283
        %v2324 = vadd.f32 %v2042, %v2285
        %v2325 = vadd.f32 %v2043, %v2288
        %v2326 = vadd.f32 %v2044, %v2290
        %v2327 = vadd.f32 %v2045, %v2293
        %v2328 = vadd.f32 %v2046, %v2295
        %2329 = vst [vmem:[#allocation2] sm:$0xff] %v2297
        %2330 = vst [vmem:[#allocation2 + $0x8] sm:$0xff] %v2298
        %2331 = vst [vmem:[#allocation2 + $0x10] sm:$0xff] %v2299
        %2332 = vst [vmem:[#allocation2 + $0x18] sm:$0xff] %v2300
        %2333 = vst [vmem:[#allocation2 + $0x20] sm:$0xff] %v2301
        %2334 = vst [vmem:[#allocation2 + $0x28] sm:$0xff] %v2302
        %2335 = vst [vmem:[#allocation2 + $0x30] sm:$0xff] %v2303
        %2336 = vst [vmem:[#allocation2 + $0x38] sm:$0xff] %v2304
        %2337 = vst [vmem:[#allocation2 + $0x40] sm:$0xff] %v2305
        %2338 = vst [vmem:[#allocation2 + $0x48] sm:$0xff] %v2306
        %2339 = vst [vmem:[#allocation2 + $0x50] sm:$0xff] %v2307
        %2340 = vst [vmem:[#allocation2 + $0x58] sm:$0xff] %v2308
        %2341 = vst [vmem:[#allocation2 + $0x60] sm:$0xff] %v2309
        %2342 = vst [vmem:[#allocation2 + $0x68] sm:$0xff] %v2310
        %2343 = vst [vmem:[#allocation2 + $0x70] sm:$0xff] %v2311
        %2344 = vst [vmem:[#allocation2 + $0x78] sm:$0xff] %v2312
        %2345 = vst [vmem:[#allocation2 + $0x80] sm:$0xff] %v2313
        %2346 = vst [vmem:[#allocation2 + $0x88] sm:$0xff] %v2314
        %2347 = vst [vmem:[#allocation2 + $0x90] sm:$0xff] %v2315
        %2348 = vst [vmem:[#allocation2 + $0x98] sm:$0xff] %v2316
        %2349 = vst [vmem:[#allocation2 + $0xa0] sm:$0xff] %v2317
        %2350 = vst [vmem:[#allocation2 + $0xa8] sm:$0xff] %v2318
        %2351 = vst [vmem:[#allocation2 + $0xb0] sm:$0xff] %v2319
        %2352 = vst [vmem:[#allocation2 + $0xb8] sm:$0xff] %v2320
        %2353 = vst [vmem:[#allocation2 + $0xc0] sm:$0xff] %v2321
        %2354 = vst [vmem:[#allocation2 + $0xc8] sm:$0xff] %v2322
        %2355 = vst [vmem:[#allocation2 + $0xd0] sm:$0xff] %v2323
        %2356 = vst [vmem:[#allocation2 + $0xd8] sm:$0xff] %v2324
        %2357 = vst [vmem:[#allocation2 + $0xe0] sm:$0xff] %v2325
        %2358 = vst [vmem:[#allocation2 + $0xe8] sm:$0xff] %v2326
        %2359 = vst [vmem:[#allocation2 + $0xf0] sm:$0xff] %v2327
        %2360 = vst [vmem:[#allocation2 + $0xf8] sm:$0xff] %v2328
        %v2361 = vld [vmem:[%s1982] sm:$0xf]
        %v2362 = vld [vmem:[%s1982 + $0x4] sm:$0xf]
        %v2363 = vld [vmem:[%s1982 + $0x8] sm:$0x1]
        %v2364 = vld [vmem:[%s1982 + $0xc] sm:$0xf]
        %v2365 = vld [vmem:[%s1982 + $0x10] sm:$0xf]
        %v2366 = vld [vmem:[%s1982 + $0x14] sm:$0x1]
        %v2367 = vld [vmem:[%s1982 + $0x18] sm:$0xf]
        %v2368 = vld [vmem:[%s1982 + $0x1c] sm:$0xf]
        %v2369 = vld [vmem:[%s1982 + $0x20] sm:$0x1]
        %v2370 = vld [vmem:[%s1982 + $0x24] sm:$0xf]
        %v2371 = vld [vmem:[%s1982 + $0x28] sm:$0xf]
        %v2372 = vld [vmem:[%s1982 + $0x2c] sm:$0x1]
        %v2373 = vld [vmem:[%s1982 + $0x30] sm:$0xf]
        %v2374 = vld [vmem:[%s1982 + $0x34] sm:$0xf]
        %v2375 = vld [vmem:[%s1982 + $0x38] sm:$0x1]
        %v2376 = vld [vmem:[%s1982 + $0x3c] sm:$0xf]
        %v2377 = vld [vmem:[%s1982 + $0x40] sm:$0xf]
        %v2378 = vld [vmem:[%s1982 + $0x44] sm:$0x1]
        %v2379 = vld [vmem:[%s1982 + $0x48] sm:$0xf]
        %v2380 = vld [vmem:[%s1982 + $0x4c] sm:$0xf]
        %v2381 = vld [vmem:[%s1982 + $0x50] sm:$0x1]
        %v2382 = vld [vmem:[%s1982 + $0x54] sm:$0xf]
        %v2383 = vld [vmem:[%s1982 + $0x58] sm:$0xf]
        %v2384 = vld [vmem:[%s1982 + $0x5c] sm:$0x1]
        %v2385 = vld [vmem:[%s1982 + $0x60] sm:$0xf]
        %v2386 = vld [vmem:[%s1982 + $0x64] sm:$0xf]
        %v2387 = vld [vmem:[%s1982 + $0x68] sm:$0x1]
        %v2388 = vld [vmem:[%s1982 + $0x6c] sm:$0xf]
        %v2389 = vld [vmem:[%s1982 + $0x70] sm:$0xf]
        %v2390 = vld [vmem:[%s1982 + $0x74] sm:$0x1]
        %v2391 = vld [vmem:[%s1982 + $0x78] sm:$0xf]
        %v2392 = vld [vmem:[%s1982 + $0x7c] sm:$0xf]
        %v2393 = vld [vmem:[%s1982 + $0x80] sm:$0x1]
        %v2394 = vld [vmem:[%s1982 + $0x84] sm:$0xf]
        %v2395 = vld [vmem:[%s1982 + $0x88] sm:$0xf]
        %v2396 = vld [vmem:[%s1982 + $0x8c] sm:$0x1]
        %v2397 = vld [vmem:[%s1982 + $0x90] sm:$0xf]
        %v2398 = vld [vmem:[%s1982 + $0x94] sm:$0xf]
        %v2399 = vld [vmem:[%s1982 + $0x98] sm:$0x1]
        %v2400 = vld [vmem:[%s1982 + $0x9c] sm:$0xf]
        %v2401 = vld [vmem:[%s1982 + $0xa0] sm:$0xf]
        %v2402 = vld [vmem:[%s1982 + $0xa4] sm:$0x1]
        %v2403 = vld [vmem:[%s1982 + $0xa8] sm:$0xf]
        %v2404 = vld [vmem:[%s1982 + $0xac] sm:$0xf]
        %v2405 = vld [vmem:[%s1982 + $0xb0] sm:$0x1]
        %v2406 = vld [vmem:[%s1982 + $0xb4] sm:$0xf]
        %v2407 = vld [vmem:[%s1982 + $0xb8] sm:$0xf]
        %v2408 = vld [vmem:[%s1982 + $0xbc] sm:$0x1]
        %v2410 = vshrl.u32 %v2361, 16
        %v2412 = vrot.slane %v2410, 4
        %v2413 = vshll.u32 %v2361, 16
        %v2415 = vrot.slane %v2413, 5
        %v2416 = vor.u32 %v2412, %v2415
        %v2417 = vrot.slane %v2416, 4
        %v2419 = vshll.u32 %v2362, 16
        %v2421 = vrot.slane %v2419, 5
        %v2422 = vsel %vm758, %v2417, %v2421
        %v2423 = vshrl.u32 %v2362, 16
        %v2425 = vrot.slane %v2423, 4
        %v2426 = vor.u32 %v2425, %v2421
        %v2427 = vrot.slane %v2426, 4
        %v2429 = vshll.u32 %v2363, 16
        %v2431 = vrot.slane %v2429, 5
        %v2432 = vsel %vm758, %v2427, %v2431
        %v2434 = vshrl.u32 %v2364, 16
        %v2436 = vrot.slane %v2434, 4
        %v2437 = vshll.u32 %v2364, 16
        %v2439 = vrot.slane %v2437, 5
        %v2440 = vor.u32 %v2436, %v2439
        %v2441 = vrot.slane %v2440, 4
        %v2443 = vshll.u32 %v2365, 16
        %v2445 = vrot.slane %v2443, 5
        %v2446 = vsel %vm758, %v2441, %v2445
        %v2447 = vshrl.u32 %v2365, 16
        %v2449 = vrot.slane %v2447, 4
        %v2450 = vor.u32 %v2449, %v2445
        %v2451 = vrot.slane %v2450, 4
        %v2453 = vshll.u32 %v2366, 16
        %v2455 = vrot.slane %v2453, 5
        %v2456 = vsel %vm758, %v2451, %v2455
        %v2458 = vshrl.u32 %v2367, 16
        %v2460 = vrot.slane %v2458, 4
        %v2461 = vshll.u32 %v2367, 16
        %v2463 = vrot.slane %v2461, 5
        %v2464 = vor.u32 %v2460, %v2463
        %v2465 = vrot.slane %v2464, 4
        %v2467 = vshll.u32 %v2368, 16
        %v2469 = vrot.slane %v2467, 5
        %v2470 = vsel %vm758, %v2465, %v2469
        %v2471 = vshrl.u32 %v2368, 16
        %v2473 = vrot.slane %v2471, 4
        %v2474 = vor.u32 %v2473, %v2469
        %v2475 = vrot.slane %v2474, 4
        %v2477 = vshll.u32 %v2369, 16
        %v2479 = vrot.slane %v2477, 5
        %v2480 = vsel %vm758, %v2475, %v2479
        %v2482 = vshrl.u32 %v2370, 16
        %v2484 = vrot.slane %v2482, 4
        %v2485 = vshll.u32 %v2370, 16
        %v2487 = vrot.slane %v2485, 5
        %v2488 = vor.u32 %v2484, %v2487
        %v2489 = vrot.slane %v2488, 4
        %v2491 = vshll.u32 %v2371, 16
        %v2493 = vrot.slane %v2491, 5
        %v2494 = vsel %vm758, %v2489, %v2493
        %v2495 = vshrl.u32 %v2371, 16
        %v2497 = vrot.slane %v2495, 4
        %v2498 = vor.u32 %v2497, %v2493
        %v2499 = vrot.slane %v2498, 4
        %v2501 = vshll.u32 %v2372, 16
        %v2503 = vrot.slane %v2501, 5
        %v2504 = vsel %vm758, %v2499, %v2503
        %v2506 = vshrl.u32 %v2373, 16
        %v2508 = vrot.slane %v2506, 4
        %v2509 = vshll.u32 %v2373, 16
        %v2511 = vrot.slane %v2509, 5
        %v2512 = vor.u32 %v2508, %v2511
        %v2513 = vrot.slane %v2512, 4
        %v2515 = vshll.u32 %v2374, 16
        %v2517 = vrot.slane %v2515, 5
        %v2518 = vsel %vm758, %v2513, %v2517
        %v2519 = vshrl.u32 %v2374, 16
        %v2521 = vrot.slane %v2519, 4
        %v2522 = vor.u32 %v2521, %v2517
        %v2523 = vrot.slane %v2522, 4
        %v2525 = vshll.u32 %v2375, 16
        %v2527 = vrot.slane %v2525, 5
        %v2528 = vsel %vm758, %v2523, %v2527
        %v2530 = vshrl.u32 %v2376, 16
        %v2532 = vrot.slane %v2530, 4
        %v2533 = vshll.u32 %v2376, 16
        %v2535 = vrot.slane %v2533, 5
        %v2536 = vor.u32 %v2532, %v2535
        %v2537 = vrot.slane %v2536, 4
        %v2539 = vshll.u32 %v2377, 16
        %v2541 = vrot.slane %v2539, 5
        %v2542 = vsel %vm758, %v2537, %v2541
        %v2543 = vshrl.u32 %v2377, 16
        %v2545 = vrot.slane %v2543, 4
        %v2546 = vor.u32 %v2545, %v2541
        %v2547 = vrot.slane %v2546, 4
        %v2549 = vshll.u32 %v2378, 16
        %v2551 = vrot.slane %v2549, 5
        %v2552 = vsel %vm758, %v2547, %v2551
        %v2554 = vshrl.u32 %v2379, 16
        %v2556 = vrot.slane %v2554, 4
        %v2557 = vshll.u32 %v2379, 16
        %v2559 = vrot.slane %v2557, 5
        %v2560 = vor.u32 %v2556, %v2559
        %v2561 = vrot.slane %v2560, 4
        %v2563 = vshll.u32 %v2380, 16
        %v2565 = vrot.slane %v2563, 5
        %v2566 = vsel %vm758, %v2561, %v2565
        %v2567 = vshrl.u32 %v2380, 16
        %v2569 = vrot.slane %v2567, 4
        %v2570 = vor.u32 %v2569, %v2565
        %v2571 = vrot.slane %v2570, 4
        %v2573 = vshll.u32 %v2381, 16
        %v2575 = vrot.slane %v2573, 5
        %v2576 = vsel %vm758, %v2571, %v2575
        %v2578 = vshrl.u32 %v2382, 16
        %v2580 = vrot.slane %v2578, 4
        %v2581 = vshll.u32 %v2382, 16
        %v2583 = vrot.slane %v2581, 5
        %v2584 = vor.u32 %v2580, %v2583
        %v2585 = vrot.slane %v2584, 4
        %v2587 = vshll.u32 %v2383, 16
        %v2589 = vrot.slane %v2587, 5
        %v2590 = vsel %vm758, %v2585, %v2589
        %v2591 = vshrl.u32 %v2383, 16
        %v2593 = vrot.slane %v2591, 4
        %v2594 = vor.u32 %v2593, %v2589
        %v2595 = vrot.slane %v2594, 4
        %v2597 = vshll.u32 %v2384, 16
        %v2599 = vrot.slane %v2597, 5
        %v2600 = vsel %vm758, %v2595, %v2599
        %v2602 = vshrl.u32 %v2385, 16
        %v2604 = vrot.slane %v2602, 4
        %v2605 = vshll.u32 %v2385, 16
        %v2607 = vrot.slane %v2605, 5
        %v2608 = vor.u32 %v2604, %v2607
        %v2609 = vrot.slane %v2608, 4
        %v2611 = vshll.u32 %v2386, 16
        %v2613 = vrot.slane %v2611, 5
        %v2614 = vsel %vm758, %v2609, %v2613
        %v2615 = vshrl.u32 %v2386, 16
        %v2617 = vrot.slane %v2615, 4
        %v2618 = vor.u32 %v2617, %v2613
        %v2619 = vrot.slane %v2618, 4
        %v2621 = vshll.u32 %v2387, 16
        %v2623 = vrot.slane %v2621, 5
        %v2624 = vsel %vm758, %v2619, %v2623
        %v2626 = vshrl.u32 %v2388, 16
        %v2628 = vrot.slane %v2626, 4
        %v2629 = vshll.u32 %v2388, 16
        %v2631 = vrot.slane %v2629, 5
        %v2632 = vor.u32 %v2628, %v2631
        %v2633 = vrot.slane %v2632, 4
        %v2635 = vshll.u32 %v2389, 16
        %v2637 = vrot.slane %v2635, 5
        %v2638 = vsel %vm758, %v2633, %v2637
        %v2639 = vshrl.u32 %v2389, 16
        %v2641 = vrot.slane %v2639, 4
        %v2642 = vor.u32 %v2641, %v2637
        %v2643 = vrot.slane %v2642, 4
        %v2645 = vshll.u32 %v2390, 16
        %v2647 = vrot.slane %v2645, 5
        %v2648 = vsel %vm758, %v2643, %v2647
        %v2650 = vshrl.u32 %v2391, 16
        %v2652 = vrot.slane %v2650, 4
        %v2653 = vshll.u32 %v2391, 16
        %v2655 = vrot.slane %v2653, 5
        %v2656 = vor.u32 %v2652, %v2655
        %v2657 = vrot.slane %v2656, 4
        %v2659 = vshll.u32 %v2392, 16
        %v2661 = vrot.slane %v2659, 5
        %v2662 = vsel %vm758, %v2657, %v2661
        %v2663 = vshrl.u32 %v2392, 16
        %v2665 = vrot.slane %v2663, 4
        %v2666 = vor.u32 %v2665, %v2661
        %v2667 = vrot.slane %v2666, 4
        %v2669 = vshll.u32 %v2393, 16
        %v2671 = vrot.slane %v2669, 5
        %v2672 = vsel %vm758, %v2667, %v2671
        %v2674 = vshrl.u32 %v2394, 16
        %v2676 = vrot.slane %v2674, 4
        %v2677 = vshll.u32 %v2394, 16
        %v2679 = vrot.slane %v2677, 5
        %v2680 = vor.u32 %v2676, %v2679
        %v2681 = vrot.slane %v2680, 4
        %v2683 = vshll.u32 %v2395, 16
        %v2685 = vrot.slane %v2683, 5
        %v2686 = vsel %vm758, %v2681, %v2685
        %v2687 = vshrl.u32 %v2395, 16
        %v2689 = vrot.slane %v2687, 4
        %v2690 = vor.u32 %v2689, %v2685
        %v2691 = vrot.slane %v2690, 4
        %v2693 = vshll.u32 %v2396, 16
        %v2695 = vrot.slane %v2693, 5
        %v2696 = vsel %vm758, %v2691, %v2695
        %v2698 = vshrl.u32 %v2397, 16
        %v2700 = vrot.slane %v2698, 4
        %v2701 = vshll.u32 %v2397, 16
        %v2703 = vrot.slane %v2701, 5
        %v2704 = vor.u32 %v2700, %v2703
        %v2705 = vrot.slane %v2704, 4
        %v2707 = vshll.u32 %v2398, 16
        %v2709 = vrot.slane %v2707, 5
        %v2710 = vsel %vm758, %v2705, %v2709
        %v2711 = vshrl.u32 %v2398, 16
        %v2713 = vrot.slane %v2711, 4
        %v2714 = vor.u32 %v2713, %v2709
        %v2715 = vrot.slane %v2714, 4
        %v2717 = vshll.u32 %v2399, 16
        %v2719 = vrot.slane %v2717, 5
        %v2720 = vsel %vm758, %v2715, %v2719
        %v2722 = vshrl.u32 %v2400, 16
        %v2724 = vrot.slane %v2722, 4
        %v2725 = vshll.u32 %v2400, 16
        %v2727 = vrot.slane %v2725, 5
        %v2728 = vor.u32 %v2724, %v2727
        %v2729 = vrot.slane %v2728, 4
        %v2731 = vshll.u32 %v2401, 16
        %v2733 = vrot.slane %v2731, 5
        %v2734 = vsel %vm758, %v2729, %v2733
        %v2735 = vshrl.u32 %v2401, 16
        %v2737 = vrot.slane %v2735, 4
        %v2738 = vor.u32 %v2737, %v2733
        %v2739 = vrot.slane %v2738, 4
        %v2741 = vshll.u32 %v2402, 16
        %v2743 = vrot.slane %v2741, 5
        %v2744 = vsel %vm758, %v2739, %v2743
        %v2746 = vshrl.u32 %v2403, 16
        %v2748 = vrot.slane %v2746, 4
        %v2749 = vshll.u32 %v2403, 16
        %v2751 = vrot.slane %v2749, 5
        %v2752 = vor.u32 %v2748, %v2751
        %v2753 = vrot.slane %v2752, 4
        %v2755 = vshll.u32 %v2404, 16
        %v2757 = vrot.slane %v2755, 5
        %v2758 = vsel %vm758, %v2753, %v2757
        %v2759 = vshrl.u32 %v2404, 16
        %v2761 = vrot.slane %v2759, 4
        %v2762 = vor.u32 %v2761, %v2757
        %v2763 = vrot.slane %v2762, 4
        %v2765 = vshll.u32 %v2405, 16
        %v2767 = vrot.slane %v2765, 5
        %v2768 = vsel %vm758, %v2763, %v2767
        %v2770 = vshrl.u32 %v2406, 16
        %v2772 = vrot.slane %v2770, 4
        %v2773 = vshll.u32 %v2406, 16
        %v2775 = vrot.slane %v2773, 5
        %v2776 = vor.u32 %v2772, %v2775
        %v2777 = vrot.slane %v2776, 4
        %v2779 = vshll.u32 %v2407, 16
        %v2781 = vrot.slane %v2779, 5
        %v2782 = vsel %vm758, %v2777, %v2781
        %v2783 = vshrl.u32 %v2407, 16
        %v2785 = vrot.slane %v2783, 4
        %v2786 = vor.u32 %v2785, %v2781
        %v2787 = vrot.slane %v2786, 4
        %v2789 = vshll.u32 %v2408, 16
        %v2791 = vrot.slane %v2789, 5
        %v2792 = vsel %vm758, %v2787, %v2791
        %v2793 = vld [vmem:[#allocation2] sm:$0xff]
        %v2794 = vld [vmem:[#allocation2 + $0x8] sm:$0xff]
        %v2795 = vld [vmem:[#allocation2 + $0x10] sm:$0xff]
        %v2796 = vld [vmem:[#allocation2 + $0x18] sm:$0xff]
        %v2797 = vld [vmem:[#allocation2 + $0x20] sm:$0xff]
        %v2798 = vld [vmem:[#allocation2 + $0x28] sm:$0xff]
        %v2799 = vld [vmem:[#allocation2 + $0x30] sm:$0xff]
        %v2800 = vld [vmem:[#allocation2 + $0x38] sm:$0xff]
        %v2801 = vld [vmem:[#allocation2 + $0x40] sm:$0xff]
        %v2802 = vld [vmem:[#allocation2 + $0x48] sm:$0xff]
        %v2803 = vld [vmem:[#allocation2 + $0x50] sm:$0xff]
        %v2804 = vld [vmem:[#allocation2 + $0x58] sm:$0xff]
        %v2805 = vld [vmem:[#allocation2 + $0x60] sm:$0xff]
        %v2806 = vld [vmem:[#allocation2 + $0x68] sm:$0xff]
        %v2807 = vld [vmem:[#allocation2 + $0x70] sm:$0xff]
        %v2808 = vld [vmem:[#allocation2 + $0x78] sm:$0xff]
        %v2809 = vld [vmem:[#allocation2 + $0x80] sm:$0xff]
        %v2810 = vld [vmem:[#allocation2 + $0x88] sm:$0xff]
        %v2811 = vld [vmem:[#allocation2 + $0x90] sm:$0xff]
        %v2812 = vld [vmem:[#allocation2 + $0x98] sm:$0xff]
        %v2813 = vld [vmem:[#allocation2 + $0xa0] sm:$0xff]
        %v2814 = vld [vmem:[#allocation2 + $0xa8] sm:$0xff]
        %v2815 = vld [vmem:[#allocation2 + $0xb0] sm:$0xff]
        %v2816 = vld [vmem:[#allocation2 + $0xb8] sm:$0xff]
        %v2817 = vld [vmem:[#allocation2 + $0xc0] sm:$0xff]
        %v2818 = vld [vmem:[#allocation2 + $0xc8] sm:$0xff]
        %v2819 = vld [vmem:[#allocation2 + $0xd0] sm:$0xff]
        %v2820 = vld [vmem:[#allocation2 + $0xd8] sm:$0xff]
        %v2821 = vld [vmem:[#allocation2 + $0xe0] sm:$0xff]
        %v2822 = vld [vmem:[#allocation2 + $0xe8] sm:$0xff]
        %v2823 = vld [vmem:[#allocation2 + $0xf0] sm:$0xff]
        %v2824 = vld [vmem:[#allocation2 + $0xf8] sm:$0xff]
        %s2825 = scalar_lea.vmem %s1, 256
        %v2826 = vld [vmem:[%s2825] sm:$0xf]
        %v2827 = vld [vmem:[%s2825 + $0x4] sm:$0xf]
        %v2828 = vld [vmem:[%s2825 + $0x8] sm:$0xf]
        %v2829 = vld [vmem:[%s2825 + $0xc] sm:$0xf]
        %v2830 = vld [vmem:[%s2825 + $0x10] sm:$0xf]
        %v2831 = vld [vmem:[%s2825 + $0x14] sm:$0xf]
        %v2832 = vld [vmem:[%s2825 + $0x18] sm:$0xf]
        %v2833 = vld [vmem:[%s2825 + $0x1c] sm:$0xf]
        %v2834 = vld [vmem:[%s2825 + $0x20] sm:$0xf]
        %v2835 = vld [vmem:[%s2825 + $0x24] sm:$0xf]
        %v2836 = vld [vmem:[%s2825 + $0x28] sm:$0xf]
        %v2837 = vld [vmem:[%s2825 + $0x2c] sm:$0xf]
        %v2838 = vld [vmem:[%s2825 + $0x30] sm:$0xf]
        %v2839 = vld [vmem:[%s2825 + $0x34] sm:$0xf]
        %v2840 = vld [vmem:[%s2825 + $0x38] sm:$0xf]
        %v2841 = vld [vmem:[%s2825 + $0x3c] sm:$0xf]
        %v2842 = vunpack.c.l.b16 %v2422
        %v2843 = vunpack.c.l.b16 %v2432
        %v2844 = vunpack.c.l.b16 %v2446
        %v2845 = vunpack.c.l.b16 %v2456
        %v2846 = vunpack.c.l.b16 %v2470
        %v2847 = vunpack.c.l.b16 %v2480
        %v2848 = vunpack.c.l.b16 %v2494
        %v2849 = vunpack.c.l.b16 %v2504
        %v2850 = vunpack.c.l.b16 %v2518
        %v2851 = vunpack.c.l.b16 %v2528
        %v2852 = vunpack.c.l.b16 %v2542
        %v2853 = vunpack.c.l.b16 %v2552
        %v2854 = vunpack.c.l.b16 %v2566
        %v2855 = vunpack.c.l.b16 %v2576
        %v2856 = vunpack.c.l.b16 %v2590
        %v2857 = vunpack.c.l.b16 %v2600
        %v2858 = vunpack.c.l.b16 %v2614
        %v2859 = vunpack.c.l.b16 %v2624
        %v2860 = vunpack.c.l.b16 %v2638
        %v2861 = vunpack.c.l.b16 %v2648
        %v2862 = vunpack.c.l.b16 %v2662
        %v2863 = vunpack.c.l.b16 %v2672
        %v2864 = vunpack.c.l.b16 %v2686
        %v2865 = vunpack.c.l.b16 %v2696
        %v2866 = vunpack.c.l.b16 %v2710
        %v2867 = vunpack.c.l.b16 %v2720
        %v2868 = vunpack.c.l.b16 %v2734
        %v2869 = vunpack.c.l.b16 %v2744
        %v2870 = vunpack.c.l.b16 %v2758
        %v2871 = vunpack.c.l.b16 %v2768
        %v2872 = vunpack.c.l.b16 %v2782
        %v2873 = vunpack.c.l.b16 %v2792
        %v2874 = vpack.c.b16 %v2843, %v2842
        %v2875 = vpack.c.b16 %v2845, %v2844
        %v2876 = vpack.c.b16 %v2847, %v2846
        %v2877 = vpack.c.b16 %v2849, %v2848
        %v2878 = vpack.c.b16 %v2851, %v2850
        %v2879 = vpack.c.b16 %v2853, %v2852
        %v2880 = vpack.c.b16 %v2855, %v2854
        %v2881 = vpack.c.b16 %v2857, %v2856
        %v2882 = vpack.c.b16 %v2859, %v2858
        %v2883 = vpack.c.b16 %v2861, %v2860
        %v2884 = vpack.c.b16 %v2863, %v2862
        %v2885 = vpack.c.b16 %v2865, %v2864
        %v2886 = vpack.c.b16 %v2867, %v2866
        %v2887 = vpack.c.b16 %v2869, %v2868
        %v2888 = vpack.c.b16 %v2871, %v2870
        %v2889 = vpack.c.b16 %v2873, %v2872
        %v2922 = vunpack.c.l.b16 %v2826
        %v2923 = vunpack.c.l.b16 %v2827
        %v2924 = vunpack.c.l.b16 %v2828
        %v2925 = vunpack.c.l.b16 %v2829
        %v2926 = vunpack.c.l.b16 %v2830
        %v2927 = vunpack.c.l.b16 %v2831
        %v2928 = vunpack.c.l.b16 %v2832
        %v2929 = vunpack.c.l.b16 %v2833
        %v2930 = vunpack.c.l.b16 %v2834
        %v2931 = vunpack.c.l.b16 %v2835
        %v2932 = vunpack.c.l.b16 %v2836
        %v2933 = vunpack.c.l.b16 %v2837
        %v2934 = vunpack.c.l.b16 %v2838
        %v2935 = vunpack.c.l.b16 %v2839
        %v2936 = vunpack.c.l.b16 %v2840
        %v2937 = vunpack.c.l.b16 %v2841
        %v2938 = vpack.c.b16 %v2923, %v2922
        %v2939 = vpack.c.b16 %v2925, %v2924
        %v2940 = vpack.c.b16 %v2927, %v2926
        %v2941 = vpack.c.b16 %v2929, %v2928
        %v2942 = vpack.c.b16 %v2931, %v2930
        %v2943 = vpack.c.b16 %v2933, %v2932
        %v2944 = vpack.c.b16 %v2935, %v2934
        %v2945 = vpack.c.b16 %v2937, %v2936
        %2954 = vmatpush.bf16.msra.mxu0 %v2945
        %2955 = vmatpush.bf16.msra.mxu0 %v2944
        %2956 = vmatpush.bf16.msra.mxu0 %v2943
        %2957 = vmatpush.bf16.msra.mxu0 %v2942
        %2958 = vmatpush.bf16.msra.mxu0 %v2941
        %2959 = vmatpush.bf16.msra.mxu0 %v2940
        %2960 = vmatpush.bf16.msra.mxu0 %v2939
        %2961 = vmatpush.bf16.msra.mxu0 %v2938
        %2962 = vmatmul.bf16.gmra.mxu0 %v2874
        %v2963 = vpop.f32.mrf.mxu0
        %v2964 = vadd.f32 0.0, %v2963
        %v2965 = vpop.f32.mrf.mxu0
        %v2966 = vadd.f32 0.0, %v2965
        %2967 = vmatmul.bf16.gmra.mxu0 %v2875
        %v2968 = vpop.f32.mrf.mxu0
        %v2969 = vadd.f32 0.0, %v2968
        %v2970 = vpop.f32.mrf.mxu0
        %v2971 = vadd.f32 0.0, %v2970
        %2972 = vmatmul.bf16.gmra.mxu0 %v2876
        %v2973 = vpop.f32.mrf.mxu0
        %v2974 = vadd.f32 0.0, %v2973
        %v2975 = vpop.f32.mrf.mxu0
        %v2976 = vadd.f32 0.0, %v2975
        %2977 = vmatmul.bf16.gmra.mxu0 %v2877
        %v2978 = vpop.f32.mrf.mxu0
        %v2979 = vadd.f32 0.0, %v2978
        %v2980 = vpop.f32.mrf.mxu0
        %v2981 = vadd.f32 0.0, %v2980
        %2982 = vmatmul.bf16.gmra.mxu0 %v2878
        %v2983 = vpop.f32.mrf.mxu0
        %v2984 = vadd.f32 0.0, %v2983
        %v2985 = vpop.f32.mrf.mxu0
        %v2986 = vadd.f32 0.0, %v2985
        %2987 = vmatmul.bf16.gmra.mxu0 %v2879
        %v2988 = vpop.f32.mrf.mxu0
        %v2989 = vadd.f32 0.0, %v2988
        %v2990 = vpop.f32.mrf.mxu0
        %v2991 = vadd.f32 0.0, %v2990
        %2992 = vmatmul.bf16.gmra.mxu0 %v2880
        %v2993 = vpop.f32.mrf.mxu0
        %v2994 = vadd.f32 0.0, %v2993
        %v2995 = vpop.f32.mrf.mxu0
        %v2996 = vadd.f32 0.0, %v2995
        %2997 = vmatmul.bf16.gmra.mxu0 %v2881
        %v2998 = vpop.f32.mrf.mxu0
        %v2999 = vadd.f32 0.0, %v2998
        %v3000 = vpop.f32.mrf.mxu0
        %v3001 = vadd.f32 0.0, %v3000
        %3002 = vmatmul.bf16.gmra.mxu0 %v2882
        %v3003 = vpop.f32.mrf.mxu0
        %v3004 = vadd.f32 0.0, %v3003
        %v3005 = vpop.f32.mrf.mxu0
        %v3006 = vadd.f32 0.0, %v3005
        %3007 = vmatmul.bf16.gmra.mxu0 %v2883
        %v3008 = vpop.f32.mrf.mxu0
        %v3009 = vadd.f32 0.0, %v3008
        %v3010 = vpop.f32.mrf.mxu0
        %v3011 = vadd.f32 0.0, %v3010
        %3012 = vmatmul.bf16.gmra.mxu0 %v2884
        %v3013 = vpop.f32.mrf.mxu0
        %v3014 = vadd.f32 0.0, %v3013
        %v3015 = vpop.f32.mrf.mxu0
        %v3016 = vadd.f32 0.0, %v3015
        %3017 = vmatmul.bf16.gmra.mxu0 %v2885
        %v3018 = vpop.f32.mrf.mxu0
        %v3019 = vadd.f32 0.0, %v3018
        %v3020 = vpop.f32.mrf.mxu0
        %v3021 = vadd.f32 0.0, %v3020
        %3022 = vmatmul.bf16.gmra.mxu0 %v2886
        %v3023 = vpop.f32.mrf.mxu0
        %v3024 = vadd.f32 0.0, %v3023
        %v3025 = vpop.f32.mrf.mxu0
        %v3026 = vadd.f32 0.0, %v3025
        %3027 = vmatmul.bf16.gmra.mxu0 %v2887
        %v3028 = vpop.f32.mrf.mxu0
        %v3029 = vadd.f32 0.0, %v3028
        %v3030 = vpop.f32.mrf.mxu0
        %v3031 = vadd.f32 0.0, %v3030
        %3032 = vmatmul.bf16.gmra.mxu0 %v2888
        %v3033 = vpop.f32.mrf.mxu0
        %v3034 = vadd.f32 0.0, %v3033
        %v3035 = vpop.f32.mrf.mxu0
        %v3036 = vadd.f32 0.0, %v3035
        %3037 = vmatmul.bf16.gmra.mxu0 %v2889
        %v3038 = vpop.f32.mrf.mxu0
        %v3039 = vadd.f32 0.0, %v3038
        %v3040 = vpop.f32.mrf.mxu0
        %v3041 = vadd.f32 0.0, %v3040
        %3042 = vdwg.mxu0
        %v3043 = vadd.f32 %v2793, %v2964
        %v3044 = vadd.f32 %v2794, %v2966
        %v3045 = vadd.f32 %v2795, %v2969
        %v3046 = vadd.f32 %v2796, %v2971
        %v3047 = vadd.f32 %v2797, %v2974
        %v3048 = vadd.f32 %v2798, %v2976
        %v3049 = vadd.f32 %v2799, %v2979
        %v3050 = vadd.f32 %v2800, %v2981
        %v3051 = vadd.f32 %v2801, %v2984
        %v3052 = vadd.f32 %v2802, %v2986
        %v3053 = vadd.f32 %v2803, %v2989
        %v3054 = vadd.f32 %v2804, %v2991
        %v3055 = vadd.f32 %v2805, %v2994
        %v3056 = vadd.f32 %v2806, %v2996
        %v3057 = vadd.f32 %v2807, %v2999
        %v3058 = vadd.f32 %v2808, %v3001
        %v3059 = vadd.f32 %v2809, %v3004
        %v3060 = vadd.f32 %v2810, %v3006
        %v3061 = vadd.f32 %v2811, %v3009
        %v3062 = vadd.f32 %v2812, %v3011
        %v3063 = vadd.f32 %v2813, %v3014
        %v3064 = vadd.f32 %v2814, %v3016
        %v3065 = vadd.f32 %v2815, %v3019
        %v3066 = vadd.f32 %v2816, %v3021
        %v3067 = vadd.f32 %v2817, %v3024
        %v3068 = vadd.f32 %v2818, %v3026
        %v3069 = vadd.f32 %v2819, %v3029
        %v3070 = vadd.f32 %v2820, %v3031
        %v3071 = vadd.f32 %v2821, %v3034
        %v3072 = vadd.f32 %v2822, %v3036
        %v3073 = vadd.f32 %v2823, %v3039
        %v3074 = vadd.f32 %v2824, %v3041
        %3075 = vst [vmem:[#allocation2] sm:$0xff] %v3043
        %3076 = vst [vmem:[#allocation2 + $0x8] sm:$0xff] %v3044
        %3077 = vst [vmem:[#allocation2 + $0x10] sm:$0xff] %v3045
        %3078 = vst [vmem:[#allocation2 + $0x18] sm:$0xff] %v3046
        %3079 = vst [vmem:[#allocation2 + $0x20] sm:$0xff] %v3047
        %3080 = vst [vmem:[#allocation2 + $0x28] sm:$0xff] %v3048
        %3081 = vst [vmem:[#allocation2 + $0x30] sm:$0xff] %v3049
        %3082 = vst [vmem:[#allocation2 + $0x38] sm:$0xff] %v3050
        %3083 = vst [vmem:[#allocation2 + $0x40] sm:$0xff] %v3051
        %3084 = vst [vmem:[#allocation2 + $0x48] sm:$0xff] %v3052
        %3085 = vst [vmem:[#allocation2 + $0x50] sm:$0xff] %v3053
        %3086 = vst [vmem:[#allocation2 + $0x58] sm:$0xff] %v3054
        %3087 = vst [vmem:[#allocation2 + $0x60] sm:$0xff] %v3055
        %3088 = vst [vmem:[#allocation2 + $0x68] sm:$0xff] %v3056
        %3089 = vst [vmem:[#allocation2 + $0x70] sm:$0xff] %v3057
        %3090 = vst [vmem:[#allocation2 + $0x78] sm:$0xff] %v3058
        %3091 = vst [vmem:[#allocation2 + $0x80] sm:$0xff] %v3059
        %3092 = vst [vmem:[#allocation2 + $0x88] sm:$0xff] %v3060
        %3093 = vst [vmem:[#allocation2 + $0x90] sm:$0xff] %v3061
        %3094 = vst [vmem:[#allocation2 + $0x98] sm:$0xff] %v3062
        %3095 = vst [vmem:[#allocation2 + $0xa0] sm:$0xff] %v3063
        %3096 = vst [vmem:[#allocation2 + $0xa8] sm:$0xff] %v3064
        %3097 = vst [vmem:[#allocation2 + $0xb0] sm:$0xff] %v3065
        %3098 = vst [vmem:[#allocation2 + $0xb8] sm:$0xff] %v3066
        %3099 = vst [vmem:[#allocation2 + $0xc0] sm:$0xff] %v3067
        %3100 = vst [vmem:[#allocation2 + $0xc8] sm:$0xff] %v3068
        %3101 = vst [vmem:[#allocation2 + $0xd0] sm:$0xff] %v3069
        %3102 = vst [vmem:[#allocation2 + $0xd8] sm:$0xff] %v3070
        %3103 = vst [vmem:[#allocation2 + $0xe0] sm:$0xff] %v3071
        %3104 = vst [vmem:[#allocation2 + $0xe8] sm:$0xff] %v3072
        %3105 = vst [vmem:[#allocation2 + $0xf0] sm:$0xff] %v3073
        %3106 = vst [vmem:[#allocation2 + $0xf8] sm:$0xff] %v3074
        %v3107 = vld [vmem:[%s1982] sm:$0xe]
        %v3108 = vld [vmem:[%s1982 + $0x4] sm:$0xf]
        %v3109 = vld [vmem:[%s1982 + $0x8] sm:$0x1]
        %v3110 = vld [vmem:[%s1982 + $0xc] sm:$0xe]
        %v3111 = vld [vmem:[%s1982 + $0x10] sm:$0xf]
        %v3112 = vld [vmem:[%s1982 + $0x14] sm:$0x1]
        %v3113 = vld [vmem:[%s1982 + $0x18] sm:$0xe]
        %v3114 = vld [vmem:[%s1982 + $0x1c] sm:$0xf]
        %v3115 = vld [vmem:[%s1982 + $0x20] sm:$0x1]
        %v3116 = vld [vmem:[%s1982 + $0x24] sm:$0xe]
        %v3117 = vld [vmem:[%s1982 + $0x28] sm:$0xf]
        %v3118 = vld [vmem:[%s1982 + $0x2c] sm:$0x1]
        %v3119 = vld [vmem:[%s1982 + $0x30] sm:$0xe]
        %v3120 = vld [vmem:[%s1982 + $0x34] sm:$0xf]
        %v3121 = vld [vmem:[%s1982 + $0x38] sm:$0x1]
        %v3122 = vld [vmem:[%s1982 + $0x3c] sm:$0xe]
        %v3123 = vld [vmem:[%s1982 + $0x40] sm:$0xf]
        %v3124 = vld [vmem:[%s1982 + $0x44] sm:$0x1]
        %v3125 = vld [vmem:[%s1982 + $0x48] sm:$0xe]
        %v3126 = vld [vmem:[%s1982 + $0x4c] sm:$0xf]
        %v3127 = vld [vmem:[%s1982 + $0x50] sm:$0x1]
        %v3128 = vld [vmem:[%s1982 + $0x54] sm:$0xe]
        %v3129 = vld [vmem:[%s1982 + $0x58] sm:$0xf]
        %v3130 = vld [vmem:[%s1982 + $0x5c] sm:$0x1]
        %v3131 = vld [vmem:[%s1982 + $0x60] sm:$0xe]
        %v3132 = vld [vmem:[%s1982 + $0x64] sm:$0xf]
        %v3133 = vld [vmem:[%s1982 + $0x68] sm:$0x1]
        %v3134 = vld [vmem:[%s1982 + $0x6c] sm:$0xe]
        %v3135 = vld [vmem:[%s1982 + $0x70] sm:$0xf]
        %v3136 = vld [vmem:[%s1982 + $0x74] sm:$0x1]
        %v3137 = vld [vmem:[%s1982 + $0x78] sm:$0xe]
        %v3138 = vld [vmem:[%s1982 + $0x7c] sm:$0xf]
        %v3139 = vld [vmem:[%s1982 + $0x80] sm:$0x1]
        %v3140 = vld [vmem:[%s1982 + $0x84] sm:$0xe]
        %v3141 = vld [vmem:[%s1982 + $0x88] sm:$0xf]
        %v3142 = vld [vmem:[%s1982 + $0x8c] sm:$0x1]
        %v3143 = vld [vmem:[%s1982 + $0x90] sm:$0xe]
        %v3144 = vld [vmem:[%s1982 + $0x94] sm:$0xf]
        %v3145 = vld [vmem:[%s1982 + $0x98] sm:$0x1]
        %v3146 = vld [vmem:[%s1982 + $0x9c] sm:$0xe]
        %v3147 = vld [vmem:[%s1982 + $0xa0] sm:$0xf]
        %v3148 = vld [vmem:[%s1982 + $0xa4] sm:$0x1]
        %v3149 = vld [vmem:[%s1982 + $0xa8] sm:$0xe]
        %v3150 = vld [vmem:[%s1982 + $0xac] sm:$0xf]
        %v3151 = vld [vmem:[%s1982 + $0xb0] sm:$0x1]
        %v3152 = vld [vmem:[%s1982 + $0xb4] sm:$0xe]
        %v3153 = vld [vmem:[%s1982 + $0xb8] sm:$0xf]
        %v3154 = vld [vmem:[%s1982 + $0xbc] sm:$0x1]
        %v3203 = vrot.slane %v3107, 5
        %v3204 = vrot.slane %v3203, 4
        %v3205 = vrot.slane %v3108, 5
        %v3206 = vsel %vm1555, %v3204, %v3205
        %v3207 = vrot.slane %v3205, 4
        %v3208 = vrot.slane %v3109, 5
        %v3209 = vsel %vm1555, %v3207, %v3208
        %v3210 = vrot.slane %v3110, 5
        %v3211 = vrot.slane %v3210, 4
        %v3212 = vrot.slane %v3111, 5
        %v3213 = vsel %vm1555, %v3211, %v3212
        %v3214 = vrot.slane %v3212, 4
        %v3215 = vrot.slane %v3112, 5
        %v3216 = vsel %vm1555, %v3214, %v3215
        %v3217 = vrot.slane %v3113, 5
        %v3218 = vrot.slane %v3217, 4
        %v3219 = vrot.slane %v3114, 5
        %v3220 = vsel %vm1555, %v3218, %v3219
        %v3221 = vrot.slane %v3219, 4
        %v3222 = vrot.slane %v3115, 5
        %v3223 = vsel %vm1555, %v3221, %v3222
        %v3224 = vrot.slane %v3116, 5
        %v3225 = vrot.slane %v3224, 4
        %v3226 = vrot.slane %v3117, 5
        %v3227 = vsel %vm1555, %v3225, %v3226
        %v3228 = vrot.slane %v3226, 4
        %v3229 = vrot.slane %v3118, 5
        %v3230 = vsel %vm1555, %v3228, %v3229
        %v3231 = vrot.slane %v3119, 5
        %v3232 = vrot.slane %v3231, 4
        %v3233 = vrot.slane %v3120, 5
        %v3234 = vsel %vm1555, %v3232, %v3233
        %v3235 = vrot.slane %v3233, 4
        %v3236 = vrot.slane %v3121, 5
        %v3237 = vsel %vm1555, %v3235, %v3236
        %v3238 = vrot.slane %v3122, 5
        %v3239 = vrot.slane %v3238, 4
        %v3240 = vrot.slane %v3123, 5
        %v3241 = vsel %vm1555, %v3239, %v3240
        %v3242 = vrot.slane %v3240, 4
        %v3243 = vrot.slane %v3124, 5
        %v3244 = vsel %vm1555, %v3242, %v3243
        %v3245 = vrot.slane %v3125, 5
        %v3246 = vrot.slane %v3245, 4
        %v3247 = vrot.slane %v3126, 5
        %v3248 = vsel %vm1555, %v3246, %v3247
        %v3249 = vrot.slane %v3247, 4
        %v3250 = vrot.slane %v3127, 5
        %v3251 = vsel %vm1555, %v3249, %v3250
        %v3252 = vrot.slane %v3128, 5
        %v3253 = vrot.slane %v3252, 4
        %v3254 = vrot.slane %v3129, 5
        %v3255 = vsel %vm1555, %v3253, %v3254
        %v3256 = vrot.slane %v3254, 4
        %v3257 = vrot.slane %v3130, 5
        %v3258 = vsel %vm1555, %v3256, %v3257
        %v3259 = vrot.slane %v3131, 5
        %v3260 = vrot.slane %v3259, 4
        %v3261 = vrot.slane %v3132, 5
        %v3262 = vsel %vm1555, %v3260, %v3261
        %v3263 = vrot.slane %v3261, 4
        %v3264 = vrot.slane %v3133, 5
        %v3265 = vsel %vm1555, %v3263, %v3264
        %v3266 = vrot.slane %v3134, 5
        %v3267 = vrot.slane %v3266, 4
        %v3268 = vrot.slane %v3135, 5
        %v3269 = vsel %vm1555, %v3267, %v3268
        %v3270 = vrot.slane %v3268, 4
        %v3271 = vrot.slane %v3136, 5
        %v3272 = vsel %vm1555, %v3270, %v3271
        %v3273 = vrot.slane %v3137, 5
        %v3274 = vrot.slane %v3273, 4
        %v3275 = vrot.slane %v3138, 5
        %v3276 = vsel %vm1555, %v3274, %v3275
        %v3277 = vrot.slane %v3275, 4
        %v3278 = vrot.slane %v3139, 5
        %v3279 = vsel %vm1555, %v3277, %v3278
        %v3280 = vrot.slane %v3140, 5
        %v3281 = vrot.slane %v3280, 4
        %v3282 = vrot.slane %v3141, 5
        %v3283 = vsel %vm1555, %v3281, %v3282
        %v3284 = vrot.slane %v3282, 4
        %v3285 = vrot.slane %v3142, 5
        %v3286 = vsel %vm1555, %v3284, %v3285
        %v3287 = vrot.slane %v3143, 5
        %v3288 = vrot.slane %v3287, 4
        %v3289 = vrot.slane %v3144, 5
        %v3290 = vsel %vm1555, %v3288, %v3289
        %v3291 = vrot.slane %v3289, 4
        %v3292 = vrot.slane %v3145, 5
        %v3293 = vsel %vm1555, %v3291, %v3292
        %v3294 = vrot.slane %v3146, 5
        %v3295 = vrot.slane %v3294, 4
        %v3296 = vrot.slane %v3147, 5
        %v3297 = vsel %vm1555, %v3295, %v3296
        %v3298 = vrot.slane %v3296, 4
        %v3299 = vrot.slane %v3148, 5
        %v3300 = vsel %vm1555, %v3298, %v3299
        %v3301 = vrot.slane %v3149, 5
        %v3302 = vrot.slane %v3301, 4
        %v3303 = vrot.slane %v3150, 5
        %v3304 = vsel %vm1555, %v3302, %v3303
        %v3305 = vrot.slane %v3303, 4
        %v3306 = vrot.slane %v3151, 5
        %v3307 = vsel %vm1555, %v3305, %v3306
        %v3308 = vrot.slane %v3152, 5
        %v3309 = vrot.slane %v3308, 4
        %v3310 = vrot.slane %v3153, 5
        %v3311 = vsel %vm1555, %v3309, %v3310
        %v3312 = vrot.slane %v3310, 4
        %v3313 = vrot.slane %v3154, 5
        %v3314 = vsel %vm1555, %v3312, %v3313
        %v3315 = vld [vmem:[#allocation2] sm:$0xff]
        %v3316 = vld [vmem:[#allocation2 + $0x8] sm:$0xff]
        %v3317 = vld [vmem:[#allocation2 + $0x10] sm:$0xff]
        %v3318 = vld [vmem:[#allocation2 + $0x18] sm:$0xff]
        %v3319 = vld [vmem:[#allocation2 + $0x20] sm:$0xff]
        %v3320 = vld [vmem:[#allocation2 + $0x28] sm:$0xff]
        %v3321 = vld [vmem:[#allocation2 + $0x30] sm:$0xff]
        %v3322 = vld [vmem:[#allocation2 + $0x38] sm:$0xff]
        %v3323 = vld [vmem:[#allocation2 + $0x40] sm:$0xff]
        %v3324 = vld [vmem:[#allocation2 + $0x48] sm:$0xff]
        %v3325 = vld [vmem:[#allocation2 + $0x50] sm:$0xff]
        %v3326 = vld [vmem:[#allocation2 + $0x58] sm:$0xff]
        %v3327 = vld [vmem:[#allocation2 + $0x60] sm:$0xff]
        %v3328 = vld [vmem:[#allocation2 + $0x68] sm:$0xff]
        %v3329 = vld [vmem:[#allocation2 + $0x70] sm:$0xff]
        %v3330 = vld [vmem:[#allocation2 + $0x78] sm:$0xff]
        %v3331 = vld [vmem:[#allocation2 + $0x80] sm:$0xff]
        %v3332 = vld [vmem:[#allocation2 + $0x88] sm:$0xff]
        %v3333 = vld [vmem:[#allocation2 + $0x90] sm:$0xff]
        %v3334 = vld [vmem:[#allocation2 + $0x98] sm:$0xff]
        %v3335 = vld [vmem:[#allocation2 + $0xa0] sm:$0xff]
        %v3336 = vld [vmem:[#allocation2 + $0xa8] sm:$0xff]
        %v3337 = vld [vmem:[#allocation2 + $0xb0] sm:$0xff]
        %v3338 = vld [vmem:[#allocation2 + $0xb8] sm:$0xff]
        %v3339 = vld [vmem:[#allocation2 + $0xc0] sm:$0xff]
        %v3340 = vld [vmem:[#allocation2 + $0xc8] sm:$0xff]
        %v3341 = vld [vmem:[#allocation2 + $0xd0] sm:$0xff]
        %v3342 = vld [vmem:[#allocation2 + $0xd8] sm:$0xff]
        %v3343 = vld [vmem:[#allocation2 + $0xe0] sm:$0xff]
        %v3344 = vld [vmem:[#allocation2 + $0xe8] sm:$0xff]
        %v3345 = vld [vmem:[#allocation2 + $0xf0] sm:$0xff]
        %v3346 = vld [vmem:[#allocation2 + $0xf8] sm:$0xff]
        %s3347 = scalar_lea.vmem %s1, 320
        %v3348 = vld [vmem:[%s3347] sm:$0xf]
        %v3349 = vld [vmem:[%s3347 + $0x4] sm:$0xf]
        %v3350 = vld [vmem:[%s3347 + $0x8] sm:$0xf]
        %v3351 = vld [vmem:[%s3347 + $0xc] sm:$0xf]
        %v3352 = vld [vmem:[%s3347 + $0x10] sm:$0xf]
        %v3353 = vld [vmem:[%s3347 + $0x14] sm:$0xf]
        %v3354 = vld [vmem:[%s3347 + $0x18] sm:$0xf]
        %v3355 = vld [vmem:[%s3347 + $0x1c] sm:$0xf]
        %v3356 = vld [vmem:[%s3347 + $0x20] sm:$0xf]
        %v3357 = vld [vmem:[%s3347 + $0x24] sm:$0xf]
        %v3358 = vld [vmem:[%s3347 + $0x28] sm:$0xf]
        %v3359 = vld [vmem:[%s3347 + $0x2c] sm:$0xf]
        %v3360 = vld [vmem:[%s3347 + $0x30] sm:$0xf]
        %v3361 = vld [vmem:[%s3347 + $0x34] sm:$0xf]
        %v3362 = vld [vmem:[%s3347 + $0x38] sm:$0xf]
        %v3363 = vld [vmem:[%s3347 + $0x3c] sm:$0xf]
        %v3364 = vunpack.c.l.b16 %v3206
        %v3365 = vunpack.c.l.b16 %v3209
        %v3366 = vunpack.c.l.b16 %v3213
        %v3367 = vunpack.c.l.b16 %v3216
        %v3368 = vunpack.c.l.b16 %v3220
        %v3369 = vunpack.c.l.b16 %v3223
        %v3370 = vunpack.c.l.b16 %v3227
        %v3371 = vunpack.c.l.b16 %v3230
        %v3372 = vunpack.c.l.b16 %v3234
        %v3373 = vunpack.c.l.b16 %v3237
        %v3374 = vunpack.c.l.b16 %v3241
        %v3375 = vunpack.c.l.b16 %v3244
        %v3376 = vunpack.c.l.b16 %v3248
        %v3377 = vunpack.c.l.b16 %v3251
        %v3378 = vunpack.c.l.b16 %v3255
        %v3379 = vunpack.c.l.b16 %v3258
        %v3380 = vunpack.c.l.b16 %v3262
        %v3381 = vunpack.c.l.b16 %v3265
        %v3382 = vunpack.c.l.b16 %v3269
        %v3383 = vunpack.c.l.b16 %v3272
        %v3384 = vunpack.c.l.b16 %v3276
        %v3385 = vunpack.c.l.b16 %v3279
        %v3386 = vunpack.c.l.b16 %v3283
        %v3387 = vunpack.c.l.b16 %v3286
        %v3388 = vunpack.c.l.b16 %v3290
        %v3389 = vunpack.c.l.b16 %v3293
        %v3390 = vunpack.c.l.b16 %v3297
        %v3391 = vunpack.c.l.b16 %v3300
        %v3392 = vunpack.c.l.b16 %v3304
        %v3393 = vunpack.c.l.b16 %v3307
        %v3394 = vunpack.c.l.b16 %v3311
        %v3395 = vunpack.c.l.b16 %v3314
        %v3396 = vpack.c.b16 %v3365, %v3364
        %v3397 = vpack.c.b16 %v3367, %v3366
        %v3398 = vpack.c.b16 %v3369, %v3368
        %v3399 = vpack.c.b16 %v3371, %v3370
        %v3400 = vpack.c.b16 %v3373, %v3372
        %v3401 = vpack.c.b16 %v3375, %v3374
        %v3402 = vpack.c.b16 %v3377, %v3376
        %v3403 = vpack.c.b16 %v3379, %v3378
        %v3404 = vpack.c.b16 %v3381, %v3380
        %v3405 = vpack.c.b16 %v3383, %v3382
        %v3406 = vpack.c.b16 %v3385, %v3384
        %v3407 = vpack.c.b16 %v3387, %v3386
        %v3408 = vpack.c.b16 %v3389, %v3388
        %v3409 = vpack.c.b16 %v3391, %v3390
        %v3410 = vpack.c.b16 %v3393, %v3392
        %v3411 = vpack.c.b16 %v3395, %v3394
        %v3444 = vunpack.c.l.b16 %v3348
        %v3445 = vunpack.c.l.b16 %v3349
        %v3446 = vunpack.c.l.b16 %v3350
        %v3447 = vunpack.c.l.b16 %v3351
        %v3448 = vunpack.c.l.b16 %v3352
        %v3449 = vunpack.c.l.b16 %v3353
        %v3450 = vunpack.c.l.b16 %v3354
        %v3451 = vunpack.c.l.b16 %v3355
        %v3452 = vunpack.c.l.b16 %v3356
        %v3453 = vunpack.c.l.b16 %v3357
        %v3454 = vunpack.c.l.b16 %v3358
        %v3455 = vunpack.c.l.b16 %v3359
        %v3456 = vunpack.c.l.b16 %v3360
        %v3457 = vunpack.c.l.b16 %v3361
        %v3458 = vunpack.c.l.b16 %v3362
        %v3459 = vunpack.c.l.b16 %v3363
        %v3460 = vpack.c.b16 %v3445, %v3444
        %v3461 = vpack.c.b16 %v3447, %v3446
        %v3462 = vpack.c.b16 %v3449, %v3448
        %v3463 = vpack.c.b16 %v3451, %v3450
        %v3464 = vpack.c.b16 %v3453, %v3452
        %v3465 = vpack.c.b16 %v3455, %v3454
        %v3466 = vpack.c.b16 %v3457, %v3456
        %v3467 = vpack.c.b16 %v3459, %v3458
        %3476 = vmatpush.bf16.msra.mxu0 %v3467
        %3477 = vmatpush.bf16.msra.mxu0 %v3466
        %3478 = vmatpush.bf16.msra.mxu0 %v3465
        %3479 = vmatpush.bf16.msra.mxu0 %v3464
        %3480 = vmatpush.bf16.msra.mxu0 %v3463
        %3481 = vmatpush.bf16.msra.mxu0 %v3462
        %3482 = vmatpush.bf16.msra.mxu0 %v3461
        %3483 = vmatpush.bf16.msra.mxu0 %v3460
        %3484 = vmatmul.bf16.gmra.mxu0 %v3396
        %v3485 = vpop.f32.mrf.mxu0
        %v3486 = vadd.f32 0.0, %v3485
        %v3487 = vpop.f32.mrf.mxu0
        %v3488 = vadd.f32 0.0, %v3487
        %3489 = vmatmul.bf16.gmra.mxu0 %v3397
        %v3490 = vpop.f32.mrf.mxu0
        %v3491 = vadd.f32 0.0, %v3490
        %v3492 = vpop.f32.mrf.mxu0
        %v3493 = vadd.f32 0.0, %v3492
        %3494 = vmatmul.bf16.gmra.mxu0 %v3398
        %v3495 = vpop.f32.mrf.mxu0
        %v3496 = vadd.f32 0.0, %v3495
        %v3497 = vpop.f32.mrf.mxu0
        %v3498 = vadd.f32 0.0, %v3497
        %3499 = vmatmul.bf16.gmra.mxu0 %v3399
        %v3500 = vpop.f32.mrf.mxu0
        %v3501 = vadd.f32 0.0, %v3500
        %v3502 = vpop.f32.mrf.mxu0
        %v3503 = vadd.f32 0.0, %v3502
        %3504 = vmatmul.bf16.gmra.mxu0 %v3400
        %v3505 = vpop.f32.mrf.mxu0
        %v3506 = vadd.f32 0.0, %v3505
        %v3507 = vpop.f32.mrf.mxu0
        %v3508 = vadd.f32 0.0, %v3507
        %3509 = vmatmul.bf16.gmra.mxu0 %v3401
        %v3510 = vpop.f32.mrf.mxu0
        %v3511 = vadd.f32 0.0, %v3510
        %v3512 = vpop.f32.mrf.mxu0
        %v3513 = vadd.f32 0.0, %v3512
        %3514 = vmatmul.bf16.gmra.mxu0 %v3402
        %v3515 = vpop.f32.mrf.mxu0
        %v3516 = vadd.f32 0.0, %v3515
        %v3517 = vpop.f32.mrf.mxu0
        %v3518 = vadd.f32 0.0, %v3517
        %3519 = vmatmul.bf16.gmra.mxu0 %v3403
        %v3520 = vpop.f32.mrf.mxu0
        %v3521 = vadd.f32 0.0, %v3520
        %v3522 = vpop.f32.mrf.mxu0
        %v3523 = vadd.f32 0.0, %v3522
        %3524 = vmatmul.bf16.gmra.mxu0 %v3404
        %v3525 = vpop.f32.mrf.mxu0
        %v3526 = vadd.f32 0.0, %v3525
        %v3527 = vpop.f32.mrf.mxu0
        %v3528 = vadd.f32 0.0, %v3527
        %3529 = vmatmul.bf16.gmra.mxu0 %v3405
        %v3530 = vpop.f32.mrf.mxu0
        %v3531 = vadd.f32 0.0, %v3530
        %v3532 = vpop.f32.mrf.mxu0
        %v3533 = vadd.f32 0.0, %v3532
        %3534 = vmatmul.bf16.gmra.mxu0 %v3406
        %v3535 = vpop.f32.mrf.mxu0
        %v3536 = vadd.f32 0.0, %v3535
        %v3537 = vpop.f32.mrf.mxu0
        %v3538 = vadd.f32 0.0, %v3537
        %3539 = vmatmul.bf16.gmra.mxu0 %v3407
        %v3540 = vpop.f32.mrf.mxu0
        %v3541 = vadd.f32 0.0, %v3540
        %v3542 = vpop.f32.mrf.mxu0
        %v3543 = vadd.f32 0.0, %v3542
        %3544 = vmatmul.bf16.gmra.mxu0 %v3408
        %v3545 = vpop.f32.mrf.mxu0
        %v3546 = vadd.f32 0.0, %v3545
        %v3547 = vpop.f32.mrf.mxu0
        %v3548 = vadd.f32 0.0, %v3547
        %3549 = vmatmul.bf16.gmra.mxu0 %v3409
        %v3550 = vpop.f32.mrf.mxu0
        %v3551 = vadd.f32 0.0, %v3550
        %v3552 = vpop.f32.mrf.mxu0
        %v3553 = vadd.f32 0.0, %v3552
        %3554 = vmatmul.bf16.gmra.mxu0 %v3410
        %v3555 = vpop.f32.mrf.mxu0
        %v3556 = vadd.f32 0.0, %v3555
        %v3557 = vpop.f32.mrf.mxu0
        %v3558 = vadd.f32 0.0, %v3557
        %3559 = vmatmul.bf16.gmra.mxu0 %v3411
        %v3560 = vpop.f32.mrf.mxu0
        %v3561 = vadd.f32 0.0, %v3560
        %v3562 = vpop.f32.mrf.mxu0
        %v3563 = vadd.f32 0.0, %v3562
        %3564 = vdwg.mxu0
        %v3565 = vadd.f32 %v3315, %v3486
        %v3566 = vadd.f32 %v3316, %v3488
        %v3567 = vadd.f32 %v3317, %v3491
        %v3568 = vadd.f32 %v3318, %v3493
        %v3569 = vadd.f32 %v3319, %v3496
        %v3570 = vadd.f32 %v3320, %v3498
        %v3571 = vadd.f32 %v3321, %v3501
        %v3572 = vadd.f32 %v3322, %v3503
        %v3573 = vadd.f32 %v3323, %v3506
        %v3574 = vadd.f32 %v3324, %v3508
        %v3575 = vadd.f32 %v3325, %v3511
        %v3576 = vadd.f32 %v3326, %v3513
        %v3577 = vadd.f32 %v3327, %v3516
        %v3578 = vadd.f32 %v3328, %v3518
        %v3579 = vadd.f32 %v3329, %v3521
        %v3580 = vadd.f32 %v3330, %v3523
        %v3581 = vadd.f32 %v3331, %v3526
        %v3582 = vadd.f32 %v3332, %v3528
        %v3583 = vadd.f32 %v3333, %v3531
        %v3584 = vadd.f32 %v3334, %v3533
        %v3585 = vadd.f32 %v3335, %v3536
        %v3586 = vadd.f32 %v3336, %v3538
        %v3587 = vadd.f32 %v3337, %v3541
        %v3588 = vadd.f32 %v3338, %v3543
        %v3589 = vadd.f32 %v3339, %v3546
        %v3590 = vadd.f32 %v3340, %v3548
        %v3591 = vadd.f32 %v3341, %v3551
        %v3592 = vadd.f32 %v3342, %v3553
        %v3593 = vadd.f32 %v3343, %v3556
        %v3594 = vadd.f32 %v3344, %v3558
        %v3595 = vadd.f32 %v3345, %v3561
        %v3596 = vadd.f32 %v3346, %v3563
        %3597 = vst [vmem:[#allocation2] sm:$0xff] %v3565
        %3598 = vst [vmem:[#allocation2 + $0x8] sm:$0xff] %v3566
        %3599 = vst [vmem:[#allocation2 + $0x10] sm:$0xff] %v3567
        %3600 = vst [vmem:[#allocation2 + $0x18] sm:$0xff] %v3568
        %3601 = vst [vmem:[#allocation2 + $0x20] sm:$0xff] %v3569
        %3602 = vst [vmem:[#allocation2 + $0x28] sm:$0xff] %v3570
        %3603 = vst [vmem:[#allocation2 + $0x30] sm:$0xff] %v3571
        %3604 = vst [vmem:[#allocation2 + $0x38] sm:$0xff] %v3572
        %3605 = vst [vmem:[#allocation2 + $0x40] sm:$0xff] %v3573
        %3606 = vst [vmem:[#allocation2 + $0x48] sm:$0xff] %v3574
        %3607 = vst [vmem:[#allocation2 + $0x50] sm:$0xff] %v3575
        %3608 = vst [vmem:[#allocation2 + $0x58] sm:$0xff] %v3576
        %3609 = vst [vmem:[#allocation2 + $0x60] sm:$0xff] %v3577
        %3610 = vst [vmem:[#allocation2 + $0x68] sm:$0xff] %v3578
        %3611 = vst [vmem:[#allocation2 + $0x70] sm:$0xff] %v3579
        %3612 = vst [vmem:[#allocation2 + $0x78] sm:$0xff] %v3580
        %3613 = vst [vmem:[#allocation2 + $0x80] sm:$0xff] %v3581
        %3614 = vst [vmem:[#allocation2 + $0x88] sm:$0xff] %v3582
        %3615 = vst [vmem:[#allocation2 + $0x90] sm:$0xff] %v3583
        %3616 = vst [vmem:[#allocation2 + $0x98] sm:$0xff] %v3584
        %3617 = vst [vmem:[#allocation2 + $0xa0] sm:$0xff] %v3585
        %3618 = vst [vmem:[#allocation2 + $0xa8] sm:$0xff] %v3586
        %3619 = vst [vmem:[#allocation2 + $0xb0] sm:$0xff] %v3587
        %3620 = vst [vmem:[#allocation2 + $0xb8] sm:$0xff] %v3588
        %3621 = vst [vmem:[#allocation2 + $0xc0] sm:$0xff] %v3589
        %3622 = vst [vmem:[#allocation2 + $0xc8] sm:$0xff] %v3590
        %3623 = vst [vmem:[#allocation2 + $0xd0] sm:$0xff] %v3591
        %3624 = vst [vmem:[#allocation2 + $0xd8] sm:$0xff] %v3592
        %3625 = vst [vmem:[#allocation2 + $0xe0] sm:$0xff] %v3593
        %3626 = vst [vmem:[#allocation2 + $0xe8] sm:$0xff] %v3594
        %3627 = vst [vmem:[#allocation2 + $0xf0] sm:$0xff] %v3595
        %3628 = vst [vmem:[#allocation2 + $0xf8] sm:$0xff] %v3596
        %s3629 = scalar_lea.vmem %s293, 24
        %v3630 = vld [vmem:[%s3629] sm:$0xf]
        %v3631 = vld [vmem:[%s3629 + $0x4] sm:$0xf]
        %v3632 = vld [vmem:[%s3629 + $0xc] sm:$0xf]
        %v3633 = vld [vmem:[%s3629 + $0x10] sm:$0xf]
        %v3634 = vld [vmem:[%s3629 + $0x18] sm:$0xf]
        %v3635 = vld [vmem:[%s3629 + $0x1c] sm:$0xf]
        %v3636 = vld [vmem:[%s3629 + $0x24] sm:$0xf]
        %v3637 = vld [vmem:[%s3629 + $0x28] sm:$0xf]
        %v3638 = vld [vmem:[%s3629 + $0x30] sm:$0xf]
        %v3639 = vld [vmem:[%s3629 + $0x34] sm:$0xf]
        %v3640 = vld [vmem:[%s3629 + $0x3c] sm:$0xf]
        %v3641 = vld [vmem:[%s3629 + $0x40] sm:$0xf]
        %v3642 = vld [vmem:[%s3629 + $0x48] sm:$0xf]
        %v3643 = vld [vmem:[%s3629 + $0x4c] sm:$0xf]
        %v3644 = vld [vmem:[%s3629 + $0x54] sm:$0xf]
        %v3645 = vld [vmem:[%s3629 + $0x58] sm:$0xf]
        %v3646 = vld [vmem:[%s3629 + $0x60] sm:$0xf]
        %v3647 = vld [vmem:[%s3629 + $0x64] sm:$0xf]
        %v3648 = vld [vmem:[%s3629 + $0x6c] sm:$0xf]
        %v3649 = vld [vmem:[%s3629 + $0x70] sm:$0xf]
        %v3650 = vld [vmem:[%s3629 + $0x78] sm:$0xf]
        %v3651 = vld [vmem:[%s3629 + $0x7c] sm:$0xf]
        %v3652 = vld [vmem:[%s3629 + $0x84] sm:$0xf]
        %v3653 = vld [vmem:[%s3629 + $0x88] sm:$0xf]
        %v3654 = vld [vmem:[%s3629 + $0x90] sm:$0xf]
        %v3655 = vld [vmem:[%s3629 + $0x94] sm:$0xf]
        %v3656 = vld [vmem:[%s3629 + $0x9c] sm:$0xf]
        %v3657 = vld [vmem:[%s3629 + $0xa0] sm:$0xf]
        %v3658 = vld [vmem:[%s3629 + $0xa8] sm:$0xf]
        %v3659 = vld [vmem:[%s3629 + $0xac] sm:$0xf]
        %v3660 = vld [vmem:[%s3629 + $0xb4] sm:$0xf]
        %v3661 = vld [vmem:[%s3629 + $0xb8] sm:$0xf]
        %v3662 = vld [vmem:[#allocation2] sm:$0xff]
        %v3663 = vld [vmem:[#allocation2 + $0x8] sm:$0xff]
        %v3664 = vld [vmem:[#allocation2 + $0x10] sm:$0xff]
        %v3665 = vld [vmem:[#allocation2 + $0x18] sm:$0xff]
        %v3666 = vld [vmem:[#allocation2 + $0x20] sm:$0xff]
        %v3667 = vld [vmem:[#allocation2 + $0x28] sm:$0xff]
        %v3668 = vld [vmem:[#allocation2 + $0x30] sm:$0xff]
        %v3669 = vld [vmem:[#allocation2 + $0x38] sm:$0xff]
        %v3670 = vld [vmem:[#allocation2 + $0x40] sm:$0xff]
        %v3671 = vld [vmem:[#allocation2 + $0x48] sm:$0xff]
        %v3672 = vld [vmem:[#allocation2 + $0x50] sm:$0xff]
        %v3673 = vld [vmem:[#allocation2 + $0x58] sm:$0xff]
        %v3674 = vld [vmem:[#allocation2 + $0x60] sm:$0xff]
        %v3675 = vld [vmem:[#allocation2 + $0x68] sm:$0xff]
        %v3676 = vld [vmem:[#allocation2 + $0x70] sm:$0xff]
        %v3677 = vld [vmem:[#allocation2 + $0x78] sm:$0xff]
        %v3678 = vld [vmem:[#allocation2 + $0x80] sm:$0xff]
        %v3679 = vld [vmem:[#allocation2 + $0x88] sm:$0xff]
        %v3680 = vld [vmem:[#allocation2 + $0x90] sm:$0xff]
        %v3681 = vld [vmem:[#allocation2 + $0x98] sm:$0xff]
        %v3682 = vld [vmem:[#allocation2 + $0xa0] sm:$0xff]
        %v3683 = vld [vmem:[#allocation2 + $0xa8] sm:$0xff]
        %v3684 = vld [vmem:[#allocation2 + $0xb0] sm:$0xff]
        %v3685 = vld [vmem:[#allocation2 + $0xb8] sm:$0xff]
        %v3686 = vld [vmem:[#allocation2 + $0xc0] sm:$0xff]
        %v3687 = vld [vmem:[#allocation2 + $0xc8] sm:$0xff]
        %v3688 = vld [vmem:[#allocation2 + $0xd0] sm:$0xff]
        %v3689 = vld [vmem:[#allocation2 + $0xd8] sm:$0xff]
        %v3690 = vld [vmem:[#allocation2 + $0xe0] sm:$0xff]
        %v3691 = vld [vmem:[#allocation2 + $0xe8] sm:$0xff]
        %v3692 = vld [vmem:[#allocation2 + $0xf0] sm:$0xff]
        %v3693 = vld [vmem:[#allocation2 + $0xf8] sm:$0xff]
        %s3694 = scalar_lea.vmem %s1, 384
        %v3695 = vld [vmem:[%s3694] sm:$0xf]
        %v3696 = vld [vmem:[%s3694 + $0x4] sm:$0xf]
        %v3697 = vld [vmem:[%s3694 + $0x8] sm:$0xf]
        %v3698 = vld [vmem:[%s3694 + $0xc] sm:$0xf]
        %v3699 = vld [vmem:[%s3694 + $0x10] sm:$0xf]
        %v3700 = vld [vmem:[%s3694 + $0x14] sm:$0xf]
        %v3701 = vld [vmem:[%s3694 + $0x18] sm:$0xf]
        %v3702 = vld [vmem:[%s3694 + $0x1c] sm:$0xf]
        %v3703 = vld [vmem:[%s3694 + $0x20] sm:$0xf]
        %v3704 = vld [vmem:[%s3694 + $0x24] sm:$0xf]
        %v3705 = vld [vmem:[%s3694 + $0x28] sm:$0xf]
        %v3706 = vld [vmem:[%s3694 + $0x2c] sm:$0xf]
        %v3707 = vld [vmem:[%s3694 + $0x30] sm:$0xf]
        %v3708 = vld [vmem:[%s3694 + $0x34] sm:$0xf]
        %v3709 = vld [vmem:[%s3694 + $0x38] sm:$0xf]
        %v3710 = vld [vmem:[%s3694 + $0x3c] sm:$0xf]
        %v3743 = vunpack.c.l.b16 %v3630
        %v3744 = vunpack.c.l.b16 %v3631
        %v3745 = vunpack.c.l.b16 %v3632
        %v3746 = vunpack.c.l.b16 %v3633
        %v3747 = vunpack.c.l.b16 %v3634
        %v3748 = vunpack.c.l.b16 %v3635
        %v3749 = vunpack.c.l.b16 %v3636
        %v3750 = vunpack.c.l.b16 %v3637
        %v3751 = vunpack.c.l.b16 %v3638
        %v3752 = vunpack.c.l.b16 %v3639
        %v3753 = vunpack.c.l.b16 %v3640
        %v3754 = vunpack.c.l.b16 %v3641
        %v3755 = vunpack.c.l.b16 %v3642
        %v3756 = vunpack.c.l.b16 %v3643
        %v3757 = vunpack.c.l.b16 %v3644
        %v3758 = vunpack.c.l.b16 %v3645
        %v3759 = vunpack.c.l.b16 %v3646
        %v3760 = vunpack.c.l.b16 %v3647
        %v3761 = vunpack.c.l.b16 %v3648
        %v3762 = vunpack.c.l.b16 %v3649
        %v3763 = vunpack.c.l.b16 %v3650
        %v3764 = vunpack.c.l.b16 %v3651
        %v3765 = vunpack.c.l.b16 %v3652
        %v3766 = vunpack.c.l.b16 %v3653
        %v3767 = vunpack.c.l.b16 %v3654
        %v3768 = vunpack.c.l.b16 %v3655
        %v3769 = vunpack.c.l.b16 %v3656
        %v3770 = vunpack.c.l.b16 %v3657
        %v3771 = vunpack.c.l.b16 %v3658
        %v3772 = vunpack.c.l.b16 %v3659
        %v3773 = vunpack.c.l.b16 %v3660
        %v3774 = vunpack.c.l.b16 %v3661
        %v3775 = vpack.c.b16 %v3744, %v3743
        %v3776 = vpack.c.b16 %v3746, %v3745
        %v3777 = vpack.c.b16 %v3748, %v3747
        %v3778 = vpack.c.b16 %v3750, %v3749
        %v3779 = vpack.c.b16 %v3752, %v3751
        %v3780 = vpack.c.b16 %v3754, %v3753
        %v3781 = vpack.c.b16 %v3756, %v3755
        %v3782 = vpack.c.b16 %v3758, %v3757
        %v3783 = vpack.c.b16 %v3760, %v3759
        %v3784 = vpack.c.b16 %v3762, %v3761
        %v3785 = vpack.c.b16 %v3764, %v3763
        %v3786 = vpack.c.b16 %v3766, %v3765
        %v3787 = vpack.c.b16 %v3768, %v3767
        %v3788 = vpack.c.b16 %v3770, %v3769
        %v3789 = vpack.c.b16 %v3772, %v3771
        %v3790 = vpack.c.b16 %v3774, %v3773
        %v3823 = vunpack.c.l.b16 %v3695
        %v3824 = vunpack.c.l.b16 %v3696
        %v3825 = vunpack.c.l.b16 %v3697
        %v3826 = vunpack.c.l.b16 %v3698
        %v3827 = vunpack.c.l.b16 %v3699
        %v3828 = vunpack.c.l.b16 %v3700
        %v3829 = vunpack.c.l.b16 %v3701
        %v3830 = vunpack.c.l.b16 %v3702
        %v3831 = vunpack.c.l.b16 %v3703
        %v3832 = vunpack.c.l.b16 %v3704
        %v3833 = vunpack.c.l.b16 %v3705
        %v3834 = vunpack.c.l.b16 %v3706
        %v3835 = vunpack.c.l.b16 %v3707
        %v3836 = vunpack.c.l.b16 %v3708
        %v3837 = vunpack.c.l.b16 %v3709
        %v3838 = vunpack.c.l.b16 %v3710
        %v3839 = vpack.c.b16 %v3824, %v3823
        %v3840 = vpack.c.b16 %v3826, %v3825
        %v3841 = vpack.c.b16 %v3828, %v3827
        %v3842 = vpack.c.b16 %v3830, %v3829
        %v3843 = vpack.c.b16 %v3832, %v3831
        %v3844 = vpack.c.b16 %v3834, %v3833
        %v3845 = vpack.c.b16 %v3836, %v3835
        %v3846 = vpack.c.b16 %v3838, %v3837
        %3855 = vmatpush.bf16.msra.mxu0 %v3846
        %3856 = vmatpush.bf16.msra.mxu0 %v3845
        %3857 = vmatpush.bf16.msra.mxu0 %v3844
        %3858 = vmatpush.bf16.msra.mxu0 %v3843
        %3859 = vmatpush.bf16.msra.mxu0 %v3842
        %3860 = vmatpush.bf16.msra.mxu0 %v3841
        %3861 = vmatpush.bf16.msra.mxu0 %v3840
        %3862 = vmatpush.bf16.msra.mxu0 %v3839
        %3863 = vmatmul.bf16.gmra.mxu0 %v3775
        %v3864 = vpop.f32.mrf.mxu0
        %v3865 = vadd.f32 0.0, %v3864
        %v3866 = vpop.f32.mrf.mxu0
        %v3867 = vadd.f32 0.0, %v3866
        %3868 = vmatmul.bf16.gmra.mxu0 %v3776
        %v3869 = vpop.f32.mrf.mxu0
        %v3870 = vadd.f32 0.0, %v3869
        %v3871 = vpop.f32.mrf.mxu0
        %v3872 = vadd.f32 0.0, %v3871
        %3873 = vmatmul.bf16.gmra.mxu0 %v3777
        %v3874 = vpop.f32.mrf.mxu0
        %v3875 = vadd.f32 0.0, %v3874
        %v3876 = vpop.f32.mrf.mxu0
        %v3877 = vadd.f32 0.0, %v3876
        %3878 = vmatmul.bf16.gmra.mxu0 %v3778
        %v3879 = vpop.f32.mrf.mxu0
        %v3880 = vadd.f32 0.0, %v3879
        %v3881 = vpop.f32.mrf.mxu0
        %v3882 = vadd.f32 0.0, %v3881
        %3883 = vmatmul.bf16.gmra.mxu0 %v3779
        %v3884 = vpop.f32.mrf.mxu0
        %v3885 = vadd.f32 0.0, %v3884
        %v3886 = vpop.f32.mrf.mxu0
        %v3887 = vadd.f32 0.0, %v3886
        %3888 = vmatmul.bf16.gmra.mxu0 %v3780
        %v3889 = vpop.f32.mrf.mxu0
        %v3890 = vadd.f32 0.0, %v3889
        %v3891 = vpop.f32.mrf.mxu0
        %v3892 = vadd.f32 0.0, %v3891
        %3893 = vmatmul.bf16.gmra.mxu0 %v3781
        %v3894 = vpop.f32.mrf.mxu0
        %v3895 = vadd.f32 0.0, %v3894
        %v3896 = vpop.f32.mrf.mxu0
        %v3897 = vadd.f32 0.0, %v3896
        %3898 = vmatmul.bf16.gmra.mxu0 %v3782
        %v3899 = vpop.f32.mrf.mxu0
        %v3900 = vadd.f32 0.0, %v3899
        %v3901 = vpop.f32.mrf.mxu0
        %v3902 = vadd.f32 0.0, %v3901
        %3903 = vmatmul.bf16.gmra.mxu0 %v3783
        %v3904 = vpop.f32.mrf.mxu0
        %v3905 = vadd.f32 0.0, %v3904
        %v3906 = vpop.f32.mrf.mxu0
        %v3907 = vadd.f32 0.0, %v3906
        %3908 = vmatmul.bf16.gmra.mxu0 %v3784
        %v3909 = vpop.f32.mrf.mxu0
        %v3910 = vadd.f32 0.0, %v3909
        %v3911 = vpop.f32.mrf.mxu0
        %v3912 = vadd.f32 0.0, %v3911
        %3913 = vmatmul.bf16.gmra.mxu0 %v3785
        %v3914 = vpop.f32.mrf.mxu0
        %v3915 = vadd.f32 0.0, %v3914
        %v3916 = vpop.f32.mrf.mxu0
        %v3917 = vadd.f32 0.0, %v3916
        %3918 = vmatmul.bf16.gmra.mxu0 %v3786
        %v3919 = vpop.f32.mrf.mxu0
        %v3920 = vadd.f32 0.0, %v3919
        %v3921 = vpop.f32.mrf.mxu0
        %v3922 = vadd.f32 0.0, %v3921
        %3923 = vmatmul.bf16.gmra.mxu0 %v3787
        %v3924 = vpop.f32.mrf.mxu0
        %v3925 = vadd.f32 0.0, %v3924
        %v3926 = vpop.f32.mrf.mxu0
        %v3927 = vadd.f32 0.0, %v3926
        %3928 = vmatmul.bf16.gmra.mxu0 %v3788
        %v3929 = vpop.f32.mrf.mxu0
        %v3930 = vadd.f32 0.0, %v3929
        %v3931 = vpop.f32.mrf.mxu0
        %v3932 = vadd.f32 0.0, %v3931
        %3933 = vmatmul.bf16.gmra.mxu0 %v3789
        %v3934 = vpop.f32.mrf.mxu0
        %v3935 = vadd.f32 0.0, %v3934
        %v3936 = vpop.f32.mrf.mxu0
        %v3937 = vadd.f32 0.0, %v3936
        %3938 = vmatmul.bf16.gmra.mxu0 %v3790
        %v3939 = vpop.f32.mrf.mxu0
        %v3940 = vadd.f32 0.0, %v3939
        %v3941 = vpop.f32.mrf.mxu0
        %v3942 = vadd.f32 0.0, %v3941
        %3943 = vdwg.mxu0
        %v3944 = vadd.f32 %v3662, %v3865
        %v3945 = vadd.f32 %v3663, %v3867
        %v3946 = vadd.f32 %v3664, %v3870
        %v3947 = vadd.f32 %v3665, %v3872
        %v3948 = vadd.f32 %v3666, %v3875
        %v3949 = vadd.f32 %v3667, %v3877
        %v3950 = vadd.f32 %v3668, %v3880
        %v3951 = vadd.f32 %v3669, %v3882
        %v3952 = vadd.f32 %v3670, %v3885
        %v3953 = vadd.f32 %v3671, %v3887
        %v3954 = vadd.f32 %v3672, %v3890
        %v3955 = vadd.f32 %v3673, %v3892
        %v3956 = vadd.f32 %v3674, %v3895
        %v3957 = vadd.f32 %v3675, %v3897
        %v3958 = vadd.f32 %v3676, %v3900
        %v3959 = vadd.f32 %v3677, %v3902
        %v3960 = vadd.f32 %v3678, %v3905
        %v3961 = vadd.f32 %v3679, %v3907
        %v3962 = vadd.f32 %v3680, %v3910
        %v3963 = vadd.f32 %v3681, %v3912
        %v3964 = vadd.f32 %v3682, %v3915
        %v3965 = vadd.f32 %v3683, %v3917
        %v3966 = vadd.f32 %v3684, %v3920
        %v3967 = vadd.f32 %v3685, %v3922
        %v3968 = vadd.f32 %v3686, %v3925
        %v3969 = vadd.f32 %v3687, %v3927
        %v3970 = vadd.f32 %v3688, %v3930
        %v3971 = vadd.f32 %v3689, %v3932
        %v3972 = vadd.f32 %v3690, %v3935
        %v3973 = vadd.f32 %v3691, %v3937
        %v3974 = vadd.f32 %v3692, %v3940
        %v3975 = vadd.f32 %v3693, %v3942
        %3976 = vst [vmem:[#allocation2] sm:$0xff] %v3944
        %3977 = vst [vmem:[#allocation2 + $0x8] sm:$0xff] %v3945
        %3978 = vst [vmem:[#allocation2 + $0x10] sm:$0xff] %v3946
        %3979 = vst [vmem:[#allocation2 + $0x18] sm:$0xff] %v3947
        %3980 = vst [vmem:[#allocation2 + $0x20] sm:$0xff] %v3948
        %3981 = vst [vmem:[#allocation2 + $0x28] sm:$0xff] %v3949
        %3982 = vst [vmem:[#allocation2 + $0x30] sm:$0xff] %v3950
        %3983 = vst [vmem:[#allocation2 + $0x38] sm:$0xff] %v3951
        %3984 = vst [vmem:[#allocation2 + $0x40] sm:$0xff] %v3952
        %3985 = vst [vmem:[#allocation2 + $0x48] sm:$0xff] %v3953
        %3986 = vst [vmem:[#allocation2 + $0x50] sm:$0xff] %v3954
        %3987 = vst [vmem:[#allocation2 + $0x58] sm:$0xff] %v3955
        %3988 = vst [vmem:[#allocation2 + $0x60] sm:$0xff] %v3956
        %3989 = vst [vmem:[#allocation2 + $0x68] sm:$0xff] %v3957
        %3990 = vst [vmem:[#allocation2 + $0x70] sm:$0xff] %v3958
        %3991 = vst [vmem:[#allocation2 + $0x78] sm:$0xff] %v3959
        %3992 = vst [vmem:[#allocation2 + $0x80] sm:$0xff] %v3960
        %3993 = vst [vmem:[#allocation2 + $0x88] sm:$0xff] %v3961
        %3994 = vst [vmem:[#allocation2 + $0x90] sm:$0xff] %v3962
        %3995 = vst [vmem:[#allocation2 + $0x98] sm:$0xff] %v3963
        %3996 = vst [vmem:[#allocation2 + $0xa0] sm:$0xff] %v3964
        %3997 = vst [vmem:[#allocation2 + $0xa8] sm:$0xff] %v3965
        %3998 = vst [vmem:[#allocation2 + $0xb0] sm:$0xff] %v3966
        %3999 = vst [vmem:[#allocation2 + $0xb8] sm:$0xff] %v3967
        %4000 = vst [vmem:[#allocation2 + $0xc0] sm:$0xff] %v3968
        %4001 = vst [vmem:[#allocation2 + $0xc8] sm:$0xff] %v3969
        %4002 = vst [vmem:[#allocation2 + $0xd0] sm:$0xff] %v3970
        %4003 = vst [vmem:[#allocation2 + $0xd8] sm:$0xff] %v3971
        %4004 = vst [vmem:[#allocation2 + $0xe0] sm:$0xff] %v3972
        %4005 = vst [vmem:[#allocation2 + $0xe8] sm:$0xff] %v3973
        %4006 = vst [vmem:[#allocation2 + $0xf0] sm:$0xff] %v3974
        %4007 = vst [vmem:[#allocation2 + $0xf8] sm:$0xff] %v3975
        %v4008 = vld [vmem:[%s3629] sm:$0xf]
        %v4009 = vld [vmem:[%s3629 + $0x4] sm:$0xf]
        %v4010 = vld [vmem:[%s3629 + $0x8] sm:$0x1]
        %v4011 = vld [vmem:[%s3629 + $0xc] sm:$0xf]
        %v4012 = vld [vmem:[%s3629 + $0x10] sm:$0xf]
        %v4013 = vld [vmem:[%s3629 + $0x14] sm:$0x1]
        %v4014 = vld [vmem:[%s3629 + $0x18] sm:$0xf]
        %v4015 = vld [vmem:[%s3629 + $0x1c] sm:$0xf]
        %v4016 = vld [vmem:[%s3629 + $0x20] sm:$0x1]
        %v4017 = vld [vmem:[%s3629 + $0x24] sm:$0xf]
        %v4018 = vld [vmem:[%s3629 + $0x28] sm:$0xf]
        %v4019 = vld [vmem:[%s3629 + $0x2c] sm:$0x1]
        %v4020 = vld [vmem:[%s3629 + $0x30] sm:$0xf]
        %v4021 = vld [vmem:[%s3629 + $0x34] sm:$0xf]
        %v4022 = vld [vmem:[%s3629 + $0x38] sm:$0x1]
        %v4023 = vld [vmem:[%s3629 + $0x3c] sm:$0xf]
        %v4024 = vld [vmem:[%s3629 + $0x40] sm:$0xf]
        %v4025 = vld [vmem:[%s3629 + $0x44] sm:$0x1]
        %v4026 = vld [vmem:[%s3629 + $0x48] sm:$0xf]
        %v4027 = vld [vmem:[%s3629 + $0x4c] sm:$0xf]
        %v4028 = vld [vmem:[%s3629 + $0x50] sm:$0x1]
        %v4029 = vld [vmem:[%s3629 + $0x54] sm:$0xf]
        %v4030 = vld [vmem:[%s3629 + $0x58] sm:$0xf]
        %v4031 = vld [vmem:[%s3629 + $0x5c] sm:$0x1]
        %v4032 = vld [vmem:[%s3629 + $0x60] sm:$0xf]
        %v4033 = vld [vmem:[%s3629 + $0x64] sm:$0xf]
        %v4034 = vld [vmem:[%s3629 + $0x68] sm:$0x1]
        %v4035 = vld [vmem:[%s3629 + $0x6c] sm:$0xf]
        %v4036 = vld [vmem:[%s3629 + $0x70] sm:$0xf]
        %v4037 = vld [vmem:[%s3629 + $0x74] sm:$0x1]
        %v4038 = vld [vmem:[%s3629 + $0x78] sm:$0xf]
        %v4039 = vld [vmem:[%s3629 + $0x7c] sm:$0xf]
        %v4040 = vld [vmem:[%s3629 + $0x80] sm:$0x1]
        %v4041 = vld [vmem:[%s3629 + $0x84] sm:$0xf]
        %v4042 = vld [vmem:[%s3629 + $0x88] sm:$0xf]
        %v4043 = vld [vmem:[%s3629 + $0x8c] sm:$0x1]
        %v4044 = vld [vmem:[%s3629 + $0x90] sm:$0xf]
        %v4045 = vld [vmem:[%s3629 + $0x94] sm:$0xf]
        %v4046 = vld [vmem:[%s3629 + $0x98] sm:$0x1]
        %v4047 = vld [vmem:[%s3629 + $0x9c] sm:$0xf]
        %v4048 = vld [vmem:[%s3629 + $0xa0] sm:$0xf]
        %v4049 = vld [vmem:[%s3629 + $0xa4] sm:$0x1]
        %v4050 = vld [vmem:[%s3629 + $0xa8] sm:$0xf]
        %v4051 = vld [vmem:[%s3629 + $0xac] sm:$0xf]
        %v4052 = vld [vmem:[%s3629 + $0xb0] sm:$0x1]
        %v4053 = vld [vmem:[%s3629 + $0xb4] sm:$0xf]
        %v4054 = vld [vmem:[%s3629 + $0xb8] sm:$0xf]
        %v4055 = vld [vmem:[%s3629 + $0xbc] sm:$0x1]
        %v4057 = vshrl.u32 %v4008, 16
        %v4059 = vrot.slane %v4057, 4
        %v4060 = vshll.u32 %v4008, 16
        %v4062 = vrot.slane %v4060, 5
        %v4063 = vor.u32 %v4059, %v4062
        %v4064 = vrot.slane %v4063, 4
        %v4066 = vshll.u32 %v4009, 16
        %v4068 = vrot.slane %v4066, 5
        %v4069 = vsel %vm758, %v4064, %v4068
        %v4070 = vshrl.u32 %v4009, 16
        %v4072 = vrot.slane %v4070, 4
        %v4073 = vor.u32 %v4072, %v4068
        %v4074 = vrot.slane %v4073, 4
        %v4076 = vshll.u32 %v4010, 16
        %v4078 = vrot.slane %v4076, 5
        %v4079 = vsel %vm758, %v4074, %v4078
        %v4081 = vshrl.u32 %v4011, 16
        %v4083 = vrot.slane %v4081, 4
        %v4084 = vshll.u32 %v4011, 16
        %v4086 = vrot.slane %v4084, 5
        %v4087 = vor.u32 %v4083, %v4086
        %v4088 = vrot.slane %v4087, 4
        %v4090 = vshll.u32 %v4012, 16
        %v4092 = vrot.slane %v4090, 5
        %v4093 = vsel %vm758, %v4088, %v4092
        %v4094 = vshrl.u32 %v4012, 16
        %v4096 = vrot.slane %v4094, 4
        %v4097 = vor.u32 %v4096, %v4092
        %v4098 = vrot.slane %v4097, 4
        %v4100 = vshll.u32 %v4013, 16
        %v4102 = vrot.slane %v4100, 5
        %v4103 = vsel %vm758, %v4098, %v4102
        %v4105 = vshrl.u32 %v4014, 16
        %v4107 = vrot.slane %v4105, 4
        %v4108 = vshll.u32 %v4014, 16
        %v4110 = vrot.slane %v4108, 5
        %v4111 = vor.u32 %v4107, %v4110
        %v4112 = vrot.slane %v4111, 4
        %v4114 = vshll.u32 %v4015, 16
        %v4116 = vrot.slane %v4114, 5
        %v4117 = vsel %vm758, %v4112, %v4116
        %v4118 = vshrl.u32 %v4015, 16
        %v4120 = vrot.slane %v4118, 4
        %v4121 = vor.u32 %v4120, %v4116
        %v4122 = vrot.slane %v4121, 4
        %v4124 = vshll.u32 %v4016, 16
        %v4126 = vrot.slane %v4124, 5
        %v4127 = vsel %vm758, %v4122, %v4126
        %v4129 = vshrl.u32 %v4017, 16
        %v4131 = vrot.slane %v4129, 4
        %v4132 = vshll.u32 %v4017, 16
        %v4134 = vrot.slane %v4132, 5
        %v4135 = vor.u32 %v4131, %v4134
        %v4136 = vrot.slane %v4135, 4
        %v4138 = vshll.u32 %v4018, 16
        %v4140 = vrot.slane %v4138, 5
        %v4141 = vsel %vm758, %v4136, %v4140
        %v4142 = vshrl.u32 %v4018, 16
        %v4144 = vrot.slane %v4142, 4
        %v4145 = vor.u32 %v4144, %v4140
        %v4146 = vrot.slane %v4145, 4
        %v4148 = vshll.u32 %v4019, 16
        %v4150 = vrot.slane %v4148, 5
        %v4151 = vsel %vm758, %v4146, %v4150
        %v4153 = vshrl.u32 %v4020, 16
        %v4155 = vrot.slane %v4153, 4
        %v4156 = vshll.u32 %v4020, 16
        %v4158 = vrot.slane %v4156, 5
        %v4159 = vor.u32 %v4155, %v4158
        %v4160 = vrot.slane %v4159, 4
        %v4162 = vshll.u32 %v4021, 16
        %v4164 = vrot.slane %v4162, 5
        %v4165 = vsel %vm758, %v4160, %v4164
        %v4166 = vshrl.u32 %v4021, 16
        %v4168 = vrot.slane %v4166, 4
        %v4169 = vor.u32 %v4168, %v4164
        %v4170 = vrot.slane %v4169, 4
        %v4172 = vshll.u32 %v4022, 16
        %v4174 = vrot.slane %v4172, 5
        %v4175 = vsel %vm758, %v4170, %v4174
        %v4177 = vshrl.u32 %v4023, 16
        %v4179 = vrot.slane %v4177, 4
        %v4180 = vshll.u32 %v4023, 16
        %v4182 = vrot.slane %v4180, 5
        %v4183 = vor.u32 %v4179, %v4182
        %v4184 = vrot.slane %v4183, 4
        %v4186 = vshll.u32 %v4024, 16
        %v4188 = vrot.slane %v4186, 5
        %v4189 = vsel %vm758, %v4184, %v4188
        %v4190 = vshrl.u32 %v4024, 16
        %v4192 = vrot.slane %v4190, 4
        %v4193 = vor.u32 %v4192, %v4188
        %v4194 = vrot.slane %v4193, 4
        %v4196 = vshll.u32 %v4025, 16
        %v4198 = vrot.slane %v4196, 5
        %v4199 = vsel %vm758, %v4194, %v4198
        %v4201 = vshrl.u32 %v4026, 16
        %v4203 = vrot.slane %v4201, 4
        %v4204 = vshll.u32 %v4026, 16
        %v4206 = vrot.slane %v4204, 5
        %v4207 = vor.u32 %v4203, %v4206
        %v4208 = vrot.slane %v4207, 4
        %v4210 = vshll.u32 %v4027, 16
        %v4212 = vrot.slane %v4210, 5
        %v4213 = vsel %vm758, %v4208, %v4212
        %v4214 = vshrl.u32 %v4027, 16
        %v4216 = vrot.slane %v4214, 4
        %v4217 = vor.u32 %v4216, %v4212
        %v4218 = vrot.slane %v4217, 4
        %v4220 = vshll.u32 %v4028, 16
        %v4222 = vrot.slane %v4220, 5
        %v4223 = vsel %vm758, %v4218, %v4222
        %v4225 = vshrl.u32 %v4029, 16
        %v4227 = vrot.slane %v4225, 4
        %v4228 = vshll.u32 %v4029, 16
        %v4230 = vrot.slane %v4228, 5
        %v4231 = vor.u32 %v4227, %v4230
        %v4232 = vrot.slane %v4231, 4
        %v4234 = vshll.u32 %v4030, 16
        %v4236 = vrot.slane %v4234, 5
        %v4237 = vsel %vm758, %v4232, %v4236
        %v4238 = vshrl.u32 %v4030, 16
        %v4240 = vrot.slane %v4238, 4
        %v4241 = vor.u32 %v4240, %v4236
        %v4242 = vrot.slane %v4241, 4
        %v4244 = vshll.u32 %v4031, 16
        %v4246 = vrot.slane %v4244, 5
        %v4247 = vsel %vm758, %v4242, %v4246
        %v4249 = vshrl.u32 %v4032, 16
        %v4251 = vrot.slane %v4249, 4
        %v4252 = vshll.u32 %v4032, 16
        %v4254 = vrot.slane %v4252, 5
        %v4255 = vor.u32 %v4251, %v4254
        %v4256 = vrot.slane %v4255, 4
        %v4258 = vshll.u32 %v4033, 16
        %v4260 = vrot.slane %v4258, 5
        %v4261 = vsel %vm758, %v4256, %v4260
        %v4262 = vshrl.u32 %v4033, 16
        %v4264 = vrot.slane %v4262, 4
        %v4265 = vor.u32 %v4264, %v4260
        %v4266 = vrot.slane %v4265, 4
        %v4268 = vshll.u32 %v4034, 16
        %v4270 = vrot.slane %v4268, 5
        %v4271 = vsel %vm758, %v4266, %v4270
        %v4273 = vshrl.u32 %v4035, 16
        %v4275 = vrot.slane %v4273, 4
        %v4276 = vshll.u32 %v4035, 16
        %v4278 = vrot.slane %v4276, 5
        %v4279 = vor.u32 %v4275, %v4278
        %v4280 = vrot.slane %v4279, 4
        %v4282 = vshll.u32 %v4036, 16
        %v4284 = vrot.slane %v4282, 5
        %v4285 = vsel %vm758, %v4280, %v4284
        %v4286 = vshrl.u32 %v4036, 16
        %v4288 = vrot.slane %v4286, 4
        %v4289 = vor.u32 %v4288, %v4284
        %v4290 = vrot.slane %v4289, 4
        %v4292 = vshll.u32 %v4037, 16
        %v4294 = vrot.slane %v4292, 5
        %v4295 = vsel %vm758, %v4290, %v4294
        %v4297 = vshrl.u32 %v4038, 16
        %v4299 = vrot.slane %v4297, 4
        %v4300 = vshll.u32 %v4038, 16
        %v4302 = vrot.slane %v4300, 5
        %v4303 = vor.u32 %v4299, %v4302
        %v4304 = vrot.slane %v4303, 4
        %v4306 = vshll.u32 %v4039, 16
        %v4308 = vrot.slane %v4306, 5
        %v4309 = vsel %vm758, %v4304, %v4308
        %v4310 = vshrl.u32 %v4039, 16
        %v4312 = vrot.slane %v4310, 4
        %v4313 = vor.u32 %v4312, %v4308
        %v4314 = vrot.slane %v4313, 4
        %v4316 = vshll.u32 %v4040, 16
        %v4318 = vrot.slane %v4316, 5
        %v4319 = vsel %vm758, %v4314, %v4318
        %v4321 = vshrl.u32 %v4041, 16
        %v4323 = vrot.slane %v4321, 4
        %v4324 = vshll.u32 %v4041, 16
        %v4326 = vrot.slane %v4324, 5
        %v4327 = vor.u32 %v4323, %v4326
        %v4328 = vrot.slane %v4327, 4
        %v4330 = vshll.u32 %v4042, 16
        %v4332 = vrot.slane %v4330, 5
        %v4333 = vsel %vm758, %v4328, %v4332
        %v4334 = vshrl.u32 %v4042, 16
        %v4336 = vrot.slane %v4334, 4
        %v4337 = vor.u32 %v4336, %v4332
        %v4338 = vrot.slane %v4337, 4
        %v4340 = vshll.u32 %v4043, 16
        %v4342 = vrot.slane %v4340, 5
        %v4343 = vsel %vm758, %v4338, %v4342
        %v4345 = vshrl.u32 %v4044, 16
        %v4347 = vrot.slane %v4345, 4
        %v4348 = vshll.u32 %v4044, 16
        %v4350 = vrot.slane %v4348, 5
        %v4351 = vor.u32 %v4347, %v4350
        %v4352 = vrot.slane %v4351, 4
        %v4354 = vshll.u32 %v4045, 16
        %v4356 = vrot.slane %v4354, 5
        %v4357 = vsel %vm758, %v4352, %v4356
        %v4358 = vshrl.u32 %v4045, 16
        %v4360 = vrot.slane %v4358, 4
        %v4361 = vor.u32 %v4360, %v4356
        %v4362 = vrot.slane %v4361, 4
        %v4364 = vshll.u32 %v4046, 16
        %v4366 = vrot.slane %v4364, 5
        %v4367 = vsel %vm758, %v4362, %v4366
        %v4369 = vshrl.u32 %v4047, 16
        %v4371 = vrot.slane %v4369, 4
        %v4372 = vshll.u32 %v4047, 16
        %v4374 = vrot.slane %v4372, 5
        %v4375 = vor.u32 %v4371, %v4374
        %v4376 = vrot.slane %v4375, 4
        %v4378 = vshll.u32 %v4048, 16
        %v4380 = vrot.slane %v4378, 5
        %v4381 = vsel %vm758, %v4376, %v4380
        %v4382 = vshrl.u32 %v4048, 16
        %v4384 = vrot.slane %v4382, 4
        %v4385 = vor.u32 %v4384, %v4380
        %v4386 = vrot.slane %v4385, 4
        %v4388 = vshll.u32 %v4049, 16
        %v4390 = vrot.slane %v4388, 5
        %v4391 = vsel %vm758, %v4386, %v4390
        %v4393 = vshrl.u32 %v4050, 16
        %v4395 = vrot.slane %v4393, 4
        %v4396 = vshll.u32 %v4050, 16
        %v4398 = vrot.slane %v4396, 5
        %v4399 = vor.u32 %v4395, %v4398
        %v4400 = vrot.slane %v4399, 4
        %v4402 = vshll.u32 %v4051, 16
        %v4404 = vrot.slane %v4402, 5
        %v4405 = vsel %vm758, %v4400, %v4404
        %v4406 = vshrl.u32 %v4051, 16
        %v4408 = vrot.slane %v4406, 4
        %v4409 = vor.u32 %v4408, %v4404
        %v4410 = vrot.slane %v4409, 4
        %v4412 = vshll.u32 %v4052, 16
        %v4414 = vrot.slane %v4412, 5
        %v4415 = vsel %vm758, %v4410, %v4414
        %v4417 = vshrl.u32 %v4053, 16
        %v4419 = vrot.slane %v4417, 4
        %v4420 = vshll.u32 %v4053, 16
        %v4422 = vrot.slane %v4420, 5
        %v4423 = vor.u32 %v4419, %v4422
        %v4424 = vrot.slane %v4423, 4
        %v4426 = vshll.u32 %v4054, 16
        %v4428 = vrot.slane %v4426, 5
        %v4429 = vsel %vm758, %v4424, %v4428
        %v4430 = vshrl.u32 %v4054, 16
        %v4432 = vrot.slane %v4430, 4
        %v4433 = vor.u32 %v4432, %v4428
        %v4434 = vrot.slane %v4433, 4
        %v4436 = vshll.u32 %v4055, 16
        %v4438 = vrot.slane %v4436, 5
        %v4439 = vsel %vm758, %v4434, %v4438
        %v4440 = vld [vmem:[#allocation2] sm:$0xff]
        %v4441 = vld [vmem:[#allocation2 + $0x8] sm:$0xff]
        %v4442 = vld [vmem:[#allocation2 + $0x10] sm:$0xff]
        %v4443 = vld [vmem:[#allocation2 + $0x18] sm:$0xff]
        %v4444 = vld [vmem:[#allocation2 + $0x20] sm:$0xff]
        %v4445 = vld [vmem:[#allocation2 + $0x28] sm:$0xff]
        %v4446 = vld [vmem:[#allocation2 + $0x30] sm:$0xff]
        %v4447 = vld [vmem:[#allocation2 + $0x38] sm:$0xff]
        %v4448 = vld [vmem:[#allocation2 + $0x40] sm:$0xff]
        %v4449 = vld [vmem:[#allocation2 + $0x48] sm:$0xff]
        %v4450 = vld [vmem:[#allocation2 + $0x50] sm:$0xff]
        %v4451 = vld [vmem:[#allocation2 + $0x58] sm:$0xff]
        %v4452 = vld [vmem:[#allocation2 + $0x60] sm:$0xff]
        %v4453 = vld [vmem:[#allocation2 + $0x68] sm:$0xff]
        %v4454 = vld [vmem:[#allocation2 + $0x70] sm:$0xff]
        %v4455 = vld [vmem:[#allocation2 + $0x78] sm:$0xff]
        %v4456 = vld [vmem:[#allocation2 + $0x80] sm:$0xff]
        %v4457 = vld [vmem:[#allocation2 + $0x88] sm:$0xff]
        %v4458 = vld [vmem:[#allocation2 + $0x90] sm:$0xff]
        %v4459 = vld [vmem:[#allocation2 + $0x98] sm:$0xff]
        %v4460 = vld [vmem:[#allocation2 + $0xa0] sm:$0xff]
        %v4461 = vld [vmem:[#allocation2 + $0xa8] sm:$0xff]
        %v4462 = vld [vmem:[#allocation2 + $0xb0] sm:$0xff]
        %v4463 = vld [vmem:[#allocation2 + $0xb8] sm:$0xff]
        %v4464 = vld [vmem:[#allocation2 + $0xc0] sm:$0xff]
        %v4465 = vld [vmem:[#allocation2 + $0xc8] sm:$0xff]
        %v4466 = vld [vmem:[#allocation2 + $0xd0] sm:$0xff]
        %v4467 = vld [vmem:[#allocation2 + $0xd8] sm:$0xff]
        %v4468 = vld [vmem:[#allocation2 + $0xe0] sm:$0xff]
        %v4469 = vld [vmem:[#allocation2 + $0xe8] sm:$0xff]
        %v4470 = vld [vmem:[#allocation2 + $0xf0] sm:$0xff]
        %v4471 = vld [vmem:[#allocation2 + $0xf8] sm:$0xff]
        %s4472 = scalar_lea.vmem %s1, 448
        %v4473 = vld [vmem:[%s4472] sm:$0xf]
        %v4474 = vld [vmem:[%s4472 + $0x4] sm:$0xf]
        %v4475 = vld [vmem:[%s4472 + $0x8] sm:$0xf]
        %v4476 = vld [vmem:[%s4472 + $0xc] sm:$0xf]
        %v4477 = vld [vmem:[%s4472 + $0x10] sm:$0xf]
        %v4478 = vld [vmem:[%s4472 + $0x14] sm:$0xf]
        %v4479 = vld [vmem:[%s4472 + $0x18] sm:$0xf]
        %v4480 = vld [vmem:[%s4472 + $0x1c] sm:$0xf]
        %v4481 = vld [vmem:[%s4472 + $0x20] sm:$0xf]
        %v4482 = vld [vmem:[%s4472 + $0x24] sm:$0xf]
        %v4483 = vld [vmem:[%s4472 + $0x28] sm:$0xf]
        %v4484 = vld [vmem:[%s4472 + $0x2c] sm:$0xf]
        %v4485 = vld [vmem:[%s4472 + $0x30] sm:$0xf]
        %v4486 = vld [vmem:[%s4472 + $0x34] sm:$0xf]
        %v4487 = vld [vmem:[%s4472 + $0x38] sm:$0xf]
        %v4488 = vld [vmem:[%s4472 + $0x3c] sm:$0xf]
        %v4489 = vunpack.c.l.b16 %v4069
        %v4490 = vunpack.c.l.b16 %v4079
        %v4491 = vunpack.c.l.b16 %v4093
        %v4492 = vunpack.c.l.b16 %v4103
        %v4493 = vunpack.c.l.b16 %v4117
        %v4494 = vunpack.c.l.b16 %v4127
        %v4495 = vunpack.c.l.b16 %v4141
        %v4496 = vunpack.c.l.b16 %v4151
        %v4497 = vunpack.c.l.b16 %v4165
        %v4498 = vunpack.c.l.b16 %v4175
        %v4499 = vunpack.c.l.b16 %v4189
        %v4500 = vunpack.c.l.b16 %v4199
        %v4501 = vunpack.c.l.b16 %v4213
        %v4502 = vunpack.c.l.b16 %v4223
        %v4503 = vunpack.c.l.b16 %v4237
        %v4504 = vunpack.c.l.b16 %v4247
        %v4505 = vunpack.c.l.b16 %v4261
        %v4506 = vunpack.c.l.b16 %v4271
        %v4507 = vunpack.c.l.b16 %v4285
        %v4508 = vunpack.c.l.b16 %v4295
        %v4509 = vunpack.c.l.b16 %v4309
        %v4510 = vunpack.c.l.b16 %v4319
        %v4511 = vunpack.c.l.b16 %v4333
        %v4512 = vunpack.c.l.b16 %v4343
        %v4513 = vunpack.c.l.b16 %v4357
        %v4514 = vunpack.c.l.b16 %v4367
        %v4515 = vunpack.c.l.b16 %v4381
        %v4516 = vunpack.c.l.b16 %v4391
        %v4517 = vunpack.c.l.b16 %v4405
        %v4518 = vunpack.c.l.b16 %v4415
        %v4519 = vunpack.c.l.b16 %v4429
        %v4520 = vunpack.c.l.b16 %v4439
        %v4521 = vpack.c.b16 %v4490, %v4489
        %v4522 = vpack.c.b16 %v4492, %v4491
        %v4523 = vpack.c.b16 %v4494, %v4493
        %v4524 = vpack.c.b16 %v4496, %v4495
        %v4525 = vpack.c.b16 %v4498, %v4497
        %v4526 = vpack.c.b16 %v4500, %v4499
        %v4527 = vpack.c.b16 %v4502, %v4501
        %v4528 = vpack.c.b16 %v4504, %v4503
        %v4529 = vpack.c.b16 %v4506, %v4505
        %v4530 = vpack.c.b16 %v4508, %v4507
        %v4531 = vpack.c.b16 %v4510, %v4509
        %v4532 = vpack.c.b16 %v4512, %v4511
        %v4533 = vpack.c.b16 %v4514, %v4513
        %v4534 = vpack.c.b16 %v4516, %v4515
        %v4535 = vpack.c.b16 %v4518, %v4517
        %v4536 = vpack.c.b16 %v4520, %v4519
        %v4569 = vunpack.c.l.b16 %v4473
        %v4570 = vunpack.c.l.b16 %v4474
        %v4571 = vunpack.c.l.b16 %v4475
        %v4572 = vunpack.c.l.b16 %v4476
        %v4573 = vunpack.c.l.b16 %v4477
        %v4574 = vunpack.c.l.b16 %v4478
        %v4575 = vunpack.c.l.b16 %v4479
        %v4576 = vunpack.c.l.b16 %v4480
        %v4577 = vunpack.c.l.b16 %v4481
        %v4578 = vunpack.c.l.b16 %v4482
        %v4579 = vunpack.c.l.b16 %v4483
        %v4580 = vunpack.c.l.b16 %v4484
        %v4581 = vunpack.c.l.b16 %v4485
        %v4582 = vunpack.c.l.b16 %v4486
        %v4583 = vunpack.c.l.b16 %v4487
        %v4584 = vunpack.c.l.b16 %v4488
        %v4585 = vpack.c.b16 %v4570, %v4569
        %v4586 = vpack.c.b16 %v4572, %v4571
        %v4587 = vpack.c.b16 %v4574, %v4573
        %v4588 = vpack.c.b16 %v4576, %v4575
        %v4589 = vpack.c.b16 %v4578, %v4577
        %v4590 = vpack.c.b16 %v4580, %v4579
        %v4591 = vpack.c.b16 %v4582, %v4581
        %v4592 = vpack.c.b16 %v4584, %v4583
        %4601 = vmatpush.bf16.msra.mxu0 %v4592
        %4602 = vmatpush.bf16.msra.mxu0 %v4591
        %4603 = vmatpush.bf16.msra.mxu0 %v4590
        %4604 = vmatpush.bf16.msra.mxu0 %v4589
        %4605 = vmatpush.bf16.msra.mxu0 %v4588
        %4606 = vmatpush.bf16.msra.mxu0 %v4587
        %4607 = vmatpush.bf16.msra.mxu0 %v4586
        %4608 = vmatpush.bf16.msra.mxu0 %v4585
        %4609 = vmatmul.bf16.gmra.mxu0 %v4521
        %v4610 = vpop.f32.mrf.mxu0
        %v4611 = vadd.f32 0.0, %v4610
        %v4612 = vpop.f32.mrf.mxu0
        %v4613 = vadd.f32 0.0, %v4612
        %4614 = vmatmul.bf16.gmra.mxu0 %v4522
        %v4615 = vpop.f32.mrf.mxu0
        %v4616 = vadd.f32 0.0, %v4615
        %v4617 = vpop.f32.mrf.mxu0
        %v4618 = vadd.f32 0.0, %v4617
        %4619 = vmatmul.bf16.gmra.mxu0 %v4523
        %v4620 = vpop.f32.mrf.mxu0
        %v4621 = vadd.f32 0.0, %v4620
        %v4622 = vpop.f32.mrf.mxu0
        %v4623 = vadd.f32 0.0, %v4622
        %4624 = vmatmul.bf16.gmra.mxu0 %v4524
        %v4625 = vpop.f32.mrf.mxu0
        %v4626 = vadd.f32 0.0, %v4625
        %v4627 = vpop.f32.mrf.mxu0
        %v4628 = vadd.f32 0.0, %v4627
        %4629 = vmatmul.bf16.gmra.mxu0 %v4525
        %v4630 = vpop.f32.mrf.mxu0
        %v4631 = vadd.f32 0.0, %v4630
        %v4632 = vpop.f32.mrf.mxu0
        %v4633 = vadd.f32 0.0, %v4632
        %4634 = vmatmul.bf16.gmra.mxu0 %v4526
        %v4635 = vpop.f32.mrf.mxu0
        %v4636 = vadd.f32 0.0, %v4635
        %v4637 = vpop.f32.mrf.mxu0
        %v4638 = vadd.f32 0.0, %v4637
        %4639 = vmatmul.bf16.gmra.mxu0 %v4527
        %v4640 = vpop.f32.mrf.mxu0
        %v4641 = vadd.f32 0.0, %v4640
        %v4642 = vpop.f32.mrf.mxu0
        %v4643 = vadd.f32 0.0, %v4642
        %4644 = vmatmul.bf16.gmra.mxu0 %v4528
        %v4645 = vpop.f32.mrf.mxu0
        %v4646 = vadd.f32 0.0, %v4645
        %v4647 = vpop.f32.mrf.mxu0
        %v4648 = vadd.f32 0.0, %v4647
        %4649 = vmatmul.bf16.gmra.mxu0 %v4529
        %v4650 = vpop.f32.mrf.mxu0
        %v4651 = vadd.f32 0.0, %v4650
        %v4652 = vpop.f32.mrf.mxu0
        %v4653 = vadd.f32 0.0, %v4652
        %4654 = vmatmul.bf16.gmra.mxu0 %v4530
        %v4655 = vpop.f32.mrf.mxu0
        %v4656 = vadd.f32 0.0, %v4655
        %v4657 = vpop.f32.mrf.mxu0
        %v4658 = vadd.f32 0.0, %v4657
        %4659 = vmatmul.bf16.gmra.mxu0 %v4531
        %v4660 = vpop.f32.mrf.mxu0
        %v4661 = vadd.f32 0.0, %v4660
        %v4662 = vpop.f32.mrf.mxu0
        %v4663 = vadd.f32 0.0, %v4662
        %4664 = vmatmul.bf16.gmra.mxu0 %v4532
        %v4665 = vpop.f32.mrf.mxu0
        %v4666 = vadd.f32 0.0, %v4665
        %v4667 = vpop.f32.mrf.mxu0
        %v4668 = vadd.f32 0.0, %v4667
        %4669 = vmatmul.bf16.gmra.mxu0 %v4533
        %v4670 = vpop.f32.mrf.mxu0
        %v4671 = vadd.f32 0.0, %v4670
        %v4672 = vpop.f32.mrf.mxu0
        %v4673 = vadd.f32 0.0, %v4672
        %4674 = vmatmul.bf16.gmra.mxu0 %v4534
        %v4675 = vpop.f32.mrf.mxu0
        %v4676 = vadd.f32 0.0, %v4675
        %v4677 = vpop.f32.mrf.mxu0
        %v4678 = vadd.f32 0.0, %v4677
        %4679 = vmatmul.bf16.gmra.mxu0 %v4535
        %v4680 = vpop.f32.mrf.mxu0
        %v4681 = vadd.f32 0.0, %v4680
        %v4682 = vpop.f32.mrf.mxu0
        %v4683 = vadd.f32 0.0, %v4682
        %4684 = vmatmul.bf16.gmra.mxu0 %v4536
        %v4685 = vpop.f32.mrf.mxu0
        %v4686 = vadd.f32 0.0, %v4685
        %v4687 = vpop.f32.mrf.mxu0
        %v4688 = vadd.f32 0.0, %v4687
        %4689 = vdwg.mxu0
        %v4690 = vadd.f32 %v4440, %v4611
        %v4691 = vadd.f32 %v4441, %v4613
        %v4692 = vadd.f32 %v4442, %v4616
        %v4693 = vadd.f32 %v4443, %v4618
        %v4694 = vadd.f32 %v4444, %v4621
        %v4695 = vadd.f32 %v4445, %v4623
        %v4696 = vadd.f32 %v4446, %v4626
        %v4697 = vadd.f32 %v4447, %v4628
        %v4698 = vadd.f32 %v4448, %v4631
        %v4699 = vadd.f32 %v4449, %v4633
        %v4700 = vadd.f32 %v4450, %v4636
        %v4701 = vadd.f32 %v4451, %v4638
        %v4702 = vadd.f32 %v4452, %v4641
        %v4703 = vadd.f32 %v4453, %v4643
        %v4704 = vadd.f32 %v4454, %v4646
        %v4705 = vadd.f32 %v4455, %v4648
        %v4706 = vadd.f32 %v4456, %v4651
        %v4707 = vadd.f32 %v4457, %v4653
        %v4708 = vadd.f32 %v4458, %v4656
        %v4709 = vadd.f32 %v4459, %v4658
        %v4710 = vadd.f32 %v4460, %v4661
        %v4711 = vadd.f32 %v4461, %v4663
        %v4712 = vadd.f32 %v4462, %v4666
        %v4713 = vadd.f32 %v4463, %v4668
        %v4714 = vadd.f32 %v4464, %v4671
        %v4715 = vadd.f32 %v4465, %v4673
        %v4716 = vadd.f32 %v4466, %v4676
        %v4717 = vadd.f32 %v4467, %v4678
        %v4718 = vadd.f32 %v4468, %v4681
        %v4719 = vadd.f32 %v4469, %v4683
        %v4720 = vadd.f32 %v4470, %v4686
        %v4721 = vadd.f32 %v4471, %v4688
        %4722 = vst [vmem:[#allocation2] sm:$0xff] %v4690
        %4723 = vst [vmem:[#allocation2 + $0x8] sm:$0xff] %v4691
        %4724 = vst [vmem:[#allocation2 + $0x10] sm:$0xff] %v4692
        %4725 = vst [vmem:[#allocation2 + $0x18] sm:$0xff] %v4693
        %4726 = vst [vmem:[#allocation2 + $0x20] sm:$0xff] %v4694
        %4727 = vst [vmem:[#allocation2 + $0x28] sm:$0xff] %v4695
        %4728 = vst [vmem:[#allocation2 + $0x30] sm:$0xff] %v4696
        %4729 = vst [vmem:[#allocation2 + $0x38] sm:$0xff] %v4697
        %4730 = vst [vmem:[#allocation2 + $0x40] sm:$0xff] %v4698
        %4731 = vst [vmem:[#allocation2 + $0x48] sm:$0xff] %v4699
        %4732 = vst [vmem:[#allocation2 + $0x50] sm:$0xff] %v4700
        %4733 = vst [vmem:[#allocation2 + $0x58] sm:$0xff] %v4701
        %4734 = vst [vmem:[#allocation2 + $0x60] sm:$0xff] %v4702
        %4735 = vst [vmem:[#allocation2 + $0x68] sm:$0xff] %v4703
        %4736 = vst [vmem:[#allocation2 + $0x70] sm:$0xff] %v4704
        %4737 = vst [vmem:[#allocation2 + $0x78] sm:$0xff] %v4705
        %4738 = vst [vmem:[#allocation2 + $0x80] sm:$0xff] %v4706
        %4739 = vst [vmem:[#allocation2 + $0x88] sm:$0xff] %v4707
        %4740 = vst [vmem:[#allocation2 + $0x90] sm:$0xff] %v4708
        %4741 = vst [vmem:[#allocation2 + $0x98] sm:$0xff] %v4709
        %4742 = vst [vmem:[#allocation2 + $0xa0] sm:$0xff] %v4710
        %4743 = vst [vmem:[#allocation2 + $0xa8] sm:$0xff] %v4711
        %4744 = vst [vmem:[#allocation2 + $0xb0] sm:$0xff] %v4712
        %4745 = vst [vmem:[#allocation2 + $0xb8] sm:$0xff] %v4713
        %4746 = vst [vmem:[#allocation2 + $0xc0] sm:$0xff] %v4714
        %4747 = vst [vmem:[#allocation2 + $0xc8] sm:$0xff] %v4715
        %4748 = vst [vmem:[#allocation2 + $0xd0] sm:$0xff] %v4716
        %4749 = vst [vmem:[#allocation2 + $0xd8] sm:$0xff] %v4717
        %4750 = vst [vmem:[#allocation2 + $0xe0] sm:$0xff] %v4718
        %4751 = vst [vmem:[#allocation2 + $0xe8] sm:$0xff] %v4719
        %4752 = vst [vmem:[#allocation2 + $0xf0] sm:$0xff] %v4720
        %4753 = vst [vmem:[#allocation2 + $0xf8] sm:$0xff] %v4721
        %v4754 = vld [vmem:[%s3629] sm:$0xe]
        %v4755 = vld [vmem:[%s3629 + $0x4] sm:$0xf]
        %v4756 = vld [vmem:[%s3629 + $0x8] sm:$0x1]
        %v4757 = vld [vmem:[%s3629 + $0xc] sm:$0xe]
        %v4758 = vld [vmem:[%s3629 + $0x10] sm:$0xf]
        %v4759 = vld [vmem:[%s3629 + $0x14] sm:$0x1]
        %v4760 = vld [vmem:[%s3629 + $0x18] sm:$0xe]
        %v4761 = vld [vmem:[%s3629 + $0x1c] sm:$0xf]
        %v4762 = vld [vmem:[%s3629 + $0x20] sm:$0x1]
        %v4763 = vld [vmem:[%s3629 + $0x24] sm:$0xe]
        %v4764 = vld [vmem:[%s3629 + $0x28] sm:$0xf]
        %v4765 = vld [vmem:[%s3629 + $0x2c] sm:$0x1]
        %v4766 = vld [vmem:[%s3629 + $0x30] sm:$0xe]
        %v4767 = vld [vmem:[%s3629 + $0x34] sm:$0xf]
        %v4768 = vld [vmem:[%s3629 + $0x38] sm:$0x1]
        %v4769 = vld [vmem:[%s3629 + $0x3c] sm:$0xe]
        %v4770 = vld [vmem:[%s3629 + $0x40] sm:$0xf]
        %v4771 = vld [vmem:[%s3629 + $0x44] sm:$0x1]
        %v4772 = vld [vmem:[%s3629 + $0x48] sm:$0xe]
        %v4773 = vld [vmem:[%s3629 + $0x4c] sm:$0xf]
        %v4774 = vld [vmem:[%s3629 + $0x50] sm:$0x1]
        %v4775 = vld [vmem:[%s3629 + $0x54] sm:$0xe]
        %v4776 = vld [vmem:[%s3629 + $0x58] sm:$0xf]
        %v4777 = vld [vmem:[%s3629 + $0x5c] sm:$0x1]
        %v4778 = vld [vmem:[%s3629 + $0x60] sm:$0xe]
        %v4779 = vld [vmem:[%s3629 + $0x64] sm:$0xf]
        %v4780 = vld [vmem:[%s3629 + $0x68] sm:$0x1]
        %v4781 = vld [vmem:[%s3629 + $0x6c] sm:$0xe]
        %v4782 = vld [vmem:[%s3629 + $0x70] sm:$0xf]
        %v4783 = vld [vmem:[%s3629 + $0x74] sm:$0x1]
        %v4784 = vld [vmem:[%s3629 + $0x78] sm:$0xe]
        %v4785 = vld [vmem:[%s3629 + $0x7c] sm:$0xf]
        %v4786 = vld [vmem:[%s3629 + $0x80] sm:$0x1]
        %v4787 = vld [vmem:[%s3629 + $0x84] sm:$0xe]
        %v4788 = vld [vmem:[%s3629 + $0x88] sm:$0xf]
        %v4789 = vld [vmem:[%s3629 + $0x8c] sm:$0x1]
        %v4790 = vld [vmem:[%s3629 + $0x90] sm:$0xe]
        %v4791 = vld [vmem:[%s3629 + $0x94] sm:$0xf]
        %v4792 = vld [vmem:[%s3629 + $0x98] sm:$0x1]
        %v4793 = vld [vmem:[%s3629 + $0x9c] sm:$0xe]
        %v4794 = vld [vmem:[%s3629 + $0xa0] sm:$0xf]
        %v4795 = vld [vmem:[%s3629 + $0xa4] sm:$0x1]
        %v4796 = vld [vmem:[%s3629 + $0xa8] sm:$0xe]
        %v4797 = vld [vmem:[%s3629 + $0xac] sm:$0xf]
        %v4798 = vld [vmem:[%s3629 + $0xb0] sm:$0x1]
        %v4799 = vld [vmem:[%s3629 + $0xb4] sm:$0xe]
        %v4800 = vld [vmem:[%s3629 + $0xb8] sm:$0xf]
        %v4801 = vld [vmem:[%s3629 + $0xbc] sm:$0x1]
        %v4850 = vrot.slane %v4754, 5
        %v4851 = vrot.slane %v4850, 4
        %v4852 = vrot.slane %v4755, 5
        %v4853 = vsel %vm1555, %v4851, %v4852
        %v4854 = vrot.slane %v4852, 4
        %v4855 = vrot.slane %v4756, 5
        %v4856 = vsel %vm1555, %v4854, %v4855
        %v4857 = vrot.slane %v4757, 5
        %v4858 = vrot.slane %v4857, 4
        %v4859 = vrot.slane %v4758, 5
        %v4860 = vsel %vm1555, %v4858, %v4859
        %v4861 = vrot.slane %v4859, 4
        %v4862 = vrot.slane %v4759, 5
        %v4863 = vsel %vm1555, %v4861, %v4862
        %v4864 = vrot.slane %v4760, 5
        %v4865 = vrot.slane %v4864, 4
        %v4866 = vrot.slane %v4761, 5
        %v4867 = vsel %vm1555, %v4865, %v4866
        %v4868 = vrot.slane %v4866, 4
        %v4869 = vrot.slane %v4762, 5
        %v4870 = vsel %vm1555, %v4868, %v4869
        %v4871 = vrot.slane %v4763, 5
        %v4872 = vrot.slane %v4871, 4
        %v4873 = vrot.slane %v4764, 5
        %v4874 = vsel %vm1555, %v4872, %v4873
        %v4875 = vrot.slane %v4873, 4
        %v4876 = vrot.slane %v4765, 5
        %v4877 = vsel %vm1555, %v4875, %v4876
        %v4878 = vrot.slane %v4766, 5
        %v4879 = vrot.slane %v4878, 4
        %v4880 = vrot.slane %v4767, 5
        %v4881 = vsel %vm1555, %v4879, %v4880
        %v4882 = vrot.slane %v4880, 4
        %v4883 = vrot.slane %v4768, 5
        %v4884 = vsel %vm1555, %v4882, %v4883
        %v4885 = vrot.slane %v4769, 5
        %v4886 = vrot.slane %v4885, 4
        %v4887 = vrot.slane %v4770, 5
        %v4888 = vsel %vm1555, %v4886, %v4887
        %v4889 = vrot.slane %v4887, 4
        %v4890 = vrot.slane %v4771, 5
        %v4891 = vsel %vm1555, %v4889, %v4890
        %v4892 = vrot.slane %v4772, 5
        %v4893 = vrot.slane %v4892, 4
        %v4894 = vrot.slane %v4773, 5
        %v4895 = vsel %vm1555, %v4893, %v4894
        %v4896 = vrot.slane %v4894, 4
        %v4897 = vrot.slane %v4774, 5
        %v4898 = vsel %vm1555, %v4896, %v4897
        %v4899 = vrot.slane %v4775, 5
        %v4900 = vrot.slane %v4899, 4
        %v4901 = vrot.slane %v4776, 5
        %v4902 = vsel %vm1555, %v4900, %v4901
        %v4903 = vrot.slane %v4901, 4
        %v4904 = vrot.slane %v4777, 5
        %v4905 = vsel %vm1555, %v4903, %v4904
        %v4906 = vrot.slane %v4778, 5
        %v4907 = vrot.slane %v4906, 4
        %v4908 = vrot.slane %v4779, 5
        %v4909 = vsel %vm1555, %v4907, %v4908
        %v4910 = vrot.slane %v4908, 4
        %v4911 = vrot.slane %v4780, 5
        %v4912 = vsel %vm1555, %v4910, %v4911
        %v4913 = vrot.slane %v4781, 5
        %v4914 = vrot.slane %v4913, 4
        %v4915 = vrot.slane %v4782, 5
        %v4916 = vsel %vm1555, %v4914, %v4915
        %v4917 = vrot.slane %v4915, 4
        %v4918 = vrot.slane %v4783, 5
        %v4919 = vsel %vm1555, %v4917, %v4918
        %v4920 = vrot.slane %v4784, 5
        %v4921 = vrot.slane %v4920, 4
        %v4922 = vrot.slane %v4785, 5
        %v4923 = vsel %vm1555, %v4921, %v4922
        %v4924 = vrot.slane %v4922, 4
        %v4925 = vrot.slane %v4786, 5
        %v4926 = vsel %vm1555, %v4924, %v4925
        %v4927 = vrot.slane %v4787, 5
        %v4928 = vrot.slane %v4927, 4
        %v4929 = vrot.slane %v4788, 5
        %v4930 = vsel %vm1555, %v4928, %v4929
        %v4931 = vrot.slane %v4929, 4
        %v4932 = vrot.slane %v4789, 5
        %v4933 = vsel %vm1555, %v4931, %v4932
        %v4934 = vrot.slane %v4790, 5
        %v4935 = vrot.slane %v4934, 4
        %v4936 = vrot.slane %v4791, 5
        %v4937 = vsel %vm1555, %v4935, %v4936
        %v4938 = vrot.slane %v4936, 4
        %v4939 = vrot.slane %v4792, 5
        %v4940 = vsel %vm1555, %v4938, %v4939
        %v4941 = vrot.slane %v4793, 5
        %v4942 = vrot.slane %v4941, 4
        %v4943 = vrot.slane %v4794, 5
        %v4944 = vsel %vm1555, %v4942, %v4943
        %v4945 = vrot.slane %v4943, 4
        %v4946 = vrot.slane %v4795, 5
        %v4947 = vsel %vm1555, %v4945, %v4946
        %v4948 = vrot.slane %v4796, 5
        %v4949 = vrot.slane %v4948, 4
        %v4950 = vrot.slane %v4797, 5
        %v4951 = vsel %vm1555, %v4949, %v4950
        %v4952 = vrot.slane %v4950, 4
        %v4953 = vrot.slane %v4798, 5
        %v4954 = vsel %vm1555, %v4952, %v4953
        %v4955 = vrot.slane %v4799, 5
        %v4956 = vrot.slane %v4955, 4
        %v4957 = vrot.slane %v4800, 5
        %v4958 = vsel %vm1555, %v4956, %v4957
        %v4959 = vrot.slane %v4957, 4
        %v4960 = vrot.slane %v4801, 5
        %v4961 = vsel %vm1555, %v4959, %v4960
        %v4962 = vld [vmem:[#allocation2] sm:$0xff]
        %v4963 = vld [vmem:[#allocation2 + $0x8] sm:$0xff]
        %v4964 = vld [vmem:[#allocation2 + $0x10] sm:$0xff]
        %v4965 = vld [vmem:[#allocation2 + $0x18] sm:$0xff]
        %v4966 = vld [vmem:[#allocation2 + $0x20] sm:$0xff]
        %v4967 = vld [vmem:[#allocation2 + $0x28] sm:$0xff]
        %v4968 = vld [vmem:[#allocation2 + $0x30] sm:$0xff]
        %v4969 = vld [vmem:[#allocation2 + $0x38] sm:$0xff]
        %v4970 = vld [vmem:[#allocation2 + $0x40] sm:$0xff]
        %v4971 = vld [vmem:[#allocation2 + $0x48] sm:$0xff]
        %v4972 = vld [vmem:[#allocation2 + $0x50] sm:$0xff]
        %v4973 = vld [vmem:[#allocation2 + $0x58] sm:$0xff]
        %v4974 = vld [vmem:[#allocation2 + $0x60] sm:$0xff]
        %v4975 = vld [vmem:[#allocation2 + $0x68] sm:$0xff]
        %v4976 = vld [vmem:[#allocation2 + $0x70] sm:$0xff]
        %v4977 = vld [vmem:[#allocation2 + $0x78] sm:$0xff]
        %v4978 = vld [vmem:[#allocation2 + $0x80] sm:$0xff]
        %v4979 = vld [vmem:[#allocation2 + $0x88] sm:$0xff]
        %v4980 = vld [vmem:[#allocation2 + $0x90] sm:$0xff]
        %v4981 = vld [vmem:[#allocation2 + $0x98] sm:$0xff]
        %v4982 = vld [vmem:[#allocation2 + $0xa0] sm:$0xff]
        %v4983 = vld [vmem:[#allocation2 + $0xa8] sm:$0xff]
        %v4984 = vld [vmem:[#allocation2 + $0xb0] sm:$0xff]
        %v4985 = vld [vmem:[#allocation2 + $0xb8] sm:$0xff]
        %v4986 = vld [vmem:[#allocation2 + $0xc0] sm:$0xff]
        %v4987 = vld [vmem:[#allocation2 + $0xc8] sm:$0xff]
        %v4988 = vld [vmem:[#allocation2 + $0xd0] sm:$0xff]
        %v4989 = vld [vmem:[#allocation2 + $0xd8] sm:$0xff]
        %v4990 = vld [vmem:[#allocation2 + $0xe0] sm:$0xff]
        %v4991 = vld [vmem:[#allocation2 + $0xe8] sm:$0xff]
        %v4992 = vld [vmem:[#allocation2 + $0xf0] sm:$0xff]
        %v4993 = vld [vmem:[#allocation2 + $0xf8] sm:$0xff]
        %s4994 = scalar_lea.vmem %s1, 512
        %v4995 = vld [vmem:[%s4994] sm:$0xf]
        %v4996 = vld [vmem:[%s4994 + $0x4] sm:$0xf]
        %v4997 = vld [vmem:[%s4994 + $0x8] sm:$0xf]
        %v4998 = vld [vmem:[%s4994 + $0xc] sm:$0xf]
        %v4999 = vld [vmem:[%s4994 + $0x10] sm:$0xf]
        %v5000 = vld [vmem:[%s4994 + $0x14] sm:$0xf]
        %v5001 = vld [vmem:[%s4994 + $0x18] sm:$0xf]
        %v5002 = vld [vmem:[%s4994 + $0x1c] sm:$0xf]
        %v5003 = vld [vmem:[%s4994 + $0x20] sm:$0xf]
        %v5004 = vld [vmem:[%s4994 + $0x24] sm:$0xf]
        %v5005 = vld [vmem:[%s4994 + $0x28] sm:$0xf]
        %v5006 = vld [vmem:[%s4994 + $0x2c] sm:$0xf]
        %v5007 = vld [vmem:[%s4994 + $0x30] sm:$0xf]
        %v5008 = vld [vmem:[%s4994 + $0x34] sm:$0xf]
        %v5009 = vld [vmem:[%s4994 + $0x38] sm:$0xf]
        %v5010 = vld [vmem:[%s4994 + $0x3c] sm:$0xf]
        %v5011 = vunpack.c.l.b16 %v4853
        %v5012 = vunpack.c.l.b16 %v4856
        %v5013 = vunpack.c.l.b16 %v4860
        %v5014 = vunpack.c.l.b16 %v4863
        %v5015 = vunpack.c.l.b16 %v4867
        %v5016 = vunpack.c.l.b16 %v4870
        %v5017 = vunpack.c.l.b16 %v4874
        %v5018 = vunpack.c.l.b16 %v4877
        %v5019 = vunpack.c.l.b16 %v4881
        %v5020 = vunpack.c.l.b16 %v4884
        %v5021 = vunpack.c.l.b16 %v4888
        %v5022 = vunpack.c.l.b16 %v4891
        %v5023 = vunpack.c.l.b16 %v4895
        %v5024 = vunpack.c.l.b16 %v4898
        %v5025 = vunpack.c.l.b16 %v4902
        %v5026 = vunpack.c.l.b16 %v4905
        %v5027 = vunpack.c.l.b16 %v4909
        %v5028 = vunpack.c.l.b16 %v4912
        %v5029 = vunpack.c.l.b16 %v4916
        %v5030 = vunpack.c.l.b16 %v4919
        %v5031 = vunpack.c.l.b16 %v4923
        %v5032 = vunpack.c.l.b16 %v4926
        %v5033 = vunpack.c.l.b16 %v4930
        %v5034 = vunpack.c.l.b16 %v4933
        %v5035 = vunpack.c.l.b16 %v4937
        %v5036 = vunpack.c.l.b16 %v4940
        %v5037 = vunpack.c.l.b16 %v4944
        %v5038 = vunpack.c.l.b16 %v4947
        %v5039 = vunpack.c.l.b16 %v4951
        %v5040 = vunpack.c.l.b16 %v4954
        %v5041 = vunpack.c.l.b16 %v4958
        %v5042 = vunpack.c.l.b16 %v4961
        %v5043 = vpack.c.b16 %v5012, %v5011
        %v5044 = vpack.c.b16 %v5014, %v5013
        %v5045 = vpack.c.b16 %v5016, %v5015
        %v5046 = vpack.c.b16 %v5018, %v5017
        %v5047 = vpack.c.b16 %v5020, %v5019
        %v5048 = vpack.c.b16 %v5022, %v5021
        %v5049 = vpack.c.b16 %v5024, %v5023
        %v5050 = vpack.c.b16 %v5026, %v5025
        %v5051 = vpack.c.b16 %v5028, %v5027
        %v5052 = vpack.c.b16 %v5030, %v5029
        %v5053 = vpack.c.b16 %v5032, %v5031
        %v5054 = vpack.c.b16 %v5034, %v5033
        %v5055 = vpack.c.b16 %v5036, %v5035
        %v5056 = vpack.c.b16 %v5038, %v5037
        %v5057 = vpack.c.b16 %v5040, %v5039
        %v5058 = vpack.c.b16 %v5042, %v5041
        %v5091 = vunpack.c.l.b16 %v4995
        %v5092 = vunpack.c.l.b16 %v4996
        %v5093 = vunpack.c.l.b16 %v4997
        %v5094 = vunpack.c.l.b16 %v4998
        %v5095 = vunpack.c.l.b16 %v4999
        %v5096 = vunpack.c.l.b16 %v5000
        %v5097 = vunpack.c.l.b16 %v5001
        %v5098 = vunpack.c.l.b16 %v5002
        %v5099 = vunpack.c.l.b16 %v5003
        %v5100 = vunpack.c.l.b16 %v5004
        %v5101 = vunpack.c.l.b16 %v5005
        %v5102 = vunpack.c.l.b16 %v5006
        %v5103 = vunpack.c.l.b16 %v5007
        %v5104 = vunpack.c.l.b16 %v5008
        %v5105 = vunpack.c.l.b16 %v5009
        %v5106 = vunpack.c.l.b16 %v5010
        %v5107 = vpack.c.b16 %v5092, %v5091
        %v5108 = vpack.c.b16 %v5094, %v5093
        %v5109 = vpack.c.b16 %v5096, %v5095
        %v5110 = vpack.c.b16 %v5098, %v5097
        %v5111 = vpack.c.b16 %v5100, %v5099
        %v5112 = vpack.c.b16 %v5102, %v5101
        %v5113 = vpack.c.b16 %v5104, %v5103
        %v5114 = vpack.c.b16 %v5106, %v5105
        %5123 = vmatpush.bf16.msra.mxu0 %v5114
        %5124 = vmatpush.bf16.msra.mxu0 %v5113
        %5125 = vmatpush.bf16.msra.mxu0 %v5112
        %5126 = vmatpush.bf16.msra.mxu0 %v5111
        %5127 = vmatpush.bf16.msra.mxu0 %v5110
        %5128 = vmatpush.bf16.msra.mxu0 %v5109
        %5129 = vmatpush.bf16.msra.mxu0 %v5108
        %5130 = vmatpush.bf16.msra.mxu0 %v5107
        %5131 = vmatmul.bf16.gmra.mxu0 %v5043
        %v5132 = vpop.f32.mrf.mxu0
        %v5133 = vadd.f32 0.0, %v5132
        %v5134 = vpop.f32.mrf.mxu0
        %v5135 = vadd.f32 0.0, %v5134
        %5136 = vmatmul.bf16.gmra.mxu0 %v5044
        %v5137 = vpop.f32.mrf.mxu0
        %v5138 = vadd.f32 0.0, %v5137
        %v5139 = vpop.f32.mrf.mxu0
        %v5140 = vadd.f32 0.0, %v5139
        %5141 = vmatmul.bf16.gmra.mxu0 %v5045
        %v5142 = vpop.f32.mrf.mxu0
        %v5143 = vadd.f32 0.0, %v5142
        %v5144 = vpop.f32.mrf.mxu0
        %v5145 = vadd.f32 0.0, %v5144
        %5146 = vmatmul.bf16.gmra.mxu0 %v5046
        %v5147 = vpop.f32.mrf.mxu0
        %v5148 = vadd.f32 0.0, %v5147
        %v5149 = vpop.f32.mrf.mxu0
        %v5150 = vadd.f32 0.0, %v5149
        %5151 = vmatmul.bf16.gmra.mxu0 %v5047
        %v5152 = vpop.f32.mrf.mxu0
        %v5153 = vadd.f32 0.0, %v5152
        %v5154 = vpop.f32.mrf.mxu0
        %v5155 = vadd.f32 0.0, %v5154
        %5156 = vmatmul.bf16.gmra.mxu0 %v5048
        %v5157 = vpop.f32.mrf.mxu0
        %v5158 = vadd.f32 0.0, %v5157
        %v5159 = vpop.f32.mrf.mxu0
        %v5160 = vadd.f32 0.0, %v5159
        %5161 = vmatmul.bf16.gmra.mxu0 %v5049
        %v5162 = vpop.f32.mrf.mxu0
        %v5163 = vadd.f32 0.0, %v5162
        %v5164 = vpop.f32.mrf.mxu0
        %v5165 = vadd.f32 0.0, %v5164
        %5166 = vmatmul.bf16.gmra.mxu0 %v5050
        %v5167 = vpop.f32.mrf.mxu0
        %v5168 = vadd.f32 0.0, %v5167
        %v5169 = vpop.f32.mrf.mxu0
        %v5170 = vadd.f32 0.0, %v5169
        %5171 = vmatmul.bf16.gmra.mxu0 %v5051
        %v5172 = vpop.f32.mrf.mxu0
        %v5173 = vadd.f32 0.0, %v5172
        %v5174 = vpop.f32.mrf.mxu0
        %v5175 = vadd.f32 0.0, %v5174
        %5176 = vmatmul.bf16.gmra.mxu0 %v5052
        %v5177 = vpop.f32.mrf.mxu0
        %v5178 = vadd.f32 0.0, %v5177
        %v5179 = vpop.f32.mrf.mxu0
        %v5180 = vadd.f32 0.0, %v5179
        %5181 = vmatmul.bf16.gmra.mxu0 %v5053
        %v5182 = vpop.f32.mrf.mxu0
        %v5183 = vadd.f32 0.0, %v5182
        %v5184 = vpop.f32.mrf.mxu0
        %v5185 = vadd.f32 0.0, %v5184
        %5186 = vmatmul.bf16.gmra.mxu0 %v5054
        %v5187 = vpop.f32.mrf.mxu0
        %v5188 = vadd.f32 0.0, %v5187
        %v5189 = vpop.f32.mrf.mxu0
        %v5190 = vadd.f32 0.0, %v5189
        %5191 = vmatmul.bf16.gmra.mxu0 %v5055
        %v5192 = vpop.f32.mrf.mxu0
        %v5193 = vadd.f32 0.0, %v5192
        %v5194 = vpop.f32.mrf.mxu0
        %v5195 = vadd.f32 0.0, %v5194
        %5196 = vmatmul.bf16.gmra.mxu0 %v5056
        %v5197 = vpop.f32.mrf.mxu0
        %v5198 = vadd.f32 0.0, %v5197
        %v5199 = vpop.f32.mrf.mxu0
        %v5200 = vadd.f32 0.0, %v5199
        %5201 = vmatmul.bf16.gmra.mxu0 %v5057
        %v5202 = vpop.f32.mrf.mxu0
        %v5203 = vadd.f32 0.0, %v5202
        %v5204 = vpop.f32.mrf.mxu0
        %v5205 = vadd.f32 0.0, %v5204
        %5206 = vmatmul.bf16.gmra.mxu0 %v5058
        %v5207 = vpop.f32.mrf.mxu0
        %v5208 = vadd.f32 0.0, %v5207
        %v5209 = vpop.f32.mrf.mxu0
        %v5210 = vadd.f32 0.0, %v5209
        %5211 = vdwg.mxu0
        %v5212 = vadd.f32 %v4962, %v5133
        %v5213 = vadd.f32 %v4963, %v5135
        %v5214 = vadd.f32 %v4964, %v5138
        %v5215 = vadd.f32 %v4965, %v5140
        %v5216 = vadd.f32 %v4966, %v5143
        %v5217 = vadd.f32 %v4967, %v5145
        %v5218 = vadd.f32 %v4968, %v5148
        %v5219 = vadd.f32 %v4969, %v5150
        %v5220 = vadd.f32 %v4970, %v5153
        %v5221 = vadd.f32 %v4971, %v5155
        %v5222 = vadd.f32 %v4972, %v5158
        %v5223 = vadd.f32 %v4973, %v5160
        %v5224 = vadd.f32 %v4974, %v5163
        %v5225 = vadd.f32 %v4975, %v5165
        %v5226 = vadd.f32 %v4976, %v5168
        %v5227 = vadd.f32 %v4977, %v5170
        %v5228 = vadd.f32 %v4978, %v5173
        %v5229 = vadd.f32 %v4979, %v5175
        %v5230 = vadd.f32 %v4980, %v5178
        %v5231 = vadd.f32 %v4981, %v5180
        %v5232 = vadd.f32 %v4982, %v5183
        %v5233 = vadd.f32 %v4983, %v5185
        %v5234 = vadd.f32 %v4984, %v5188
        %v5235 = vadd.f32 %v4985, %v5190
        %v5236 = vadd.f32 %v4986, %v5193
        %v5237 = vadd.f32 %v4987, %v5195
        %v5238 = vadd.f32 %v4988, %v5198
        %v5239 = vadd.f32 %v4989, %v5200
        %v5240 = vadd.f32 %v4990, %v5203
        %v5241 = vadd.f32 %v4991, %v5205
        %v5242 = vadd.f32 %v4992, %v5208
        %v5243 = vadd.f32 %v4993, %v5210
        %5244 = vst [vmem:[#allocation2] sm:$0xff] %v5212
        %5245 = vst [vmem:[#allocation2 + $0x8] sm:$0xff] %v5213
        %5246 = vst [vmem:[#allocation2 + $0x10] sm:$0xff] %v5214
        %5247 = vst [vmem:[#allocation2 + $0x18] sm:$0xff] %v5215
        %5248 = vst [vmem:[#allocation2 + $0x20] sm:$0xff] %v5216
        %5249 = vst [vmem:[#allocation2 + $0x28] sm:$0xff] %v5217
        %5250 = vst [vmem:[#allocation2 + $0x30] sm:$0xff] %v5218
        %5251 = vst [vmem:[#allocation2 + $0x38] sm:$0xff] %v5219
        %5252 = vst [vmem:[#allocation2 + $0x40] sm:$0xff] %v5220
        %5253 = vst [vmem:[#allocation2 + $0x48] sm:$0xff] %v5221
        %5254 = vst [vmem:[#allocation2 + $0x50] sm:$0xff] %v5222
        %5255 = vst [vmem:[#allocation2 + $0x58] sm:$0xff] %v5223
        %5256 = vst [vmem:[#allocation2 + $0x60] sm:$0xff] %v5224
        %5257 = vst [vmem:[#allocation2 + $0x68] sm:$0xff] %v5225
        %5258 = vst [vmem:[#allocation2 + $0x70] sm:$0xff] %v5226
        %5259 = vst [vmem:[#allocation2 + $0x78] sm:$0xff] %v5227
        %5260 = vst [vmem:[#allocation2 + $0x80] sm:$0xff] %v5228
        %5261 = vst [vmem:[#allocation2 + $0x88] sm:$0xff] %v5229
        %5262 = vst [vmem:[#allocation2 + $0x90] sm:$0xff] %v5230
        %5263 = vst [vmem:[#allocation2 + $0x98] sm:$0xff] %v5231
        %5264 = vst [vmem:[#allocation2 + $0xa0] sm:$0xff] %v5232
        %5265 = vst [vmem:[#allocation2 + $0xa8] sm:$0xff] %v5233
        %5266 = vst [vmem:[#allocation2 + $0xb0] sm:$0xff] %v5234
        %5267 = vst [vmem:[#allocation2 + $0xb8] sm:$0xff] %v5235
        %5268 = vst [vmem:[#allocation2 + $0xc0] sm:$0xff] %v5236
        %5269 = vst [vmem:[#allocation2 + $0xc8] sm:$0xff] %v5237
        %5270 = vst [vmem:[#allocation2 + $0xd0] sm:$0xff] %v5238
        %5271 = vst [vmem:[#allocation2 + $0xd8] sm:$0xff] %v5239
        %5272 = vst [vmem:[#allocation2 + $0xe0] sm:$0xff] %v5240
        %5273 = vst [vmem:[#allocation2 + $0xe8] sm:$0xff] %v5241
        %5274 = vst [vmem:[#allocation2 + $0xf0] sm:$0xff] %v5242
        %5275 = vst [vmem:[#allocation2 + $0xf8] sm:$0xff] %v5243
        %v5276 = vld [vmem:[#allocation2] sm:$0xff]
        %v5277 = vld [vmem:[#allocation2 + $0x8] sm:$0xff]
        %v5278 = vld [vmem:[#allocation2 + $0x10] sm:$0xff]
        %v5279 = vld [vmem:[#allocation2 + $0x18] sm:$0xff]
        %v5280 = vld [vmem:[#allocation2 + $0x20] sm:$0xff]
        %v5281 = vld [vmem:[#allocation2 + $0x28] sm:$0xff]
        %v5282 = vld [vmem:[#allocation2 + $0x30] sm:$0xff]
        %v5283 = vld [vmem:[#allocation2 + $0x38] sm:$0xff]
        %v5284 = vld [vmem:[#allocation2 + $0x40] sm:$0xff]
        %v5285 = vld [vmem:[#allocation2 + $0x48] sm:$0xff]
        %v5286 = vld [vmem:[#allocation2 + $0x50] sm:$0xff]
        %v5287 = vld [vmem:[#allocation2 + $0x58] sm:$0xff]
        %v5288 = vld [vmem:[#allocation2 + $0x60] sm:$0xff]
        %v5289 = vld [vmem:[#allocation2 + $0x68] sm:$0xff]
        %v5290 = vld [vmem:[#allocation2 + $0x70] sm:$0xff]
        %v5291 = vld [vmem:[#allocation2 + $0x78] sm:$0xff]
        %v5292 = vld [vmem:[#allocation2 + $0x80] sm:$0xff]
        %v5293 = vld [vmem:[#allocation2 + $0x88] sm:$0xff]
        %v5294 = vld [vmem:[#allocation2 + $0x90] sm:$0xff]
        %v5295 = vld [vmem:[#allocation2 + $0x98] sm:$0xff]
        %v5296 = vld [vmem:[#allocation2 + $0xa0] sm:$0xff]
        %v5297 = vld [vmem:[#allocation2 + $0xa8] sm:$0xff]
        %v5298 = vld [vmem:[#allocation2 + $0xb0] sm:$0xff]
        %v5299 = vld [vmem:[#allocation2 + $0xb8] sm:$0xff]
        %v5300 = vld [vmem:[#allocation2 + $0xc0] sm:$0xff]
        %v5301 = vld [vmem:[#allocation2 + $0xc8] sm:$0xff]
        %v5302 = vld [vmem:[#allocation2 + $0xd0] sm:$0xff]
        %v5303 = vld [vmem:[#allocation2 + $0xd8] sm:$0xff]
        %v5304 = vld [vmem:[#allocation2 + $0xe0] sm:$0xff]
        %v5305 = vld [vmem:[#allocation2 + $0xe8] sm:$0xff]
        %v5306 = vld [vmem:[#allocation2 + $0xf0] sm:$0xff]
        %v5307 = vld [vmem:[#allocation2 + $0xf8] sm:$0xff]
        %v5308 = vmax.f32 %v5276, 0.0
        %v5309 = vmax.f32 %v5277, 0.0
        %v5310 = vmax.f32 %v5278, 0.0
        %v5311 = vmax.f32 %v5279, 0.0
        %v5312 = vmax.f32 %v5280, 0.0
        %v5313 = vmax.f32 %v5281, 0.0
        %v5314 = vmax.f32 %v5282, 0.0
        %v5315 = vmax.f32 %v5283, 0.0
        %v5316 = vmax.f32 %v5284, 0.0
        %v5317 = vmax.f32 %v5285, 0.0
        %v5318 = vmax.f32 %v5286, 0.0
        %v5319 = vmax.f32 %v5287, 0.0
        %v5320 = vmax.f32 %v5288, 0.0
        %v5321 = vmax.f32 %v5289, 0.0
        %v5322 = vmax.f32 %v5290, 0.0
        %v5323 = vmax.f32 %v5291, 0.0
        %v5324 = vmax.f32 %v5292, 0.0
        %v5325 = vmax.f32 %v5293, 0.0
        %v5326 = vmax.f32 %v5294, 0.0
        %v5327 = vmax.f32 %v5295, 0.0
        %v5328 = vmax.f32 %v5296, 0.0
        %v5329 = vmax.f32 %v5297, 0.0
        %v5330 = vmax.f32 %v5298, 0.0
        %v5331 = vmax.f32 %v5299, 0.0
        %v5332 = vmax.f32 %v5300, 0.0
        %v5333 = vmax.f32 %v5301, 0.0
        %v5334 = vmax.f32 %v5302, 0.0
        %v5335 = vmax.f32 %v5303, 0.0
        %v5336 = vmax.f32 %v5304, 0.0
        %v5337 = vmax.f32 %v5305, 0.0
        %v5338 = vmax.f32 %v5306, 0.0
        %v5339 = vmax.f32 %v5307, 0.0
        %5340 = vst [vmem:[#allocation3] sm:$0xf] 0
        %5341 = vst [vmem:[#allocation3 + $0x4] sm:$0xf] 0
        %5342 = vst [vmem:[#allocation3 + $0x8] sm:$0x1] 0
        %s5343 = scalar_lea.vmem [#allocation3], 204
        %5344 = vst [vmem:[%s5343] sm:$0xf] 0
        %5345 = vst [vmem:[%s5343 + $0x4] sm:$0xf] 0
        %5346 = vst [vmem:[%s5343 + $0x8] sm:$0x1] 0
        %vm5347 = vcmask 1040384
        %vm5348 = vsmask.f32 256
        %vm5349 = vmand %vm5347, %vm5348
        %v5350 = vld [vmem:[#allocation3] sm:$0x1]
        %v5351 = vsel %vm5349, 0, %v5350
        %5352 = vst [vmem:[#allocation3] sm:$0x1] %v5351
        %v5353 = vld [vmem:[#allocation3 + $0xc] sm:$0x1]
        %v5354 = vsel %vm5349, 0, %v5353
        %5355 = vst [vmem:[#allocation3 + $0xc] sm:$0x1] %v5354
        %v5356 = vld [vmem:[#allocation3 + $0x18] sm:$0x1]
        %v5357 = vsel %vm5349, 0, %v5356
        %5358 = vst [vmem:[#allocation3 + $0x18] sm:$0x1] %v5357
        %v5359 = vld [vmem:[#allocation3 + $0x24] sm:$0x1]
        %v5360 = vsel %vm5349, 0, %v5359
        %5361 = vst [vmem:[#allocation3 + $0x24] sm:$0x1] %v5360
        %v5362 = vld [vmem:[#allocation3 + $0x30] sm:$0x1]
        %v5363 = vsel %vm5349, 0, %v5362
        %5364 = vst [vmem:[#allocation3 + $0x30] sm:$0x1] %v5363
        %v5365 = vld [vmem:[#allocation3 + $0x3c] sm:$0x1]
        %v5366 = vsel %vm5349, 0, %v5365
        %5367 = vst [vmem:[#allocation3 + $0x3c] sm:$0x1] %v5366
        %v5368 = vld [vmem:[#allocation3 + $0x48] sm:$0x1]
        %v5369 = vsel %vm5349, 0, %v5368
        %5370 = vst [vmem:[#allocation3 + $0x48] sm:$0x1] %v5369
        %v5371 = vld [vmem:[#allocation3 + $0x54] sm:$0x1]
        %v5372 = vsel %vm5349, 0, %v5371
        %5373 = vst [vmem:[#allocation3 + $0x54] sm:$0x1] %v5372
        %v5374 = vld [vmem:[#allocation3 + $0x60] sm:$0x1]
        %v5375 = vsel %vm5349, 0, %v5374
        %5376 = vst [vmem:[#allocation3 + $0x60] sm:$0x1] %v5375
        %v5377 = vld [vmem:[#allocation3 + $0x6c] sm:$0x1]
        %v5378 = vsel %vm5349, 0, %v5377
        %5379 = vst [vmem:[#allocation3 + $0x6c] sm:$0x1] %v5378
        %v5380 = vld [vmem:[#allocation3 + $0x78] sm:$0x1]
        %v5381 = vsel %vm5349, 0, %v5380
        %5382 = vst [vmem:[#allocation3 + $0x78] sm:$0x1] %v5381
        %v5383 = vld [vmem:[#allocation3 + $0x84] sm:$0x1]
        %v5384 = vsel %vm5349, 0, %v5383
        %5385 = vst [vmem:[#allocation3 + $0x84] sm:$0x1] %v5384
        %v5386 = vld [vmem:[#allocation3 + $0x90] sm:$0x1]
        %v5387 = vsel %vm5349, 0, %v5386
        %5388 = vst [vmem:[#allocation3 + $0x90] sm:$0x1] %v5387
        %v5389 = vld [vmem:[#allocation3 + $0x9c] sm:$0x1]
        %v5390 = vsel %vm5349, 0, %v5389
        %5391 = vst [vmem:[#allocation3 + $0x9c] sm:$0x1] %v5390
        %v5392 = vld [vmem:[#allocation3 + $0xa8] sm:$0x1]
        %v5393 = vsel %vm5349, 0, %v5392
        %5394 = vst [vmem:[#allocation3 + $0xa8] sm:$0x1] %v5393
        %v5395 = vld [vmem:[#allocation3 + $0xb4] sm:$0x1]
        %v5396 = vsel %vm5349, 0, %v5395
        %5397 = vst [vmem:[#allocation3 + $0xb4] sm:$0x1] %v5396
        %v5398 = vld [vmem:[#allocation3 + $0xc0] sm:$0x1]
        %v5399 = vsel %vm5349, 0, %v5398
        %5400 = vst [vmem:[#allocation3 + $0xc0] sm:$0x1] %v5399
        %v5401 = vld [vmem:[#allocation3 + $0xcc] sm:$0x1]
        %v5402 = vsel %vm5349, 0, %v5401
        %5403 = vst [vmem:[#allocation3 + $0xcc] sm:$0x1] %v5402
        %vm5404 = vsmask.f32 7938
        %vm5405 = vmand %vm5347, %vm5404
        %v5406 = vld [vmem:[#allocation3 + $0x8] sm:$0x1]
        %v5407 = vsel %vm5405, 0, %v5406
        %5408 = vst [vmem:[#allocation3 + $0x8] sm:$0x1] %v5407
        %v5409 = vld [vmem:[#allocation3 + $0x14] sm:$0x1]
        %v5410 = vsel %vm5405, 0, %v5409
        %5411 = vst [vmem:[#allocation3 + $0x14] sm:$0x1] %v5410
        %v5412 = vld [vmem:[#allocation3 + $0x20] sm:$0x1]
        %v5413 = vsel %vm5405, 0, %v5412
        %5414 = vst [vmem:[#allocation3 + $0x20] sm:$0x1] %v5413
        %v5415 = vld [vmem:[#allocation3 + $0x2c] sm:$0x1]
        %v5416 = vsel %vm5405, 0, %v5415
        %5417 = vst [vmem:[#allocation3 + $0x2c] sm:$0x1] %v5416
        %v5418 = vld [vmem:[#allocation3 + $0x38] sm:$0x1]
        %v5419 = vsel %vm5405, 0, %v5418
        %5420 = vst [vmem:[#allocation3 + $0x38] sm:$0x1] %v5419
        %v5421 = vld [vmem:[#allocation3 + $0x44] sm:$0x1]
        %v5422 = vsel %vm5405, 0, %v5421
        %5423 = vst [vmem:[#allocation3 + $0x44] sm:$0x1] %v5422
        %v5424 = vld [vmem:[#allocation3 + $0x50] sm:$0x1]
        %v5425 = vsel %vm5405, 0, %v5424
        %5426 = vst [vmem:[#allocation3 + $0x50] sm:$0x1] %v5425
        %v5427 = vld [vmem:[#allocation3 + $0x5c] sm:$0x1]
        %v5428 = vsel %vm5405, 0, %v5427
        %5429 = vst [vmem:[#allocation3 + $0x5c] sm:$0x1] %v5428
        %v5430 = vld [vmem:[#allocation3 + $0x68] sm:$0x1]
        %v5431 = vsel %vm5405, 0, %v5430
        %5432 = vst [vmem:[#allocation3 + $0x68] sm:$0x1] %v5431
        %v5433 = vld [vmem:[#allocation3 + $0x74] sm:$0x1]
        %v5434 = vsel %vm5405, 0, %v5433
        %5435 = vst [vmem:[#allocation3 + $0x74] sm:$0x1] %v5434
        %v5436 = vld [vmem:[#allocation3 + $0x80] sm:$0x1]
        %v5437 = vsel %vm5405, 0, %v5436
        %5438 = vst [vmem:[#allocation3 + $0x80] sm:$0x1] %v5437
        %v5439 = vld [vmem:[#allocation3 + $0x8c] sm:$0x1]
        %v5440 = vsel %vm5405, 0, %v5439
        %5441 = vst [vmem:[#allocation3 + $0x8c] sm:$0x1] %v5440
        %v5442 = vld [vmem:[#allocation3 + $0x98] sm:$0x1]
        %v5443 = vsel %vm5405, 0, %v5442
        %5444 = vst [vmem:[#allocation3 + $0x98] sm:$0x1] %v5443
        %v5445 = vld [vmem:[#allocation3 + $0xa4] sm:$0x1]
        %v5446 = vsel %vm5405, 0, %v5445
        %5447 = vst [vmem:[#allocation3 + $0xa4] sm:$0x1] %v5446
        %v5448 = vld [vmem:[#allocation3 + $0xb0] sm:$0x1]
        %v5449 = vsel %vm5405, 0, %v5448
        %5450 = vst [vmem:[#allocation3 + $0xb0] sm:$0x1] %v5449
        %v5451 = vld [vmem:[#allocation3 + $0xbc] sm:$0x1]
        %v5452 = vsel %vm5405, 0, %v5451
        %5453 = vst [vmem:[#allocation3 + $0xbc] sm:$0x1] %v5452
        %v5454 = vld [vmem:[#allocation3 + $0xc8] sm:$0x1]
        %v5455 = vsel %vm5405, 0, %v5454
        %5456 = vst [vmem:[#allocation3 + $0xc8] sm:$0x1] %v5455
        %v5457 = vld [vmem:[#allocation3 + $0xd4] sm:$0x1]
        %v5458 = vsel %vm5405, 0, %v5457
        %5459 = vst [vmem:[#allocation3 + $0xd4] sm:$0x1] %v5458
        %v5460 = vpack.c.bf16 %v5308, %v5308
        %v5461 = vpack.c.bf16 %v5309, %v5309
        %v5462 = vpack.c.bf16 %v5310, %v5310
        %v5463 = vpack.c.bf16 %v5311, %v5311
        %v5464 = vpack.c.bf16 %v5312, %v5312
        %v5465 = vpack.c.bf16 %v5313, %v5313
        %v5466 = vpack.c.bf16 %v5314, %v5314
        %v5467 = vpack.c.bf16 %v5315, %v5315
        %v5468 = vpack.c.bf16 %v5316, %v5316
        %v5469 = vpack.c.bf16 %v5317, %v5317
        %v5470 = vpack.c.bf16 %v5318, %v5318
        %v5471 = vpack.c.bf16 %v5319, %v5319
        %v5472 = vpack.c.bf16 %v5320, %v5320
        %v5473 = vpack.c.bf16 %v5321, %v5321
        %v5474 = vpack.c.bf16 %v5322, %v5322
        %v5475 = vpack.c.bf16 %v5323, %v5323
        %v5476 = vpack.c.bf16 %v5324, %v5324
        %v5477 = vpack.c.bf16 %v5325, %v5325
        %v5478 = vpack.c.bf16 %v5326, %v5326
        %v5479 = vpack.c.bf16 %v5327, %v5327
        %v5480 = vpack.c.bf16 %v5328, %v5328
        %v5481 = vpack.c.bf16 %v5329, %v5329
        %v5482 = vpack.c.bf16 %v5330, %v5330
        %v5483 = vpack.c.bf16 %v5331, %v5331
        %v5484 = vpack.c.bf16 %v5332, %v5332
        %v5485 = vpack.c.bf16 %v5333, %v5333
        %v5486 = vpack.c.bf16 %v5334, %v5334
        %v5487 = vpack.c.bf16 %v5335, %v5335
        %v5488 = vpack.c.bf16 %v5336, %v5336
        %v5489 = vpack.c.bf16 %v5337, %v5337
        %v5490 = vpack.c.bf16 %v5338, %v5338
        %v5491 = vpack.c.bf16 %v5339, %v5339
        %vm5492 = vsmask.f32 4368
        %vm5493 = vmor %vm5348, %vm5492
        %v5495 = vshrl.u32 %v5460, 16
        %v5497 = vrot.slane %v5495, 7
        %v5498 = vshll.u32 %v5460, 16
        %v5500 = vor.u32 %v5497, %v5498
        %v5501 = vrot.slane %v5497, 4
        %v5503 = vshrl.u32 %v5461, 16
        %v5505 = vrot.slane %v5503, 7
        %v5506 = vshll.u32 %v5461, 16
        %v5508 = vor.u32 %v5505, %v5506
        %v5509 = vsel %vm5493, %v5501, %v5508
        %v5510 = vrot.slane %v5505, 4
        %v5512 = vshrl.u32 %v5462, 16
        %v5514 = vrot.slane %v5512, 7
        %v5515 = vshll.u32 %v5462, 16
        %v5517 = vor.u32 %v5514, %v5515
        %v5518 = vrot.slane %v5514, 4
        %v5520 = vshrl.u32 %v5463, 16
        %v5522 = vrot.slane %v5520, 7
        %v5523 = vshll.u32 %v5463, 16
        %v5525 = vor.u32 %v5522, %v5523
        %v5526 = vsel %vm5493, %v5518, %v5525
        %v5527 = vrot.slane %v5522, 4
        %v5529 = vshrl.u32 %v5464, 16
        %v5531 = vrot.slane %v5529, 7
        %v5532 = vshll.u32 %v5464, 16
        %v5534 = vor.u32 %v5531, %v5532
        %v5535 = vrot.slane %v5531, 4
        %v5537 = vshrl.u32 %v5465, 16
        %v5539 = vrot.slane %v5537, 7
        %v5540 = vshll.u32 %v5465, 16
        %v5542 = vor.u32 %v5539, %v5540
        %v5543 = vsel %vm5493, %v5535, %v5542
        %v5544 = vrot.slane %v5539, 4
        %v5546 = vshrl.u32 %v5466, 16
        %v5548 = vrot.slane %v5546, 7
        %v5549 = vshll.u32 %v5466, 16
        %v5551 = vor.u32 %v5548, %v5549
        %v5552 = vrot.slane %v5548, 4
        %v5554 = vshrl.u32 %v5467, 16
        %v5556 = vrot.slane %v5554, 7
        %v5557 = vshll.u32 %v5467, 16
        %v5559 = vor.u32 %v5556, %v5557
        %v5560 = vsel %vm5493, %v5552, %v5559
        %v5561 = vrot.slane %v5556, 4
        %v5563 = vshrl.u32 %v5468, 16
        %v5565 = vrot.slane %v5563, 7
        %v5566 = vshll.u32 %v5468, 16
        %v5568 = vor.u32 %v5565, %v5566
        %v5569 = vrot.slane %v5565, 4
        %v5571 = vshrl.u32 %v5469, 16
        %v5573 = vrot.slane %v5571, 7
        %v5574 = vshll.u32 %v5469, 16
        %v5576 = vor.u32 %v5573, %v5574
        %v5577 = vsel %vm5493, %v5569, %v5576
        %v5578 = vrot.slane %v5573, 4
        %v5580 = vshrl.u32 %v5470, 16
        %v5582 = vrot.slane %v5580, 7
        %v5583 = vshll.u32 %v5470, 16
        %v5585 = vor.u32 %v5582, %v5583
        %v5586 = vrot.slane %v5582, 4
        %v5588 = vshrl.u32 %v5471, 16
        %v5590 = vrot.slane %v5588, 7
        %v5591 = vshll.u32 %v5471, 16
        %v5593 = vor.u32 %v5590, %v5591
        %v5594 = vsel %vm5493, %v5586, %v5593
        %v5595 = vrot.slane %v5590, 4
        %v5597 = vshrl.u32 %v5472, 16
        %v5599 = vrot.slane %v5597, 7
        %v5600 = vshll.u32 %v5472, 16
        %v5602 = vor.u32 %v5599, %v5600
        %v5603 = vrot.slane %v5599, 4
        %v5605 = vshrl.u32 %v5473, 16
        %v5607 = vrot.slane %v5605, 7
        %v5608 = vshll.u32 %v5473, 16
        %v5610 = vor.u32 %v5607, %v5608
        %v5611 = vsel %vm5493, %v5603, %v5610
        %v5612 = vrot.slane %v5607, 4
        %v5614 = vshrl.u32 %v5474, 16
        %v5616 = vrot.slane %v5614, 7
        %v5617 = vshll.u32 %v5474, 16
        %v5619 = vor.u32 %v5616, %v5617
        %v5620 = vrot.slane %v5616, 4
        %v5622 = vshrl.u32 %v5475, 16
        %v5624 = vrot.slane %v5622, 7
        %v5625 = vshll.u32 %v5475, 16
        %v5627 = vor.u32 %v5624, %v5625
        %v5628 = vsel %vm5493, %v5620, %v5627
        %v5629 = vrot.slane %v5624, 4
        %v5631 = vshrl.u32 %v5476, 16
        %v5633 = vrot.slane %v5631, 7
        %v5634 = vshll.u32 %v5476, 16
        %v5636 = vor.u32 %v5633, %v5634
        %v5637 = vrot.slane %v5633, 4
        %v5639 = vshrl.u32 %v5477, 16
        %v5641 = vrot.slane %v5639, 7
        %v5642 = vshll.u32 %v5477, 16
        %v5644 = vor.u32 %v5641, %v5642
        %v5645 = vsel %vm5493, %v5637, %v5644
        %v5646 = vrot.slane %v5641, 4
        %v5648 = vshrl.u32 %v5478, 16
        %v5650 = vrot.slane %v5648, 7
        %v5651 = vshll.u32 %v5478, 16
        %v5653 = vor.u32 %v5650, %v5651
        %v5654 = vrot.slane %v5650, 4
        %v5656 = vshrl.u32 %v5479, 16
        %v5658 = vrot.slane %v5656, 7
        %v5659 = vshll.u32 %v5479, 16
        %v5661 = vor.u32 %v5658, %v5659
        %v5662 = vsel %vm5493, %v5654, %v5661
        %v5663 = vrot.slane %v5658, 4
        %v5665 = vshrl.u32 %v5480, 16
        %v5667 = vrot.slane %v5665, 7
        %v5668 = vshll.u32 %v5480, 16
        %v5670 = vor.u32 %v5667, %v5668
        %v5671 = vrot.slane %v5667, 4
        %v5673 = vshrl.u32 %v5481, 16
        %v5675 = vrot.slane %v5673, 7
        %v5676 = vshll.u32 %v5481, 16
        %v5678 = vor.u32 %v5675, %v5676
        %v5679 = vsel %vm5493, %v5671, %v5678
        %v5680 = vrot.slane %v5675, 4
        %v5682 = vshrl.u32 %v5482, 16
        %v5684 = vrot.slane %v5682, 7
        %v5685 = vshll.u32 %v5482, 16
        %v5687 = vor.u32 %v5684, %v5685
        %v5688 = vrot.slane %v5684, 4
        %v5690 = vshrl.u32 %v5483, 16
        %v5692 = vrot.slane %v5690, 7
        %v5693 = vshll.u32 %v5483, 16
        %v5695 = vor.u32 %v5692, %v5693
        %v5696 = vsel %vm5493, %v5688, %v5695
        %v5697 = vrot.slane %v5692, 4
        %v5699 = vshrl.u32 %v5484, 16
        %v5701 = vrot.slane %v5699, 7
        %v5702 = vshll.u32 %v5484, 16
        %v5704 = vor.u32 %v5701, %v5702
        %v5705 = vrot.slane %v5701, 4
        %v5707 = vshrl.u32 %v5485, 16
        %v5709 = vrot.slane %v5707, 7
        %v5710 = vshll.u32 %v5485, 16
        %v5712 = vor.u32 %v5709, %v5710
        %v5713 = vsel %vm5493, %v5705, %v5712
        %v5714 = vrot.slane %v5709, 4
        %v5716 = vshrl.u32 %v5486, 16
        %v5718 = vrot.slane %v5716, 7
        %v5719 = vshll.u32 %v5486, 16
        %v5721 = vor.u32 %v5718, %v5719
        %v5722 = vrot.slane %v5718, 4
        %v5724 = vshrl.u32 %v5487, 16
        %v5726 = vrot.slane %v5724, 7
        %v5727 = vshll.u32 %v5487, 16
        %v5729 = vor.u32 %v5726, %v5727
        %v5730 = vsel %vm5493, %v5722, %v5729
        %v5731 = vrot.slane %v5726, 4
        %v5733 = vshrl.u32 %v5488, 16
        %v5735 = vrot.slane %v5733, 7
        %v5736 = vshll.u32 %v5488, 16
        %v5738 = vor.u32 %v5735, %v5736
        %v5739 = vrot.slane %v5735, 4
        %v5741 = vshrl.u32 %v5489, 16
        %v5743 = vrot.slane %v5741, 7
        %v5744 = vshll.u32 %v5489, 16
        %v5746 = vor.u32 %v5743, %v5744
        %v5747 = vsel %vm5493, %v5739, %v5746
        %v5748 = vrot.slane %v5743, 4
        %v5750 = vshrl.u32 %v5490, 16
        %v5752 = vrot.slane %v5750, 7
        %v5753 = vshll.u32 %v5490, 16
        %v5755 = vor.u32 %v5752, %v5753
        %v5756 = vrot.slane %v5752, 4
        %v5758 = vshrl.u32 %v5491, 16
        %v5760 = vrot.slane %v5758, 7
        %v5761 = vshll.u32 %v5491, 16
        %v5763 = vor.u32 %v5760, %v5761
        %v5764 = vsel %vm5493, %v5756, %v5763
        %v5765 = vrot.slane %v5760, 4
        %s5814 = scalar_lea.vmem [#allocation3], 12
        %vm5815 = vcmask 1043456
        %vm5816 = vmand %vm5815, %vm5404
        %v5817 = vld [vmem:[%s5814] sm:$0xf]
        %v5818 = vsel %vm5816, %v5500, %v5817
        %5819 = vst [vmem:[%s5814] sm:$0xf] %v5818
        %5820 = vst [vmem:[%s5814 + $0x4] sm:$0xf] %v5509
        %v5821 = vld [vmem:[%s5814 + $0x8] sm:$0x1]
        %v5822 = vsel %vm5349, %v5510, %v5821
        %5823 = vst [vmem:[%s5814 + $0x8] sm:$0x1] %v5822
        %v5824 = vld [vmem:[%s5814 + $0xc] sm:$0xf]
        %v5825 = vsel %vm5816, %v5517, %v5824
        %5826 = vst [vmem:[%s5814 + $0xc] sm:$0xf] %v5825
        %5827 = vst [vmem:[%s5814 + $0x10] sm:$0xf] %v5526
        %v5828 = vld [vmem:[%s5814 + $0x14] sm:$0x1]
        %v5829 = vsel %vm5349, %v5527, %v5828
        %5830 = vst [vmem:[%s5814 + $0x14] sm:$0x1] %v5829
        %v5831 = vld [vmem:[%s5814 + $0x18] sm:$0xf]
        %v5832 = vsel %vm5816, %v5534, %v5831
        %5833 = vst [vmem:[%s5814 + $0x18] sm:$0xf] %v5832
        %5834 = vst [vmem:[%s5814 + $0x1c] sm:$0xf] %v5543
        %v5835 = vld [vmem:[%s5814 + $0x20] sm:$0x1]
        %v5836 = vsel %vm5349, %v5544, %v5835
        %5837 = vst [vmem:[%s5814 + $0x20] sm:$0x1] %v5836
        %v5838 = vld [vmem:[%s5814 + $0x24] sm:$0xf]
        %v5839 = vsel %vm5816, %v5551, %v5838
        %5840 = vst [vmem:[%s5814 + $0x24] sm:$0xf] %v5839
        %5841 = vst [vmem:[%s5814 + $0x28] sm:$0xf] %v5560
        %v5842 = vld [vmem:[%s5814 + $0x2c] sm:$0x1]
        %v5843 = vsel %vm5349, %v5561, %v5842
        %5844 = vst [vmem:[%s5814 + $0x2c] sm:$0x1] %v5843
        %v5845 = vld [vmem:[%s5814 + $0x30] sm:$0xf]
        %v5846 = vsel %vm5816, %v5568, %v5845
        %5847 = vst [vmem:[%s5814 + $0x30] sm:$0xf] %v5846
        %5848 = vst [vmem:[%s5814 + $0x34] sm:$0xf] %v5577
        %v5849 = vld [vmem:[%s5814 + $0x38] sm:$0x1]
        %v5850 = vsel %vm5349, %v5578, %v5849
        %5851 = vst [vmem:[%s5814 + $0x38] sm:$0x1] %v5850
        %v5852 = vld [vmem:[%s5814 + $0x3c] sm:$0xf]
        %v5853 = vsel %vm5816, %v5585, %v5852
        %5854 = vst [vmem:[%s5814 + $0x3c] sm:$0xf] %v5853
        %5855 = vst [vmem:[%s5814 + $0x40] sm:$0xf] %v5594
        %v5856 = vld [vmem:[%s5814 + $0x44] sm:$0x1]
        %v5857 = vsel %vm5349, %v5595, %v5856
        %5858 = vst [vmem:[%s5814 + $0x44] sm:$0x1] %v5857
        %v5859 = vld [vmem:[%s5814 + $0x48] sm:$0xf]
        %v5860 = vsel %vm5816, %v5602, %v5859
        %5861 = vst [vmem:[%s5814 + $0x48] sm:$0xf] %v5860
        %5862 = vst [vmem:[%s5814 + $0x4c] sm:$0xf] %v5611
        %v5863 = vld [vmem:[%s5814 + $0x50] sm:$0x1]
        %v5864 = vsel %vm5349, %v5612, %v5863
        %5865 = vst [vmem:[%s5814 + $0x50] sm:$0x1] %v5864
        %v5866 = vld [vmem:[%s5814 + $0x54] sm:$0xf]
        %v5867 = vsel %vm5816, %v5619, %v5866
        %5868 = vst [vmem:[%s5814 + $0x54] sm:$0xf] %v5867
        %5869 = vst [vmem:[%s5814 + $0x58] sm:$0xf] %v5628
        %v5870 = vld [vmem:[%s5814 + $0x5c] sm:$0x1]
        %v5871 = vsel %vm5349, %v5629, %v5870
        %5872 = vst [vmem:[%s5814 + $0x5c] sm:$0x1] %v5871
        %v5873 = vld [vmem:[%s5814 + $0x60] sm:$0xf]
        %v5874 = vsel %vm5816, %v5636, %v5873
        %5875 = vst [vmem:[%s5814 + $0x60] sm:$0xf] %v5874
        %5876 = vst [vmem:[%s5814 + $0x64] sm:$0xf] %v5645
        %v5877 = vld [vmem:[%s5814 + $0x68] sm:$0x1]
        %v5878 = vsel %vm5349, %v5646, %v5877
        %5879 = vst [vmem:[%s5814 + $0x68] sm:$0x1] %v5878
        %v5880 = vld [vmem:[%s5814 + $0x6c] sm:$0xf]
        %v5881 = vsel %vm5816, %v5653, %v5880
        %5882 = vst [vmem:[%s5814 + $0x6c] sm:$0xf] %v5881
        %5883 = vst [vmem:[%s5814 + $0x70] sm:$0xf] %v5662
        %v5884 = vld [vmem:[%s5814 + $0x74] sm:$0x1]
        %v5885 = vsel %vm5349, %v5663, %v5884
        %5886 = vst [vmem:[%s5814 + $0x74] sm:$0x1] %v5885
        %v5887 = vld [vmem:[%s5814 + $0x78] sm:$0xf]
        %v5888 = vsel %vm5816, %v5670, %v5887
        %5889 = vst [vmem:[%s5814 + $0x78] sm:$0xf] %v5888
        %5890 = vst [vmem:[%s5814 + $0x7c] sm:$0xf] %v5679
        %v5891 = vld [vmem:[%s5814 + $0x80] sm:$0x1]
        %v5892 = vsel %vm5349, %v5680, %v5891
        %5893 = vst [vmem:[%s5814 + $0x80] sm:$0x1] %v5892
        %v5894 = vld [vmem:[%s5814 + $0x84] sm:$0xf]
        %v5895 = vsel %vm5816, %v5687, %v5894
        %5896 = vst [vmem:[%s5814 + $0x84] sm:$0xf] %v5895
        %5897 = vst [vmem:[%s5814 + $0x88] sm:$0xf] %v5696
        %v5898 = vld [vmem:[%s5814 + $0x8c] sm:$0x1]
        %v5899 = vsel %vm5349, %v5697, %v5898
        %5900 = vst [vmem:[%s5814 + $0x8c] sm:$0x1] %v5899
        %v5901 = vld [vmem:[%s5814 + $0x90] sm:$0xf]
        %v5902 = vsel %vm5816, %v5704, %v5901
        %5903 = vst [vmem:[%s5814 + $0x90] sm:$0xf] %v5902
        %5904 = vst [vmem:[%s5814 + $0x94] sm:$0xf] %v5713
        %v5905 = vld [vmem:[%s5814 + $0x98] sm:$0x1]
        %v5906 = vsel %vm5349, %v5714, %v5905
        %5907 = vst [vmem:[%s5814 + $0x98] sm:$0x1] %v5906
        %v5908 = vld [vmem:[%s5814 + $0x9c] sm:$0xf]
        %v5909 = vsel %vm5816, %v5721, %v5908
        %5910 = vst [vmem:[%s5814 + $0x9c] sm:$0xf] %v5909
        %5911 = vst [vmem:[%s5814 + $0xa0] sm:$0xf] %v5730
        %v5912 = vld [vmem:[%s5814 + $0xa4] sm:$0x1]
        %v5913 = vsel %vm5349, %v5731, %v5912
        %5914 = vst [vmem:[%s5814 + $0xa4] sm:$0x1] %v5913
        %v5915 = vld [vmem:[%s5814 + $0xa8] sm:$0xf]
        %v5916 = vsel %vm5816, %v5738, %v5915
        %5917 = vst [vmem:[%s5814 + $0xa8] sm:$0xf] %v5916
        %5918 = vst [vmem:[%s5814 + $0xac] sm:$0xf] %v5747
        %v5919 = vld [vmem:[%s5814 + $0xb0] sm:$0x1]
        %v5920 = vsel %vm5349, %v5748, %v5919
        %5921 = vst [vmem:[%s5814 + $0xb0] sm:$0x1] %v5920
        %v5922 = vld [vmem:[%s5814 + $0xb4] sm:$0xf]
        %v5923 = vsel %vm5816, %v5755, %v5922
        %5924 = vst [vmem:[%s5814 + $0xb4] sm:$0xf] %v5923
        %5925 = vst [vmem:[%s5814 + $0xb8] sm:$0xf] %v5764
        %v5926 = vld [vmem:[%s5814 + $0xbc] sm:$0x1]
        %v5927 = vsel %vm5349, %v5765, %v5926
        %5928 = vst [vmem:[%s5814 + $0xbc] sm:$0x1] %v5927
        %v5929 = vld [vmem:[%s4] sm:$0x1]
        %v5931 = vperm.slane %v5929, 0
        %5933 = vst [vmem:[#allocation2] sm:$0xff] %v5931
        %5934 = vst [vmem:[#allocation2 + $0x8] sm:$0xff] %v5931
        %5935 = vst [vmem:[#allocation2 + $0x10] sm:$0xff] %v5931
        %5936 = vst [vmem:[#allocation2 + $0x18] sm:$0xff] %v5931
        %5937 = vst [vmem:[#allocation2 + $0x20] sm:$0xff] %v5931
        %5938 = vst [vmem:[#allocation2 + $0x28] sm:$0xff] %v5931
        %5939 = vst [vmem:[#allocation2 + $0x30] sm:$0xff] %v5931
        %5940 = vst [vmem:[#allocation2 + $0x38] sm:$0xff] %v5931
        %5941 = vst [vmem:[#allocation2 + $0x40] sm:$0xff] %v5931
        %5942 = vst [vmem:[#allocation2 + $0x48] sm:$0xff] %v5931
        %5943 = vst [vmem:[#allocation2 + $0x50] sm:$0xff] %v5931
        %5944 = vst [vmem:[#allocation2 + $0x58] sm:$0xff] %v5931
        %5945 = vst [vmem:[#allocation2 + $0x60] sm:$0xff] %v5931
        %5946 = vst [vmem:[#allocation2 + $0x68] sm:$0xff] %v5931
        %5947 = vst [vmem:[#allocation2 + $0x70] sm:$0xff] %v5931
        %5948 = vst [vmem:[#allocation2 + $0x78] sm:$0xff] %v5931
        %5949 = vst [vmem:[#allocation2 + $0x80] sm:$0xff] %v5931
        %5950 = vst [vmem:[#allocation2 + $0x88] sm:$0xff] %v5931
        %5951 = vst [vmem:[#allocation2 + $0x90] sm:$0xff] %v5931
        %5952 = vst [vmem:[#allocation2 + $0x98] sm:$0xff] %v5931
        %5953 = vst [vmem:[#allocation2 + $0xa0] sm:$0xff] %v5931
        %5954 = vst [vmem:[#allocation2 + $0xa8] sm:$0xff] %v5931
        %5955 = vst [vmem:[#allocation2 + $0xb0] sm:$0xff] %v5931
        %5956 = vst [vmem:[#allocation2 + $0xb8] sm:$0xff] %v5931
        %5957 = vst [vmem:[#allocation2 + $0xc0] sm:$0xff] %v5931
        %5958 = vst [vmem:[#allocation2 + $0xc8] sm:$0xff] %v5931
        %5959 = vst [vmem:[#allocation2 + $0xd0] sm:$0xff] %v5931
        %5960 = vst [vmem:[#allocation2 + $0xd8] sm:$0xff] %v5931
        %5961 = vst [vmem:[#allocation2 + $0xe0] sm:$0xff] %v5931
        %5962 = vst [vmem:[#allocation2 + $0xe8] sm:$0xff] %v5931
        %5963 = vst [vmem:[#allocation2 + $0xf0] sm:$0xff] %v5931
        %5964 = vst [vmem:[#allocation2 + $0xf8] sm:$0xff] %v5931
        %v5965 = vld [vmem:[#allocation3] sm:$0xf]
        %v5966 = vld [vmem:[#allocation3 + $0x4] sm:$0xf]
        %v5967 = vld [vmem:[#allocation3 + $0xc] sm:$0xf]
        %v5968 = vld [vmem:[#allocation3 + $0x10] sm:$0xf]
        %v5969 = vld [vmem:[#allocation3 + $0x18] sm:$0xf]
        %v5970 = vld [vmem:[#allocation3 + $0x1c] sm:$0xf]
        %v5971 = vld [vmem:[#allocation3 + $0x24] sm:$0xf]
        %v5972 = vld [vmem:[#allocation3 + $0x28] sm:$0xf]
        %v5973 = vld [vmem:[#allocation3 + $0x30] sm:$0xf]
        %v5974 = vld [vmem:[#allocation3 + $0x34] sm:$0xf]
        %v5975 = vld [vmem:[#allocation3 + $0x3c] sm:$0xf]
        %v5976 = vld [vmem:[#allocation3 + $0x40] sm:$0xf]
        %v5977 = vld [vmem:[#allocation3 + $0x48] sm:$0xf]
        %v5978 = vld [vmem:[#allocation3 + $0x4c] sm:$0xf]
        %v5979 = vld [vmem:[#allocation3 + $0x54] sm:$0xf]
        %v5980 = vld [vmem:[#allocation3 + $0x58] sm:$0xf]
        %v5981 = vld [vmem:[#allocation3 + $0x60] sm:$0xf]
        %v5982 = vld [vmem:[#allocation3 + $0x64] sm:$0xf]
        %v5983 = vld [vmem:[#allocation3 + $0x6c] sm:$0xf]
        %v5984 = vld [vmem:[#allocation3 + $0x70] sm:$0xf]
        %v5985 = vld [vmem:[#allocation3 + $0x78] sm:$0xf]
        %v5986 = vld [vmem:[#allocation3 + $0x7c] sm:$0xf]
        %v5987 = vld [vmem:[#allocation3 + $0x84] sm:$0xf]
        %v5988 = vld [vmem:[#allocation3 + $0x88] sm:$0xf]
        %v5989 = vld [vmem:[#allocation3 + $0x90] sm:$0xf]
        %v5990 = vld [vmem:[#allocation3 + $0x94] sm:$0xf]
        %v5991 = vld [vmem:[#allocation3 + $0x9c] sm:$0xf]
        %v5992 = vld [vmem:[#allocation3 + $0xa0] sm:$0xf]
        %v5993 = vld [vmem:[#allocation3 + $0xa8] sm:$0xf]
        %v5994 = vld [vmem:[#allocation3 + $0xac] sm:$0xf]
        %v5995 = vld [vmem:[#allocation3 + $0xb4] sm:$0xf]
        %v5996 = vld [vmem:[#allocation3 + $0xb8] sm:$0xf]
        %v5997 = vld [vmem:[#allocation2] sm:$0xff]
        %v5998 = vld [vmem:[#allocation2 + $0x8] sm:$0xff]
        %v5999 = vld [vmem:[#allocation2 + $0x10] sm:$0xff]
        %v6000 = vld [vmem:[#allocation2 + $0x18] sm:$0xff]
        %v6001 = vld [vmem:[#allocation2 + $0x20] sm:$0xff]
        %v6002 = vld [vmem:[#allocation2 + $0x28] sm:$0xff]
        %v6003 = vld [vmem:[#allocation2 + $0x30] sm:$0xff]
        %v6004 = vld [vmem:[#allocation2 + $0x38] sm:$0xff]
        %v6005 = vld [vmem:[#allocation2 + $0x40] sm:$0xff]
        %v6006 = vld [vmem:[#allocation2 + $0x48] sm:$0xff]
        %v6007 = vld [vmem:[#allocation2 + $0x50] sm:$0xff]
        %v6008 = vld [vmem:[#allocation2 + $0x58] sm:$0xff]
        %v6009 = vld [vmem:[#allocation2 + $0x60] sm:$0xff]
        %v6010 = vld [vmem:[#allocation2 + $0x68] sm:$0xff]
        %v6011 = vld [vmem:[#allocation2 + $0x70] sm:$0xff]
        %v6012 = vld [vmem:[#allocation2 + $0x78] sm:$0xff]
        %v6013 = vld [vmem:[#allocation2 + $0x80] sm:$0xff]
        %v6014 = vld [vmem:[#allocation2 + $0x88] sm:$0xff]
        %v6015 = vld [vmem:[#allocation2 + $0x90] sm:$0xff]
        %v6016 = vld [vmem:[#allocation2 + $0x98] sm:$0xff]
        %v6017 = vld [vmem:[#allocation2 + $0xa0] sm:$0xff]
        %v6018 = vld [vmem:[#allocation2 + $0xa8] sm:$0xff]
        %v6019 = vld [vmem:[#allocation2 + $0xb0] sm:$0xff]
        %v6020 = vld [vmem:[#allocation2 + $0xb8] sm:$0xff]
        %v6021 = vld [vmem:[#allocation2 + $0xc0] sm:$0xff]
        %v6022 = vld [vmem:[#allocation2 + $0xc8] sm:$0xff]
        %v6023 = vld [vmem:[#allocation2 + $0xd0] sm:$0xff]
        %v6024 = vld [vmem:[#allocation2 + $0xd8] sm:$0xff]
        %v6025 = vld [vmem:[#allocation2 + $0xe0] sm:$0xff]
        %v6026 = vld [vmem:[#allocation2 + $0xe8] sm:$0xff]
        %v6027 = vld [vmem:[#allocation2 + $0xf0] sm:$0xff]
        %v6028 = vld [vmem:[#allocation2 + $0xf8] sm:$0xff]
        %v6029 = vld [vmem:[#allocation4] sm:$0xf]
        %v6030 = vld [vmem:[#allocation4 + $0x4] sm:$0xf]
        %v6031 = vld [vmem:[#allocation4 + $0x8] sm:$0xf]
        %v6032 = vld [vmem:[#allocation4 + $0xc] sm:$0xf]
        %v6033 = vld [vmem:[#allocation4 + $0x10] sm:$0xf]
        %v6034 = vld [vmem:[#allocation4 + $0x14] sm:$0xf]
        %v6035 = vld [vmem:[#allocation4 + $0x18] sm:$0xf]
        %v6036 = vld [vmem:[#allocation4 + $0x1c] sm:$0xf]
        %v6037 = vld [vmem:[#allocation4 + $0x20] sm:$0xf]
        %v6038 = vld [vmem:[#allocation4 + $0x24] sm:$0xf]
        %v6039 = vld [vmem:[#allocation4 + $0x28] sm:$0xf]
        %v6040 = vld [vmem:[#allocation4 + $0x2c] sm:$0xf]
        %v6041 = vld [vmem:[#allocation4 + $0x30] sm:$0xf]
        %v6042 = vld [vmem:[#allocation4 + $0x34] sm:$0xf]
        %v6043 = vld [vmem:[#allocation4 + $0x38] sm:$0xf]
        %v6044 = vld [vmem:[#allocation4 + $0x3c] sm:$0xf]
        %v6077 = vunpack.c.l.b16 %v5965
        %v6078 = vunpack.c.l.b16 %v5966
        %v6079 = vunpack.c.l.b16 %v5967
        %v6080 = vunpack.c.l.b16 %v5968
        %v6081 = vunpack.c.l.b16 %v5969
        %v6082 = vunpack.c.l.b16 %v5970
        %v6083 = vunpack.c.l.b16 %v5971
        %v6084 = vunpack.c.l.b16 %v5972
        %v6085 = vunpack.c.l.b16 %v5973
        %v6086 = vunpack.c.l.b16 %v5974
        %v6087 = vunpack.c.l.b16 %v5975
        %v6088 = vunpack.c.l.b16 %v5976
        %v6089 = vunpack.c.l.b16 %v5977
        %v6090 = vunpack.c.l.b16 %v5978
        %v6091 = vunpack.c.l.b16 %v5979
        %v6092 = vunpack.c.l.b16 %v5980
        %v6093 = vunpack.c.l.b16 %v5981
        %v6094 = vunpack.c.l.b16 %v5982
        %v6095 = vunpack.c.l.b16 %v5983
        %v6096 = vunpack.c.l.b16 %v5984
        %v6097 = vunpack.c.l.b16 %v5985
        %v6098 = vunpack.c.l.b16 %v5986
        %v6099 = vunpack.c.l.b16 %v5987
        %v6100 = vunpack.c.l.b16 %v5988
        %v6101 = vunpack.c.l.b16 %v5989
        %v6102 = vunpack.c.l.b16 %v5990
        %v6103 = vunpack.c.l.b16 %v5991
        %v6104 = vunpack.c.l.b16 %v5992
        %v6105 = vunpack.c.l.b16 %v5993
        %v6106 = vunpack.c.l.b16 %v5994
        %v6107 = vunpack.c.l.b16 %v5995
        %v6108 = vunpack.c.l.b16 %v5996
        %v6109 = vpack.c.b16 %v6078, %v6077
        %v6110 = vpack.c.b16 %v6080, %v6079
        %v6111 = vpack.c.b16 %v6082, %v6081
        %v6112 = vpack.c.b16 %v6084, %v6083
        %v6113 = vpack.c.b16 %v6086, %v6085
        %v6114 = vpack.c.b16 %v6088, %v6087
        %v6115 = vpack.c.b16 %v6090, %v6089
        %v6116 = vpack.c.b16 %v6092, %v6091
        %v6117 = vpack.c.b16 %v6094, %v6093
        %v6118 = vpack.c.b16 %v6096, %v6095
        %v6119 = vpack.c.b16 %v6098, %v6097
        %v6120 = vpack.c.b16 %v6100, %v6099
        %v6121 = vpack.c.b16 %v6102, %v6101
        %v6122 = vpack.c.b16 %v6104, %v6103
        %v6123 = vpack.c.b16 %v6106, %v6105
        %v6124 = vpack.c.b16 %v6108, %v6107
        %v6157 = vunpack.c.l.b16 %v6029
        %v6158 = vunpack.c.l.b16 %v6030
        %v6159 = vunpack.c.l.b16 %v6031
        %v6160 = vunpack.c.l.b16 %v6032
        %v6161 = vunpack.c.l.b16 %v6033
        %v6162 = vunpack.c.l.b16 %v6034
        %v6163 = vunpack.c.l.b16 %v6035
        %v6164 = vunpack.c.l.b16 %v6036
        %v6165 = vunpack.c.l.b16 %v6037
        %v6166 = vunpack.c.l.b16 %v6038
        %v6167 = vunpack.c.l.b16 %v6039
        %v6168 = vunpack.c.l.b16 %v6040
        %v6169 = vunpack.c.l.b16 %v6041
        %v6170 = vunpack.c.l.b16 %v6042
        %v6171 = vunpack.c.l.b16 %v6043
        %v6172 = vunpack.c.l.b16 %v6044
        %v6173 = vpack.c.b16 %v6158, %v6157
        %v6174 = vpack.c.b16 %v6160, %v6159
        %v6175 = vpack.c.b16 %v6162, %v6161
        %v6176 = vpack.c.b16 %v6164, %v6163
        %v6177 = vpack.c.b16 %v6166, %v6165
        %v6178 = vpack.c.b16 %v6168, %v6167
        %v6179 = vpack.c.b16 %v6170, %v6169
        %v6180 = vpack.c.b16 %v6172, %v6171
        %6189 = vmatpush.bf16.msra.mxu0 %v6180
        %6190 = vmatpush.bf16.msra.mxu0 %v6179
        %6191 = vmatpush.bf16.msra.mxu0 %v6178
        %6192 = vmatpush.bf16.msra.mxu0 %v6177
        %6193 = vmatpush.bf16.msra.mxu0 %v6176
        %6194 = vmatpush.bf16.msra.mxu0 %v6175
        %6195 = vmatpush.bf16.msra.mxu0 %v6174
        %6196 = vmatpush.bf16.msra.mxu0 %v6173
        %6197 = vmatmul.bf16.gmra.mxu0 %v6109
        %v6198 = vpop.f32.mrf.mxu0
        %v6199 = vadd.f32 0.0, %v6198
        %v6200 = vpop.f32.mrf.mxu0
        %v6201 = vadd.f32 0.0, %v6200
        %6202 = vmatmul.bf16.gmra.mxu0 %v6110
        %v6203 = vpop.f32.mrf.mxu0
        %v6204 = vadd.f32 0.0, %v6203
        %v6205 = vpop.f32.mrf.mxu0
        %v6206 = vadd.f32 0.0, %v6205
        %6207 = vmatmul.bf16.gmra.mxu0 %v6111
        %v6208 = vpop.f32.mrf.mxu0
        %v6209 = vadd.f32 0.0, %v6208
        %v6210 = vpop.f32.mrf.mxu0
        %v6211 = vadd.f32 0.0, %v6210
        %6212 = vmatmul.bf16.gmra.mxu0 %v6112
        %v6213 = vpop.f32.mrf.mxu0
        %v6214 = vadd.f32 0.0, %v6213
        %v6215 = vpop.f32.mrf.mxu0
        %v6216 = vadd.f32 0.0, %v6215
        %6217 = vmatmul.bf16.gmra.mxu0 %v6113
        %v6218 = vpop.f32.mrf.mxu0
        %v6219 = vadd.f32 0.0, %v6218
        %v6220 = vpop.f32.mrf.mxu0
        %v6221 = vadd.f32 0.0, %v6220
        %6222 = vmatmul.bf16.gmra.mxu0 %v6114
        %v6223 = vpop.f32.mrf.mxu0
        %v6224 = vadd.f32 0.0, %v6223
        %v6225 = vpop.f32.mrf.mxu0
        %v6226 = vadd.f32 0.0, %v6225
        %6227 = vmatmul.bf16.gmra.mxu0 %v6115
        %v6228 = vpop.f32.mrf.mxu0
        %v6229 = vadd.f32 0.0, %v6228
        %v6230 = vpop.f32.mrf.mxu0
        %v6231 = vadd.f32 0.0, %v6230
        %6232 = vmatmul.bf16.gmra.mxu0 %v6116
        %v6233 = vpop.f32.mrf.mxu0
        %v6234 = vadd.f32 0.0, %v6233
        %v6235 = vpop.f32.mrf.mxu0
        %v6236 = vadd.f32 0.0, %v6235
        %6237 = vmatmul.bf16.gmra.mxu0 %v6117
        %v6238 = vpop.f32.mrf.mxu0
        %v6239 = vadd.f32 0.0, %v6238
        %v6240 = vpop.f32.mrf.mxu0
        %v6241 = vadd.f32 0.0, %v6240
        %6242 = vmatmul.bf16.gmra.mxu0 %v6118
        %v6243 = vpop.f32.mrf.mxu0
        %v6244 = vadd.f32 0.0, %v6243
        %v6245 = vpop.f32.mrf.mxu0
        %v6246 = vadd.f32 0.0, %v6245
        %6247 = vmatmul.bf16.gmra.mxu0 %v6119
        %v6248 = vpop.f32.mrf.mxu0
        %v6249 = vadd.f32 0.0, %v6248
        %v6250 = vpop.f32.mrf.mxu0
        %v6251 = vadd.f32 0.0, %v6250
        %6252 = vmatmul.bf16.gmra.mxu0 %v6120
        %v6253 = vpop.f32.mrf.mxu0
        %v6254 = vadd.f32 0.0, %v6253
        %v6255 = vpop.f32.mrf.mxu0
        %v6256 = vadd.f32 0.0, %v6255
        %6257 = vmatmul.bf16.gmra.mxu0 %v6121
        %v6258 = vpop.f32.mrf.mxu0
        %v6259 = vadd.f32 0.0, %v6258
        %v6260 = vpop.f32.mrf.mxu0
        %v6261 = vadd.f32 0.0, %v6260
        %6262 = vmatmul.bf16.gmra.mxu0 %v6122
        %v6263 = vpop.f32.mrf.mxu0
        %v6264 = vadd.f32 0.0, %v6263
        %v6265 = vpop.f32.mrf.mxu0
        %v6266 = vadd.f32 0.0, %v6265
        %6267 = vmatmul.bf16.gmra.mxu0 %v6123
        %v6268 = vpop.f32.mrf.mxu0
        %v6269 = vadd.f32 0.0, %v6268
        %v6270 = vpop.f32.mrf.mxu0
        %v6271 = vadd.f32 0.0, %v6270
        %6272 = vmatmul.bf16.gmra.mxu0 %v6124
        %v6273 = vpop.f32.mrf.mxu0
        %v6274 = vadd.f32 0.0, %v6273
        %v6275 = vpop.f32.mrf.mxu0
        %v6276 = vadd.f32 0.0, %v6275
        %6277 = vdwg.mxu0
        %v6278 = vadd.f32 %v5997, %v6199
        %v6279 = vadd.f32 %v5998, %v6201
        %v6280 = vadd.f32 %v5999, %v6204
        %v6281 = vadd.f32 %v6000, %v6206
        %v6282 = vadd.f32 %v6001, %v6209
        %v6283 = vadd.f32 %v6002, %v6211
        %v6284 = vadd.f32 %v6003, %v6214
        %v6285 = vadd.f32 %v6004, %v6216
        %v6286 = vadd.f32 %v6005, %v6219
        %v6287 = vadd.f32 %v6006, %v6221
        %v6288 = vadd.f32 %v6007, %v6224
        %v6289 = vadd.f32 %v6008, %v6226
        %v6290 = vadd.f32 %v6009, %v6229
        %v6291 = vadd.f32 %v6010, %v6231
        %v6292 = vadd.f32 %v6011, %v6234
        %v6293 = vadd.f32 %v6012, %v6236
        %v6294 = vadd.f32 %v6013, %v6239
        %v6295 = vadd.f32 %v6014, %v6241
        %v6296 = vadd.f32 %v6015, %v6244
        %v6297 = vadd.f32 %v6016, %v6246
        %v6298 = vadd.f32 %v6017, %v6249
        %v6299 = vadd.f32 %v6018, %v6251
        %v6300 = vadd.f32 %v6019, %v6254
        %v6301 = vadd.f32 %v6020, %v6256
        %v6302 = vadd.f32 %v6021, %v6259
        %v6303 = vadd.f32 %v6022, %v6261
        %v6304 = vadd.f32 %v6023, %v6264
        %v6305 = vadd.f32 %v6024, %v6266
        %v6306 = vadd.f32 %v6025, %v6269
        %v6307 = vadd.f32 %v6026, %v6271
        %v6308 = vadd.f32 %v6027, %v6274
        %v6309 = vadd.f32 %v6028, %v6276
        %6310 = vst [vmem:[#allocation2] sm:$0xff] %v6278
        %6311 = vst [vmem:[#allocation2 + $0x8] sm:$0xff] %v6279
        %6312 = vst [vmem:[#allocation2 + $0x10] sm:$0xff] %v6280
        %6313 = vst [vmem:[#allocation2 + $0x18] sm:$0xff] %v6281
        %6314 = vst [vmem:[#allocation2 + $0x20] sm:$0xff] %v6282
        %6315 = vst [vmem:[#allocation2 + $0x28] sm:$0xff] %v6283
        %6316 = vst [vmem:[#allocation2 + $0x30] sm:$0xff] %v6284
        %6317 = vst [vmem:[#allocation2 + $0x38] sm:$0xff] %v6285
        %6318 = vst [vmem:[#allocation2 + $0x40] sm:$0xff] %v6286
        %6319 = vst [vmem:[#allocation2 + $0x48] sm:$0xff] %v6287
        %6320 = vst [vmem:[#allocation2 + $0x50] sm:$0xff] %v6288
        %6321 = vst [vmem:[#allocation2 + $0x58] sm:$0xff] %v6289
        %6322 = vst [vmem:[#allocation2 + $0x60] sm:$0xff] %v6290
        %6323 = vst [vmem:[#allocation2 + $0x68] sm:$0xff] %v6291
        %6324 = vst [vmem:[#allocation2 + $0x70] sm:$0xff] %v6292
        %6325 = vst [vmem:[#allocation2 + $0x78] sm:$0xff] %v6293
        %6326 = vst [vmem:[#allocation2 + $0x80] sm:$0xff] %v6294
        %6327 = vst [vmem:[#allocation2 + $0x88] sm:$0xff] %v6295
        %6328 = vst [vmem:[#allocation2 + $0x90] sm:$0xff] %v6296
        %6329 = vst [vmem:[#allocation2 + $0x98] sm:$0xff] %v6297
        %6330 = vst [vmem:[#allocation2 + $0xa0] sm:$0xff] %v6298
        %6331 = vst [vmem:[#allocation2 + $0xa8] sm:$0xff] %v6299
        %6332 = vst [vmem:[#allocation2 + $0xb0] sm:$0xff] %v6300
        %6333 = vst [vmem:[#allocation2 + $0xb8] sm:$0xff] %v6301
        %6334 = vst [vmem:[#allocation2 + $0xc0] sm:$0xff] %v6302
        %6335 = vst [vmem:[#allocation2 + $0xc8] sm:$0xff] %v6303
        %6336 = vst [vmem:[#allocation2 + $0xd0] sm:$0xff] %v6304
        %6337 = vst [vmem:[#allocation2 + $0xd8] sm:$0xff] %v6305
        %6338 = vst [vmem:[#allocation2 + $0xe0] sm:$0xff] %v6306
        %6339 = vst [vmem:[#allocation2 + $0xe8] sm:$0xff] %v6307
        %6340 = vst [vmem:[#allocation2 + $0xf0] sm:$0xff] %v6308
        %6341 = vst [vmem:[#allocation2 + $0xf8] sm:$0xff] %v6309
        %v6342 = vld [vmem:[#allocation3] sm:$0xf]
        %v6343 = vld [vmem:[#allocation3 + $0x4] sm:$0xf]
        %v6344 = vld [vmem:[#allocation3 + $0x8] sm:$0x1]
        %v6345 = vld [vmem:[#allocation3 + $0xc] sm:$0xf]
        %v6346 = vld [vmem:[#allocation3 + $0x10] sm:$0xf]
        %v6347 = vld [vmem:[#allocation3 + $0x14] sm:$0x1]
        %v6348 = vld [vmem:[#allocation3 + $0x18] sm:$0xf]
        %v6349 = vld [vmem:[#allocation3 + $0x1c] sm:$0xf]
        %v6350 = vld [vmem:[#allocation3 + $0x20] sm:$0x1]
        %v6351 = vld [vmem:[#allocation3 + $0x24] sm:$0xf]
        %v6352 = vld [vmem:[#allocation3 + $0x28] sm:$0xf]
        %v6353 = vld [vmem:[#allocation3 + $0x2c] sm:$0x1]
        %v6354 = vld [vmem:[#allocation3 + $0x30] sm:$0xf]
        %v6355 = vld [vmem:[#allocation3 + $0x34] sm:$0xf]
        %v6356 = vld [vmem:[#allocation3 + $0x38] sm:$0x1]
        %v6357 = vld [vmem:[#allocation3 + $0x3c] sm:$0xf]
        %v6358 = vld [vmem:[#allocation3 + $0x40] sm:$0xf]
        %v6359 = vld [vmem:[#allocation3 + $0x44] sm:$0x1]
        %v6360 = vld [vmem:[#allocation3 + $0x48] sm:$0xf]
        %v6361 = vld [vmem:[#allocation3 + $0x4c] sm:$0xf]
        %v6362 = vld [vmem:[#allocation3 + $0x50] sm:$0x1]
        %v6363 = vld [vmem:[#allocation3 + $0x54] sm:$0xf]
        %v6364 = vld [vmem:[#allocation3 + $0x58] sm:$0xf]
        %v6365 = vld [vmem:[#allocation3 + $0x5c] sm:$0x1]
        %v6366 = vld [vmem:[#allocation3 + $0x60] sm:$0xf]
        %v6367 = vld [vmem:[#allocation3 + $0x64] sm:$0xf]
        %v6368 = vld [vmem:[#allocation3 + $0x68] sm:$0x1]
        %v6369 = vld [vmem:[#allocation3 + $0x6c] sm:$0xf]
        %v6370 = vld [vmem:[#allocation3 + $0x70] sm:$0xf]
        %v6371 = vld [vmem:[#allocation3 + $0x74] sm:$0x1]
        %v6372 = vld [vmem:[#allocation3 + $0x78] sm:$0xf]
        %v6373 = vld [vmem:[#allocation3 + $0x7c] sm:$0xf]
        %v6374 = vld [vmem:[#allocation3 + $0x80] sm:$0x1]
        %v6375 = vld [vmem:[#allocation3 + $0x84] sm:$0xf]
        %v6376 = vld [vmem:[#allocation3 + $0x88] sm:$0xf]
        %v6377 = vld [vmem:[#allocation3 + $0x8c] sm:$0x1]
        %v6378 = vld [vmem:[#allocation3 + $0x90] sm:$0xf]
        %v6379 = vld [vmem:[#allocation3 + $0x94] sm:$0xf]
        %v6380 = vld [vmem:[#allocation3 + $0x98] sm:$0x1]
        %v6381 = vld [vmem:[#allocation3 + $0x9c] sm:$0xf]
        %v6382 = vld [vmem:[#allocation3 + $0xa0] sm:$0xf]
        %v6383 = vld [vmem:[#allocation3 + $0xa4] sm:$0x1]
        %v6384 = vld [vmem:[#allocation3 + $0xa8] sm:$0xf]
        %v6385 = vld [vmem:[#allocation3 + $0xac] sm:$0xf]
        %v6386 = vld [vmem:[#allocation3 + $0xb0] sm:$0x1]
        %v6387 = vld [vmem:[#allocation3 + $0xb4] sm:$0xf]
        %v6388 = vld [vmem:[#allocation3 + $0xb8] sm:$0xf]
        %v6389 = vld [vmem:[#allocation3 + $0xbc] sm:$0x1]
        %v6391 = vshrl.u32 %v6342, 16
        %v6393 = vrot.slane %v6391, 4
        %v6394 = vshll.u32 %v6342, 16
        %v6396 = vrot.slane %v6394, 5
        %v6397 = vor.u32 %v6393, %v6396
        %v6398 = vrot.slane %v6397, 4
        %v6400 = vshll.u32 %v6343, 16
        %v6402 = vrot.slane %v6400, 5
        %v6403 = vsel %vm758, %v6398, %v6402
        %v6404 = vshrl.u32 %v6343, 16
        %v6406 = vrot.slane %v6404, 4
        %v6407 = vor.u32 %v6406, %v6402
        %v6408 = vrot.slane %v6407, 4
        %v6410 = vshll.u32 %v6344, 16
        %v6412 = vrot.slane %v6410, 5
        %v6413 = vsel %vm758, %v6408, %v6412
        %v6415 = vshrl.u32 %v6345, 16
        %v6417 = vrot.slane %v6415, 4
        %v6418 = vshll.u32 %v6345, 16
        %v6420 = vrot.slane %v6418, 5
        %v6421 = vor.u32 %v6417, %v6420
        %v6422 = vrot.slane %v6421, 4
        %v6424 = vshll.u32 %v6346, 16
        %v6426 = vrot.slane %v6424, 5
        %v6427 = vsel %vm758, %v6422, %v6426
        %v6428 = vshrl.u32 %v6346, 16
        %v6430 = vrot.slane %v6428, 4
        %v6431 = vor.u32 %v6430, %v6426
        %v6432 = vrot.slane %v6431, 4
        %v6434 = vshll.u32 %v6347, 16
        %v6436 = vrot.slane %v6434, 5
        %v6437 = vsel %vm758, %v6432, %v6436
        %v6439 = vshrl.u32 %v6348, 16
        %v6441 = vrot.slane %v6439, 4
        %v6442 = vshll.u32 %v6348, 16
        %v6444 = vrot.slane %v6442, 5
        %v6445 = vor.u32 %v6441, %v6444
        %v6446 = vrot.slane %v6445, 4
        %v6448 = vshll.u32 %v6349, 16
        %v6450 = vrot.slane %v6448, 5
        %v6451 = vsel %vm758, %v6446, %v6450
        %v6452 = vshrl.u32 %v6349, 16
        %v6454 = vrot.slane %v6452, 4
        %v6455 = vor.u32 %v6454, %v6450
        %v6456 = vrot.slane %v6455, 4
        %v6458 = vshll.u32 %v6350, 16
        %v6460 = vrot.slane %v6458, 5
        %v6461 = vsel %vm758, %v6456, %v6460
        %v6463 = vshrl.u32 %v6351, 16
        %v6465 = vrot.slane %v6463, 4
        %v6466 = vshll.u32 %v6351, 16
        %v6468 = vrot.slane %v6466, 5
        %v6469 = vor.u32 %v6465, %v6468
        %v6470 = vrot.slane %v6469, 4
        %v6472 = vshll.u32 %v6352, 16
        %v6474 = vrot.slane %v6472, 5
        %v6475 = vsel %vm758, %v6470, %v6474
        %v6476 = vshrl.u32 %v6352, 16
        %v6478 = vrot.slane %v6476, 4
        %v6479 = vor.u32 %v6478, %v6474
        %v6480 = vrot.slane %v6479, 4
        %v6482 = vshll.u32 %v6353, 16
        %v6484 = vrot.slane %v6482, 5
        %v6485 = vsel %vm758, %v6480, %v6484
        %v6487 = vshrl.u32 %v6354, 16
        %v6489 = vrot.slane %v6487, 4
        %v6490 = vshll.u32 %v6354, 16
        %v6492 = vrot.slane %v6490, 5
        %v6493 = vor.u32 %v6489, %v6492
        %v6494 = vrot.slane %v6493, 4
        %v6496 = vshll.u32 %v6355, 16
        %v6498 = vrot.slane %v6496, 5
        %v6499 = vsel %vm758, %v6494, %v6498
        %v6500 = vshrl.u32 %v6355, 16
        %v6502 = vrot.slane %v6500, 4
        %v6503 = vor.u32 %v6502, %v6498
        %v6504 = vrot.slane %v6503, 4
        %v6506 = vshll.u32 %v6356, 16
        %v6508 = vrot.slane %v6506, 5
        %v6509 = vsel %vm758, %v6504, %v6508
        %v6511 = vshrl.u32 %v6357, 16
        %v6513 = vrot.slane %v6511, 4
        %v6514 = vshll.u32 %v6357, 16
        %v6516 = vrot.slane %v6514, 5
        %v6517 = vor.u32 %v6513, %v6516
        %v6518 = vrot.slane %v6517, 4
        %v6520 = vshll.u32 %v6358, 16
        %v6522 = vrot.slane %v6520, 5
        %v6523 = vsel %vm758, %v6518, %v6522
        %v6524 = vshrl.u32 %v6358, 16
        %v6526 = vrot.slane %v6524, 4
        %v6527 = vor.u32 %v6526, %v6522
        %v6528 = vrot.slane %v6527, 4
        %v6530 = vshll.u32 %v6359, 16
        %v6532 = vrot.slane %v6530, 5
        %v6533 = vsel %vm758, %v6528, %v6532
        %v6535 = vshrl.u32 %v6360, 16
        %v6537 = vrot.slane %v6535, 4
        %v6538 = vshll.u32 %v6360, 16
        %v6540 = vrot.slane %v6538, 5
        %v6541 = vor.u32 %v6537, %v6540
        %v6542 = vrot.slane %v6541, 4
        %v6544 = vshll.u32 %v6361, 16
        %v6546 = vrot.slane %v6544, 5
        %v6547 = vsel %vm758, %v6542, %v6546
        %v6548 = vshrl.u32 %v6361, 16
        %v6550 = vrot.slane %v6548, 4
        %v6551 = vor.u32 %v6550, %v6546
        %v6552 = vrot.slane %v6551, 4
        %v6554 = vshll.u32 %v6362, 16
        %v6556 = vrot.slane %v6554, 5
        %v6557 = vsel %vm758, %v6552, %v6556
        %v6559 = vshrl.u32 %v6363, 16
        %v6561 = vrot.slane %v6559, 4
        %v6562 = vshll.u32 %v6363, 16
        %v6564 = vrot.slane %v6562, 5
        %v6565 = vor.u32 %v6561, %v6564
        %v6566 = vrot.slane %v6565, 4
        %v6568 = vshll.u32 %v6364, 16
        %v6570 = vrot.slane %v6568, 5
        %v6571 = vsel %vm758, %v6566, %v6570
        %v6572 = vshrl.u32 %v6364, 16
        %v6574 = vrot.slane %v6572, 4
        %v6575 = vor.u32 %v6574, %v6570
        %v6576 = vrot.slane %v6575, 4
        %v6578 = vshll.u32 %v6365, 16
        %v6580 = vrot.slane %v6578, 5
        %v6581 = vsel %vm758, %v6576, %v6580
        %v6583 = vshrl.u32 %v6366, 16
        %v6585 = vrot.slane %v6583, 4
        %v6586 = vshll.u32 %v6366, 16
        %v6588 = vrot.slane %v6586, 5
        %v6589 = vor.u32 %v6585, %v6588
        %v6590 = vrot.slane %v6589, 4
        %v6592 = vshll.u32 %v6367, 16
        %v6594 = vrot.slane %v6592, 5
        %v6595 = vsel %vm758, %v6590, %v6594
        %v6596 = vshrl.u32 %v6367, 16
        %v6598 = vrot.slane %v6596, 4
        %v6599 = vor.u32 %v6598, %v6594
        %v6600 = vrot.slane %v6599, 4
        %v6602 = vshll.u32 %v6368, 16
        %v6604 = vrot.slane %v6602, 5
        %v6605 = vsel %vm758, %v6600, %v6604
        %v6607 = vshrl.u32 %v6369, 16
        %v6609 = vrot.slane %v6607, 4
        %v6610 = vshll.u32 %v6369, 16
        %v6612 = vrot.slane %v6610, 5
        %v6613 = vor.u32 %v6609, %v6612
        %v6614 = vrot.slane %v6613, 4
        %v6616 = vshll.u32 %v6370, 16
        %v6618 = vrot.slane %v6616, 5
        %v6619 = vsel %vm758, %v6614, %v6618
        %v6620 = vshrl.u32 %v6370, 16
        %v6622 = vrot.slane %v6620, 4
        %v6623 = vor.u32 %v6622, %v6618
        %v6624 = vrot.slane %v6623, 4
        %v6626 = vshll.u32 %v6371, 16
        %v6628 = vrot.slane %v6626, 5
        %v6629 = vsel %vm758, %v6624, %v6628
        %v6631 = vshrl.u32 %v6372, 16
        %v6633 = vrot.slane %v6631, 4
        %v6634 = vshll.u32 %v6372, 16
        %v6636 = vrot.slane %v6634, 5
        %v6637 = vor.u32 %v6633, %v6636
        %v6638 = vrot.slane %v6637, 4
        %v6640 = vshll.u32 %v6373, 16
        %v6642 = vrot.slane %v6640, 5
        %v6643 = vsel %vm758, %v6638, %v6642
        %v6644 = vshrl.u32 %v6373, 16
        %v6646 = vrot.slane %v6644, 4
        %v6647 = vor.u32 %v6646, %v6642
        %v6648 = vrot.slane %v6647, 4
        %v6650 = vshll.u32 %v6374, 16
        %v6652 = vrot.slane %v6650, 5
        %v6653 = vsel %vm758, %v6648, %v6652
        %v6655 = vshrl.u32 %v6375, 16
        %v6657 = vrot.slane %v6655, 4
        %v6658 = vshll.u32 %v6375, 16
        %v6660 = vrot.slane %v6658, 5
        %v6661 = vor.u32 %v6657, %v6660
        %v6662 = vrot.slane %v6661, 4
        %v6664 = vshll.u32 %v6376, 16
        %v6666 = vrot.slane %v6664, 5
        %v6667 = vsel %vm758, %v6662, %v6666
        %v6668 = vshrl.u32 %v6376, 16
        %v6670 = vrot.slane %v6668, 4
        %v6671 = vor.u32 %v6670, %v6666
        %v6672 = vrot.slane %v6671, 4
        %v6674 = vshll.u32 %v6377, 16
        %v6676 = vrot.slane %v6674, 5
        %v6677 = vsel %vm758, %v6672, %v6676
        %v6679 = vshrl.u32 %v6378, 16
        %v6681 = vrot.slane %v6679, 4
        %v6682 = vshll.u32 %v6378, 16
        %v6684 = vrot.slane %v6682, 5
        %v6685 = vor.u32 %v6681, %v6684
        %v6686 = vrot.slane %v6685, 4
        %v6688 = vshll.u32 %v6379, 16
        %v6690 = vrot.slane %v6688, 5
        %v6691 = vsel %vm758, %v6686, %v6690
        %v6692 = vshrl.u32 %v6379, 16
        %v6694 = vrot.slane %v6692, 4
        %v6695 = vor.u32 %v6694, %v6690
        %v6696 = vrot.slane %v6695, 4
        %v6698 = vshll.u32 %v6380, 16
        %v6700 = vrot.slane %v6698, 5
        %v6701 = vsel %vm758, %v6696, %v6700
        %v6703 = vshrl.u32 %v6381, 16
        %v6705 = vrot.slane %v6703, 4
        %v6706 = vshll.u32 %v6381, 16
        %v6708 = vrot.slane %v6706, 5
        %v6709 = vor.u32 %v6705, %v6708
        %v6710 = vrot.slane %v6709, 4
        %v6712 = vshll.u32 %v6382, 16
        %v6714 = vrot.slane %v6712, 5
        %v6715 = vsel %vm758, %v6710, %v6714
        %v6716 = vshrl.u32 %v6382, 16
        %v6718 = vrot.slane %v6716, 4
        %v6719 = vor.u32 %v6718, %v6714
        %v6720 = vrot.slane %v6719, 4
        %v6722 = vshll.u32 %v6383, 16
        %v6724 = vrot.slane %v6722, 5
        %v6725 = vsel %vm758, %v6720, %v6724
        %v6727 = vshrl.u32 %v6384, 16
        %v6729 = vrot.slane %v6727, 4
        %v6730 = vshll.u32 %v6384, 16
        %v6732 = vrot.slane %v6730, 5
        %v6733 = vor.u32 %v6729, %v6732
        %v6734 = vrot.slane %v6733, 4
        %v6736 = vshll.u32 %v6385, 16
        %v6738 = vrot.slane %v6736, 5
        %v6739 = vsel %vm758, %v6734, %v6738
        %v6740 = vshrl.u32 %v6385, 16
        %v6742 = vrot.slane %v6740, 4
        %v6743 = vor.u32 %v6742, %v6738
        %v6744 = vrot.slane %v6743, 4
        %v6746 = vshll.u32 %v6386, 16
        %v6748 = vrot.slane %v6746, 5
        %v6749 = vsel %vm758, %v6744, %v6748
        %v6751 = vshrl.u32 %v6387, 16
        %v6753 = vrot.slane %v6751, 4
        %v6754 = vshll.u32 %v6387, 16
        %v6756 = vrot.slane %v6754, 5
        %v6757 = vor.u32 %v6753, %v6756
        %v6758 = vrot.slane %v6757, 4
        %v6760 = vshll.u32 %v6388, 16
        %v6762 = vrot.slane %v6760, 5
        %v6763 = vsel %vm758, %v6758, %v6762
        %v6764 = vshrl.u32 %v6388, 16
        %v6766 = vrot.slane %v6764, 4
        %v6767 = vor.u32 %v6766, %v6762
        %v6768 = vrot.slane %v6767, 4
        %v6770 = vshll.u32 %v6389, 16
        %v6772 = vrot.slane %v6770, 5
        %v6773 = vsel %vm758, %v6768, %v6772
        %v6774 = vld [vmem:[#allocation2] sm:$0xff]
        %v6775 = vld [vmem:[#allocation2 + $0x8] sm:$0xff]
        %v6776 = vld [vmem:[#allocation2 + $0x10] sm:$0xff]
        %v6777 = vld [vmem:[#allocation2 + $0x18] sm:$0xff]
        %v6778 = vld [vmem:[#allocation2 + $0x20] sm:$0xff]
        %v6779 = vld [vmem:[#allocation2 + $0x28] sm:$0xff]
        %v6780 = vld [vmem:[#allocation2 + $0x30] sm:$0xff]
        %v6781 = vld [vmem:[#allocation2 + $0x38] sm:$0xff]
        %v6782 = vld [vmem:[#allocation2 + $0x40] sm:$0xff]
        %v6783 = vld [vmem:[#allocation2 + $0x48] sm:$0xff]
        %v6784 = vld [vmem:[#allocation2 + $0x50] sm:$0xff]
        %v6785 = vld [vmem:[#allocation2 + $0x58] sm:$0xff]
        %v6786 = vld [vmem:[#allocation2 + $0x60] sm:$0xff]
        %v6787 = vld [vmem:[#allocation2 + $0x68] sm:$0xff]
        %v6788 = vld [vmem:[#allocation2 + $0x70] sm:$0xff]
        %v6789 = vld [vmem:[#allocation2 + $0x78] sm:$0xff]
        %v6790 = vld [vmem:[#allocation2 + $0x80] sm:$0xff]
        %v6791 = vld [vmem:[#allocation2 + $0x88] sm:$0xff]
        %v6792 = vld [vmem:[#allocation2 + $0x90] sm:$0xff]
        %v6793 = vld [vmem:[#allocation2 + $0x98] sm:$0xff]
        %v6794 = vld [vmem:[#allocation2 + $0xa0] sm:$0xff]
        %v6795 = vld [vmem:[#allocation2 + $0xa8] sm:$0xff]
        %v6796 = vld [vmem:[#allocation2 + $0xb0] sm:$0xff]
        %v6797 = vld [vmem:[#allocation2 + $0xb8] sm:$0xff]
        %v6798 = vld [vmem:[#allocation2 + $0xc0] sm:$0xff]
        %v6799 = vld [vmem:[#allocation2 + $0xc8] sm:$0xff]
        %v6800 = vld [vmem:[#allocation2 + $0xd0] sm:$0xff]
        %v6801 = vld [vmem:[#allocation2 + $0xd8] sm:$0xff]
        %v6802 = vld [vmem:[#allocation2 + $0xe0] sm:$0xff]
        %v6803 = vld [vmem:[#allocation2 + $0xe8] sm:$0xff]
        %v6804 = vld [vmem:[#allocation2 + $0xf0] sm:$0xff]
        %v6805 = vld [vmem:[#allocation2 + $0xf8] sm:$0xff]
        %s6806 = scalar_lea.vmem [#allocation4], 64
        %v6807 = vld [vmem:[%s6806] sm:$0xf]
        %v6808 = vld [vmem:[%s6806 + $0x4] sm:$0xf]
        %v6809 = vld [vmem:[%s6806 + $0x8] sm:$0xf]
        %v6810 = vld [vmem:[%s6806 + $0xc] sm:$0xf]
        %v6811 = vld [vmem:[%s6806 + $0x10] sm:$0xf]
        %v6812 = vld [vmem:[%s6806 + $0x14] sm:$0xf]
        %v6813 = vld [vmem:[%s6806 + $0x18] sm:$0xf]
        %v6814 = vld [vmem:[%s6806 + $0x1c] sm:$0xf]
        %v6815 = vld [vmem:[%s6806 + $0x20] sm:$0xf]
        %v6816 = vld [vmem:[%s6806 + $0x24] sm:$0xf]
        %v6817 = vld [vmem:[%s6806 + $0x28] sm:$0xf]
        %v6818 = vld [vmem:[%s6806 + $0x2c] sm:$0xf]
        %v6819 = vld [vmem:[%s6806 + $0x30] sm:$0xf]
        %v6820 = vld [vmem:[%s6806 + $0x34] sm:$0xf]
        %v6821 = vld [vmem:[%s6806 + $0x38] sm:$0xf]
        %v6822 = vld [vmem:[%s6806 + $0x3c] sm:$0xf]
        %v6823 = vunpack.c.l.b16 %v6403
        %v6824 = vunpack.c.l.b16 %v6413
        %v6825 = vunpack.c.l.b16 %v6427
        %v6826 = vunpack.c.l.b16 %v6437
        %v6827 = vunpack.c.l.b16 %v6451
        %v6828 = vunpack.c.l.b16 %v6461
        %v6829 = vunpack.c.l.b16 %v6475
        %v6830 = vunpack.c.l.b16 %v6485
        %v6831 = vunpack.c.l.b16 %v6499
        %v6832 = vunpack.c.l.b16 %v6509
        %v6833 = vunpack.c.l.b16 %v6523
        %v6834 = vunpack.c.l.b16 %v6533
        %v6835 = vunpack.c.l.b16 %v6547
        %v6836 = vunpack.c.l.b16 %v6557
        %v6837 = vunpack.c.l.b16 %v6571
        %v6838 = vunpack.c.l.b16 %v6581
        %v6839 = vunpack.c.l.b16 %v6595
        %v6840 = vunpack.c.l.b16 %v6605
        %v6841 = vunpack.c.l.b16 %v6619
        %v6842 = vunpack.c.l.b16 %v6629
        %v6843 = vunpack.c.l.b16 %v6643
        %v6844 = vunpack.c.l.b16 %v6653
        %v6845 = vunpack.c.l.b16 %v6667
        %v6846 = vunpack.c.l.b16 %v6677
        %v6847 = vunpack.c.l.b16 %v6691
        %v6848 = vunpack.c.l.b16 %v6701
        %v6849 = vunpack.c.l.b16 %v6715
        %v6850 = vunpack.c.l.b16 %v6725
        %v6851 = vunpack.c.l.b16 %v6739
        %v6852 = vunpack.c.l.b16 %v6749
        %v6853 = vunpack.c.l.b16 %v6763
        %v6854 = vunpack.c.l.b16 %v6773
        %v6855 = vpack.c.b16 %v6824, %v6823
        %v6856 = vpack.c.b16 %v6826, %v6825
        %v6857 = vpack.c.b16 %v6828, %v6827
        %v6858 = vpack.c.b16 %v6830, %v6829
        %v6859 = vpack.c.b16 %v6832, %v6831
        %v6860 = vpack.c.b16 %v6834, %v6833
        %v6861 = vpack.c.b16 %v6836, %v6835
        %v6862 = vpack.c.b16 %v6838, %v6837
        %v6863 = vpack.c.b16 %v6840, %v6839
        %v6864 = vpack.c.b16 %v6842, %v6841
        %v6865 = vpack.c.b16 %v6844, %v6843
        %v6866 = vpack.c.b16 %v6846, %v6845
        %v6867 = vpack.c.b16 %v6848, %v6847
        %v6868 = vpack.c.b16 %v6850, %v6849
        %v6869 = vpack.c.b16 %v6852, %v6851
        %v6870 = vpack.c.b16 %v6854, %v6853
        %v6903 = vunpack.c.l.b16 %v6807
        %v6904 = vunpack.c.l.b16 %v6808
        %v6905 = vunpack.c.l.b16 %v6809
        %v6906 = vunpack.c.l.b16 %v6810
        %v6907 = vunpack.c.l.b16 %v6811
        %v6908 = vunpack.c.l.b16 %v6812
        %v6909 = vunpack.c.l.b16 %v6813
        %v6910 = vunpack.c.l.b16 %v6814
        %v6911 = vunpack.c.l.b16 %v6815
        %v6912 = vunpack.c.l.b16 %v6816
        %v6913 = vunpack.c.l.b16 %v6817
        %v6914 = vunpack.c.l.b16 %v6818
        %v6915 = vunpack.c.l.b16 %v6819
        %v6916 = vunpack.c.l.b16 %v6820
        %v6917 = vunpack.c.l.b16 %v6821
        %v6918 = vunpack.c.l.b16 %v6822
        %v6919 = vpack.c.b16 %v6904, %v6903
        %v6920 = vpack.c.b16 %v6906, %v6905
        %v6921 = vpack.c.b16 %v6908, %v6907
        %v6922 = vpack.c.b16 %v6910, %v6909
        %v6923 = vpack.c.b16 %v6912, %v6911
        %v6924 = vpack.c.b16 %v6914, %v6913
        %v6925 = vpack.c.b16 %v6916, %v6915
        %v6926 = vpack.c.b16 %v6918, %v6917
        %6935 = vmatpush.bf16.msra.mxu0 %v6926
        %6936 = vmatpush.bf16.msra.mxu0 %v6925
        %6937 = vmatpush.bf16.msra.mxu0 %v6924
        %6938 = vmatpush.bf16.msra.mxu0 %v6923
        %6939 = vmatpush.bf16.msra.mxu0 %v6922
        %6940 = vmatpush.bf16.msra.mxu0 %v6921
        %6941 = vmatpush.bf16.msra.mxu0 %v6920
        %6942 = vmatpush.bf16.msra.mxu0 %v6919
        %6943 = vmatmul.bf16.gmra.mxu0 %v6855
        %v6944 = vpop.f32.mrf.mxu0
        %v6945 = vadd.f32 0.0, %v6944
        %v6946 = vpop.f32.mrf.mxu0
        %v6947 = vadd.f32 0.0, %v6946
        %6948 = vmatmul.bf16.gmra.mxu0 %v6856
        %v6949 = vpop.f32.mrf.mxu0
        %v6950 = vadd.f32 0.0, %v6949
        %v6951 = vpop.f32.mrf.mxu0
        %v6952 = vadd.f32 0.0, %v6951
        %6953 = vmatmul.bf16.gmra.mxu0 %v6857
        %v6954 = vpop.f32.mrf.mxu0
        %v6955 = vadd.f32 0.0, %v6954
        %v6956 = vpop.f32.mrf.mxu0
        %v6957 = vadd.f32 0.0, %v6956
        %6958 = vmatmul.bf16.gmra.mxu0 %v6858
        %v6959 = vpop.f32.mrf.mxu0
        %v6960 = vadd.f32 0.0, %v6959
        %v6961 = vpop.f32.mrf.mxu0
        %v6962 = vadd.f32 0.0, %v6961
        %6963 = vmatmul.bf16.gmra.mxu0 %v6859
        %v6964 = vpop.f32.mrf.mxu0
        %v6965 = vadd.f32 0.0, %v6964
        %v6966 = vpop.f32.mrf.mxu0
        %v6967 = vadd.f32 0.0, %v6966
        %6968 = vmatmul.bf16.gmra.mxu0 %v6860
        %v6969 = vpop.f32.mrf.mxu0
        %v6970 = vadd.f32 0.0, %v6969
        %v6971 = vpop.f32.mrf.mxu0
        %v6972 = vadd.f32 0.0, %v6971
        %6973 = vmatmul.bf16.gmra.mxu0 %v6861
        %v6974 = vpop.f32.mrf.mxu0
        %v6975 = vadd.f32 0.0, %v6974
        %v6976 = vpop.f32.mrf.mxu0
        %v6977 = vadd.f32 0.0, %v6976
        %6978 = vmatmul.bf16.gmra.mxu0 %v6862
        %v6979 = vpop.f32.mrf.mxu0
        %v6980 = vadd.f32 0.0, %v6979
        %v6981 = vpop.f32.mrf.mxu0
        %v6982 = vadd.f32 0.0, %v6981
        %6983 = vmatmul.bf16.gmra.mxu0 %v6863
        %v6984 = vpop.f32.mrf.mxu0
        %v6985 = vadd.f32 0.0, %v6984
        %v6986 = vpop.f32.mrf.mxu0
        %v6987 = vadd.f32 0.0, %v6986
        %6988 = vmatmul.bf16.gmra.mxu0 %v6864
        %v6989 = vpop.f32.mrf.mxu0
        %v6990 = vadd.f32 0.0, %v6989
        %v6991 = vpop.f32.mrf.mxu0
        %v6992 = vadd.f32 0.0, %v6991
        %6993 = vmatmul.bf16.gmra.mxu0 %v6865
        %v6994 = vpop.f32.mrf.mxu0
        %v6995 = vadd.f32 0.0, %v6994
        %v6996 = vpop.f32.mrf.mxu0
        %v6997 = vadd.f32 0.0, %v6996
        %6998 = vmatmul.bf16.gmra.mxu0 %v6866
        %v6999 = vpop.f32.mrf.mxu0
        %v7000 = vadd.f32 0.0, %v6999
        %v7001 = vpop.f32.mrf.mxu0
        %v7002 = vadd.f32 0.0, %v7001
        %7003 = vmatmul.bf16.gmra.mxu0 %v6867
        %v7004 = vpop.f32.mrf.mxu0
        %v7005 = vadd.f32 0.0, %v7004
        %v7006 = vpop.f32.mrf.mxu0
        %v7007 = vadd.f32 0.0, %v7006
        %7008 = vmatmul.bf16.gmra.mxu0 %v6868
        %v7009 = vpop.f32.mrf.mxu0
        %v7010 = vadd.f32 0.0, %v7009
        %v7011 = vpop.f32.mrf.mxu0
        %v7012 = vadd.f32 0.0, %v7011
        %7013 = vmatmul.bf16.gmra.mxu0 %v6869
        %v7014 = vpop.f32.mrf.mxu0
        %v7015 = vadd.f32 0.0, %v7014
        %v7016 = vpop.f32.mrf.mxu0
        %v7017 = vadd.f32 0.0, %v7016
        %7018 = vmatmul.bf16.gmra.mxu0 %v6870
        %v7019 = vpop.f32.mrf.mxu0
        %v7020 = vadd.f32 0.0, %v7019
        %v7021 = vpop.f32.mrf.mxu0
        %v7022 = vadd.f32 0.0, %v7021
        %7023 = vdwg.mxu0
        %v7024 = vadd.f32 %v6774, %v6945
        %v7025 = vadd.f32 %v6775, %v6947
        %v7026 = vadd.f32 %v6776, %v6950
        %v7027 = vadd.f32 %v6777, %v6952
        %v7028 = vadd.f32 %v6778, %v6955
        %v7029 = vadd.f32 %v6779, %v6957
        %v7030 = vadd.f32 %v6780, %v6960
        %v7031 = vadd.f32 %v6781, %v6962
        %v7032 = vadd.f32 %v6782, %v6965
        %v7033 = vadd.f32 %v6783, %v6967
        %v7034 = vadd.f32 %v6784, %v6970
        %v7035 = vadd.f32 %v6785, %v6972
        %v7036 = vadd.f32 %v6786, %v6975
        %v7037 = vadd.f32 %v6787, %v6977
        %v7038 = vadd.f32 %v6788, %v6980
        %v7039 = vadd.f32 %v6789, %v6982
        %v7040 = vadd.f32 %v6790, %v6985
        %v7041 = vadd.f32 %v6791, %v6987
        %v7042 = vadd.f32 %v6792, %v6990
        %v7043 = vadd.f32 %v6793, %v6992
        %v7044 = vadd.f32 %v6794, %v6995
        %v7045 = vadd.f32 %v6795, %v6997
        %v7046 = vadd.f32 %v6796, %v7000
        %v7047 = vadd.f32 %v6797, %v7002
        %v7048 = vadd.f32 %v6798, %v7005
        %v7049 = vadd.f32 %v6799, %v7007
        %v7050 = vadd.f32 %v6800, %v7010
        %v7051 = vadd.f32 %v6801, %v7012
        %v7052 = vadd.f32 %v6802, %v7015
        %v7053 = vadd.f32 %v6803, %v7017
        %v7054 = vadd.f32 %v6804, %v7020
        %v7055 = vadd.f32 %v6805, %v7022
        %7056 = vst [vmem:[#allocation2] sm:$0xff] %v7024
        %7057 = vst [vmem:[#allocation2 + $0x8] sm:$0xff] %v7025
        %7058 = vst [vmem:[#allocation2 + $0x10] sm:$0xff] %v7026
        %7059 = vst [vmem:[#allocation2 + $0x18] sm:$0xff] %v7027
        %7060 = vst [vmem:[#allocation2 + $0x20] sm:$0xff] %v7028
        %7061 = vst [vmem:[#allocation2 + $0x28] sm:$0xff] %v7029
        %7062 = vst [vmem:[#allocation2 + $0x30] sm:$0xff] %v7030
        %7063 = vst [vmem:[#allocation2 + $0x38] sm:$0xff] %v7031
        %7064 = vst [vmem:[#allocation2 + $0x40] sm:$0xff] %v7032
        %7065 = vst [vmem:[#allocation2 + $0x48] sm:$0xff] %v7033
        %7066 = vst [vmem:[#allocation2 + $0x50] sm:$0xff] %v7034
        %7067 = vst [vmem:[#allocation2 + $0x58] sm:$0xff] %v7035
        %7068 = vst [vmem:[#allocation2 + $0x60] sm:$0xff] %v7036
        %7069 = vst [vmem:[#allocation2 + $0x68] sm:$0xff] %v7037
        %7070 = vst [vmem:[#allocation2 + $0x70] sm:$0xff] %v7038
        %7071 = vst [vmem:[#allocation2 + $0x78] sm:$0xff] %v7039
        %7072 = vst [vmem:[#allocation2 + $0x80] sm:$0xff] %v7040
        %7073 = vst [vmem:[#allocation2 + $0x88] sm:$0xff] %v7041
        %7074 = vst [vmem:[#allocation2 + $0x90] sm:$0xff] %v7042
        %7075 = vst [vmem:[#allocation2 + $0x98] sm:$0xff] %v7043
        %7076 = vst [vmem:[#allocation2 + $0xa0] sm:$0xff] %v7044
        %7077 = vst [vmem:[#allocation2 + $0xa8] sm:$0xff] %v7045
        %7078 = vst [vmem:[#allocation2 + $0xb0] sm:$0xff] %v7046
        %7079 = vst [vmem:[#allocation2 + $0xb8] sm:$0xff] %v7047
        %7080 = vst [vmem:[#allocation2 + $0xc0] sm:$0xff] %v7048
        %7081 = vst [vmem:[#allocation2 + $0xc8] sm:$0xff] %v7049
        %7082 = vst [vmem:[#allocation2 + $0xd0] sm:$0xff] %v7050
        %7083 = vst [vmem:[#allocation2 + $0xd8] sm:$0xff] %v7051
        %7084 = vst [vmem:[#allocation2 + $0xe0] sm:$0xff] %v7052
        %7085 = vst [vmem:[#allocation2 + $0xe8] sm:$0xff] %v7053
        %7086 = vst [vmem:[#allocation2 + $0xf0] sm:$0xff] %v7054
        %7087 = vst [vmem:[#allocation2 + $0xf8] sm:$0xff] %v7055
        %v7088 = vld [vmem:[#allocation3] sm:$0xe]
        %v7089 = vld [vmem:[#allocation3 + $0x4] sm:$0xf]
        %v7090 = vld [vmem:[#allocation3 + $0x8] sm:$0x1]
        %v7091 = vld [vmem:[#allocation3 + $0xc] sm:$0xe]
        %v7092 = vld [vmem:[#allocation3 + $0x10] sm:$0xf]
        %v7093 = vld [vmem:[#allocation3 + $0x14] sm:$0x1]
        %v7094 = vld [vmem:[#allocation3 + $0x18] sm:$0xe]
        %v7095 = vld [vmem:[#allocation3 + $0x1c] sm:$0xf]
        %v7096 = vld [vmem:[#allocation3 + $0x20] sm:$0x1]
        %v7097 = vld [vmem:[#allocation3 + $0x24] sm:$0xe]
        %v7098 = vld [vmem:[#allocation3 + $0x28] sm:$0xf]
        %v7099 = vld [vmem:[#allocation3 + $0x2c] sm:$0x1]
        %v7100 = vld [vmem:[#allocation3 + $0x30] sm:$0xe]
        %v7101 = vld [vmem:[#allocation3 + $0x34] sm:$0xf]
        %v7102 = vld [vmem:[#allocation3 + $0x38] sm:$0x1]
        %v7103 = vld [vmem:[#allocation3 + $0x3c] sm:$0xe]
        %v7104 = vld [vmem:[#allocation3 + $0x40] sm:$0xf]
        %v7105 = vld [vmem:[#allocation3 + $0x44] sm:$0x1]
        %v7106 = vld [vmem:[#allocation3 + $0x48] sm:$0xe]
        %v7107 = vld [vmem:[#allocation3 + $0x4c] sm:$0xf]
        %v7108 = vld [vmem:[#allocation3 + $0x50] sm:$0x1]
        %v7109 = vld [vmem:[#allocation3 + $0x54] sm:$0xe]
        %v7110 = vld [vmem:[#allocation3 + $0x58] sm:$0xf]
        %v7111 = vld [vmem:[#allocation3 + $0x5c] sm:$0x1]
        %v7112 = vld [vmem:[#allocation3 + $0x60] sm:$0xe]
        %v7113 = vld [vmem:[#allocation3 + $0x64] sm:$0xf]
        %v7114 = vld [vmem:[#allocation3 + $0x68] sm:$0x1]
        %v7115 = vld [vmem:[#allocation3 + $0x6c] sm:$0xe]
        %v7116 = vld [vmem:[#allocation3 + $0x70] sm:$0xf]
        %v7117 = vld [vmem:[#allocation3 + $0x74] sm:$0x1]
        %v7118 = vld [vmem:[#allocation3 + $0x78] sm:$0xe]
        %v7119 = vld [vmem:[#allocation3 + $0x7c] sm:$0xf]
        %v7120 = vld [vmem:[#allocation3 + $0x80] sm:$0x1]
        %v7121 = vld [vmem:[#allocation3 + $0x84] sm:$0xe]
        %v7122 = vld [vmem:[#allocation3 + $0x88] sm:$0xf]
        %v7123 = vld [vmem:[#allocation3 + $0x8c] sm:$0x1]
        %v7124 = vld [vmem:[#allocation3 + $0x90] sm:$0xe]
        %v7125 = vld [vmem:[#allocation3 + $0x94] sm:$0xf]
        %v7126 = vld [vmem:[#allocation3 + $0x98] sm:$0x1]
        %v7127 = vld [vmem:[#allocation3 + $0x9c] sm:$0xe]
        %v7128 = vld [vmem:[#allocation3 + $0xa0] sm:$0xf]
        %v7129 = vld [vmem:[#allocation3 + $0xa4] sm:$0x1]
        %v7130 = vld [vmem:[#allocation3 + $0xa8] sm:$0xe]
        %v7131 = vld [vmem:[#allocation3 + $0xac] sm:$0xf]
        %v7132 = vld [vmem:[#allocation3 + $0xb0] sm:$0x1]
        %v7133 = vld [vmem:[#allocation3 + $0xb4] sm:$0xe]
        %v7134 = vld [vmem:[#allocation3 + $0xb8] sm:$0xf]
        %v7135 = vld [vmem:[#allocation3 + $0xbc] sm:$0x1]
        %v7184 = vrot.slane %v7088, 5
        %v7185 = vrot.slane %v7184, 4
        %v7186 = vrot.slane %v7089, 5
        %v7187 = vsel %vm1555, %v7185, %v7186
        %v7188 = vrot.slane %v7186, 4
        %v7189 = vrot.slane %v7090, 5
        %v7190 = vsel %vm1555, %v7188, %v7189
        %v7191 = vrot.slane %v7091, 5
        %v7192 = vrot.slane %v7191, 4
        %v7193 = vrot.slane %v7092, 5
        %v7194 = vsel %vm1555, %v7192, %v7193
        %v7195 = vrot.slane %v7193, 4
        %v7196 = vrot.slane %v7093, 5
        %v7197 = vsel %vm1555, %v7195, %v7196
        %v7198 = vrot.slane %v7094, 5
        %v7199 = vrot.slane %v7198, 4
        %v7200 = vrot.slane %v7095, 5
        %v7201 = vsel %vm1555, %v7199, %v7200
        %v7202 = vrot.slane %v7200, 4
        %v7203 = vrot.slane %v7096, 5
        %v7204 = vsel %vm1555, %v7202, %v7203
        %v7205 = vrot.slane %v7097, 5
        %v7206 = vrot.slane %v7205, 4
        %v7207 = vrot.slane %v7098, 5
        %v7208 = vsel %vm1555, %v7206, %v7207
        %v7209 = vrot.slane %v7207, 4
        %v7210 = vrot.slane %v7099, 5
        %v7211 = vsel %vm1555, %v7209, %v7210
        %v7212 = vrot.slane %v7100, 5
        %v7213 = vrot.slane %v7212, 4
        %v7214 = vrot.slane %v7101, 5
        %v7215 = vsel %vm1555, %v7213, %v7214
        %v7216 = vrot.slane %v7214, 4
        %v7217 = vrot.slane %v7102, 5
        %v7218 = vsel %vm1555, %v7216, %v7217
        %v7219 = vrot.slane %v7103, 5
        %v7220 = vrot.slane %v7219, 4
        %v7221 = vrot.slane %v7104, 5
        %v7222 = vsel %vm1555, %v7220, %v7221
        %v7223 = vrot.slane %v7221, 4
        %v7224 = vrot.slane %v7105, 5
        %v7225 = vsel %vm1555, %v7223, %v7224
        %v7226 = vrot.slane %v7106, 5
        %v7227 = vrot.slane %v7226, 4
        %v7228 = vrot.slane %v7107, 5
        %v7229 = vsel %vm1555, %v7227, %v7228
        %v7230 = vrot.slane %v7228, 4
        %v7231 = vrot.slane %v7108, 5
        %v7232 = vsel %vm1555, %v7230, %v7231
        %v7233 = vrot.slane %v7109, 5
        %v7234 = vrot.slane %v7233, 4
        %v7235 = vrot.slane %v7110, 5
        %v7236 = vsel %vm1555, %v7234, %v7235
        %v7237 = vrot.slane %v7235, 4
        %v7238 = vrot.slane %v7111, 5
        %v7239 = vsel %vm1555, %v7237, %v7238
        %v7240 = vrot.slane %v7112, 5
        %v7241 = vrot.slane %v7240, 4
        %v7242 = vrot.slane %v7113, 5
        %v7243 = vsel %vm1555, %v7241, %v7242
        %v7244 = vrot.slane %v7242, 4
        %v7245 = vrot.slane %v7114, 5
        %v7246 = vsel %vm1555, %v7244, %v7245
        %v7247 = vrot.slane %v7115, 5
        %v7248 = vrot.slane %v7247, 4
        %v7249 = vrot.slane %v7116, 5
        %v7250 = vsel %vm1555, %v7248, %v7249
        %v7251 = vrot.slane %v7249, 4
        %v7252 = vrot.slane %v7117, 5
        %v7253 = vsel %vm1555, %v7251, %v7252
        %v7254 = vrot.slane %v7118, 5
        %v7255 = vrot.slane %v7254, 4
        %v7256 = vrot.slane %v7119, 5
        %v7257 = vsel %vm1555, %v7255, %v7256
        %v7258 = vrot.slane %v7256, 4
        %v7259 = vrot.slane %v7120, 5
        %v7260 = vsel %vm1555, %v7258, %v7259
        %v7261 = vrot.slane %v7121, 5
        %v7262 = vrot.slane %v7261, 4
        %v7263 = vrot.slane %v7122, 5
        %v7264 = vsel %vm1555, %v7262, %v7263
        %v7265 = vrot.slane %v7263, 4
        %v7266 = vrot.slane %v7123, 5
        %v7267 = vsel %vm1555, %v7265, %v7266
        %v7268 = vrot.slane %v7124, 5
        %v7269 = vrot.slane %v7268, 4
        %v7270 = vrot.slane %v7125, 5
        %v7271 = vsel %vm1555, %v7269, %v7270
        %v7272 = vrot.slane %v7270, 4
        %v7273 = vrot.slane %v7126, 5
        %v7274 = vsel %vm1555, %v7272, %v7273
        %v7275 = vrot.slane %v7127, 5
        %v7276 = vrot.slane %v7275, 4
        %v7277 = vrot.slane %v7128, 5
        %v7278 = vsel %vm1555, %v7276, %v7277
        %v7279 = vrot.slane %v7277, 4
        %v7280 = vrot.slane %v7129, 5
        %v7281 = vsel %vm1555, %v7279, %v7280
        %v7282 = vrot.slane %v7130, 5
        %v7283 = vrot.slane %v7282, 4
        %v7284 = vrot.slane %v7131, 5
        %v7285 = vsel %vm1555, %v7283, %v7284
        %v7286 = vrot.slane %v7284, 4
        %v7287 = vrot.slane %v7132, 5
        %v7288 = vsel %vm1555, %v7286, %v7287
        %v7289 = vrot.slane %v7133, 5
        %v7290 = vrot.slane %v7289, 4
        %v7291 = vrot.slane %v7134, 5
        %v7292 = vsel %vm1555, %v7290, %v7291
        %v7293 = vrot.slane %v7291, 4
        %v7294 = vrot.slane %v7135, 5
        %v7295 = vsel %vm1555, %v7293, %v7294
        %v7296 = vld [vmem:[#allocation2] sm:$0xff]
        %v7297 = vld [vmem:[#allocation2 + $0x8] sm:$0xff]
        %v7298 = vld [vmem:[#allocation2 + $0x10] sm:$0xff]
        %v7299 = vld [vmem:[#allocation2 + $0x18] sm:$0xff]
        %v7300 = vld [vmem:[#allocation2 + $0x20] sm:$0xff]
        %v7301 = vld [vmem:[#allocation2 + $0x28] sm:$0xff]
        %v7302 = vld [vmem:[#allocation2 + $0x30] sm:$0xff]
        %v7303 = vld [vmem:[#allocation2 + $0x38] sm:$0xff]
        %v7304 = vld [vmem:[#allocation2 + $0x40] sm:$0xff]
        %v7305 = vld [vmem:[#allocation2 + $0x48] sm:$0xff]
        %v7306 = vld [vmem:[#allocation2 + $0x50] sm:$0xff]
        %v7307 = vld [vmem:[#allocation2 + $0x58] sm:$0xff]
        %v7308 = vld [vmem:[#allocation2 + $0x60] sm:$0xff]
        %v7309 = vld [vmem:[#allocation2 + $0x68] sm:$0xff]
        %v7310 = vld [vmem:[#allocation2 + $0x70] sm:$0xff]
        %v7311 = vld [vmem:[#allocation2 + $0x78] sm:$0xff]
        %v7312 = vld [vmem:[#allocation2 + $0x80] sm:$0xff]
        %v7313 = vld [vmem:[#allocation2 + $0x88] sm:$0xff]
        %v7314 = vld [vmem:[#allocation2 + $0x90] sm:$0xff]
        %v7315 = vld [vmem:[#allocation2 + $0x98] sm:$0xff]
        %v7316 = vld [vmem:[#allocation2 + $0xa0] sm:$0xff]
        %v7317 = vld [vmem:[#allocation2 + $0xa8] sm:$0xff]
        %v7318 = vld [vmem:[#allocation2 + $0xb0] sm:$0xff]
        %v7319 = vld [vmem:[#allocation2 + $0xb8] sm:$0xff]
        %v7320 = vld [vmem:[#allocation2 + $0xc0] sm:$0xff]
        %v7321 = vld [vmem:[#allocation2 + $0xc8] sm:$0xff]
        %v7322 = vld [vmem:[#allocation2 + $0xd0] sm:$0xff]
        %v7323 = vld [vmem:[#allocation2 + $0xd8] sm:$0xff]
        %v7324 = vld [vmem:[#allocation2 + $0xe0] sm:$0xff]
        %v7325 = vld [vmem:[#allocation2 + $0xe8] sm:$0xff]
        %v7326 = vld [vmem:[#allocation2 + $0xf0] sm:$0xff]
        %v7327 = vld [vmem:[#allocation2 + $0xf8] sm:$0xff]
        %s7328 = scalar_lea.vmem [#allocation4], 128
        %v7329 = vld [vmem:[%s7328] sm:$0xf]
        %v7330 = vld [vmem:[%s7328 + $0x4] sm:$0xf]
        %v7331 = vld [vmem:[%s7328 + $0x8] sm:$0xf]
        %v7332 = vld [vmem:[%s7328 + $0xc] sm:$0xf]
        %v7333 = vld [vmem:[%s7328 + $0x10] sm:$0xf]
        %v7334 = vld [vmem:[%s7328 + $0x14] sm:$0xf]
        %v7335 = vld [vmem:[%s7328 + $0x18] sm:$0xf]
        %v7336 = vld [vmem:[%s7328 + $0x1c] sm:$0xf]
        %v7337 = vld [vmem:[%s7328 + $0x20] sm:$0xf]
        %v7338 = vld [vmem:[%s7328 + $0x24] sm:$0xf]
        %v7339 = vld [vmem:[%s7328 + $0x28] sm:$0xf]
        %v7340 = vld [vmem:[%s7328 + $0x2c] sm:$0xf]
        %v7341 = vld [vmem:[%s7328 + $0x30] sm:$0xf]
        %v7342 = vld [vmem:[%s7328 + $0x34] sm:$0xf]
        %v7343 = vld [vmem:[%s7328 + $0x38] sm:$0xf]
        %v7344 = vld [vmem:[%s7328 + $0x3c] sm:$0xf]
        %v7345 = vunpack.c.l.b16 %v7187
        %v7346 = vunpack.c.l.b16 %v7190
        %v7347 = vunpack.c.l.b16 %v7194
        %v7348 = vunpack.c.l.b16 %v7197
        %v7349 = vunpack.c.l.b16 %v7201
        %v7350 = vunpack.c.l.b16 %v7204
        %v7351 = vunpack.c.l.b16 %v7208
        %v7352 = vunpack.c.l.b16 %v7211
        %v7353 = vunpack.c.l.b16 %v7215
        %v7354 = vunpack.c.l.b16 %v7218
        %v7355 = vunpack.c.l.b16 %v7222
        %v7356 = vunpack.c.l.b16 %v7225
        %v7357 = vunpack.c.l.b16 %v7229
        %v7358 = vunpack.c.l.b16 %v7232
        %v7359 = vunpack.c.l.b16 %v7236
        %v7360 = vunpack.c.l.b16 %v7239
        %v7361 = vunpack.c.l.b16 %v7243
        %v7362 = vunpack.c.l.b16 %v7246
        %v7363 = vunpack.c.l.b16 %v7250
        %v7364 = vunpack.c.l.b16 %v7253
        %v7365 = vunpack.c.l.b16 %v7257
        %v7366 = vunpack.c.l.b16 %v7260
        %v7367 = vunpack.c.l.b16 %v7264
        %v7368 = vunpack.c.l.b16 %v7267
        %v7369 = vunpack.c.l.b16 %v7271
        %v7370 = vunpack.c.l.b16 %v7274
        %v7371 = vunpack.c.l.b16 %v7278
        %v7372 = vunpack.c.l.b16 %v7281
        %v7373 = vunpack.c.l.b16 %v7285
        %v7374 = vunpack.c.l.b16 %v7288
        %v7375 = vunpack.c.l.b16 %v7292
        %v7376 = vunpack.c.l.b16 %v7295
        %v7377 = vpack.c.b16 %v7346, %v7345
        %v7378 = vpack.c.b16 %v7348, %v7347
        %v7379 = vpack.c.b16 %v7350, %v7349
        %v7380 = vpack.c.b16 %v7352, %v7351
        %v7381 = vpack.c.b16 %v7354, %v7353
        %v7382 = vpack.c.b16 %v7356, %v7355
        %v7383 = vpack.c.b16 %v7358, %v7357
        %v7384 = vpack.c.b16 %v7360, %v7359
        %v7385 = vpack.c.b16 %v7362, %v7361
        %v7386 = vpack.c.b16 %v7364, %v7363
        %v7387 = vpack.c.b16 %v7366, %v7365
        %v7388 = vpack.c.b16 %v7368, %v7367
        %v7389 = vpack.c.b16 %v7370, %v7369
        %v7390 = vpack.c.b16 %v7372, %v7371
        %v7391 = vpack.c.b16 %v7374, %v7373
        %v7392 = vpack.c.b16 %v7376, %v7375
        %v7425 = vunpack.c.l.b16 %v7329
        %v7426 = vunpack.c.l.b16 %v7330
        %v7427 = vunpack.c.l.b16 %v7331
        %v7428 = vunpack.c.l.b16 %v7332
        %v7429 = vunpack.c.l.b16 %v7333
        %v7430 = vunpack.c.l.b16 %v7334
        %v7431 = vunpack.c.l.b16 %v7335
        %v7432 = vunpack.c.l.b16 %v7336
        %v7433 = vunpack.c.l.b16 %v7337
        %v7434 = vunpack.c.l.b16 %v7338
        %v7435 = vunpack.c.l.b16 %v7339
        %v7436 = vunpack.c.l.b16 %v7340
        %v7437 = vunpack.c.l.b16 %v7341
        %v7438 = vunpack.c.l.b16 %v7342
        %v7439 = vunpack.c.l.b16 %v7343
        %v7440 = vunpack.c.l.b16 %v7344
        %v7441 = vpack.c.b16 %v7426, %v7425
        %v7442 = vpack.c.b16 %v7428, %v7427
        %v7443 = vpack.c.b16 %v7430, %v7429
        %v7444 = vpack.c.b16 %v7432, %v7431
        %v7445 = vpack.c.b16 %v7434, %v7433
        %v7446 = vpack.c.b16 %v7436, %v7435
        %v7447 = vpack.c.b16 %v7438, %v7437
        %v7448 = vpack.c.b16 %v7440, %v7439
        %7457 = vmatpush.bf16.msra.mxu0 %v7448
        %7458 = vmatpush.bf16.msra.mxu0 %v7447
        %7459 = vmatpush.bf16.msra.mxu0 %v7446
        %7460 = vmatpush.bf16.msra.mxu0 %v7445
        %7461 = vmatpush.bf16.msra.mxu0 %v7444
        %7462 = vmatpush.bf16.msra.mxu0 %v7443
        %7463 = vmatpush.bf16.msra.mxu0 %v7442
        %7464 = vmatpush.bf16.msra.mxu0 %v7441
        %7465 = vmatmul.bf16.gmra.mxu0 %v7377
        %v7466 = vpop.f32.mrf.mxu0
        %v7467 = vadd.f32 0.0, %v7466
        %v7468 = vpop.f32.mrf.mxu0
        %v7469 = vadd.f32 0.0, %v7468
        %7470 = vmatmul.bf16.gmra.mxu0 %v7378
        %v7471 = vpop.f32.mrf.mxu0
        %v7472 = vadd.f32 0.0, %v7471
        %v7473 = vpop.f32.mrf.mxu0
        %v7474 = vadd.f32 0.0, %v7473
        %7475 = vmatmul.bf16.gmra.mxu0 %v7379
        %v7476 = vpop.f32.mrf.mxu0
        %v7477 = vadd.f32 0.0, %v7476
        %v7478 = vpop.f32.mrf.mxu0
        %v7479 = vadd.f32 0.0, %v7478
        %7480 = vmatmul.bf16.gmra.mxu0 %v7380
        %v7481 = vpop.f32.mrf.mxu0
        %v7482 = vadd.f32 0.0, %v7481
        %v7483 = vpop.f32.mrf.mxu0
        %v7484 = vadd.f32 0.0, %v7483
        %7485 = vmatmul.bf16.gmra.mxu0 %v7381
        %v7486 = vpop.f32.mrf.mxu0
        %v7487 = vadd.f32 0.0, %v7486
        %v7488 = vpop.f32.mrf.mxu0
        %v7489 = vadd.f32 0.0, %v7488
        %7490 = vmatmul.bf16.gmra.mxu0 %v7382
        %v7491 = vpop.f32.mrf.mxu0
        %v7492 = vadd.f32 0.0, %v7491
        %v7493 = vpop.f32.mrf.mxu0
        %v7494 = vadd.f32 0.0, %v7493
        %7495 = vmatmul.bf16.gmra.mxu0 %v7383
        %v7496 = vpop.f32.mrf.mxu0
        %v7497 = vadd.f32 0.0, %v7496
        %v7498 = vpop.f32.mrf.mxu0
        %v7499 = vadd.f32 0.0, %v7498
        %7500 = vmatmul.bf16.gmra.mxu0 %v7384
        %v7501 = vpop.f32.mrf.mxu0
        %v7502 = vadd.f32 0.0, %v7501
        %v7503 = vpop.f32.mrf.mxu0
        %v7504 = vadd.f32 0.0, %v7503
        %7505 = vmatmul.bf16.gmra.mxu0 %v7385
        %v7506 = vpop.f32.mrf.mxu0
        %v7507 = vadd.f32 0.0, %v7506
        %v7508 = vpop.f32.mrf.mxu0
        %v7509 = vadd.f32 0.0, %v7508
        %7510 = vmatmul.bf16.gmra.mxu0 %v7386
        %v7511 = vpop.f32.mrf.mxu0
        %v7512 = vadd.f32 0.0, %v7511
        %v7513 = vpop.f32.mrf.mxu0
        %v7514 = vadd.f32 0.0, %v7513
        %7515 = vmatmul.bf16.gmra.mxu0 %v7387
        %v7516 = vpop.f32.mrf.mxu0
        %v7517 = vadd.f32 0.0, %v7516
        %v7518 = vpop.f32.mrf.mxu0
        %v7519 = vadd.f32 0.0, %v7518
        %7520 = vmatmul.bf16.gmra.mxu0 %v7388
        %v7521 = vpop.f32.mrf.mxu0
        %v7522 = vadd.f32 0.0, %v7521
        %v7523 = vpop.f32.mrf.mxu0
        %v7524 = vadd.f32 0.0, %v7523
        %7525 = vmatmul.bf16.gmra.mxu0 %v7389
        %v7526 = vpop.f32.mrf.mxu0
        %v7527 = vadd.f32 0.0, %v7526
        %v7528 = vpop.f32.mrf.mxu0
        %v7529 = vadd.f32 0.0, %v7528
        %7530 = vmatmul.bf16.gmra.mxu0 %v7390
        %v7531 = vpop.f32.mrf.mxu0
        %v7532 = vadd.f32 0.0, %v7531
        %v7533 = vpop.f32.mrf.mxu0
        %v7534 = vadd.f32 0.0, %v7533
        %7535 = vmatmul.bf16.gmra.mxu0 %v7391
        %v7536 = vpop.f32.mrf.mxu0
        %v7537 = vadd.f32 0.0, %v7536
        %v7538 = vpop.f32.mrf.mxu0
        %v7539 = vadd.f32 0.0, %v7538
        %7540 = vmatmul.bf16.gmra.mxu0 %v7392
        %v7541 = vpop.f32.mrf.mxu0
        %v7542 = vadd.f32 0.0, %v7541
        %v7543 = vpop.f32.mrf.mxu0
        %v7544 = vadd.f32 0.0, %v7543
        %7545 = vdwg.mxu0
        %v7546 = vadd.f32 %v7296, %v7467
        %v7547 = vadd.f32 %v7297, %v7469
        %v7548 = vadd.f32 %v7298, %v7472
        %v7549 = vadd.f32 %v7299, %v7474
        %v7550 = vadd.f32 %v7300, %v7477
        %v7551 = vadd.f32 %v7301, %v7479
        %v7552 = vadd.f32 %v7302, %v7482
        %v7553 = vadd.f32 %v7303, %v7484
        %v7554 = vadd.f32 %v7304, %v7487
        %v7555 = vadd.f32 %v7305, %v7489
        %v7556 = vadd.f32 %v7306, %v7492
        %v7557 = vadd.f32 %v7307, %v7494
        %v7558 = vadd.f32 %v7308, %v7497
        %v7559 = vadd.f32 %v7309, %v7499
        %v7560 = vadd.f32 %v7310, %v7502
        %v7561 = vadd.f32 %v7311, %v7504
        %v7562 = vadd.f32 %v7312, %v7507
        %v7563 = vadd.f32 %v7313, %v7509
        %v7564 = vadd.f32 %v7314, %v7512
        %v7565 = vadd.f32 %v7315, %v7514
        %v7566 = vadd.f32 %v7316, %v7517
        %v7567 = vadd.f32 %v7317, %v7519
        %v7568 = vadd.f32 %v7318, %v7522
        %v7569 = vadd.f32 %v7319, %v7524
        %v7570 = vadd.f32 %v7320, %v7527
        %v7571 = vadd.f32 %v7321, %v7529
        %v7572 = vadd.f32 %v7322, %v7532
        %v7573 = vadd.f32 %v7323, %v7534
        %v7574 = vadd.f32 %v7324, %v7537
        %v7575 = vadd.f32 %v7325, %v7539
        %v7576 = vadd.f32 %v7326, %v7542
        %v7577 = vadd.f32 %v7327, %v7544
        %7578 = vst [vmem:[#allocation2] sm:$0xff] %v7546
        %7579 = vst [vmem:[#allocation2 + $0x8] sm:$0xff] %v7547
        %7580 = vst [vmem:[#allocation2 + $0x10] sm:$0xff] %v7548
        %7581 = vst [vmem:[#allocation2 + $0x18] sm:$0xff] %v7549
        %7582 = vst [vmem:[#allocation2 + $0x20] sm:$0xff] %v7550
        %7583 = vst [vmem:[#allocation2 + $0x28] sm:$0xff] %v7551
        %7584 = vst [vmem:[#allocation2 + $0x30] sm:$0xff] %v7552
        %7585 = vst [vmem:[#allocation2 + $0x38] sm:$0xff] %v7553
        %7586 = vst [vmem:[#allocation2 + $0x40] sm:$0xff] %v7554
        %7587 = vst [vmem:[#allocation2 + $0x48] sm:$0xff] %v7555
        %7588 = vst [vmem:[#allocation2 + $0x50] sm:$0xff] %v7556
        %7589 = vst [vmem:[#allocation2 + $0x58] sm:$0xff] %v7557
        %7590 = vst [vmem:[#allocation2 + $0x60] sm:$0xff] %v7558
        %7591 = vst [vmem:[#allocation2 + $0x68] sm:$0xff] %v7559
        %7592 = vst [vmem:[#allocation2 + $0x70] sm:$0xff] %v7560
        %7593 = vst [vmem:[#allocation2 + $0x78] sm:$0xff] %v7561
        %7594 = vst [vmem:[#allocation2 + $0x80] sm:$0xff] %v7562
        %7595 = vst [vmem:[#allocation2 + $0x88] sm:$0xff] %v7563
        %7596 = vst [vmem:[#allocation2 + $0x90] sm:$0xff] %v7564
        %7597 = vst [vmem:[#allocation2 + $0x98] sm:$0xff] %v7565
        %7598 = vst [vmem:[#allocation2 + $0xa0] sm:$0xff] %v7566
        %7599 = vst [vmem:[#allocation2 + $0xa8] sm:$0xff] %v7567
        %7600 = vst [vmem:[#allocation2 + $0xb0] sm:$0xff] %v7568
        %7601 = vst [vmem:[#allocation2 + $0xb8] sm:$0xff] %v7569
        %7602 = vst [vmem:[#allocation2 + $0xc0] sm:$0xff] %v7570
        %7603 = vst [vmem:[#allocation2 + $0xc8] sm:$0xff] %v7571
        %7604 = vst [vmem:[#allocation2 + $0xd0] sm:$0xff] %v7572
        %7605 = vst [vmem:[#allocation2 + $0xd8] sm:$0xff] %v7573
        %7606 = vst [vmem:[#allocation2 + $0xe0] sm:$0xff] %v7574
        %7607 = vst [vmem:[#allocation2 + $0xe8] sm:$0xff] %v7575
        %7608 = vst [vmem:[#allocation2 + $0xf0] sm:$0xff] %v7576
        %7609 = vst [vmem:[#allocation2 + $0xf8] sm:$0xff] %v7577
        %v7610 = vld [vmem:[%s5814] sm:$0xf]
        %v7611 = vld [vmem:[%s5814 + $0x4] sm:$0xf]
        %v7612 = vld [vmem:[%s5814 + $0xc] sm:$0xf]
        %v7613 = vld [vmem:[%s5814 + $0x10] sm:$0xf]
        %v7614 = vld [vmem:[%s5814 + $0x18] sm:$0xf]
        %v7615 = vld [vmem:[%s5814 + $0x1c] sm:$0xf]
        %v7616 = vld [vmem:[%s5814 + $0x24] sm:$0xf]
        %v7617 = vld [vmem:[%s5814 + $0x28] sm:$0xf]
        %v7618 = vld [vmem:[%s5814 + $0x30] sm:$0xf]
        %v7619 = vld [vmem:[%s5814 + $0x34] sm:$0xf]
        %v7620 = vld [vmem:[%s5814 + $0x3c] sm:$0xf]
        %v7621 = vld [vmem:[%s5814 + $0x40] sm:$0xf]
        %v7622 = vld [vmem:[%s5814 + $0x48] sm:$0xf]
        %v7623 = vld [vmem:[%s5814 + $0x4c] sm:$0xf]
        %v7624 = vld [vmem:[%s5814 + $0x54] sm:$0xf]
        %v7625 = vld [vmem:[%s5814 + $0x58] sm:$0xf]
        %v7626 = vld [vmem:[%s5814 + $0x60] sm:$0xf]
        %v7627 = vld [vmem:[%s5814 + $0x64] sm:$0xf]
        %v7628 = vld [vmem:[%s5814 + $0x6c] sm:$0xf]
        %v7629 = vld [vmem:[%s5814 + $0x70] sm:$0xf]
        %v7630 = vld [vmem:[%s5814 + $0x78] sm:$0xf]
        %v7631 = vld [vmem:[%s5814 + $0x7c] sm:$0xf]
        %v7632 = vld [vmem:[%s5814 + $0x84] sm:$0xf]
        %v7633 = vld [vmem:[%s5814 + $0x88] sm:$0xf]
        %v7634 = vld [vmem:[%s5814 + $0x90] sm:$0xf]
        %v7635 = vld [vmem:[%s5814 + $0x94] sm:$0xf]
        %v7636 = vld [vmem:[%s5814 + $0x9c] sm:$0xf]
        %v7637 = vld [vmem:[%s5814 + $0xa0] sm:$0xf]
        %v7638 = vld [vmem:[%s5814 + $0xa8] sm:$0xf]
        %v7639 = vld [vmem:[%s5814 + $0xac] sm:$0xf]
        %v7640 = vld [vmem:[%s5814 + $0xb4] sm:$0xf]
        %v7641 = vld [vmem:[%s5814 + $0xb8] sm:$0xf]
        %v7642 = vld [vmem:[#allocation2] sm:$0xff]
        %v7643 = vld [vmem:[#allocation2 + $0x8] sm:$0xff]
        %v7644 = vld [vmem:[#allocation2 + $0x10] sm:$0xff]
        %v7645 = vld [vmem:[#allocation2 + $0x18] sm:$0xff]
        %v7646 = vld [vmem:[#allocation2 + $0x20] sm:$0xff]
        %v7647 = vld [vmem:[#allocation2 + $0x28] sm:$0xff]
        %v7648 = vld [vmem:[#allocation2 + $0x30] sm:$0xff]
        %v7649 = vld [vmem:[#allocation2 + $0x38] sm:$0xff]
        %v7650 = vld [vmem:[#allocation2 + $0x40] sm:$0xff]
        %v7651 = vld [vmem:[#allocation2 + $0x48] sm:$0xff]
        %v7652 = vld [vmem:[#allocation2 + $0x50] sm:$0xff]
        %v7653 = vld [vmem:[#allocation2 + $0x58] sm:$0xff]
        %v7654 = vld [vmem:[#allocation2 + $0x60] sm:$0xff]
        %v7655 = vld [vmem:[#allocation2 + $0x68] sm:$0xff]
        %v7656 = vld [vmem:[#allocation2 + $0x70] sm:$0xff]
        %v7657 = vld [vmem:[#allocation2 + $0x78] sm:$0xff]
        %v7658 = vld [vmem:[#allocation2 + $0x80] sm:$0xff]
        %v7659 = vld [vmem:[#allocation2 + $0x88] sm:$0xff]
        %v7660 = vld [vmem:[#allocation2 + $0x90] sm:$0xff]
        %v7661 = vld [vmem:[#allocation2 + $0x98] sm:$0xff]
        %v7662 = vld [vmem:[#allocation2 + $0xa0] sm:$0xff]
        %v7663 = vld [vmem:[#allocation2 + $0xa8] sm:$0xff]
        %v7664 = vld [vmem:[#allocation2 + $0xb0] sm:$0xff]
        %v7665 = vld [vmem:[#allocation2 + $0xb8] sm:$0xff]
        %v7666 = vld [vmem:[#allocation2 + $0xc0] sm:$0xff]
        %v7667 = vld [vmem:[#allocation2 + $0xc8] sm:$0xff]
        %v7668 = vld [vmem:[#allocation2 + $0xd0] sm:$0xff]
        %v7669 = vld [vmem:[#allocation2 + $0xd8] sm:$0xff]
        %v7670 = vld [vmem:[#allocation2 + $0xe0] sm:$0xff]
        %v7671 = vld [vmem:[#allocation2 + $0xe8] sm:$0xff]
        %v7672 = vld [vmem:[#allocation2 + $0xf0] sm:$0xff]
        %v7673 = vld [vmem:[#allocation2 + $0xf8] sm:$0xff]
        %s7674 = scalar_lea.vmem [#allocation4], 192
        %v7675 = vld [vmem:[%s7674] sm:$0xf]
        %v7676 = vld [vmem:[%s7674 + $0x4] sm:$0xf]
        %v7677 = vld [vmem:[%s7674 + $0x8] sm:$0xf]
        %v7678 = vld [vmem:[%s7674 + $0xc] sm:$0xf]
        %v7679 = vld [vmem:[%s7674 + $0x10] sm:$0xf]
        %v7680 = vld [vmem:[%s7674 + $0x14] sm:$0xf]
        %v7681 = vld [vmem:[%s7674 + $0x18] sm:$0xf]
        %v7682 = vld [vmem:[%s7674 + $0x1c] sm:$0xf]
        %v7683 = vld [vmem:[%s7674 + $0x20] sm:$0xf]
        %v7684 = vld [vmem:[%s7674 + $0x24] sm:$0xf]
        %v7685 = vld [vmem:[%s7674 + $0x28] sm:$0xf]
        %v7686 = vld [vmem:[%s7674 + $0x2c] sm:$0xf]
        %v7687 = vld [vmem:[%s7674 + $0x30] sm:$0xf]
        %v7688 = vld [vmem:[%s7674 + $0x34] sm:$0xf]
        %v7689 = vld [vmem:[%s7674 + $0x38] sm:$0xf]
        %v7690 = vld [vmem:[%s7674 + $0x3c] sm:$0xf]
        %v7723 = vunpack.c.l.b16 %v7610
        %v7724 = vunpack.c.l.b16 %v7611
        %v7725 = vunpack.c.l.b16 %v7612
        %v7726 = vunpack.c.l.b16 %v7613
        %v7727 = vunpack.c.l.b16 %v7614
        %v7728 = vunpack.c.l.b16 %v7615
        %v7729 = vunpack.c.l.b16 %v7616
        %v7730 = vunpack.c.l.b16 %v7617
        %v7731 = vunpack.c.l.b16 %v7618
        %v7732 = vunpack.c.l.b16 %v7619
        %v7733 = vunpack.c.l.b16 %v7620
        %v7734 = vunpack.c.l.b16 %v7621
        %v7735 = vunpack.c.l.b16 %v7622
        %v7736 = vunpack.c.l.b16 %v7623
        %v7737 = vunpack.c.l.b16 %v7624
        %v7738 = vunpack.c.l.b16 %v7625
        %v7739 = vunpack.c.l.b16 %v7626
        %v7740 = vunpack.c.l.b16 %v7627
        %v7741 = vunpack.c.l.b16 %v7628
        %v7742 = vunpack.c.l.b16 %v7629
        %v7743 = vunpack.c.l.b16 %v7630
        %v7744 = vunpack.c.l.b16 %v7631
        %v7745 = vunpack.c.l.b16 %v7632
        %v7746 = vunpack.c.l.b16 %v7633
        %v7747 = vunpack.c.l.b16 %v7634
        %v7748 = vunpack.c.l.b16 %v7635
        %v7749 = vunpack.c.l.b16 %v7636
        %v7750 = vunpack.c.l.b16 %v7637
        %v7751 = vunpack.c.l.b16 %v7638
        %v7752 = vunpack.c.l.b16 %v7639
        %v7753 = vunpack.c.l.b16 %v7640
        %v7754 = vunpack.c.l.b16 %v7641
        %v7755 = vpack.c.b16 %v7724, %v7723
        %v7756 = vpack.c.b16 %v7726, %v7725
        %v7757 = vpack.c.b16 %v7728, %v7727
        %v7758 = vpack.c.b16 %v7730, %v7729
        %v7759 = vpack.c.b16 %v7732, %v7731
        %v7760 = vpack.c.b16 %v7734, %v7733
        %v7761 = vpack.c.b16 %v7736, %v7735
        %v7762 = vpack.c.b16 %v7738, %v7737
        %v7763 = vpack.c.b16 %v7740, %v7739
        %v7764 = vpack.c.b16 %v7742, %v7741
        %v7765 = vpack.c.b16 %v7744, %v7743
        %v7766 = vpack.c.b16 %v7746, %v7745
        %v7767 = vpack.c.b16 %v7748, %v7747
        %v7768 = vpack.c.b16 %v7750, %v7749
        %v7769 = vpack.c.b16 %v7752, %v7751
        %v7770 = vpack.c.b16 %v7754, %v7753
        %v7803 = vunpack.c.l.b16 %v7675
        %v7804 = vunpack.c.l.b16 %v7676
        %v7805 = vunpack.c.l.b16 %v7677
        %v7806 = vunpack.c.l.b16 %v7678
        %v7807 = vunpack.c.l.b16 %v7679
        %v7808 = vunpack.c.l.b16 %v7680
        %v7809 = vunpack.c.l.b16 %v7681
        %v7810 = vunpack.c.l.b16 %v7682
        %v7811 = vunpack.c.l.b16 %v7683
        %v7812 = vunpack.c.l.b16 %v7684
        %v7813 = vunpack.c.l.b16 %v7685
        %v7814 = vunpack.c.l.b16 %v7686
        %v7815 = vunpack.c.l.b16 %v7687
        %v7816 = vunpack.c.l.b16 %v7688
        %v7817 = vunpack.c.l.b16 %v7689
        %v7818 = vunpack.c.l.b16 %v7690
        %v7819 = vpack.c.b16 %v7804, %v7803
        %v7820 = vpack.c.b16 %v7806, %v7805
        %v7821 = vpack.c.b16 %v7808, %v7807
        %v7822 = vpack.c.b16 %v7810, %v7809
        %v7823 = vpack.c.b16 %v7812, %v7811
        %v7824 = vpack.c.b16 %v7814, %v7813
        %v7825 = vpack.c.b16 %v7816, %v7815
        %v7826 = vpack.c.b16 %v7818, %v7817
        %7835 = vmatpush.bf16.msra.mxu0 %v7826
        %7836 = vmatpush.bf16.msra.mxu0 %v7825
        %7837 = vmatpush.bf16.msra.mxu0 %v7824
        %7838 = vmatpush.bf16.msra.mxu0 %v7823
        %7839 = vmatpush.bf16.msra.mxu0 %v7822
        %7840 = vmatpush.bf16.msra.mxu0 %v7821
        %7841 = vmatpush.bf16.msra.mxu0 %v7820
        %7842 = vmatpush.bf16.msra.mxu0 %v7819
        %7843 = vmatmul.bf16.gmra.mxu0 %v7755
        %v7844 = vpop.f32.mrf.mxu0
        %v7845 = vadd.f32 0.0, %v7844
        %v7846 = vpop.f32.mrf.mxu0
        %v7847 = vadd.f32 0.0, %v7846
        %7848 = vmatmul.bf16.gmra.mxu0 %v7756
        %v7849 = vpop.f32.mrf.mxu0
        %v7850 = vadd.f32 0.0, %v7849
        %v7851 = vpop.f32.mrf.mxu0
        %v7852 = vadd.f32 0.0, %v7851
        %7853 = vmatmul.bf16.gmra.mxu0 %v7757
        %v7854 = vpop.f32.mrf.mxu0
        %v7855 = vadd.f32 0.0, %v7854
        %v7856 = vpop.f32.mrf.mxu0
        %v7857 = vadd.f32 0.0, %v7856
        %7858 = vmatmul.bf16.gmra.mxu0 %v7758
        %v7859 = vpop.f32.mrf.mxu0
        %v7860 = vadd.f32 0.0, %v7859
        %v7861 = vpop.f32.mrf.mxu0
        %v7862 = vadd.f32 0.0, %v7861
        %7863 = vmatmul.bf16.gmra.mxu0 %v7759
        %v7864 = vpop.f32.mrf.mxu0
        %v7865 = vadd.f32 0.0, %v7864
        %v7866 = vpop.f32.mrf.mxu0
        %v7867 = vadd.f32 0.0, %v7866
        %7868 = vmatmul.bf16.gmra.mxu0 %v7760
        %v7869 = vpop.f32.mrf.mxu0
        %v7870 = vadd.f32 0.0, %v7869
        %v7871 = vpop.f32.mrf.mxu0
        %v7872 = vadd.f32 0.0, %v7871
        %7873 = vmatmul.bf16.gmra.mxu0 %v7761
        %v7874 = vpop.f32.mrf.mxu0
        %v7875 = vadd.f32 0.0, %v7874
        %v7876 = vpop.f32.mrf.mxu0
        %v7877 = vadd.f32 0.0, %v7876
        %7878 = vmatmul.bf16.gmra.mxu0 %v7762
        %v7879 = vpop.f32.mrf.mxu0
        %v7880 = vadd.f32 0.0, %v7879
        %v7881 = vpop.f32.mrf.mxu0
        %v7882 = vadd.f32 0.0, %v7881
        %7883 = vmatmul.bf16.gmra.mxu0 %v7763
        %v7884 = vpop.f32.mrf.mxu0
        %v7885 = vadd.f32 0.0, %v7884
        %v7886 = vpop.f32.mrf.mxu0
        %v7887 = vadd.f32 0.0, %v7886
        %7888 = vmatmul.bf16.gmra.mxu0 %v7764
        %v7889 = vpop.f32.mrf.mxu0
        %v7890 = vadd.f32 0.0, %v7889
        %v7891 = vpop.f32.mrf.mxu0
        %v7892 = vadd.f32 0.0, %v7891
        %7893 = vmatmul.bf16.gmra.mxu0 %v7765
        %v7894 = vpop.f32.mrf.mxu0
        %v7895 = vadd.f32 0.0, %v7894
        %v7896 = vpop.f32.mrf.mxu0
        %v7897 = vadd.f32 0.0, %v7896
        %7898 = vmatmul.bf16.gmra.mxu0 %v7766
        %v7899 = vpop.f32.mrf.mxu0
        %v7900 = vadd.f32 0.0, %v7899
        %v7901 = vpop.f32.mrf.mxu0
        %v7902 = vadd.f32 0.0, %v7901
        %7903 = vmatmul.bf16.gmra.mxu0 %v7767
        %v7904 = vpop.f32.mrf.mxu0
        %v7905 = vadd.f32 0.0, %v7904
        %v7906 = vpop.f32.mrf.mxu0
        %v7907 = vadd.f32 0.0, %v7906
        %7908 = vmatmul.bf16.gmra.mxu0 %v7768
        %v7909 = vpop.f32.mrf.mxu0
        %v7910 = vadd.f32 0.0, %v7909
        %v7911 = vpop.f32.mrf.mxu0
        %v7912 = vadd.f32 0.0, %v7911
        %7913 = vmatmul.bf16.gmra.mxu0 %v7769
        %v7914 = vpop.f32.mrf.mxu0
        %v7915 = vadd.f32 0.0, %v7914
        %v7916 = vpop.f32.mrf.mxu0
        %v7917 = vadd.f32 0.0, %v7916
        %7918 = vmatmul.bf16.gmra.mxu0 %v7770
        %v7919 = vpop.f32.mrf.mxu0
        %v7920 = vadd.f32 0.0, %v7919
        %v7921 = vpop.f32.mrf.mxu0
        %v7922 = vadd.f32 0.0, %v7921
        %7923 = vdwg.mxu0
        %v7924 = vadd.f32 %v7642, %v7845
        %v7925 = vadd.f32 %v7643, %v7847
        %v7926 = vadd.f32 %v7644, %v7850
        %v7927 = vadd.f32 %v7645, %v7852
        %v7928 = vadd.f32 %v7646, %v7855
        %v7929 = vadd.f32 %v7647, %v7857
        %v7930 = vadd.f32 %v7648, %v7860
        %v7931 = vadd.f32 %v7649, %v7862
        %v7932 = vadd.f32 %v7650, %v7865
        %v7933 = vadd.f32 %v7651, %v7867
        %v7934 = vadd.f32 %v7652, %v7870
        %v7935 = vadd.f32 %v7653, %v7872
        %v7936 = vadd.f32 %v7654, %v7875
        %v7937 = vadd.f32 %v7655, %v7877
        %v7938 = vadd.f32 %v7656, %v7880
        %v7939 = vadd.f32 %v7657, %v7882
        %v7940 = vadd.f32 %v7658, %v7885
        %v7941 = vadd.f32 %v7659, %v7887
        %v7942 = vadd.f32 %v7660, %v7890
        %v7943 = vadd.f32 %v7661, %v7892
        %v7944 = vadd.f32 %v7662, %v7895
        %v7945 = vadd.f32 %v7663, %v7897
        %v7946 = vadd.f32 %v7664, %v7900
        %v7947 = vadd.f32 %v7665, %v7902
        %v7948 = vadd.f32 %v7666, %v7905
        %v7949 = vadd.f32 %v7667, %v7907
        %v7950 = vadd.f32 %v7668, %v7910
        %v7951 = vadd.f32 %v7669, %v7912
        %v7952 = vadd.f32 %v7670, %v7915
        %v7953 = vadd.f32 %v7671, %v7917
        %v7954 = vadd.f32 %v7672, %v7920
        %v7955 = vadd.f32 %v7673, %v7922
        %7956 = vst [vmem:[#allocation2] sm:$0xff] %v7924
        %7957 = vst [vmem:[#allocation2 + $0x8] sm:$0xff] %v7925
        %7958 = vst [vmem:[#allocation2 + $0x10] sm:$0xff] %v7926
        %7959 = vst [vmem:[#allocation2 + $0x18] sm:$0xff] %v7927
        %7960 = vst [vmem:[#allocation2 + $0x20] sm:$0xff] %v7928
        %7961 = vst [vmem:[#allocation2 + $0x28] sm:$0xff] %v7929
        %7962 = vst [vmem:[#allocation2 + $0x30] sm:$0xff] %v7930
        %7963 = vst [vmem:[#allocation2 + $0x38] sm:$0xff] %v7931
        %7964 = vst [vmem:[#allocation2 + $0x40] sm:$0xff] %v7932
        %7965 = vst [vmem:[#allocation2 + $0x48] sm:$0xff] %v7933
        %7966 = vst [vmem:[#allocation2 + $0x50] sm:$0xff] %v7934
        %7967 = vst [vmem:[#allocation2 + $0x58] sm:$0xff] %v7935
        %7968 = vst [vmem:[#allocation2 + $0x60] sm:$0xff] %v7936
        %7969 = vst [vmem:[#allocation2 + $0x68] sm:$0xff] %v7937
        %7970 = vst [vmem:[#allocation2 + $0x70] sm:$0xff] %v7938
        %7971 = vst [vmem:[#allocation2 + $0x78] sm:$0xff] %v7939
        %7972 = vst [vmem:[#allocation2 + $0x80] sm:$0xff] %v7940
        %7973 = vst [vmem:[#allocation2 + $0x88] sm:$0xff] %v7941
        %7974 = vst [vmem:[#allocation2 + $0x90] sm:$0xff] %v7942
        %7975 = vst [vmem:[#allocation2 + $0x98] sm:$0xff] %v7943
        %7976 = vst [vmem:[#allocation2 + $0xa0] sm:$0xff] %v7944
        %7977 = vst [vmem:[#allocation2 + $0xa8] sm:$0xff] %v7945
        %7978 = vst [vmem:[#allocation2 + $0xb0] sm:$0xff] %v7946
        %7979 = vst [vmem:[#allocation2 + $0xb8] sm:$0xff] %v7947
        %7980 = vst [vmem:[#allocation2 + $0xc0] sm:$0xff] %v7948
        %7981 = vst [vmem:[#allocation2 + $0xc8] sm:$0xff] %v7949
        %7982 = vst [vmem:[#allocation2 + $0xd0] sm:$0xff] %v7950
        %7983 = vst [vmem:[#allocation2 + $0xd8] sm:$0xff] %v7951
        %7984 = vst [vmem:[#allocation2 + $0xe0] sm:$0xff] %v7952
        %7985 = vst [vmem:[#allocation2 + $0xe8] sm:$0xff] %v7953
        %7986 = vst [vmem:[#allocation2 + $0xf0] sm:$0xff] %v7954
        %7987 = vst [vmem:[#allocation2 + $0xf8] sm:$0xff] %v7955
        %v7988 = vld [vmem:[%s5814] sm:$0xf]
        %v7989 = vld [vmem:[%s5814 + $0x4] sm:$0xf]
        %v7990 = vld [vmem:[%s5814 + $0x8] sm:$0x1]
        %v7991 = vld [vmem:[%s5814 + $0xc] sm:$0xf]
        %v7992 = vld [vmem:[%s5814 + $0x10] sm:$0xf]
        %v7993 = vld [vmem:[%s5814 + $0x14] sm:$0x1]
        %v7994 = vld [vmem:[%s5814 + $0x18] sm:$0xf]
        %v7995 = vld [vmem:[%s5814 + $0x1c] sm:$0xf]
        %v7996 = vld [vmem:[%s5814 + $0x20] sm:$0x1]
        %v7997 = vld [vmem:[%s5814 + $0x24] sm:$0xf]
        %v7998 = vld [vmem:[%s5814 + $0x28] sm:$0xf]
        %v7999 = vld [vmem:[%s5814 + $0x2c] sm:$0x1]
        %v8000 = vld [vmem:[%s5814 + $0x30] sm:$0xf]
        %v8001 = vld [vmem:[%s5814 + $0x34] sm:$0xf]
        %v8002 = vld [vmem:[%s5814 + $0x38] sm:$0x1]
        %v8003 = vld [vmem:[%s5814 + $0x3c] sm:$0xf]
        %v8004 = vld [vmem:[%s5814 + $0x40] sm:$0xf]
        %v8005 = vld [vmem:[%s5814 + $0x44] sm:$0x1]
        %v8006 = vld [vmem:[%s5814 + $0x48] sm:$0xf]
        %v8007 = vld [vmem:[%s5814 + $0x4c] sm:$0xf]
        %v8008 = vld [vmem:[%s5814 + $0x50] sm:$0x1]
        %v8009 = vld [vmem:[%s5814 + $0x54] sm:$0xf]
        %v8010 = vld [vmem:[%s5814 + $0x58] sm:$0xf]
        %v8011 = vld [vmem:[%s5814 + $0x5c] sm:$0x1]
        %v8012 = vld [vmem:[%s5814 + $0x60] sm:$0xf]
        %v8013 = vld [vmem:[%s5814 + $0x64] sm:$0xf]
        %v8014 = vld [vmem:[%s5814 + $0x68] sm:$0x1]
        %v8015 = vld [vmem:[%s5814 + $0x6c] sm:$0xf]
        %v8016 = vld [vmem:[%s5814 + $0x70] sm:$0xf]
        %v8017 = vld [vmem:[%s5814 + $0x74] sm:$0x1]
        %v8018 = vld [vmem:[%s5814 + $0x78] sm:$0xf]
        %v8019 = vld [vmem:[%s5814 + $0x7c] sm:$0xf]
        %v8020 = vld [vmem:[%s5814 + $0x80] sm:$0x1]
        %v8021 = vld [vmem:[%s5814 + $0x84] sm:$0xf]
        %v8022 = vld [vmem:[%s5814 + $0x88] sm:$0xf]
        %v8023 = vld [vmem:[%s5814 + $0x8c] sm:$0x1]
        %v8024 = vld [vmem:[%s5814 + $0x90] sm:$0xf]
        %v8025 = vld [vmem:[%s5814 + $0x94] sm:$0xf]
        %v8026 = vld [vmem:[%s5814 + $0x98] sm:$0x1]
        %v8027 = vld [vmem:[%s5814 + $0x9c] sm:$0xf]
        %v8028 = vld [vmem:[%s5814 + $0xa0] sm:$0xf]
        %v8029 = vld [vmem:[%s5814 + $0xa4] sm:$0x1]
        %v8030 = vld [vmem:[%s5814 + $0xa8] sm:$0xf]
        %v8031 = vld [vmem:[%s5814 + $0xac] sm:$0xf]
        %v8032 = vld [vmem:[%s5814 + $0xb0] sm:$0x1]
        %v8033 = vld [vmem:[%s5814 + $0xb4] sm:$0xf]
        %v8034 = vld [vmem:[%s5814 + $0xb8] sm:$0xf]
        %v8035 = vld [vmem:[%s5814 + $0xbc] sm:$0x1]
        %v8037 = vshrl.u32 %v7988, 16
        %v8039 = vrot.slane %v8037, 4
        %v8040 = vshll.u32 %v7988, 16
        %v8042 = vrot.slane %v8040, 5
        %v8043 = vor.u32 %v8039, %v8042
        %v8044 = vrot.slane %v8043, 4
        %v8046 = vshll.u32 %v7989, 16
        %v8048 = vrot.slane %v8046, 5
        %v8049 = vsel %vm758, %v8044, %v8048
        %v8050 = vshrl.u32 %v7989, 16
        %v8052 = vrot.slane %v8050, 4
        %v8053 = vor.u32 %v8052, %v8048
        %v8054 = vrot.slane %v8053, 4
        %v8056 = vshll.u32 %v7990, 16
        %v8058 = vrot.slane %v8056, 5
        %v8059 = vsel %vm758, %v8054, %v8058
        %v8061 = vshrl.u32 %v7991, 16
        %v8063 = vrot.slane %v8061, 4
        %v8064 = vshll.u32 %v7991, 16
        %v8066 = vrot.slane %v8064, 5
        %v8067 = vor.u32 %v8063, %v8066
        %v8068 = vrot.slane %v8067, 4
        %v8070 = vshll.u32 %v7992, 16
        %v8072 = vrot.slane %v8070, 5
        %v8073 = vsel %vm758, %v8068, %v8072
        %v8074 = vshrl.u32 %v7992, 16
        %v8076 = vrot.slane %v8074, 4
        %v8077 = vor.u32 %v8076, %v8072
        %v8078 = vrot.slane %v8077, 4
        %v8080 = vshll.u32 %v7993, 16
        %v8082 = vrot.slane %v8080, 5
        %v8083 = vsel %vm758, %v8078, %v8082
        %v8085 = vshrl.u32 %v7994, 16
        %v8087 = vrot.slane %v8085, 4
        %v8088 = vshll.u32 %v7994, 16
        %v8090 = vrot.slane %v8088, 5
        %v8091 = vor.u32 %v8087, %v8090
        %v8092 = vrot.slane %v8091, 4
        %v8094 = vshll.u32 %v7995, 16
        %v8096 = vrot.slane %v8094, 5
        %v8097 = vsel %vm758, %v8092, %v8096
        %v8098 = vshrl.u32 %v7995, 16
        %v8100 = vrot.slane %v8098, 4
        %v8101 = vor.u32 %v8100, %v8096
        %v8102 = vrot.slane %v8101, 4
        %v8104 = vshll.u32 %v7996, 16
        %v8106 = vrot.slane %v8104, 5
        %v8107 = vsel %vm758, %v8102, %v8106
        %v8109 = vshrl.u32 %v7997, 16
        %v8111 = vrot.slane %v8109, 4
        %v8112 = vshll.u32 %v7997, 16
        %v8114 = vrot.slane %v8112, 5
        %v8115 = vor.u32 %v8111, %v8114
        %v8116 = vrot.slane %v8115, 4
        %v8118 = vshll.u32 %v7998, 16
        %v8120 = vrot.slane %v8118, 5
        %v8121 = vsel %vm758, %v8116, %v8120
        %v8122 = vshrl.u32 %v7998, 16
        %v8124 = vrot.slane %v8122, 4
        %v8125 = vor.u32 %v8124, %v8120
        %v8126 = vrot.slane %v8125, 4
        %v8128 = vshll.u32 %v7999, 16
        %v8130 = vrot.slane %v8128, 5
        %v8131 = vsel %vm758, %v8126, %v8130
        %v8133 = vshrl.u32 %v8000, 16
        %v8135 = vrot.slane %v8133, 4
        %v8136 = vshll.u32 %v8000, 16
        %v8138 = vrot.slane %v8136, 5
        %v8139 = vor.u32 %v8135, %v8138
        %v8140 = vrot.slane %v8139, 4
        %v8142 = vshll.u32 %v8001, 16
        %v8144 = vrot.slane %v8142, 5
        %v8145 = vsel %vm758, %v8140, %v8144
        %v8146 = vshrl.u32 %v8001, 16
        %v8148 = vrot.slane %v8146, 4
        %v8149 = vor.u32 %v8148, %v8144
        %v8150 = vrot.slane %v8149, 4
        %v8152 = vshll.u32 %v8002, 16
        %v8154 = vrot.slane %v8152, 5
        %v8155 = vsel %vm758, %v8150, %v8154
        %v8157 = vshrl.u32 %v8003, 16
        %v8159 = vrot.slane %v8157, 4
        %v8160 = vshll.u32 %v8003, 16
        %v8162 = vrot.slane %v8160, 5
        %v8163 = vor.u32 %v8159, %v8162
        %v8164 = vrot.slane %v8163, 4
        %v8166 = vshll.u32 %v8004, 16
        %v8168 = vrot.slane %v8166, 5
        %v8169 = vsel %vm758, %v8164, %v8168
        %v8170 = vshrl.u32 %v8004, 16
        %v8172 = vrot.slane %v8170, 4
        %v8173 = vor.u32 %v8172, %v8168
        %v8174 = vrot.slane %v8173, 4
        %v8176 = vshll.u32 %v8005, 16
        %v8178 = vrot.slane %v8176, 5
        %v8179 = vsel %vm758, %v8174, %v8178
        %v8181 = vshrl.u32 %v8006, 16
        %v8183 = vrot.slane %v8181, 4
        %v8184 = vshll.u32 %v8006, 16
        %v8186 = vrot.slane %v8184, 5
        %v8187 = vor.u32 %v8183, %v8186
        %v8188 = vrot.slane %v8187, 4
        %v8190 = vshll.u32 %v8007, 16
        %v8192 = vrot.slane %v8190, 5
        %v8193 = vsel %vm758, %v8188, %v8192
        %v8194 = vshrl.u32 %v8007, 16
        %v8196 = vrot.slane %v8194, 4
        %v8197 = vor.u32 %v8196, %v8192
        %v8198 = vrot.slane %v8197, 4
        %v8200 = vshll.u32 %v8008, 16
        %v8202 = vrot.slane %v8200, 5
        %v8203 = vsel %vm758, %v8198, %v8202
        %v8205 = vshrl.u32 %v8009, 16
        %v8207 = vrot.slane %v8205, 4
        %v8208 = vshll.u32 %v8009, 16
        %v8210 = vrot.slane %v8208, 5
        %v8211 = vor.u32 %v8207, %v8210
        %v8212 = vrot.slane %v8211, 4
        %v8214 = vshll.u32 %v8010, 16
        %v8216 = vrot.slane %v8214, 5
        %v8217 = vsel %vm758, %v8212, %v8216
        %v8218 = vshrl.u32 %v8010, 16
        %v8220 = vrot.slane %v8218, 4
        %v8221 = vor.u32 %v8220, %v8216
        %v8222 = vrot.slane %v8221, 4
        %v8224 = vshll.u32 %v8011, 16
        %v8226 = vrot.slane %v8224, 5
        %v8227 = vsel %vm758, %v8222, %v8226
        %v8229 = vshrl.u32 %v8012, 16
        %v8231 = vrot.slane %v8229, 4
        %v8232 = vshll.u32 %v8012, 16
        %v8234 = vrot.slane %v8232, 5
        %v8235 = vor.u32 %v8231, %v8234
        %v8236 = vrot.slane %v8235, 4
        %v8238 = vshll.u32 %v8013, 16
        %v8240 = vrot.slane %v8238, 5
        %v8241 = vsel %vm758, %v8236, %v8240
        %v8242 = vshrl.u32 %v8013, 16
        %v8244 = vrot.slane %v8242, 4
        %v8245 = vor.u32 %v8244, %v8240
        %v8246 = vrot.slane %v8245, 4
        %v8248 = vshll.u32 %v8014, 16
        %v8250 = vrot.slane %v8248, 5
        %v8251 = vsel %vm758, %v8246, %v8250
        %v8253 = vshrl.u32 %v8015, 16
        %v8255 = vrot.slane %v8253, 4
        %v8256 = vshll.u32 %v8015, 16
        %v8258 = vrot.slane %v8256, 5
        %v8259 = vor.u32 %v8255, %v8258
        %v8260 = vrot.slane %v8259, 4
        %v8262 = vshll.u32 %v8016, 16
        %v8264 = vrot.slane %v8262, 5
        %v8265 = vsel %vm758, %v8260, %v8264
        %v8266 = vshrl.u32 %v8016, 16
        %v8268 = vrot.slane %v8266, 4
        %v8269 = vor.u32 %v8268, %v8264
        %v8270 = vrot.slane %v8269, 4
        %v8272 = vshll.u32 %v8017, 16
        %v8274 = vrot.slane %v8272, 5
        %v8275 = vsel %vm758, %v8270, %v8274
        %v8277 = vshrl.u32 %v8018, 16
        %v8279 = vrot.slane %v8277, 4
        %v8280 = vshll.u32 %v8018, 16
        %v8282 = vrot.slane %v8280, 5
        %v8283 = vor.u32 %v8279, %v8282
        %v8284 = vrot.slane %v8283, 4
        %v8286 = vshll.u32 %v8019, 16
        %v8288 = vrot.slane %v8286, 5
        %v8289 = vsel %vm758, %v8284, %v8288
        %v8290 = vshrl.u32 %v8019, 16
        %v8292 = vrot.slane %v8290, 4
        %v8293 = vor.u32 %v8292, %v8288
        %v8294 = vrot.slane %v8293, 4
        %v8296 = vshll.u32 %v8020, 16
        %v8298 = vrot.slane %v8296, 5
        %v8299 = vsel %vm758, %v8294, %v8298
        %v8301 = vshrl.u32 %v8021, 16
        %v8303 = vrot.slane %v8301, 4
        %v8304 = vshll.u32 %v8021, 16
        %v8306 = vrot.slane %v8304, 5
        %v8307 = vor.u32 %v8303, %v8306
        %v8308 = vrot.slane %v8307, 4
        %v8310 = vshll.u32 %v8022, 16
        %v8312 = vrot.slane %v8310, 5
        %v8313 = vsel %vm758, %v8308, %v8312
        %v8314 = vshrl.u32 %v8022, 16
        %v8316 = vrot.slane %v8314, 4
        %v8317 = vor.u32 %v8316, %v8312
        %v8318 = vrot.slane %v8317, 4
        %v8320 = vshll.u32 %v8023, 16
        %v8322 = vrot.slane %v8320, 5
        %v8323 = vsel %vm758, %v8318, %v8322
        %v8325 = vshrl.u32 %v8024, 16
        %v8327 = vrot.slane %v8325, 4
        %v8328 = vshll.u32 %v8024, 16
        %v8330 = vrot.slane %v8328, 5
        %v8331 = vor.u32 %v8327, %v8330
        %v8332 = vrot.slane %v8331, 4
        %v8334 = vshll.u32 %v8025, 16
        %v8336 = vrot.slane %v8334, 5
        %v8337 = vsel %vm758, %v8332, %v8336
        %v8338 = vshrl.u32 %v8025, 16
        %v8340 = vrot.slane %v8338, 4
        %v8341 = vor.u32 %v8340, %v8336
        %v8342 = vrot.slane %v8341, 4
        %v8344 = vshll.u32 %v8026, 16
        %v8346 = vrot.slane %v8344, 5
        %v8347 = vsel %vm758, %v8342, %v8346
        %v8349 = vshrl.u32 %v8027, 16
        %v8351 = vrot.slane %v8349, 4
        %v8352 = vshll.u32 %v8027, 16
        %v8354 = vrot.slane %v8352, 5
        %v8355 = vor.u32 %v8351, %v8354
        %v8356 = vrot.slane %v8355, 4
        %v8358 = vshll.u32 %v8028, 16
        %v8360 = vrot.slane %v8358, 5
        %v8361 = vsel %vm758, %v8356, %v8360
        %v8362 = vshrl.u32 %v8028, 16
        %v8364 = vrot.slane %v8362, 4
        %v8365 = vor.u32 %v8364, %v8360
        %v8366 = vrot.slane %v8365, 4
        %v8368 = vshll.u32 %v8029, 16
        %v8370 = vrot.slane %v8368, 5
        %v8371 = vsel %vm758, %v8366, %v8370
        %v8373 = vshrl.u32 %v8030, 16
        %v8375 = vrot.slane %v8373, 4
        %v8376 = vshll.u32 %v8030, 16
        %v8378 = vrot.slane %v8376, 5
        %v8379 = vor.u32 %v8375, %v8378
        %v8380 = vrot.slane %v8379, 4
        %v8382 = vshll.u32 %v8031, 16
        %v8384 = vrot.slane %v8382, 5
        %v8385 = vsel %vm758, %v8380, %v8384
        %v8386 = vshrl.u32 %v8031, 16
        %v8388 = vrot.slane %v8386, 4
        %v8389 = vor.u32 %v8388, %v8384
        %v8390 = vrot.slane %v8389, 4
        %v8392 = vshll.u32 %v8032, 16
        %v8394 = vrot.slane %v8392, 5
        %v8395 = vsel %vm758, %v8390, %v8394
        %v8397 = vshrl.u32 %v8033, 16
        %v8399 = vrot.slane %v8397, 4
        %v8400 = vshll.u32 %v8033, 16
        %v8402 = vrot.slane %v8400, 5
        %v8403 = vor.u32 %v8399, %v8402
        %v8404 = vrot.slane %v8403, 4
        %v8406 = vshll.u32 %v8034, 16
        %v8408 = vrot.slane %v8406, 5
        %v8409 = vsel %vm758, %v8404, %v8408
        %v8410 = vshrl.u32 %v8034, 16
        %v8412 = vrot.slane %v8410, 4
        %v8413 = vor.u32 %v8412, %v8408
        %v8414 = vrot.slane %v8413, 4
        %v8416 = vshll.u32 %v8035, 16
        %v8418 = vrot.slane %v8416, 5
        %v8419 = vsel %vm758, %v8414, %v8418
        %v8420 = vld [vmem:[#allocation2] sm:$0xff]
        %v8421 = vld [vmem:[#allocation2 + $0x8] sm:$0xff]
        %v8422 = vld [vmem:[#allocation2 + $0x10] sm:$0xff]
        %v8423 = vld [vmem:[#allocation2 + $0x18] sm:$0xff]
        %v8424 = vld [vmem:[#allocation2 + $0x20] sm:$0xff]
        %v8425 = vld [vmem:[#allocation2 + $0x28] sm:$0xff]
        %v8426 = vld [vmem:[#allocation2 + $0x30] sm:$0xff]
        %v8427 = vld [vmem:[#allocation2 + $0x38] sm:$0xff]
        %v8428 = vld [vmem:[#allocation2 + $0x40] sm:$0xff]
        %v8429 = vld [vmem:[#allocation2 + $0x48] sm:$0xff]
        %v8430 = vld [vmem:[#allocation2 + $0x50] sm:$0xff]
        %v8431 = vld [vmem:[#allocation2 + $0x58] sm:$0xff]
        %v8432 = vld [vmem:[#allocation2 + $0x60] sm:$0xff]
        %v8433 = vld [vmem:[#allocation2 + $0x68] sm:$0xff]
        %v8434 = vld [vmem:[#allocation2 + $0x70] sm:$0xff]
        %v8435 = vld [vmem:[#allocation2 + $0x78] sm:$0xff]
        %v8436 = vld [vmem:[#allocation2 + $0x80] sm:$0xff]
        %v8437 = vld [vmem:[#allocation2 + $0x88] sm:$0xff]
        %v8438 = vld [vmem:[#allocation2 + $0x90] sm:$0xff]
        %v8439 = vld [vmem:[#allocation2 + $0x98] sm:$0xff]
        %v8440 = vld [vmem:[#allocation2 + $0xa0] sm:$0xff]
        %v8441 = vld [vmem:[#allocation2 + $0xa8] sm:$0xff]
        %v8442 = vld [vmem:[#allocation2 + $0xb0] sm:$0xff]
        %v8443 = vld [vmem:[#allocation2 + $0xb8] sm:$0xff]
        %v8444 = vld [vmem:[#allocation2 + $0xc0] sm:$0xff]
        %v8445 = vld [vmem:[#allocation2 + $0xc8] sm:$0xff]
        %v8446 = vld [vmem:[#allocation2 + $0xd0] sm:$0xff]
        %v8447 = vld [vmem:[#allocation2 + $0xd8] sm:$0xff]
        %v8448 = vld [vmem:[#allocation2 + $0xe0] sm:$0xff]
        %v8449 = vld [vmem:[#allocation2 + $0xe8] sm:$0xff]
        %v8450 = vld [vmem:[#allocation2 + $0xf0] sm:$0xff]
        %v8451 = vld [vmem:[#allocation2 + $0xf8] sm:$0xff]
        %s8452 = scalar_lea.vmem [#allocation4], 256
        %v8453 = vld [vmem:[%s8452] sm:$0xf]
        %v8454 = vld [vmem:[%s8452 + $0x4] sm:$0xf]
        %v8455 = vld [vmem:[%s8452 + $0x8] sm:$0xf]
        %v8456 = vld [vmem:[%s8452 + $0xc] sm:$0xf]
        %v8457 = vld [vmem:[%s8452 + $0x10] sm:$0xf]
        %v8458 = vld [vmem:[%s8452 + $0x14] sm:$0xf]
        %v8459 = vld [vmem:[%s8452 + $0x18] sm:$0xf]
        %v8460 = vld [vmem:[%s8452 + $0x1c] sm:$0xf]
        %v8461 = vld [vmem:[%s8452 + $0x20] sm:$0xf]
        %v8462 = vld [vmem:[%s8452 + $0x24] sm:$0xf]
        %v8463 = vld [vmem:[%s8452 + $0x28] sm:$0xf]
        %v8464 = vld [vmem:[%s8452 + $0x2c] sm:$0xf]
        %v8465 = vld [vmem:[%s8452 + $0x30] sm:$0xf]
        %v8466 = vld [vmem:[%s8452 + $0x34] sm:$0xf]
        %v8467 = vld [vmem:[%s8452 + $0x38] sm:$0xf]
        %v8468 = vld [vmem:[%s8452 + $0x3c] sm:$0xf]
        %v8469 = vunpack.c.l.b16 %v8049
        %v8470 = vunpack.c.l.b16 %v8059
        %v8471 = vunpack.c.l.b16 %v8073
        %v8472 = vunpack.c.l.b16 %v8083
        %v8473 = vunpack.c.l.b16 %v8097
        %v8474 = vunpack.c.l.b16 %v8107
        %v8475 = vunpack.c.l.b16 %v8121
        %v8476 = vunpack.c.l.b16 %v8131
        %v8477 = vunpack.c.l.b16 %v8145
        %v8478 = vunpack.c.l.b16 %v8155
        %v8479 = vunpack.c.l.b16 %v8169
        %v8480 = vunpack.c.l.b16 %v8179
        %v8481 = vunpack.c.l.b16 %v8193
        %v8482 = vunpack.c.l.b16 %v8203
        %v8483 = vunpack.c.l.b16 %v8217
        %v8484 = vunpack.c.l.b16 %v8227
        %v8485 = vunpack.c.l.b16 %v8241
        %v8486 = vunpack.c.l.b16 %v8251
        %v8487 = vunpack.c.l.b16 %v8265
        %v8488 = vunpack.c.l.b16 %v8275
        %v8489 = vunpack.c.l.b16 %v8289
        %v8490 = vunpack.c.l.b16 %v8299
        %v8491 = vunpack.c.l.b16 %v8313
        %v8492 = vunpack.c.l.b16 %v8323
        %v8493 = vunpack.c.l.b16 %v8337
        %v8494 = vunpack.c.l.b16 %v8347
        %v8495 = vunpack.c.l.b16 %v8361
        %v8496 = vunpack.c.l.b16 %v8371
        %v8497 = vunpack.c.l.b16 %v8385
        %v8498 = vunpack.c.l.b16 %v8395
        %v8499 = vunpack.c.l.b16 %v8409
        %v8500 = vunpack.c.l.b16 %v8419
        %v8501 = vpack.c.b16 %v8470, %v8469
        %v8502 = vpack.c.b16 %v8472, %v8471
        %v8503 = vpack.c.b16 %v8474, %v8473
        %v8504 = vpack.c.b16 %v8476, %v8475
        %v8505 = vpack.c.b16 %v8478, %v8477
        %v8506 = vpack.c.b16 %v8480, %v8479
        %v8507 = vpack.c.b16 %v8482, %v8481
        %v8508 = vpack.c.b16 %v8484, %v8483
        %v8509 = vpack.c.b16 %v8486, %v8485
        %v8510 = vpack.c.b16 %v8488, %v8487
        %v8511 = vpack.c.b16 %v8490, %v8489
        %v8512 = vpack.c.b16 %v8492, %v8491
        %v8513 = vpack.c.b16 %v8494, %v8493
        %v8514 = vpack.c.b16 %v8496, %v8495
        %v8515 = vpack.c.b16 %v8498, %v8497
        %v8516 = vpack.c.b16 %v8500, %v8499
        %v8549 = vunpack.c.l.b16 %v8453
        %v8550 = vunpack.c.l.b16 %v8454
        %v8551 = vunpack.c.l.b16 %v8455
        %v8552 = vunpack.c.l.b16 %v8456
        %v8553 = vunpack.c.l.b16 %v8457
        %v8554 = vunpack.c.l.b16 %v8458
        %v8555 = vunpack.c.l.b16 %v8459
        %v8556 = vunpack.c.l.b16 %v8460
        %v8557 = vunpack.c.l.b16 %v8461
        %v8558 = vunpack.c.l.b16 %v8462
        %v8559 = vunpack.c.l.b16 %v8463
        %v8560 = vunpack.c.l.b16 %v8464
        %v8561 = vunpack.c.l.b16 %v8465
        %v8562 = vunpack.c.l.b16 %v8466
        %v8563 = vunpack.c.l.b16 %v8467
        %v8564 = vunpack.c.l.b16 %v8468
        %v8565 = vpack.c.b16 %v8550, %v8549
        %v8566 = vpack.c.b16 %v8552, %v8551
        %v8567 = vpack.c.b16 %v8554, %v8553
        %v8568 = vpack.c.b16 %v8556, %v8555
        %v8569 = vpack.c.b16 %v8558, %v8557
        %v8570 = vpack.c.b16 %v8560, %v8559
        %v8571 = vpack.c.b16 %v8562, %v8561
        %v8572 = vpack.c.b16 %v8564, %v8563
        %8581 = vmatpush.bf16.msra.mxu0 %v8572
        %8582 = vmatpush.bf16.msra.mxu0 %v8571
        %8583 = vmatpush.bf16.msra.mxu0 %v8570
        %8584 = vmatpush.bf16.msra.mxu0 %v8569
        %8585 = vmatpush.bf16.msra.mxu0 %v8568
        %8586 = vmatpush.bf16.msra.mxu0 %v8567
        %8587 = vmatpush.bf16.msra.mxu0 %v8566
        %8588 = vmatpush.bf16.msra.mxu0 %v8565
        %8589 = vmatmul.bf16.gmra.mxu0 %v8501
        %v8590 = vpop.f32.mrf.mxu0
        %v8591 = vadd.f32 0.0, %v8590
        %v8592 = vpop.f32.mrf.mxu0
        %v8593 = vadd.f32 0.0, %v8592
        %8594 = vmatmul.bf16.gmra.mxu0 %v8502
        %v8595 = vpop.f32.mrf.mxu0
        %v8596 = vadd.f32 0.0, %v8595
        %v8597 = vpop.f32.mrf.mxu0
        %v8598 = vadd.f32 0.0, %v8597
        %8599 = vmatmul.bf16.gmra.mxu0 %v8503
        %v8600 = vpop.f32.mrf.mxu0
        %v8601 = vadd.f32 0.0, %v8600
        %v8602 = vpop.f32.mrf.mxu0
        %v8603 = vadd.f32 0.0, %v8602
        %8604 = vmatmul.bf16.gmra.mxu0 %v8504
        %v8605 = vpop.f32.mrf.mxu0
        %v8606 = vadd.f32 0.0, %v8605
        %v8607 = vpop.f32.mrf.mxu0
        %v8608 = vadd.f32 0.0, %v8607
        %8609 = vmatmul.bf16.gmra.mxu0 %v8505
        %v8610 = vpop.f32.mrf.mxu0
        %v8611 = vadd.f32 0.0, %v8610
        %v8612 = vpop.f32.mrf.mxu0
        %v8613 = vadd.f32 0.0, %v8612
        %8614 = vmatmul.bf16.gmra.mxu0 %v8506
        %v8615 = vpop.f32.mrf.mxu0
        %v8616 = vadd.f32 0.0, %v8615
        %v8617 = vpop.f32.mrf.mxu0
        %v8618 = vadd.f32 0.0, %v8617
        %8619 = vmatmul.bf16.gmra.mxu0 %v8507
        %v8620 = vpop.f32.mrf.mxu0
        %v8621 = vadd.f32 0.0, %v8620
        %v8622 = vpop.f32.mrf.mxu0
        %v8623 = vadd.f32 0.0, %v8622
        %8624 = vmatmul.bf16.gmra.mxu0 %v8508
        %v8625 = vpop.f32.mrf.mxu0
        %v8626 = vadd.f32 0.0, %v8625
        %v8627 = vpop.f32.mrf.mxu0
        %v8628 = vadd.f32 0.0, %v8627
        %8629 = vmatmul.bf16.gmra.mxu0 %v8509
        %v8630 = vpop.f32.mrf.mxu0
        %v8631 = vadd.f32 0.0, %v8630
        %v8632 = vpop.f32.mrf.mxu0
        %v8633 = vadd.f32 0.0, %v8632
        %8634 = vmatmul.bf16.gmra.mxu0 %v8510
        %v8635 = vpop.f32.mrf.mxu0
        %v8636 = vadd.f32 0.0, %v8635
        %v8637 = vpop.f32.mrf.mxu0
        %v8638 = vadd.f32 0.0, %v8637
        %8639 = vmatmul.bf16.gmra.mxu0 %v8511
        %v8640 = vpop.f32.mrf.mxu0
        %v8641 = vadd.f32 0.0, %v8640
        %v8642 = vpop.f32.mrf.mxu0
        %v8643 = vadd.f32 0.0, %v8642
        %8644 = vmatmul.bf16.gmra.mxu0 %v8512
        %v8645 = vpop.f32.mrf.mxu0
        %v8646 = vadd.f32 0.0, %v8645
        %v8647 = vpop.f32.mrf.mxu0
        %v8648 = vadd.f32 0.0, %v8647
        %8649 = vmatmul.bf16.gmra.mxu0 %v8513
        %v8650 = vpop.f32.mrf.mxu0
        %v8651 = vadd.f32 0.0, %v8650
        %v8652 = vpop.f32.mrf.mxu0
        %v8653 = vadd.f32 0.0, %v8652
        %8654 = vmatmul.bf16.gmra.mxu0 %v8514
        %v8655 = vpop.f32.mrf.mxu0
        %v8656 = vadd.f32 0.0, %v8655
        %v8657 = vpop.f32.mrf.mxu0
        %v8658 = vadd.f32 0.0, %v8657
        %8659 = vmatmul.bf16.gmra.mxu0 %v8515
        %v8660 = vpop.f32.mrf.mxu0
        %v8661 = vadd.f32 0.0, %v8660
        %v8662 = vpop.f32.mrf.mxu0
        %v8663 = vadd.f32 0.0, %v8662
        %8664 = vmatmul.bf16.gmra.mxu0 %v8516
        %v8665 = vpop.f32.mrf.mxu0
        %v8666 = vadd.f32 0.0, %v8665
        %v8667 = vpop.f32.mrf.mxu0
        %v8668 = vadd.f32 0.0, %v8667
        %8669 = vdwg.mxu0
        %v8670 = vadd.f32 %v8420, %v8591
        %v8671 = vadd.f32 %v8421, %v8593
        %v8672 = vadd.f32 %v8422, %v8596
        %v8673 = vadd.f32 %v8423, %v8598
        %v8674 = vadd.f32 %v8424, %v8601
        %v8675 = vadd.f32 %v8425, %v8603
        %v8676 = vadd.f32 %v8426, %v8606
        %v8677 = vadd.f32 %v8427, %v8608
        %v8678 = vadd.f32 %v8428, %v8611
        %v8679 = vadd.f32 %v8429, %v8613
        %v8680 = vadd.f32 %v8430, %v8616
        %v8681 = vadd.f32 %v8431, %v8618
        %v8682 = vadd.f32 %v8432, %v8621
        %v8683 = vadd.f32 %v8433, %v8623
        %v8684 = vadd.f32 %v8434, %v8626
        %v8685 = vadd.f32 %v8435, %v8628
        %v8686 = vadd.f32 %v8436, %v8631
        %v8687 = vadd.f32 %v8437, %v8633
        %v8688 = vadd.f32 %v8438, %v8636
        %v8689 = vadd.f32 %v8439, %v8638
        %v8690 = vadd.f32 %v8440, %v8641
        %v8691 = vadd.f32 %v8441, %v8643
        %v8692 = vadd.f32 %v8442, %v8646
        %v8693 = vadd.f32 %v8443, %v8648
        %v8694 = vadd.f32 %v8444, %v8651
        %v8695 = vadd.f32 %v8445, %v8653
        %v8696 = vadd.f32 %v8446, %v8656
        %v8697 = vadd.f32 %v8447, %v8658
        %v8698 = vadd.f32 %v8448, %v8661
        %v8699 = vadd.f32 %v8449, %v8663
        %v8700 = vadd.f32 %v8450, %v8666
        %v8701 = vadd.f32 %v8451, %v8668
        %8702 = vst [vmem:[#allocation2] sm:$0xff] %v8670
        %8703 = vst [vmem:[#allocation2 + $0x8] sm:$0xff] %v8671
        %8704 = vst [vmem:[#allocation2 + $0x10] sm:$0xff] %v8672
        %8705 = vst [vmem:[#allocation2 + $0x18] sm:$0xff] %v8673
        %8706 = vst [vmem:[#allocation2 + $0x20] sm:$0xff] %v8674
        %8707 = vst [vmem:[#allocation2 + $0x28] sm:$0xff] %v8675
        %8708 = vst [vmem:[#allocation2 + $0x30] sm:$0xff] %v8676
        %8709 = vst [vmem:[#allocation2 + $0x38] sm:$0xff] %v8677
        %8710 = vst [vmem:[#allocation2 + $0x40] sm:$0xff] %v8678
        %8711 = vst [vmem:[#allocation2 + $0x48] sm:$0xff] %v8679
        %8712 = vst [vmem:[#allocation2 + $0x50] sm:$0xff] %v8680
        %8713 = vst [vmem:[#allocation2 + $0x58] sm:$0xff] %v8681
        %8714 = vst [vmem:[#allocation2 + $0x60] sm:$0xff] %v8682
        %8715 = vst [vmem:[#allocation2 + $0x68] sm:$0xff] %v8683
        %8716 = vst [vmem:[#allocation2 + $0x70] sm:$0xff] %v8684
        %8717 = vst [vmem:[#allocation2 + $0x78] sm:$0xff] %v8685
        %8718 = vst [vmem:[#allocation2 + $0x80] sm:$0xff] %v8686
        %8719 = vst [vmem:[#allocation2 + $0x88] sm:$0xff] %v8687
        %8720 = vst [vmem:[#allocation2 + $0x90] sm:$0xff] %v8688
        %8721 = vst [vmem:[#allocation2 + $0x98] sm:$0xff] %v8689
        %8722 = vst [vmem:[#allocation2 + $0xa0] sm:$0xff] %v8690
        %8723 = vst [vmem:[#allocation2 + $0xa8] sm:$0xff] %v8691
        %8724 = vst [vmem:[#allocation2 + $0xb0] sm:$0xff] %v8692
        %8725 = vst [vmem:[#allocation2 + $0xb8] sm:$0xff] %v8693
        %8726 = vst [vmem:[#allocation2 + $0xc0] sm:$0xff] %v8694
        %8727 = vst [vmem:[#allocation2 + $0xc8] sm:$0xff] %v8695
        %8728 = vst [vmem:[#allocation2 + $0xd0] sm:$0xff] %v8696
        %8729 = vst [vmem:[#allocation2 + $0xd8] sm:$0xff] %v8697
        %8730 = vst [vmem:[#allocation2 + $0xe0] sm:$0xff] %v8698
        %8731 = vst [vmem:[#allocation2 + $0xe8] sm:$0xff] %v8699
        %8732 = vst [vmem:[#allocation2 + $0xf0] sm:$0xff] %v8700
        %8733 = vst [vmem:[#allocation2 + $0xf8] sm:$0xff] %v8701
        %v8734 = vld [vmem:[%s5814] sm:$0xe]
        %v8735 = vld [vmem:[%s5814 + $0x4] sm:$0xf]
        %v8736 = vld [vmem:[%s5814 + $0x8] sm:$0x1]
        %v8737 = vld [vmem:[%s5814 + $0xc] sm:$0xe]
        %v8738 = vld [vmem:[%s5814 + $0x10] sm:$0xf]
        %v8739 = vld [vmem:[%s5814 + $0x14] sm:$0x1]
        %v8740 = vld [vmem:[%s5814 + $0x18] sm:$0xe]
        %v8741 = vld [vmem:[%s5814 + $0x1c] sm:$0xf]
        %v8742 = vld [vmem:[%s5814 + $0x20] sm:$0x1]
        %v8743 = vld [vmem:[%s5814 + $0x24] sm:$0xe]
        %v8744 = vld [vmem:[%s5814 + $0x28] sm:$0xf]
        %v8745 = vld [vmem:[%s5814 + $0x2c] sm:$0x1]
        %v8746 = vld [vmem:[%s5814 + $0x30] sm:$0xe]
        %v8747 = vld [vmem:[%s5814 + $0x34] sm:$0xf]
        %v8748 = vld [vmem:[%s5814 + $0x38] sm:$0x1]
        %v8749 = vld [vmem:[%s5814 + $0x3c] sm:$0xe]
        %v8750 = vld [vmem:[%s5814 + $0x40] sm:$0xf]
        %v8751 = vld [vmem:[%s5814 + $0x44] sm:$0x1]
        %v8752 = vld [vmem:[%s5814 + $0x48] sm:$0xe]
        %v8753 = vld [vmem:[%s5814 + $0x4c] sm:$0xf]
        %v8754 = vld [vmem:[%s5814 + $0x50] sm:$0x1]
        %v8755 = vld [vmem:[%s5814 + $0x54] sm:$0xe]
        %v8756 = vld [vmem:[%s5814 + $0x58] sm:$0xf]
        %v8757 = vld [vmem:[%s5814 + $0x5c] sm:$0x1]
        %v8758 = vld [vmem:[%s5814 + $0x60] sm:$0xe]
        %v8759 = vld [vmem:[%s5814 + $0x64] sm:$0xf]
        %v8760 = vld [vmem:[%s5814 + $0x68] sm:$0x1]
        %v8761 = vld [vmem:[%s5814 + $0x6c] sm:$0xe]
        %v8762 = vld [vmem:[%s5814 + $0x70] sm:$0xf]
        %v8763 = vld [vmem:[%s5814 + $0x74] sm:$0x1]
        %v8764 = vld [vmem:[%s5814 + $0x78] sm:$0xe]
        %v8765 = vld [vmem:[%s5814 + $0x7c] sm:$0xf]
        %v8766 = vld [vmem:[%s5814 + $0x80] sm:$0x1]
        %v8767 = vld [vmem:[%s5814 + $0x84] sm:$0xe]
        %v8768 = vld [vmem:[%s5814 + $0x88] sm:$0xf]
        %v8769 = vld [vmem:[%s5814 + $0x8c] sm:$0x1]
        %v8770 = vld [vmem:[%s5814 + $0x90] sm:$0xe]
        %v8771 = vld [vmem:[%s5814 + $0x94] sm:$0xf]
        %v8772 = vld [vmem:[%s5814 + $0x98] sm:$0x1]
        %v8773 = vld [vmem:[%s5814 + $0x9c] sm:$0xe]
        %v8774 = vld [vmem:[%s5814 + $0xa0] sm:$0xf]
        %v8775 = vld [vmem:[%s5814 + $0xa4] sm:$0x1]
        %v8776 = vld [vmem:[%s5814 + $0xa8] sm:$0xe]
        %v8777 = vld [vmem:[%s5814 + $0xac] sm:$0xf]
        %v8778 = vld [vmem:[%s5814 + $0xb0] sm:$0x1]
        %v8779 = vld [vmem:[%s5814 + $0xb4] sm:$0xe]
        %v8780 = vld [vmem:[%s5814 + $0xb8] sm:$0xf]
        %v8781 = vld [vmem:[%s5814 + $0xbc] sm:$0x1]
        %v8830 = vrot.slane %v8734, 5
        %v8831 = vrot.slane %v8830, 4
        %v8832 = vrot.slane %v8735, 5
        %v8833 = vsel %vm1555, %v8831, %v8832
        %v8834 = vrot.slane %v8832, 4
        %v8835 = vrot.slane %v8736, 5
        %v8836 = vsel %vm1555, %v8834, %v8835
        %v8837 = vrot.slane %v8737, 5
        %v8838 = vrot.slane %v8837, 4
        %v8839 = vrot.slane %v8738, 5
        %v8840 = vsel %vm1555, %v8838, %v8839
        %v8841 = vrot.slane %v8839, 4
        %v8842 = vrot.slane %v8739, 5
        %v8843 = vsel %vm1555, %v8841, %v8842
        %v8844 = vrot.slane %v8740, 5
        %v8845 = vrot.slane %v8844, 4
        %v8846 = vrot.slane %v8741, 5
        %v8847 = vsel %vm1555, %v8845, %v8846
        %v8848 = vrot.slane %v8846, 4
        %v8849 = vrot.slane %v8742, 5
        %v8850 = vsel %vm1555, %v8848, %v8849
        %v8851 = vrot.slane %v8743, 5
        %v8852 = vrot.slane %v8851, 4
        %v8853 = vrot.slane %v8744, 5
        %v8854 = vsel %vm1555, %v8852, %v8853
        %v8855 = vrot.slane %v8853, 4
        %v8856 = vrot.slane %v8745, 5
        %v8857 = vsel %vm1555, %v8855, %v8856
        %v8858 = vrot.slane %v8746, 5
        %v8859 = vrot.slane %v8858, 4
        %v8860 = vrot.slane %v8747, 5
        %v8861 = vsel %vm1555, %v8859, %v8860
        %v8862 = vrot.slane %v8860, 4
        %v8863 = vrot.slane %v8748, 5
        %v8864 = vsel %vm1555, %v8862, %v8863
        %v8865 = vrot.slane %v8749, 5
        %v8866 = vrot.slane %v8865, 4
        %v8867 = vrot.slane %v8750, 5
        %v8868 = vsel %vm1555, %v8866, %v8867
        %v8869 = vrot.slane %v8867, 4
        %v8870 = vrot.slane %v8751, 5
        %v8871 = vsel %vm1555, %v8869, %v8870
        %v8872 = vrot.slane %v8752, 5
        %v8873 = vrot.slane %v8872, 4
        %v8874 = vrot.slane %v8753, 5
        %v8875 = vsel %vm1555, %v8873, %v8874
        %v8876 = vrot.slane %v8874, 4
        %v8877 = vrot.slane %v8754, 5
        %v8878 = vsel %vm1555, %v8876, %v8877
        %v8879 = vrot.slane %v8755, 5
        %v8880 = vrot.slane %v8879, 4
        %v8881 = vrot.slane %v8756, 5
        %v8882 = vsel %vm1555, %v8880, %v8881
        %v8883 = vrot.slane %v8881, 4
        %v8884 = vrot.slane %v8757, 5
        %v8885 = vsel %vm1555, %v8883, %v8884
        %v8886 = vrot.slane %v8758, 5
        %v8887 = vrot.slane %v8886, 4
        %v8888 = vrot.slane %v8759, 5
        %v8889 = vsel %vm1555, %v8887, %v8888
        %v8890 = vrot.slane %v8888, 4
        %v8891 = vrot.slane %v8760, 5
        %v8892 = vsel %vm1555, %v8890, %v8891
        %v8893 = vrot.slane %v8761, 5
        %v8894 = vrot.slane %v8893, 4
        %v8895 = vrot.slane %v8762, 5
        %v8896 = vsel %vm1555, %v8894, %v8895
        %v8897 = vrot.slane %v8895, 4
        %v8898 = vrot.slane %v8763, 5
        %v8899 = vsel %vm1555, %v8897, %v8898
        %v8900 = vrot.slane %v8764, 5
        %v8901 = vrot.slane %v8900, 4
        %v8902 = vrot.slane %v8765, 5
        %v8903 = vsel %vm1555, %v8901, %v8902
        %v8904 = vrot.slane %v8902, 4
        %v8905 = vrot.slane %v8766, 5
        %v8906 = vsel %vm1555, %v8904, %v8905
        %v8907 = vrot.slane %v8767, 5
        %v8908 = vrot.slane %v8907, 4
        %v8909 = vrot.slane %v8768, 5
        %v8910 = vsel %vm1555, %v8908, %v8909
        %v8911 = vrot.slane %v8909, 4
        %v8912 = vrot.slane %v8769, 5
        %v8913 = vsel %vm1555, %v8911, %v8912
        %v8914 = vrot.slane %v8770, 5
        %v8915 = vrot.slane %v8914, 4
        %v8916 = vrot.slane %v8771, 5
        %v8917 = vsel %vm1555, %v8915, %v8916
        %v8918 = vrot.slane %v8916, 4
        %v8919 = vrot.slane %v8772, 5
        %v8920 = vsel %vm1555, %v8918, %v8919
        %v8921 = vrot.slane %v8773, 5
        %v8922 = vrot.slane %v8921, 4
        %v8923 = vrot.slane %v8774, 5
        %v8924 = vsel %vm1555, %v8922, %v8923
        %v8925 = vrot.slane %v8923, 4
        %v8926 = vrot.slane %v8775, 5
        %v8927 = vsel %vm1555, %v8925, %v8926
        %v8928 = vrot.slane %v8776, 5
        %v8929 = vrot.slane %v8928, 4
        %v8930 = vrot.slane %v8777, 5
        %v8931 = vsel %vm1555, %v8929, %v8930
        %v8932 = vrot.slane %v8930, 4
        %v8933 = vrot.slane %v8778, 5
        %v8934 = vsel %vm1555, %v8932, %v8933
        %v8935 = vrot.slane %v8779, 5
        %v8936 = vrot.slane %v8935, 4
        %v8937 = vrot.slane %v8780, 5
        %v8938 = vsel %vm1555, %v8936, %v8937
        %v8939 = vrot.slane %v8937, 4
        %v8940 = vrot.slane %v8781, 5
        %v8941 = vsel %vm1555, %v8939, %v8940
        %v8942 = vld [vmem:[#allocation2] sm:$0xff]
        %v8943 = vld [vmem:[#allocation2 + $0x8] sm:$0xff]
        %v8944 = vld [vmem:[#allocation2 + $0x10] sm:$0xff]
        %v8945 = vld [vmem:[#allocation2 + $0x18] sm:$0xff]
        %v8946 = vld [vmem:[#allocation2 + $0x20] sm:$0xff]
        %v8947 = vld [vmem:[#allocation2 + $0x28] sm:$0xff]
        %v8948 = vld [vmem:[#allocation2 + $0x30] sm:$0xff]
        %v8949 = vld [vmem:[#allocation2 + $0x38] sm:$0xff]
        %v8950 = vld [vmem:[#allocation2 + $0x40] sm:$0xff]
        %v8951 = vld [vmem:[#allocation2 + $0x48] sm:$0xff]
        %v8952 = vld [vmem:[#allocation2 + $0x50] sm:$0xff]
        %v8953 = vld [vmem:[#allocation2 + $0x58] sm:$0xff]
        %v8954 = vld [vmem:[#allocation2 + $0x60] sm:$0xff]
        %v8955 = vld [vmem:[#allocation2 + $0x68] sm:$0xff]
        %v8956 = vld [vmem:[#allocation2 + $0x70] sm:$0xff]
        %v8957 = vld [vmem:[#allocation2 + $0x78] sm:$0xff]
        %v8958 = vld [vmem:[#allocation2 + $0x80] sm:$0xff]
        %v8959 = vld [vmem:[#allocation2 + $0x88] sm:$0xff]
        %v8960 = vld [vmem:[#allocation2 + $0x90] sm:$0xff]
        %v8961 = vld [vmem:[#allocation2 + $0x98] sm:$0xff]
        %v8962 = vld [vmem:[#allocation2 + $0xa0] sm:$0xff]
        %v8963 = vld [vmem:[#allocation2 + $0xa8] sm:$0xff]
        %v8964 = vld [vmem:[#allocation2 + $0xb0] sm:$0xff]
        %v8965 = vld [vmem:[#allocation2 + $0xb8] sm:$0xff]
        %v8966 = vld [vmem:[#allocation2 + $0xc0] sm:$0xff]
        %v8967 = vld [vmem:[#allocation2 + $0xc8] sm:$0xff]
        %v8968 = vld [vmem:[#allocation2 + $0xd0] sm:$0xff]
        %v8969 = vld [vmem:[#allocation2 + $0xd8] sm:$0xff]
        %v8970 = vld [vmem:[#allocation2 + $0xe0] sm:$0xff]
        %v8971 = vld [vmem:[#allocation2 + $0xe8] sm:$0xff]
        %v8972 = vld [vmem:[#allocation2 + $0xf0] sm:$0xff]
        %v8973 = vld [vmem:[#allocation2 + $0xf8] sm:$0xff]
        %s8974 = scalar_lea.vmem [#allocation4], 320
        %v8975 = vld [vmem:[%s8974] sm:$0xf]
        %v8976 = vld [vmem:[%s8974 + $0x4] sm:$0xf]
        %v8977 = vld [vmem:[%s8974 + $0x8] sm:$0xf]
        %v8978 = vld [vmem:[%s8974 + $0xc] sm:$0xf]
        %v8979 = vld [vmem:[%s8974 + $0x10] sm:$0xf]
        %v8980 = vld [vmem:[%s8974 + $0x14] sm:$0xf]
        %v8981 = vld [vmem:[%s8974 + $0x18] sm:$0xf]
        %v8982 = vld [vmem:[%s8974 + $0x1c] sm:$0xf]
        %v8983 = vld [vmem:[%s8974 + $0x20] sm:$0xf]
        %v8984 = vld [vmem:[%s8974 + $0x24] sm:$0xf]
        %v8985 = vld [vmem:[%s8974 + $0x28] sm:$0xf]
        %v8986 = vld [vmem:[%s8974 + $0x2c] sm:$0xf]
        %v8987 = vld [vmem:[%s8974 + $0x30] sm:$0xf]
        %v8988 = vld [vmem:[%s8974 + $0x34] sm:$0xf]
        %v8989 = vld [vmem:[%s8974 + $0x38] sm:$0xf]
        %v8990 = vld [vmem:[%s8974 + $0x3c] sm:$0xf]
        %v8991 = vunpack.c.l.b16 %v8833
        %v8992 = vunpack.c.l.b16 %v8836
        %v8993 = vunpack.c.l.b16 %v8840
        %v8994 = vunpack.c.l.b16 %v8843
        %v8995 = vunpack.c.l.b16 %v8847
        %v8996 = vunpack.c.l.b16 %v8850
        %v8997 = vunpack.c.l.b16 %v8854
        %v8998 = vunpack.c.l.b16 %v8857
        %v8999 = vunpack.c.l.b16 %v8861
        %v9000 = vunpack.c.l.b16 %v8864
        %v9001 = vunpack.c.l.b16 %v8868
        %v9002 = vunpack.c.l.b16 %v8871
        %v9003 = vunpack.c.l.b16 %v8875
        %v9004 = vunpack.c.l.b16 %v8878
        %v9005 = vunpack.c.l.b16 %v8882
        %v9006 = vunpack.c.l.b16 %v8885
        %v9007 = vunpack.c.l.b16 %v8889
        %v9008 = vunpack.c.l.b16 %v8892
        %v9009 = vunpack.c.l.b16 %v8896
        %v9010 = vunpack.c.l.b16 %v8899
        %v9011 = vunpack.c.l.b16 %v8903
        %v9012 = vunpack.c.l.b16 %v8906
        %v9013 = vunpack.c.l.b16 %v8910
        %v9014 = vunpack.c.l.b16 %v8913
        %v9015 = vunpack.c.l.b16 %v8917
        %v9016 = vunpack.c.l.b16 %v8920
        %v9017 = vunpack.c.l.b16 %v8924
        %v9018 = vunpack.c.l.b16 %v8927
        %v9019 = vunpack.c.l.b16 %v8931
        %v9020 = vunpack.c.l.b16 %v8934
        %v9021 = vunpack.c.l.b16 %v8938
        %v9022 = vunpack.c.l.b16 %v8941
        %v9023 = vpack.c.b16 %v8992, %v8991
        %v9024 = vpack.c.b16 %v8994, %v8993
        %v9025 = vpack.c.b16 %v8996, %v8995
        %v9026 = vpack.c.b16 %v8998, %v8997
        %v9027 = vpack.c.b16 %v9000, %v8999
        %v9028 = vpack.c.b16 %v9002, %v9001
        %v9029 = vpack.c.b16 %v9004, %v9003
        %v9030 = vpack.c.b16 %v9006, %v9005
        %v9031 = vpack.c.b16 %v9008, %v9007
        %v9032 = vpack.c.b16 %v9010, %v9009
        %v9033 = vpack.c.b16 %v9012, %v9011
        %v9034 = vpack.c.b16 %v9014, %v9013
        %v9035 = vpack.c.b16 %v9016, %v9015
        %v9036 = vpack.c.b16 %v9018, %v9017
        %v9037 = vpack.c.b16 %v9020, %v9019
        %v9038 = vpack.c.b16 %v9022, %v9021
        %v9071 = vunpack.c.l.b16 %v8975
        %v9072 = vunpack.c.l.b16 %v8976
        %v9073 = vunpack.c.l.b16 %v8977
        %v9074 = vunpack.c.l.b16 %v8978
        %v9075 = vunpack.c.l.b16 %v8979
        %v9076 = vunpack.c.l.b16 %v8980
        %v9077 = vunpack.c.l.b16 %v8981
        %v9078 = vunpack.c.l.b16 %v8982
        %v9079 = vunpack.c.l.b16 %v8983
        %v9080 = vunpack.c.l.b16 %v8984
        %v9081 = vunpack.c.l.b16 %v8985
        %v9082 = vunpack.c.l.b16 %v8986
        %v9083 = vunpack.c.l.b16 %v8987
        %v9084 = vunpack.c.l.b16 %v8988
        %v9085 = vunpack.c.l.b16 %v8989
        %v9086 = vunpack.c.l.b16 %v8990
        %v9087 = vpack.c.b16 %v9072, %v9071
        %v9088 = vpack.c.b16 %v9074, %v9073
        %v9089 = vpack.c.b16 %v9076, %v9075
        %v9090 = vpack.c.b16 %v9078, %v9077
        %v9091 = vpack.c.b16 %v9080, %v9079
        %v9092 = vpack.c.b16 %v9082, %v9081
        %v9093 = vpack.c.b16 %v9084, %v9083
        %v9094 = vpack.c.b16 %v9086, %v9085
        %9103 = vmatpush.bf16.msra.mxu0 %v9094
        %9104 = vmatpush.bf16.msra.mxu0 %v9093
        %9105 = vmatpush.bf16.msra.mxu0 %v9092
        %9106 = vmatpush.bf16.msra.mxu0 %v9091
        %9107 = vmatpush.bf16.msra.mxu0 %v9090
        %9108 = vmatpush.bf16.msra.mxu0 %v9089
        %9109 = vmatpush.bf16.msra.mxu0 %v9088
        %9110 = vmatpush.bf16.msra.mxu0 %v9087
        %9111 = vmatmul.bf16.gmra.mxu0 %v9023
        %v9112 = vpop.f32.mrf.mxu0
        %v9113 = vadd.f32 0.0, %v9112
        %v9114 = vpop.f32.mrf.mxu0
        %v9115 = vadd.f32 0.0, %v9114
        %9116 = vmatmul.bf16.gmra.mxu0 %v9024
        %v9117 = vpop.f32.mrf.mxu0
        %v9118 = vadd.f32 0.0, %v9117
        %v9119 = vpop.f32.mrf.mxu0
        %v9120 = vadd.f32 0.0, %v9119
        %9121 = vmatmul.bf16.gmra.mxu0 %v9025
        %v9122 = vpop.f32.mrf.mxu0
        %v9123 = vadd.f32 0.0, %v9122
        %v9124 = vpop.f32.mrf.mxu0
        %v9125 = vadd.f32 0.0, %v9124
        %9126 = vmatmul.bf16.gmra.mxu0 %v9026
        %v9127 = vpop.f32.mrf.mxu0
        %v9128 = vadd.f32 0.0, %v9127
        %v9129 = vpop.f32.mrf.mxu0
        %v9130 = vadd.f32 0.0, %v9129
        %9131 = vmatmul.bf16.gmra.mxu0 %v9027
        %v9132 = vpop.f32.mrf.mxu0
        %v9133 = vadd.f32 0.0, %v9132
        %v9134 = vpop.f32.mrf.mxu0
        %v9135 = vadd.f32 0.0, %v9134
        %9136 = vmatmul.bf16.gmra.mxu0 %v9028
        %v9137 = vpop.f32.mrf.mxu0
        %v9138 = vadd.f32 0.0, %v9137
        %v9139 = vpop.f32.mrf.mxu0
        %v9140 = vadd.f32 0.0, %v9139
        %9141 = vmatmul.bf16.gmra.mxu0 %v9029
        %v9142 = vpop.f32.mrf.mxu0
        %v9143 = vadd.f32 0.0, %v9142
        %v9144 = vpop.f32.mrf.mxu0
        %v9145 = vadd.f32 0.0, %v9144
        %9146 = vmatmul.bf16.gmra.mxu0 %v9030
        %v9147 = vpop.f32.mrf.mxu0
        %v9148 = vadd.f32 0.0, %v9147
        %v9149 = vpop.f32.mrf.mxu0
        %v9150 = vadd.f32 0.0, %v9149
        %9151 = vmatmul.bf16.gmra.mxu0 %v9031
        %v9152 = vpop.f32.mrf.mxu0
        %v9153 = vadd.f32 0.0, %v9152
        %v9154 = vpop.f32.mrf.mxu0
        %v9155 = vadd.f32 0.0, %v9154
        %9156 = vmatmul.bf16.gmra.mxu0 %v9032
        %v9157 = vpop.f32.mrf.mxu0
        %v9158 = vadd.f32 0.0, %v9157
        %v9159 = vpop.f32.mrf.mxu0
        %v9160 = vadd.f32 0.0, %v9159
        %9161 = vmatmul.bf16.gmra.mxu0 %v9033
        %v9162 = vpop.f32.mrf.mxu0
        %v9163 = vadd.f32 0.0, %v9162
        %v9164 = vpop.f32.mrf.mxu0
        %v9165 = vadd.f32 0.0, %v9164
        %9166 = vmatmul.bf16.gmra.mxu0 %v9034
        %v9167 = vpop.f32.mrf.mxu0
        %v9168 = vadd.f32 0.0, %v9167
        %v9169 = vpop.f32.mrf.mxu0
        %v9170 = vadd.f32 0.0, %v9169
        %9171 = vmatmul.bf16.gmra.mxu0 %v9035
        %v9172 = vpop.f32.mrf.mxu0
        %v9173 = vadd.f32 0.0, %v9172
        %v9174 = vpop.f32.mrf.mxu0
        %v9175 = vadd.f32 0.0, %v9174
        %9176 = vmatmul.bf16.gmra.mxu0 %v9036
        %v9177 = vpop.f32.mrf.mxu0
        %v9178 = vadd.f32 0.0, %v9177
        %v9179 = vpop.f32.mrf.mxu0
        %v9180 = vadd.f32 0.0, %v9179
        %9181 = vmatmul.bf16.gmra.mxu0 %v9037
        %v9182 = vpop.f32.mrf.mxu0
        %v9183 = vadd.f32 0.0, %v9182
        %v9184 = vpop.f32.mrf.mxu0
        %v9185 = vadd.f32 0.0, %v9184
        %9186 = vmatmul.bf16.gmra.mxu0 %v9038
        %v9187 = vpop.f32.mrf.mxu0
        %v9188 = vadd.f32 0.0, %v9187
        %v9189 = vpop.f32.mrf.mxu0
        %v9190 = vadd.f32 0.0, %v9189
        %9191 = vdwg.mxu0
        %v9192 = vadd.f32 %v8942, %v9113
        %v9193 = vadd.f32 %v8943, %v9115
        %v9194 = vadd.f32 %v8944, %v9118
        %v9195 = vadd.f32 %v8945, %v9120
        %v9196 = vadd.f32 %v8946, %v9123
        %v9197 = vadd.f32 %v8947, %v9125
        %v9198 = vadd.f32 %v8948, %v9128
        %v9199 = vadd.f32 %v8949, %v9130
        %v9200 = vadd.f32 %v8950, %v9133
        %v9201 = vadd.f32 %v8951, %v9135
        %v9202 = vadd.f32 %v8952, %v9138
        %v9203 = vadd.f32 %v8953, %v9140
        %v9204 = vadd.f32 %v8954, %v9143
        %v9205 = vadd.f32 %v8955, %v9145
        %v9206 = vadd.f32 %v8956, %v9148
        %v9207 = vadd.f32 %v8957, %v9150
        %v9208 = vadd.f32 %v8958, %v9153
        %v9209 = vadd.f32 %v8959, %v9155
        %v9210 = vadd.f32 %v8960, %v9158
        %v9211 = vadd.f32 %v8961, %v9160
        %v9212 = vadd.f32 %v8962, %v9163
        %v9213 = vadd.f32 %v8963, %v9165
        %v9214 = vadd.f32 %v8964, %v9168
        %v9215 = vadd.f32 %v8965, %v9170
        %v9216 = vadd.f32 %v8966, %v9173
        %v9217 = vadd.f32 %v8967, %v9175
        %v9218 = vadd.f32 %v8968, %v9178
        %v9219 = vadd.f32 %v8969, %v9180
        %v9220 = vadd.f32 %v8970, %v9183
        %v9221 = vadd.f32 %v8971, %v9185
        %v9222 = vadd.f32 %v8972, %v9188
        %v9223 = vadd.f32 %v8973, %v9190
        %9224 = vst [vmem:[#allocation2] sm:$0xff] %v9192
        %9225 = vst [vmem:[#allocation2 + $0x8] sm:$0xff] %v9193
        %9226 = vst [vmem:[#allocation2 + $0x10] sm:$0xff] %v9194
        %9227 = vst [vmem:[#allocation2 + $0x18] sm:$0xff] %v9195
        %9228 = vst [vmem:[#allocation2 + $0x20] sm:$0xff] %v9196
        %9229 = vst [vmem:[#allocation2 + $0x28] sm:$0xff] %v9197
        %9230 = vst [vmem:[#allocation2 + $0x30] sm:$0xff] %v9198
        %9231 = vst [vmem:[#allocation2 + $0x38] sm:$0xff] %v9199
        %9232 = vst [vmem:[#allocation2 + $0x40] sm:$0xff] %v9200
        %9233 = vst [vmem:[#allocation2 + $0x48] sm:$0xff] %v9201
        %9234 = vst [vmem:[#allocation2 + $0x50] sm:$0xff] %v9202
        %9235 = vst [vmem:[#allocation2 + $0x58] sm:$0xff] %v9203
        %9236 = vst [vmem:[#allocation2 + $0x60] sm:$0xff] %v9204
        %9237 = vst [vmem:[#allocation2 + $0x68] sm:$0xff] %v9205
        %9238 = vst [vmem:[#allocation2 + $0x70] sm:$0xff] %v9206
        %9239 = vst [vmem:[#allocation2 + $0x78] sm:$0xff] %v9207
        %9240 = vst [vmem:[#allocation2 + $0x80] sm:$0xff] %v9208
        %9241 = vst [vmem:[#allocation2 + $0x88] sm:$0xff] %v9209
        %9242 = vst [vmem:[#allocation2 + $0x90] sm:$0xff] %v9210
        %9243 = vst [vmem:[#allocation2 + $0x98] sm:$0xff] %v9211
        %9244 = vst [vmem:[#allocation2 + $0xa0] sm:$0xff] %v9212
        %9245 = vst [vmem:[#allocation2 + $0xa8] sm:$0xff] %v9213
        %9246 = vst [vmem:[#allocation2 + $0xb0] sm:$0xff] %v9214
        %9247 = vst [vmem:[#allocation2 + $0xb8] sm:$0xff] %v9215
        %9248 = vst [vmem:[#allocation2 + $0xc0] sm:$0xff] %v9216
        %9249 = vst [vmem:[#allocation2 + $0xc8] sm:$0xff] %v9217
        %9250 = vst [vmem:[#allocation2 + $0xd0] sm:$0xff] %v9218
        %9251 = vst [vmem:[#allocation2 + $0xd8] sm:$0xff] %v9219
        %9252 = vst [vmem:[#allocation2 + $0xe0] sm:$0xff] %v9220
        %9253 = vst [vmem:[#allocation2 + $0xe8] sm:$0xff] %v9221
        %9254 = vst [vmem:[#allocation2 + $0xf0] sm:$0xff] %v9222
        %9255 = vst [vmem:[#allocation2 + $0xf8] sm:$0xff] %v9223
        %s9256 = scalar_lea.vmem [#allocation3], 24
        %v9257 = vld [vmem:[%s9256] sm:$0xf]
        %v9258 = vld [vmem:[%s9256 + $0x4] sm:$0xf]
        %v9259 = vld [vmem:[%s9256 + $0xc] sm:$0xf]
        %v9260 = vld [vmem:[%s9256 + $0x10] sm:$0xf]
        %v9261 = vld [vmem:[%s9256 + $0x18] sm:$0xf]
        %v9262 = vld [vmem:[%s9256 + $0x1c] sm:$0xf]
        %v9263 = vld [vmem:[%s9256 + $0x24] sm:$0xf]
        %v9264 = vld [vmem:[%s9256 + $0x28] sm:$0xf]
        %v9265 = vld [vmem:[%s9256 + $0x30] sm:$0xf]
        %v9266 = vld [vmem:[%s9256 + $0x34] sm:$0xf]
        %v9267 = vld [vmem:[%s9256 + $0x3c] sm:$0xf]
        %v9268 = vld [vmem:[%s9256 + $0x40] sm:$0xf]
        %v9269 = vld [vmem:[%s9256 + $0x48] sm:$0xf]
        %v9270 = vld [vmem:[%s9256 + $0x4c] sm:$0xf]
        %v9271 = vld [vmem:[%s9256 + $0x54] sm:$0xf]
        %v9272 = vld [vmem:[%s9256 + $0x58] sm:$0xf]
        %v9273 = vld [vmem:[%s9256 + $0x60] sm:$0xf]
        %v9274 = vld [vmem:[%s9256 + $0x64] sm:$0xf]
        %v9275 = vld [vmem:[%s9256 + $0x6c] sm:$0xf]
        %v9276 = vld [vmem:[%s9256 + $0x70] sm:$0xf]
        %v9277 = vld [vmem:[%s9256 + $0x78] sm:$0xf]
        %v9278 = vld [vmem:[%s9256 + $0x7c] sm:$0xf]
        %v9279 = vld [vmem:[%s9256 + $0x84] sm:$0xf]
        %v9280 = vld [vmem:[%s9256 + $0x88] sm:$0xf]
        %v9281 = vld [vmem:[%s9256 + $0x90] sm:$0xf]
        %v9282 = vld [vmem:[%s9256 + $0x94] sm:$0xf]
        %v9283 = vld [vmem:[%s9256 + $0x9c] sm:$0xf]
        %v9284 = vld [vmem:[%s9256 + $0xa0] sm:$0xf]
        %v9285 = vld [vmem:[%s9256 + $0xa8] sm:$0xf]
        %v9286 = vld [vmem:[%s9256 + $0xac] sm:$0xf]
        %v9287 = vld [vmem:[%s9256 + $0xb4] sm:$0xf]
        %v9288 = vld [vmem:[%s9256 + $0xb8] sm:$0xf]
        %v9289 = vld [vmem:[#allocation2] sm:$0xff]
        %v9290 = vld [vmem:[#allocation2 + $0x8] sm:$0xff]
        %v9291 = vld [vmem:[#allocation2 + $0x10] sm:$0xff]
        %v9292 = vld [vmem:[#allocation2 + $0x18] sm:$0xff]
        %v9293 = vld [vmem:[#allocation2 + $0x20] sm:$0xff]
        %v9294 = vld [vmem:[#allocation2 + $0x28] sm:$0xff]
        %v9295 = vld [vmem:[#allocation2 + $0x30] sm:$0xff]
        %v9296 = vld [vmem:[#allocation2 + $0x38] sm:$0xff]
        %v9297 = vld [vmem:[#allocation2 + $0x40] sm:$0xff]
        %v9298 = vld [vmem:[#allocation2 + $0x48] sm:$0xff]
        %v9299 = vld [vmem:[#allocation2 + $0x50] sm:$0xff]
        %v9300 = vld [vmem:[#allocation2 + $0x58] sm:$0xff]
        %v9301 = vld [vmem:[#allocation2 + $0x60] sm:$0xff]
        %v9302 = vld [vmem:[#allocation2 + $0x68] sm:$0xff]
        %v9303 = vld [vmem:[#allocation2 + $0x70] sm:$0xff]
        %v9304 = vld [vmem:[#allocation2 + $0x78] sm:$0xff]
        %v9305 = vld [vmem:[#allocation2 + $0x80] sm:$0xff]
        %v9306 = vld [vmem:[#allocation2 + $0x88] sm:$0xff]
        %v9307 = vld [vmem:[#allocation2 + $0x90] sm:$0xff]
        %v9308 = vld [vmem:[#allocation2 + $0x98] sm:$0xff]
        %v9309 = vld [vmem:[#allocation2 + $0xa0] sm:$0xff]
        %v9310 = vld [vmem:[#allocation2 + $0xa8] sm:$0xff]
        %v9311 = vld [vmem:[#allocation2 + $0xb0] sm:$0xff]
        %v9312 = vld [vmem:[#allocation2 + $0xb8] sm:$0xff]
        %v9313 = vld [vmem:[#allocation2 + $0xc0] sm:$0xff]
        %v9314 = vld [vmem:[#allocation2 + $0xc8] sm:$0xff]
        %v9315 = vld [vmem:[#allocation2 + $0xd0] sm:$0xff]
        %v9316 = vld [vmem:[#allocation2 + $0xd8] sm:$0xff]
        %v9317 = vld [vmem:[#allocation2 + $0xe0] sm:$0xff]
        %v9318 = vld [vmem:[#allocation2 + $0xe8] sm:$0xff]
        %v9319 = vld [vmem:[#allocation2 + $0xf0] sm:$0xff]
        %v9320 = vld [vmem:[#allocation2 + $0xf8] sm:$0xff]
        %s9321 = scalar_lea.vmem [#allocation4], 384
        %v9322 = vld [vmem:[%s9321] sm:$0xf]
        %v9323 = vld [vmem:[%s9321 + $0x4] sm:$0xf]
        %v9324 = vld [vmem:[%s9321 + $0x8] sm:$0xf]
        %v9325 = vld [vmem:[%s9321 + $0xc] sm:$0xf]
        %v9326 = vld [vmem:[%s9321 + $0x10] sm:$0xf]
        %v9327 = vld [vmem:[%s9321 + $0x14] sm:$0xf]
        %v9328 = vld [vmem:[%s9321 + $0x18] sm:$0xf]
        %v9329 = vld [vmem:[%s9321 + $0x1c] sm:$0xf]
        %v9330 = vld [vmem:[%s9321 + $0x20] sm:$0xf]
        %v9331 = vld [vmem:[%s9321 + $0x24] sm:$0xf]
        %v9332 = vld [vmem:[%s9321 + $0x28] sm:$0xf]
        %v9333 = vld [vmem:[%s9321 + $0x2c] sm:$0xf]
        %v9334 = vld [vmem:[%s9321 + $0x30] sm:$0xf]
        %v9335 = vld [vmem:[%s9321 + $0x34] sm:$0xf]
        %v9336 = vld [vmem:[%s9321 + $0x38] sm:$0xf]
        %v9337 = vld [vmem:[%s9321 + $0x3c] sm:$0xf]
        %v9370 = vunpack.c.l.b16 %v9257
        %v9371 = vunpack.c.l.b16 %v9258
        %v9372 = vunpack.c.l.b16 %v9259
        %v9373 = vunpack.c.l.b16 %v9260
        %v9374 = vunpack.c.l.b16 %v9261
        %v9375 = vunpack.c.l.b16 %v9262
        %v9376 = vunpack.c.l.b16 %v9263
        %v9377 = vunpack.c.l.b16 %v9264
        %v9378 = vunpack.c.l.b16 %v9265
        %v9379 = vunpack.c.l.b16 %v9266
        %v9380 = vunpack.c.l.b16 %v9267
        %v9381 = vunpack.c.l.b16 %v9268
        %v9382 = vunpack.c.l.b16 %v9269
        %v9383 = vunpack.c.l.b16 %v9270
        %v9384 = vunpack.c.l.b16 %v9271
        %v9385 = vunpack.c.l.b16 %v9272
        %v9386 = vunpack.c.l.b16 %v9273
        %v9387 = vunpack.c.l.b16 %v9274
        %v9388 = vunpack.c.l.b16 %v9275
        %v9389 = vunpack.c.l.b16 %v9276
        %v9390 = vunpack.c.l.b16 %v9277
        %v9391 = vunpack.c.l.b16 %v9278
        %v9392 = vunpack.c.l.b16 %v9279
        %v9393 = vunpack.c.l.b16 %v9280
        %v9394 = vunpack.c.l.b16 %v9281
        %v9395 = vunpack.c.l.b16 %v9282
        %v9396 = vunpack.c.l.b16 %v9283
        %v9397 = vunpack.c.l.b16 %v9284
        %v9398 = vunpack.c.l.b16 %v9285
        %v9399 = vunpack.c.l.b16 %v9286
        %v9400 = vunpack.c.l.b16 %v9287
        %v9401 = vunpack.c.l.b16 %v9288
        %v9402 = vpack.c.b16 %v9371, %v9370
        %v9403 = vpack.c.b16 %v9373, %v9372
        %v9404 = vpack.c.b16 %v9375, %v9374
        %v9405 = vpack.c.b16 %v9377, %v9376
        %v9406 = vpack.c.b16 %v9379, %v9378
        %v9407 = vpack.c.b16 %v9381, %v9380
        %v9408 = vpack.c.b16 %v9383, %v9382
        %v9409 = vpack.c.b16 %v9385, %v9384
        %v9410 = vpack.c.b16 %v9387, %v9386
        %v9411 = vpack.c.b16 %v9389, %v9388
        %v9412 = vpack.c.b16 %v9391, %v9390
        %v9413 = vpack.c.b16 %v9393, %v9392
        %v9414 = vpack.c.b16 %v9395, %v9394
        %v9415 = vpack.c.b16 %v9397, %v9396
        %v9416 = vpack.c.b16 %v9399, %v9398
        %v9417 = vpack.c.b16 %v9401, %v9400
        %v9450 = vunpack.c.l.b16 %v9322
        %v9451 = vunpack.c.l.b16 %v9323
        %v9452 = vunpack.c.l.b16 %v9324
        %v9453 = vunpack.c.l.b16 %v9325
        %v9454 = vunpack.c.l.b16 %v9326
        %v9455 = vunpack.c.l.b16 %v9327
        %v9456 = vunpack.c.l.b16 %v9328
        %v9457 = vunpack.c.l.b16 %v9329
        %v9458 = vunpack.c.l.b16 %v9330
        %v9459 = vunpack.c.l.b16 %v9331
        %v9460 = vunpack.c.l.b16 %v9332
        %v9461 = vunpack.c.l.b16 %v9333
        %v9462 = vunpack.c.l.b16 %v9334
        %v9463 = vunpack.c.l.b16 %v9335
        %v9464 = vunpack.c.l.b16 %v9336
        %v9465 = vunpack.c.l.b16 %v9337
        %v9466 = vpack.c.b16 %v9451, %v9450
        %v9467 = vpack.c.b16 %v9453, %v9452
        %v9468 = vpack.c.b16 %v9455, %v9454
        %v9469 = vpack.c.b16 %v9457, %v9456
        %v9470 = vpack.c.b16 %v9459, %v9458
        %v9471 = vpack.c.b16 %v9461, %v9460
        %v9472 = vpack.c.b16 %v9463, %v9462
        %v9473 = vpack.c.b16 %v9465, %v9464
        %9482 = vmatpush.bf16.msra.mxu0 %v9473
        %9483 = vmatpush.bf16.msra.mxu0 %v9472
        %9484 = vmatpush.bf16.msra.mxu0 %v9471
        %9485 = vmatpush.bf16.msra.mxu0 %v9470
        %9486 = vmatpush.bf16.msra.mxu0 %v9469
        %9487 = vmatpush.bf16.msra.mxu0 %v9468
        %9488 = vmatpush.bf16.msra.mxu0 %v9467
        %9489 = vmatpush.bf16.msra.mxu0 %v9466
        %9490 = vmatmul.bf16.gmra.mxu0 %v9402
        %v9491 = vpop.f32.mrf.mxu0
        %v9492 = vadd.f32 0.0, %v9491
        %v9493 = vpop.f32.mrf.mxu0
        %v9494 = vadd.f32 0.0, %v9493
        %9495 = vmatmul.bf16.gmra.mxu0 %v9403
        %v9496 = vpop.f32.mrf.mxu0
        %v9497 = vadd.f32 0.0, %v9496
        %v9498 = vpop.f32.mrf.mxu0
        %v9499 = vadd.f32 0.0, %v9498
        %9500 = vmatmul.bf16.gmra.mxu0 %v9404
        %v9501 = vpop.f32.mrf.mxu0
        %v9502 = vadd.f32 0.0, %v9501
        %v9503 = vpop.f32.mrf.mxu0
        %v9504 = vadd.f32 0.0, %v9503
        %9505 = vmatmul.bf16.gmra.mxu0 %v9405
        %v9506 = vpop.f32.mrf.mxu0
        %v9507 = vadd.f32 0.0, %v9506
        %v9508 = vpop.f32.mrf.mxu0
        %v9509 = vadd.f32 0.0, %v9508
        %9510 = vmatmul.bf16.gmra.mxu0 %v9406
        %v9511 = vpop.f32.mrf.mxu0
        %v9512 = vadd.f32 0.0, %v9511
        %v9513 = vpop.f32.mrf.mxu0
        %v9514 = vadd.f32 0.0, %v9513
        %9515 = vmatmul.bf16.gmra.mxu0 %v9407
        %v9516 = vpop.f32.mrf.mxu0
        %v9517 = vadd.f32 0.0, %v9516
        %v9518 = vpop.f32.mrf.mxu0
        %v9519 = vadd.f32 0.0, %v9518
        %9520 = vmatmul.bf16.gmra.mxu0 %v9408
        %v9521 = vpop.f32.mrf.mxu0
        %v9522 = vadd.f32 0.0, %v9521
        %v9523 = vpop.f32.mrf.mxu0
        %v9524 = vadd.f32 0.0, %v9523
        %9525 = vmatmul.bf16.gmra.mxu0 %v9409
        %v9526 = vpop.f32.mrf.mxu0
        %v9527 = vadd.f32 0.0, %v9526
        %v9528 = vpop.f32.mrf.mxu0
        %v9529 = vadd.f32 0.0, %v9528
        %9530 = vmatmul.bf16.gmra.mxu0 %v9410
        %v9531 = vpop.f32.mrf.mxu0
        %v9532 = vadd.f32 0.0, %v9531
        %v9533 = vpop.f32.mrf.mxu0
        %v9534 = vadd.f32 0.0, %v9533
        %9535 = vmatmul.bf16.gmra.mxu0 %v9411
        %v9536 = vpop.f32.mrf.mxu0
        %v9537 = vadd.f32 0.0, %v9536
        %v9538 = vpop.f32.mrf.mxu0
        %v9539 = vadd.f32 0.0, %v9538
        %9540 = vmatmul.bf16.gmra.mxu0 %v9412
        %v9541 = vpop.f32.mrf.mxu0
        %v9542 = vadd.f32 0.0, %v9541
        %v9543 = vpop.f32.mrf.mxu0
        %v9544 = vadd.f32 0.0, %v9543
        %9545 = vmatmul.bf16.gmra.mxu0 %v9413
        %v9546 = vpop.f32.mrf.mxu0
        %v9547 = vadd.f32 0.0, %v9546
        %v9548 = vpop.f32.mrf.mxu0
        %v9549 = vadd.f32 0.0, %v9548
        %9550 = vmatmul.bf16.gmra.mxu0 %v9414
        %v9551 = vpop.f32.mrf.mxu0
        %v9552 = vadd.f32 0.0, %v9551
        %v9553 = vpop.f32.mrf.mxu0
        %v9554 = vadd.f32 0.0, %v9553
        %9555 = vmatmul.bf16.gmra.mxu0 %v9415
        %v9556 = vpop.f32.mrf.mxu0
        %v9557 = vadd.f32 0.0, %v9556
        %v9558 = vpop.f32.mrf.mxu0
        %v9559 = vadd.f32 0.0, %v9558
        %9560 = vmatmul.bf16.gmra.mxu0 %v9416
        %v9561 = vpop.f32.mrf.mxu0
        %v9562 = vadd.f32 0.0, %v9561
        %v9563 = vpop.f32.mrf.mxu0
        %v9564 = vadd.f32 0.0, %v9563
        %9565 = vmatmul.bf16.gmra.mxu0 %v9417
        %v9566 = vpop.f32.mrf.mxu0
        %v9567 = vadd.f32 0.0, %v9566
        %v9568 = vpop.f32.mrf.mxu0
        %v9569 = vadd.f32 0.0, %v9568
        %9570 = vdwg.mxu0
        %v9571 = vadd.f32 %v9289, %v9492
        %v9572 = vadd.f32 %v9290, %v9494
        %v9573 = vadd.f32 %v9291, %v9497
        %v9574 = vadd.f32 %v9292, %v9499
        %v9575 = vadd.f32 %v9293, %v9502
        %v9576 = vadd.f32 %v9294, %v9504
        %v9577 = vadd.f32 %v9295, %v9507
        %v9578 = vadd.f32 %v9296, %v9509
        %v9579 = vadd.f32 %v9297, %v9512
        %v9580 = vadd.f32 %v9298, %v9514
        %v9581 = vadd.f32 %v9299, %v9517
        %v9582 = vadd.f32 %v9300, %v9519
        %v9583 = vadd.f32 %v9301, %v9522
        %v9584 = vadd.f32 %v9302, %v9524
        %v9585 = vadd.f32 %v9303, %v9527
        %v9586 = vadd.f32 %v9304, %v9529
        %v9587 = vadd.f32 %v9305, %v9532
        %v9588 = vadd.f32 %v9306, %v9534
        %v9589 = vadd.f32 %v9307, %v9537
        %v9590 = vadd.f32 %v9308, %v9539
        %v9591 = vadd.f32 %v9309, %v9542
        %v9592 = vadd.f32 %v9310, %v9544
        %v9593 = vadd.f32 %v9311, %v9547
        %v9594 = vadd.f32 %v9312, %v9549
        %v9595 = vadd.f32 %v9313, %v9552
        %v9596 = vadd.f32 %v9314, %v9554
        %v9597 = vadd.f32 %v9315, %v9557
        %v9598 = vadd.f32 %v9316, %v9559
        %v9599 = vadd.f32 %v9317, %v9562
        %v9600 = vadd.f32 %v9318, %v9564
        %v9601 = vadd.f32 %v9319, %v9567
        %v9602 = vadd.f32 %v9320, %v9569
        %9603 = vst [vmem:[#allocation2] sm:$0xff] %v9571
        %9604 = vst [vmem:[#allocation2 + $0x8] sm:$0xff] %v9572
        %9605 = vst [vmem:[#allocation2 + $0x10] sm:$0xff] %v9573
        %9606 = vst [vmem:[#allocation2 + $0x18] sm:$0xff] %v9574
        %9607 = vst [vmem:[#allocation2 + $0x20] sm:$0xff] %v9575
        %9608 = vst [vmem:[#allocation2 + $0x28] sm:$0xff] %v9576
        %9609 = vst [vmem:[#allocation2 + $0x30] sm:$0xff] %v9577
        %9610 = vst [vmem:[#allocation2 + $0x38] sm:$0xff] %v9578
        %9611 = vst [vmem:[#allocation2 + $0x40] sm:$0xff] %v9579
        %9612 = vst [vmem:[#allocation2 + $0x48] sm:$0xff] %v9580
        %9613 = vst [vmem:[#allocation2 + $0x50] sm:$0xff] %v9581
        %9614 = vst [vmem:[#allocation2 + $0x58] sm:$0xff] %v9582
        %9615 = vst [vmem:[#allocation2 + $0x60] sm:$0xff] %v9583
        %9616 = vst [vmem:[#allocation2 + $0x68] sm:$0xff] %v9584
        %9617 = vst [vmem:[#allocation2 + $0x70] sm:$0xff] %v9585
        %9618 = vst [vmem:[#allocation2 + $0x78] sm:$0xff] %v9586
        %9619 = vst [vmem:[#allocation2 + $0x80] sm:$0xff] %v9587
        %9620 = vst [vmem:[#allocation2 + $0x88] sm:$0xff] %v9588
        %9621 = vst [vmem:[#allocation2 + $0x90] sm:$0xff] %v9589
        %9622 = vst [vmem:[#allocation2 + $0x98] sm:$0xff] %v9590
        %9623 = vst [vmem:[#allocation2 + $0xa0] sm:$0xff] %v9591
        %9624 = vst [vmem:[#allocation2 + $0xa8] sm:$0xff] %v9592
        %9625 = vst [vmem:[#allocation2 + $0xb0] sm:$0xff] %v9593
        %9626 = vst [vmem:[#allocation2 + $0xb8] sm:$0xff] %v9594
        %9627 = vst [vmem:[#allocation2 + $0xc0] sm:$0xff] %v9595
        %9628 = vst [vmem:[#allocation2 + $0xc8] sm:$0xff] %v9596
        %9629 = vst [vmem:[#allocation2 + $0xd0] sm:$0xff] %v9597
        %9630 = vst [vmem:[#allocation2 + $0xd8] sm:$0xff] %v9598
        %9631 = vst [vmem:[#allocation2 + $0xe0] sm:$0xff] %v9599
        %9632 = vst [vmem:[#allocation2 + $0xe8] sm:$0xff] %v9600
        %9633 = vst [vmem:[#allocation2 + $0xf0] sm:$0xff] %v9601
        %9634 = vst [vmem:[#allocation2 + $0xf8] sm:$0xff] %v9602
        %v9635 = vld [vmem:[%s9256] sm:$0xf]
        %v9636 = vld [vmem:[%s9256 + $0x4] sm:$0xf]
        %v9637 = vld [vmem:[%s9256 + $0x8] sm:$0x1]
        %v9638 = vld [vmem:[%s9256 + $0xc] sm:$0xf]
        %v9639 = vld [vmem:[%s9256 + $0x10] sm:$0xf]
        %v9640 = vld [vmem:[%s9256 + $0x14] sm:$0x1]
        %v9641 = vld [vmem:[%s9256 + $0x18] sm:$0xf]
        %v9642 = vld [vmem:[%s9256 + $0x1c] sm:$0xf]
        %v9643 = vld [vmem:[%s9256 + $0x20] sm:$0x1]
        %v9644 = vld [vmem:[%s9256 + $0x24] sm:$0xf]
        %v9645 = vld [vmem:[%s9256 + $0x28] sm:$0xf]
        %v9646 = vld [vmem:[%s9256 + $0x2c] sm:$0x1]
        %v9647 = vld [vmem:[%s9256 + $0x30] sm:$0xf]
        %v9648 = vld [vmem:[%s9256 + $0x34] sm:$0xf]
        %v9649 = vld [vmem:[%s9256 + $0x38] sm:$0x1]
        %v9650 = vld [vmem:[%s9256 + $0x3c] sm:$0xf]
        %v9651 = vld [vmem:[%s9256 + $0x40] sm:$0xf]
        %v9652 = vld [vmem:[%s9256 + $0x44] sm:$0x1]
        %v9653 = vld [vmem:[%s9256 + $0x48] sm:$0xf]
        %v9654 = vld [vmem:[%s9256 + $0x4c] sm:$0xf]
        %v9655 = vld [vmem:[%s9256 + $0x50] sm:$0x1]
        %v9656 = vld [vmem:[%s9256 + $0x54] sm:$0xf]
        %v9657 = vld [vmem:[%s9256 + $0x58] sm:$0xf]
        %v9658 = vld [vmem:[%s9256 + $0x5c] sm:$0x1]
        %v9659 = vld [vmem:[%s9256 + $0x60] sm:$0xf]
        %v9660 = vld [vmem:[%s9256 + $0x64] sm:$0xf]
        %v9661 = vld [vmem:[%s9256 + $0x68] sm:$0x1]
        %v9662 = vld [vmem:[%s9256 + $0x6c] sm:$0xf]
        %v9663 = vld [vmem:[%s9256 + $0x70] sm:$0xf]
        %v9664 = vld [vmem:[%s9256 + $0x74] sm:$0x1]
        %v9665 = vld [vmem:[%s9256 + $0x78] sm:$0xf]
        %v9666 = vld [vmem:[%s9256 + $0x7c] sm:$0xf]
        %v9667 = vld [vmem:[%s9256 + $0x80] sm:$0x1]
        %v9668 = vld [vmem:[%s9256 + $0x84] sm:$0xf]
        %v9669 = vld [vmem:[%s9256 + $0x88] sm:$0xf]
        %v9670 = vld [vmem:[%s9256 + $0x8c] sm:$0x1]
        %v9671 = vld [vmem:[%s9256 + $0x90] sm:$0xf]
        %v9672 = vld [vmem:[%s9256 + $0x94] sm:$0xf]
        %v9673 = vld [vmem:[%s9256 + $0x98] sm:$0x1]
        %v9674 = vld [vmem:[%s9256 + $0x9c] sm:$0xf]
        %v9675 = vld [vmem:[%s9256 + $0xa0] sm:$0xf]
        %v9676 = vld [vmem:[%s9256 + $0xa4] sm:$0x1]
        %v9677 = vld [vmem:[%s9256 + $0xa8] sm:$0xf]
        %v9678 = vld [vmem:[%s9256 + $0xac] sm:$0xf]
        %v9679 = vld [vmem:[%s9256 + $0xb0] sm:$0x1]
        %v9680 = vld [vmem:[%s9256 + $0xb4] sm:$0xf]
        %v9681 = vld [vmem:[%s9256 + $0xb8] sm:$0xf]
        %v9682 = vld [vmem:[%s9256 + $0xbc] sm:$0x1]
        %v9684 = vshrl.u32 %v9635, 16
        %v9686 = vrot.slane %v9684, 4
        %v9687 = vshll.u32 %v9635, 16
        %v9689 = vrot.slane %v9687, 5
        %v9690 = vor.u32 %v9686, %v9689
        %v9691 = vrot.slane %v9690, 4
        %v9693 = vshll.u32 %v9636, 16
        %v9695 = vrot.slane %v9693, 5
        %v9696 = vsel %vm758, %v9691, %v9695
        %v9697 = vshrl.u32 %v9636, 16
        %v9699 = vrot.slane %v9697, 4
        %v9700 = vor.u32 %v9699, %v9695
        %v9701 = vrot.slane %v9700, 4
        %v9703 = vshll.u32 %v9637, 16
        %v9705 = vrot.slane %v9703, 5
        %v9706 = vsel %vm758, %v9701, %v9705
        %v9708 = vshrl.u32 %v9638, 16
        %v9710 = vrot.slane %v9708, 4
        %v9711 = vshll.u32 %v9638, 16
        %v9713 = vrot.slane %v9711, 5
        %v9714 = vor.u32 %v9710, %v9713
        %v9715 = vrot.slane %v9714, 4
        %v9717 = vshll.u32 %v9639, 16
        %v9719 = vrot.slane %v9717, 5
        %v9720 = vsel %vm758, %v9715, %v9719
        %v9721 = vshrl.u32 %v9639, 16
        %v9723 = vrot.slane %v9721, 4
        %v9724 = vor.u32 %v9723, %v9719
        %v9725 = vrot.slane %v9724, 4
        %v9727 = vshll.u32 %v9640, 16
        %v9729 = vrot.slane %v9727, 5
        %v9730 = vsel %vm758, %v9725, %v9729
        %v9732 = vshrl.u32 %v9641, 16
        %v9734 = vrot.slane %v9732, 4
        %v9735 = vshll.u32 %v9641, 16
        %v9737 = vrot.slane %v9735, 5
        %v9738 = vor.u32 %v9734, %v9737
        %v9739 = vrot.slane %v9738, 4
        %v9741 = vshll.u32 %v9642, 16
        %v9743 = vrot.slane %v9741, 5
        %v9744 = vsel %vm758, %v9739, %v9743
        %v9745 = vshrl.u32 %v9642, 16
        %v9747 = vrot.slane %v9745, 4
        %v9748 = vor.u32 %v9747, %v9743
        %v9749 = vrot.slane %v9748, 4
        %v9751 = vshll.u32 %v9643, 16
        %v9753 = vrot.slane %v9751, 5
        %v9754 = vsel %vm758, %v9749, %v9753
        %v9756 = vshrl.u32 %v9644, 16
        %v9758 = vrot.slane %v9756, 4
        %v9759 = vshll.u32 %v9644, 16
        %v9761 = vrot.slane %v9759, 5
        %v9762 = vor.u32 %v9758, %v9761
        %v9763 = vrot.slane %v9762, 4
        %v9765 = vshll.u32 %v9645, 16
        %v9767 = vrot.slane %v9765, 5
        %v9768 = vsel %vm758, %v9763, %v9767
        %v9769 = vshrl.u32 %v9645, 16
        %v9771 = vrot.slane %v9769, 4
        %v9772 = vor.u32 %v9771, %v9767
        %v9773 = vrot.slane %v9772, 4
        %v9775 = vshll.u32 %v9646, 16
        %v9777 = vrot.slane %v9775, 5
        %v9778 = vsel %vm758, %v9773, %v9777
        %v9780 = vshrl.u32 %v9647, 16
        %v9782 = vrot.slane %v9780, 4
        %v9783 = vshll.u32 %v9647, 16
        %v9785 = vrot.slane %v9783, 5
        %v9786 = vor.u32 %v9782, %v9785
        %v9787 = vrot.slane %v9786, 4
        %v9789 = vshll.u32 %v9648, 16
        %v9791 = vrot.slane %v9789, 5
        %v9792 = vsel %vm758, %v9787, %v9791
        %v9793 = vshrl.u32 %v9648, 16
        %v9795 = vrot.slane %v9793, 4
        %v9796 = vor.u32 %v9795, %v9791
        %v9797 = vrot.slane %v9796, 4
        %v9799 = vshll.u32 %v9649, 16
        %v9801 = vrot.slane %v9799, 5
        %v9802 = vsel %vm758, %v9797, %v9801
        %v9804 = vshrl.u32 %v9650, 16
        %v9806 = vrot.slane %v9804, 4
        %v9807 = vshll.u32 %v9650, 16
        %v9809 = vrot.slane %v9807, 5
        %v9810 = vor.u32 %v9806, %v9809
        %v9811 = vrot.slane %v9810, 4
        %v9813 = vshll.u32 %v9651, 16
        %v9815 = vrot.slane %v9813, 5
        %v9816 = vsel %vm758, %v9811, %v9815
        %v9817 = vshrl.u32 %v9651, 16
        %v9819 = vrot.slane %v9817, 4
        %v9820 = vor.u32 %v9819, %v9815
        %v9821 = vrot.slane %v9820, 4
        %v9823 = vshll.u32 %v9652, 16
        %v9825 = vrot.slane %v9823, 5
        %v9826 = vsel %vm758, %v9821, %v9825
        %v9828 = vshrl.u32 %v9653, 16
        %v9830 = vrot.slane %v9828, 4
        %v9831 = vshll.u32 %v9653, 16
        %v9833 = vrot.slane %v9831, 5
        %v9834 = vor.u32 %v9830, %v9833
        %v9835 = vrot.slane %v9834, 4
        %v9837 = vshll.u32 %v9654, 16
        %v9839 = vrot.slane %v9837, 5
        %v9840 = vsel %vm758, %v9835, %v9839
        %v9841 = vshrl.u32 %v9654, 16
        %v9843 = vrot.slane %v9841, 4
        %v9844 = vor.u32 %v9843, %v9839
        %v9845 = vrot.slane %v9844, 4
        %v9847 = vshll.u32 %v9655, 16
        %v9849 = vrot.slane %v9847, 5
        %v9850 = vsel %vm758, %v9845, %v9849
        %v9852 = vshrl.u32 %v9656, 16
        %v9854 = vrot.slane %v9852, 4
        %v9855 = vshll.u32 %v9656, 16
        %v9857 = vrot.slane %v9855, 5
        %v9858 = vor.u32 %v9854, %v9857
        %v9859 = vrot.slane %v9858, 4
        %v9861 = vshll.u32 %v9657, 16
        %v9863 = vrot.slane %v9861, 5
        %v9864 = vsel %vm758, %v9859, %v9863
        %v9865 = vshrl.u32 %v9657, 16
        %v9867 = vrot.slane %v9865, 4
        %v9868 = vor.u32 %v9867, %v9863
        %v9869 = vrot.slane %v9868, 4
        %v9871 = vshll.u32 %v9658, 16
        %v9873 = vrot.slane %v9871, 5
        %v9874 = vsel %vm758, %v9869, %v9873
        %v9876 = vshrl.u32 %v9659, 16
        %v9878 = vrot.slane %v9876, 4
        %v9879 = vshll.u32 %v9659, 16
        %v9881 = vrot.slane %v9879, 5
        %v9882 = vor.u32 %v9878, %v9881
        %v9883 = vrot.slane %v9882, 4
        %v9885 = vshll.u32 %v9660, 16
        %v9887 = vrot.slane %v9885, 5
        %v9888 = vsel %vm758, %v9883, %v9887
        %v9889 = vshrl.u32 %v9660, 16
        %v9891 = vrot.slane %v9889, 4
        %v9892 = vor.u32 %v9891, %v9887
        %v9893 = vrot.slane %v9892, 4
        %v9895 = vshll.u32 %v9661, 16
        %v9897 = vrot.slane %v9895, 5
        %v9898 = vsel %vm758, %v9893, %v9897
        %v9900 = vshrl.u32 %v9662, 16
        %v9902 = vrot.slane %v9900, 4
        %v9903 = vshll.u32 %v9662, 16
        %v9905 = vrot.slane %v9903, 5
        %v9906 = vor.u32 %v9902, %v9905
        %v9907 = vrot.slane %v9906, 4
        %v9909 = vshll.u32 %v9663, 16
        %v9911 = vrot.slane %v9909, 5
        %v9912 = vsel %vm758, %v9907, %v9911
        %v9913 = vshrl.u32 %v9663, 16
        %v9915 = vrot.slane %v9913, 4
        %v9916 = vor.u32 %v9915, %v9911
        %v9917 = vrot.slane %v9916, 4
        %v9919 = vshll.u32 %v9664, 16
        %v9921 = vrot.slane %v9919, 5
        %v9922 = vsel %vm758, %v9917, %v9921
        %v9924 = vshrl.u32 %v9665, 16
        %v9926 = vrot.slane %v9924, 4
        %v9927 = vshll.u32 %v9665, 16
        %v9929 = vrot.slane %v9927, 5
        %v9930 = vor.u32 %v9926, %v9929
        %v9931 = vrot.slane %v9930, 4
        %v9933 = vshll.u32 %v9666, 16
        %v9935 = vrot.slane %v9933, 5
        %v9936 = vsel %vm758, %v9931, %v9935
        %v9937 = vshrl.u32 %v9666, 16
        %v9939 = vrot.slane %v9937, 4
        %v9940 = vor.u32 %v9939, %v9935
        %v9941 = vrot.slane %v9940, 4
        %v9943 = vshll.u32 %v9667, 16
        %v9945 = vrot.slane %v9943, 5
        %v9946 = vsel %vm758, %v9941, %v9945
        %v9948 = vshrl.u32 %v9668, 16
        %v9950 = vrot.slane %v9948, 4
        %v9951 = vshll.u32 %v9668, 16
        %v9953 = vrot.slane %v9951, 5
        %v9954 = vor.u32 %v9950, %v9953
        %v9955 = vrot.slane %v9954, 4
        %v9957 = vshll.u32 %v9669, 16
        %v9959 = vrot.slane %v9957, 5
        %v9960 = vsel %vm758, %v9955, %v9959
        %v9961 = vshrl.u32 %v9669, 16
        %v9963 = vrot.slane %v9961, 4
        %v9964 = vor.u32 %v9963, %v9959
        %v9965 = vrot.slane %v9964, 4
        %v9967 = vshll.u32 %v9670, 16
        %v9969 = vrot.slane %v9967, 5
        %v9970 = vsel %vm758, %v9965, %v9969
        %v9972 = vshrl.u32 %v9671, 16
        %v9974 = vrot.slane %v9972, 4
        %v9975 = vshll.u32 %v9671, 16
        %v9977 = vrot.slane %v9975, 5
        %v9978 = vor.u32 %v9974, %v9977
        %v9979 = vrot.slane %v9978, 4
        %v9981 = vshll.u32 %v9672, 16
        %v9983 = vrot.slane %v9981, 5
        %v9984 = vsel %vm758, %v9979, %v9983
        %v9985 = vshrl.u32 %v9672, 16
        %v9987 = vrot.slane %v9985, 4
        %v9988 = vor.u32 %v9987, %v9983
        %v9989 = vrot.slane %v9988, 4
        %v9991 = vshll.u32 %v9673, 16
        %v9993 = vrot.slane %v9991, 5
        %v9994 = vsel %vm758, %v9989, %v9993
        %v9996 = vshrl.u32 %v9674, 16
        %v9998 = vrot.slane %v9996, 4
        %v9999 = vshll.u32 %v9674, 16
        %v10001 = vrot.slane %v9999, 5
        %v10002 = vor.u32 %v9998, %v10001
        %v10003 = vrot.slane %v10002, 4
        %v10005 = vshll.u32 %v9675, 16
        %v10007 = vrot.slane %v10005, 5
        %v10008 = vsel %vm758, %v10003, %v10007
        %v10009 = vshrl.u32 %v9675, 16
        %v10011 = vrot.slane %v10009, 4
        %v10012 = vor.u32 %v10011, %v10007
        %v10013 = vrot.slane %v10012, 4
        %v10015 = vshll.u32 %v9676, 16
        %v10017 = vrot.slane %v10015, 5
        %v10018 = vsel %vm758, %v10013, %v10017
        %v10020 = vshrl.u32 %v9677, 16
        %v10022 = vrot.slane %v10020, 4
        %v10023 = vshll.u32 %v9677, 16
        %v10025 = vrot.slane %v10023, 5
        %v10026 = vor.u32 %v10022, %v10025
        %v10027 = vrot.slane %v10026, 4
        %v10029 = vshll.u32 %v9678, 16
        %v10031 = vrot.slane %v10029, 5
        %v10032 = vsel %vm758, %v10027, %v10031
        %v10033 = vshrl.u32 %v9678, 16
        %v10035 = vrot.slane %v10033, 4
        %v10036 = vor.u32 %v10035, %v10031
        %v10037 = vrot.slane %v10036, 4
        %v10039 = vshll.u32 %v9679, 16
        %v10041 = vrot.slane %v10039, 5
        %v10042 = vsel %vm758, %v10037, %v10041
        %v10044 = vshrl.u32 %v9680, 16
        %v10046 = vrot.slane %v10044, 4
        %v10047 = vshll.u32 %v9680, 16
        %v10049 = vrot.slane %v10047, 5
        %v10050 = vor.u32 %v10046, %v10049
        %v10051 = vrot.slane %v10050, 4
        %v10053 = vshll.u32 %v9681, 16
        %v10055 = vrot.slane %v10053, 5
        %v10056 = vsel %vm758, %v10051, %v10055
        %v10057 = vshrl.u32 %v9681, 16
        %v10059 = vrot.slane %v10057, 4
        %v10060 = vor.u32 %v10059, %v10055
        %v10061 = vrot.slane %v10060, 4
        %v10063 = vshll.u32 %v9682, 16
        %v10065 = vrot.slane %v10063, 5
        %v10066 = vsel %vm758, %v10061, %v10065
        %v10067 = vld [vmem:[#allocation2] sm:$0xff]
        %v10068 = vld [vmem:[#allocation2 + $0x8] sm:$0xff]
        %v10069 = vld [vmem:[#allocation2 + $0x10] sm:$0xff]
        %v10070 = vld [vmem:[#allocation2 + $0x18] sm:$0xff]
        %v10071 = vld [vmem:[#allocation2 + $0x20] sm:$0xff]
        %v10072 = vld [vmem:[#allocation2 + $0x28] sm:$0xff]
        %v10073 = vld [vmem:[#allocation2 + $0x30] sm:$0xff]
        %v10074 = vld [vmem:[#allocation2 + $0x38] sm:$0xff]
        %v10075 = vld [vmem:[#allocation2 + $0x40] sm:$0xff]
        %v10076 = vld [vmem:[#allocation2 + $0x48] sm:$0xff]
        %v10077 = vld [vmem:[#allocation2 + $0x50] sm:$0xff]
        %v10078 = vld [vmem:[#allocation2 + $0x58] sm:$0xff]
        %v10079 = vld [vmem:[#allocation2 + $0x60] sm:$0xff]
        %v10080 = vld [vmem:[#allocation2 + $0x68] sm:$0xff]
        %v10081 = vld [vmem:[#allocation2 + $0x70] sm:$0xff]
        %v10082 = vld [vmem:[#allocation2 + $0x78] sm:$0xff]
        %v10083 = vld [vmem:[#allocation2 + $0x80] sm:$0xff]
        %v10084 = vld [vmem:[#allocation2 + $0x88] sm:$0xff]
        %v10085 = vld [vmem:[#allocation2 + $0x90] sm:$0xff]
        %v10086 = vld [vmem:[#allocation2 + $0x98] sm:$0xff]
        %v10087 = vld [vmem:[#allocation2 + $0xa0] sm:$0xff]
        %v10088 = vld [vmem:[#allocation2 + $0xa8] sm:$0xff]
        %v10089 = vld [vmem:[#allocation2 + $0xb0] sm:$0xff]
        %v10090 = vld [vmem:[#allocation2 + $0xb8] sm:$0xff]
        %v10091 = vld [vmem:[#allocation2 + $0xc0] sm:$0xff]
        %v10092 = vld [vmem:[#allocation2 + $0xc8] sm:$0xff]
        %v10093 = vld [vmem:[#allocation2 + $0xd0] sm:$0xff]
        %v10094 = vld [vmem:[#allocation2 + $0xd8] sm:$0xff]
        %v10095 = vld [vmem:[#allocation2 + $0xe0] sm:$0xff]
        %v10096 = vld [vmem:[#allocation2 + $0xe8] sm:$0xff]
        %v10097 = vld [vmem:[#allocation2 + $0xf0] sm:$0xff]
        %v10098 = vld [vmem:[#allocation2 + $0xf8] sm:$0xff]
        %s10099 = scalar_lea.vmem [#allocation4], 448
        %v10100 = vld [vmem:[%s10099] sm:$0xf]
        %v10101 = vld [vmem:[%s10099 + $0x4] sm:$0xf]
        %v10102 = vld [vmem:[%s10099 + $0x8] sm:$0xf]
        %v10103 = vld [vmem:[%s10099 + $0xc] sm:$0xf]
        %v10104 = vld [vmem:[%s10099 + $0x10] sm:$0xf]
        %v10105 = vld [vmem:[%s10099 + $0x14] sm:$0xf]
        %v10106 = vld [vmem:[%s10099 + $0x18] sm:$0xf]
        %v10107 = vld [vmem:[%s10099 + $0x1c] sm:$0xf]
        %v10108 = vld [vmem:[%s10099 + $0x20] sm:$0xf]
        %v10109 = vld [vmem:[%s10099 + $0x24] sm:$0xf]
        %v10110 = vld [vmem:[%s10099 + $0x28] sm:$0xf]
        %v10111 = vld [vmem:[%s10099 + $0x2c] sm:$0xf]
        %v10112 = vld [vmem:[%s10099 + $0x30] sm:$0xf]
        %v10113 = vld [vmem:[%s10099 + $0x34] sm:$0xf]
        %v10114 = vld [vmem:[%s10099 + $0x38] sm:$0xf]
        %v10115 = vld [vmem:[%s10099 + $0x3c] sm:$0xf]
        %v10116 = vunpack.c.l.b16 %v9696
        %v10117 = vunpack.c.l.b16 %v9706
        %v10118 = vunpack.c.l.b16 %v9720
        %v10119 = vunpack.c.l.b16 %v9730
        %v10120 = vunpack.c.l.b16 %v9744
        %v10121 = vunpack.c.l.b16 %v9754
        %v10122 = vunpack.c.l.b16 %v9768
        %v10123 = vunpack.c.l.b16 %v9778
        %v10124 = vunpack.c.l.b16 %v9792
        %v10125 = vunpack.c.l.b16 %v9802
        %v10126 = vunpack.c.l.b16 %v9816
        %v10127 = vunpack.c.l.b16 %v9826
        %v10128 = vunpack.c.l.b16 %v9840
        %v10129 = vunpack.c.l.b16 %v9850
        %v10130 = vunpack.c.l.b16 %v9864
        %v10131 = vunpack.c.l.b16 %v9874
        %v10132 = vunpack.c.l.b16 %v9888
        %v10133 = vunpack.c.l.b16 %v9898
        %v10134 = vunpack.c.l.b16 %v9912
        %v10135 = vunpack.c.l.b16 %v9922
        %v10136 = vunpack.c.l.b16 %v9936
        %v10137 = vunpack.c.l.b16 %v9946
        %v10138 = vunpack.c.l.b16 %v9960
        %v10139 = vunpack.c.l.b16 %v9970
        %v10140 = vunpack.c.l.b16 %v9984
        %v10141 = vunpack.c.l.b16 %v9994
        %v10142 = vunpack.c.l.b16 %v10008
        %v10143 = vunpack.c.l.b16 %v10018
        %v10144 = vunpack.c.l.b16 %v10032
        %v10145 = vunpack.c.l.b16 %v10042
        %v10146 = vunpack.c.l.b16 %v10056
        %v10147 = vunpack.c.l.b16 %v10066
        %v10148 = vpack.c.b16 %v10117, %v10116
        %v10149 = vpack.c.b16 %v10119, %v10118
        %v10150 = vpack.c.b16 %v10121, %v10120
        %v10151 = vpack.c.b16 %v10123, %v10122
        %v10152 = vpack.c.b16 %v10125, %v10124
        %v10153 = vpack.c.b16 %v10127, %v10126
        %v10154 = vpack.c.b16 %v10129, %v10128
        %v10155 = vpack.c.b16 %v10131, %v10130
        %v10156 = vpack.c.b16 %v10133, %v10132
        %v10157 = vpack.c.b16 %v10135, %v10134
        %v10158 = vpack.c.b16 %v10137, %v10136
        %v10159 = vpack.c.b16 %v10139, %v10138
        %v10160 = vpack.c.b16 %v10141, %v10140
        %v10161 = vpack.c.b16 %v10143, %v10142
        %v10162 = vpack.c.b16 %v10145, %v10144
        %v10163 = vpack.c.b16 %v10147, %v10146
        %v10196 = vunpack.c.l.b16 %v10100
        %v10197 = vunpack.c.l.b16 %v10101
        %v10198 = vunpack.c.l.b16 %v10102
        %v10199 = vunpack.c.l.b16 %v10103
        %v10200 = vunpack.c.l.b16 %v10104
        %v10201 = vunpack.c.l.b16 %v10105
        %v10202 = vunpack.c.l.b16 %v10106
        %v10203 = vunpack.c.l.b16 %v10107
        %v10204 = vunpack.c.l.b16 %v10108
        %v10205 = vunpack.c.l.b16 %v10109
        %v10206 = vunpack.c.l.b16 %v10110
        %v10207 = vunpack.c.l.b16 %v10111
        %v10208 = vunpack.c.l.b16 %v10112
        %v10209 = vunpack.c.l.b16 %v10113
        %v10210 = vunpack.c.l.b16 %v10114
        %v10211 = vunpack.c.l.b16 %v10115
        %v10212 = vpack.c.b16 %v10197, %v10196
        %v10213 = vpack.c.b16 %v10199, %v10198
        %v10214 = vpack.c.b16 %v10201, %v10200
        %v10215 = vpack.c.b16 %v10203, %v10202
        %v10216 = vpack.c.b16 %v10205, %v10204
        %v10217 = vpack.c.b16 %v10207, %v10206
        %v10218 = vpack.c.b16 %v10209, %v10208
        %v10219 = vpack.c.b16 %v10211, %v10210
        %10228 = vmatpush.bf16.msra.mxu0 %v10219
        %10229 = vmatpush.bf16.msra.mxu0 %v10218
        %10230 = vmatpush.bf16.msra.mxu0 %v10217
        %10231 = vmatpush.bf16.msra.mxu0 %v10216
        %10232 = vmatpush.bf16.msra.mxu0 %v10215
        %10233 = vmatpush.bf16.msra.mxu0 %v10214
        %10234 = vmatpush.bf16.msra.mxu0 %v10213
        %10235 = vmatpush.bf16.msra.mxu0 %v10212
        %10236 = vmatmul.bf16.gmra.mxu0 %v10148
        %v10237 = vpop.f32.mrf.mxu0
        %v10238 = vadd.f32 0.0, %v10237
        %v10239 = vpop.f32.mrf.mxu0
        %v10240 = vadd.f32 0.0, %v10239
        %10241 = vmatmul.bf16.gmra.mxu0 %v10149
        %v10242 = vpop.f32.mrf.mxu0
        %v10243 = vadd.f32 0.0, %v10242
        %v10244 = vpop.f32.mrf.mxu0
        %v10245 = vadd.f32 0.0, %v10244
        %10246 = vmatmul.bf16.gmra.mxu0 %v10150
        %v10247 = vpop.f32.mrf.mxu0
        %v10248 = vadd.f32 0.0, %v10247
        %v10249 = vpop.f32.mrf.mxu0
        %v10250 = vadd.f32 0.0, %v10249
        %10251 = vmatmul.bf16.gmra.mxu0 %v10151
        %v10252 = vpop.f32.mrf.mxu0
        %v10253 = vadd.f32 0.0, %v10252
        %v10254 = vpop.f32.mrf.mxu0
        %v10255 = vadd.f32 0.0, %v10254
        %10256 = vmatmul.bf16.gmra.mxu0 %v10152
        %v10257 = vpop.f32.mrf.mxu0
        %v10258 = vadd.f32 0.0, %v10257
        %v10259 = vpop.f32.mrf.mxu0
        %v10260 = vadd.f32 0.0, %v10259
        %10261 = vmatmul.bf16.gmra.mxu0 %v10153
        %v10262 = vpop.f32.mrf.mxu0
        %v10263 = vadd.f32 0.0, %v10262
        %v10264 = vpop.f32.mrf.mxu0
        %v10265 = vadd.f32 0.0, %v10264
        %10266 = vmatmul.bf16.gmra.mxu0 %v10154
        %v10267 = vpop.f32.mrf.mxu0
        %v10268 = vadd.f32 0.0, %v10267
        %v10269 = vpop.f32.mrf.mxu0
        %v10270 = vadd.f32 0.0, %v10269
        %10271 = vmatmul.bf16.gmra.mxu0 %v10155
        %v10272 = vpop.f32.mrf.mxu0
        %v10273 = vadd.f32 0.0, %v10272
        %v10274 = vpop.f32.mrf.mxu0
        %v10275 = vadd.f32 0.0, %v10274
        %10276 = vmatmul.bf16.gmra.mxu0 %v10156
        %v10277 = vpop.f32.mrf.mxu0
        %v10278 = vadd.f32 0.0, %v10277
        %v10279 = vpop.f32.mrf.mxu0
        %v10280 = vadd.f32 0.0, %v10279
        %10281 = vmatmul.bf16.gmra.mxu0 %v10157
        %v10282 = vpop.f32.mrf.mxu0
        %v10283 = vadd.f32 0.0, %v10282
        %v10284 = vpop.f32.mrf.mxu0
        %v10285 = vadd.f32 0.0, %v10284
        %10286 = vmatmul.bf16.gmra.mxu0 %v10158
        %v10287 = vpop.f32.mrf.mxu0
        %v10288 = vadd.f32 0.0, %v10287
        %v10289 = vpop.f32.mrf.mxu0
        %v10290 = vadd.f32 0.0, %v10289
        %10291 = vmatmul.bf16.gmra.mxu0 %v10159
        %v10292 = vpop.f32.mrf.mxu0
        %v10293 = vadd.f32 0.0, %v10292
        %v10294 = vpop.f32.mrf.mxu0
        %v10295 = vadd.f32 0.0, %v10294
        %10296 = vmatmul.bf16.gmra.mxu0 %v10160
        %v10297 = vpop.f32.mrf.mxu0
        %v10298 = vadd.f32 0.0, %v10297
        %v10299 = vpop.f32.mrf.mxu0
        %v10300 = vadd.f32 0.0, %v10299
        %10301 = vmatmul.bf16.gmra.mxu0 %v10161
        %v10302 = vpop.f32.mrf.mxu0
        %v10303 = vadd.f32 0.0, %v10302
        %v10304 = vpop.f32.mrf.mxu0
        %v10305 = vadd.f32 0.0, %v10304
        %10306 = vmatmul.bf16.gmra.mxu0 %v10162
        %v10307 = vpop.f32.mrf.mxu0
        %v10308 = vadd.f32 0.0, %v10307
        %v10309 = vpop.f32.mrf.mxu0
        %v10310 = vadd.f32 0.0, %v10309
        %10311 = vmatmul.bf16.gmra.mxu0 %v10163
        %v10312 = vpop.f32.mrf.mxu0
        %v10313 = vadd.f32 0.0, %v10312
        %v10314 = vpop.f32.mrf.mxu0
        %v10315 = vadd.f32 0.0, %v10314
        %10316 = vdwg.mxu0
        %v10317 = vadd.f32 %v10067, %v10238
        %v10318 = vadd.f32 %v10068, %v10240
        %v10319 = vadd.f32 %v10069, %v10243
        %v10320 = vadd.f32 %v10070, %v10245
        %v10321 = vadd.f32 %v10071, %v10248
        %v10322 = vadd.f32 %v10072, %v10250
        %v10323 = vadd.f32 %v10073, %v10253
        %v10324 = vadd.f32 %v10074, %v10255
        %v10325 = vadd.f32 %v10075, %v10258
        %v10326 = vadd.f32 %v10076, %v10260
        %v10327 = vadd.f32 %v10077, %v10263
        %v10328 = vadd.f32 %v10078, %v10265
        %v10329 = vadd.f32 %v10079, %v10268
        %v10330 = vadd.f32 %v10080, %v10270
        %v10331 = vadd.f32 %v10081, %v10273
        %v10332 = vadd.f32 %v10082, %v10275
        %v10333 = vadd.f32 %v10083, %v10278
        %v10334 = vadd.f32 %v10084, %v10280
        %v10335 = vadd.f32 %v10085, %v10283
        %v10336 = vadd.f32 %v10086, %v10285
        %v10337 = vadd.f32 %v10087, %v10288
        %v10338 = vadd.f32 %v10088, %v10290
        %v10339 = vadd.f32 %v10089, %v10293
        %v10340 = vadd.f32 %v10090, %v10295
        %v10341 = vadd.f32 %v10091, %v10298
        %v10342 = vadd.f32 %v10092, %v10300
        %v10343 = vadd.f32 %v10093, %v10303
        %v10344 = vadd.f32 %v10094, %v10305
        %v10345 = vadd.f32 %v10095, %v10308
        %v10346 = vadd.f32 %v10096, %v10310
        %v10347 = vadd.f32 %v10097, %v10313
        %v10348 = vadd.f32 %v10098, %v10315
        %10349 = vst [vmem:[#allocation2] sm:$0xff] %v10317
        %10350 = vst [vmem:[#allocation2 + $0x8] sm:$0xff] %v10318
        %10351 = vst [vmem:[#allocation2 + $0x10] sm:$0xff] %v10319
        %10352 = vst [vmem:[#allocation2 + $0x18] sm:$0xff] %v10320
        %10353 = vst [vmem:[#allocation2 + $0x20] sm:$0xff] %v10321
        %10354 = vst [vmem:[#allocation2 + $0x28] sm:$0xff] %v10322
        %10355 = vst [vmem:[#allocation2 + $0x30] sm:$0xff] %v10323
        %10356 = vst [vmem:[#allocation2 + $0x38] sm:$0xff] %v10324
        %10357 = vst [vmem:[#allocation2 + $0x40] sm:$0xff] %v10325
        %10358 = vst [vmem:[#allocation2 + $0x48] sm:$0xff] %v10326
        %10359 = vst [vmem:[#allocation2 + $0x50] sm:$0xff] %v10327
        %10360 = vst [vmem:[#allocation2 + $0x58] sm:$0xff] %v10328
        %10361 = vst [vmem:[#allocation2 + $0x60] sm:$0xff] %v10329
        %10362 = vst [vmem:[#allocation2 + $0x68] sm:$0xff] %v10330
        %10363 = vst [vmem:[#allocation2 + $0x70] sm:$0xff] %v10331
        %10364 = vst [vmem:[#allocation2 + $0x78] sm:$0xff] %v10332
        %10365 = vst [vmem:[#allocation2 + $0x80] sm:$0xff] %v10333
        %10366 = vst [vmem:[#allocation2 + $0x88] sm:$0xff] %v10334
        %10367 = vst [vmem:[#allocation2 + $0x90] sm:$0xff] %v10335
        %10368 = vst [vmem:[#allocation2 + $0x98] sm:$0xff] %v10336
        %10369 = vst [vmem:[#allocation2 + $0xa0] sm:$0xff] %v10337
        %10370 = vst [vmem:[#allocation2 + $0xa8] sm:$0xff] %v10338
        %10371 = vst [vmem:[#allocation2 + $0xb0] sm:$0xff] %v10339
        %10372 = vst [vmem:[#allocation2 + $0xb8] sm:$0xff] %v10340
        %10373 = vst [vmem:[#allocation2 + $0xc0] sm:$0xff] %v10341
        %10374 = vst [vmem:[#allocation2 + $0xc8] sm:$0xff] %v10342
        %10375 = vst [vmem:[#allocation2 + $0xd0] sm:$0xff] %v10343
        %10376 = vst [vmem:[#allocation2 + $0xd8] sm:$0xff] %v10344
        %10377 = vst [vmem:[#allocation2 + $0xe0] sm:$0xff] %v10345
        %10378 = vst [vmem:[#allocation2 + $0xe8] sm:$0xff] %v10346
        %10379 = vst [vmem:[#allocation2 + $0xf0] sm:$0xff] %v10347
        %10380 = vst [vmem:[#allocation2 + $0xf8] sm:$0xff] %v10348
        %v10381 = vld [vmem:[%s9256] sm:$0xe]
        %v10382 = vld [vmem:[%s9256 + $0x4] sm:$0xf]
        %v10383 = vld [vmem:[%s9256 + $0x8] sm:$0x1]
        %v10384 = vld [vmem:[%s9256 + $0xc] sm:$0xe]
        %v10385 = vld [vmem:[%s9256 + $0x10] sm:$0xf]
        %v10386 = vld [vmem:[%s9256 + $0x14] sm:$0x1]
        %v10387 = vld [vmem:[%s9256 + $0x18] sm:$0xe]
        %v10388 = vld [vmem:[%s9256 + $0x1c] sm:$0xf]
        %v10389 = vld [vmem:[%s9256 + $0x20] sm:$0x1]
        %v10390 = vld [vmem:[%s9256 + $0x24] sm:$0xe]
        %v10391 = vld [vmem:[%s9256 + $0x28] sm:$0xf]
        %v10392 = vld [vmem:[%s9256 + $0x2c] sm:$0x1]
        %v10393 = vld [vmem:[%s9256 + $0x30] sm:$0xe]
        %v10394 = vld [vmem:[%s9256 + $0x34] sm:$0xf]
        %v10395 = vld [vmem:[%s9256 + $0x38] sm:$0x1]
        %v10396 = vld [vmem:[%s9256 + $0x3c] sm:$0xe]
        %v10397 = vld [vmem:[%s9256 + $0x40] sm:$0xf]
        %v10398 = vld [vmem:[%s9256 + $0x44] sm:$0x1]
        %v10399 = vld [vmem:[%s9256 + $0x48] sm:$0xe]
        %v10400 = vld [vmem:[%s9256 + $0x4c] sm:$0xf]
        %v10401 = vld [vmem:[%s9256 + $0x50] sm:$0x1]
        %v10402 = vld [vmem:[%s9256 + $0x54] sm:$0xe]
        %v10403 = vld [vmem:[%s9256 + $0x58] sm:$0xf]
        %v10404 = vld [vmem:[%s9256 + $0x5c] sm:$0x1]
        %v10405 = vld [vmem:[%s9256 + $0x60] sm:$0xe]
        %v10406 = vld [vmem:[%s9256 + $0x64] sm:$0xf]
        %v10407 = vld [vmem:[%s9256 + $0x68] sm:$0x1]
        %v10408 = vld [vmem:[%s9256 + $0x6c] sm:$0xe]
        %v10409 = vld [vmem:[%s9256 + $0x70] sm:$0xf]
        %v10410 = vld [vmem:[%s9256 + $0x74] sm:$0x1]
        %v10411 = vld [vmem:[%s9256 + $0x78] sm:$0xe]
        %v10412 = vld [vmem:[%s9256 + $0x7c] sm:$0xf]
        %v10413 = vld [vmem:[%s9256 + $0x80] sm:$0x1]
        %v10414 = vld [vmem:[%s9256 + $0x84] sm:$0xe]
        %v10415 = vld [vmem:[%s9256 + $0x88] sm:$0xf]
        %v10416 = vld [vmem:[%s9256 + $0x8c] sm:$0x1]
        %v10417 = vld [vmem:[%s9256 + $0x90] sm:$0xe]
        %v10418 = vld [vmem:[%s9256 + $0x94] sm:$0xf]
        %v10419 = vld [vmem:[%s9256 + $0x98] sm:$0x1]
        %v10420 = vld [vmem:[%s9256 + $0x9c] sm:$0xe]
        %v10421 = vld [vmem:[%s9256 + $0xa0] sm:$0xf]
        %v10422 = vld [vmem:[%s9256 + $0xa4] sm:$0x1]
        %v10423 = vld [vmem:[%s9256 + $0xa8] sm:$0xe]
        %v10424 = vld [vmem:[%s9256 + $0xac] sm:$0xf]
        %v10425 = vld [vmem:[%s9256 + $0xb0] sm:$0x1]
        %v10426 = vld [vmem:[%s9256 + $0xb4] sm:$0xe]
        %v10427 = vld [vmem:[%s9256 + $0xb8] sm:$0xf]
        %v10428 = vld [vmem:[%s9256 + $0xbc] sm:$0x1]
        %v10477 = vrot.slane %v10381, 5
        %v10478 = vrot.slane %v10477, 4
        %v10479 = vrot.slane %v10382, 5
        %v10480 = vsel %vm1555, %v10478, %v10479
        %v10481 = vrot.slane %v10479, 4
        %v10482 = vrot.slane %v10383, 5
        %v10483 = vsel %vm1555, %v10481, %v10482
        %v10484 = vrot.slane %v10384, 5
        %v10485 = vrot.slane %v10484, 4
        %v10486 = vrot.slane %v10385, 5
        %v10487 = vsel %vm1555, %v10485, %v10486
        %v10488 = vrot.slane %v10486, 4
        %v10489 = vrot.slane %v10386, 5
        %v10490 = vsel %vm1555, %v10488, %v10489
        %v10491 = vrot.slane %v10387, 5
        %v10492 = vrot.slane %v10491, 4
        %v10493 = vrot.slane %v10388, 5
        %v10494 = vsel %vm1555, %v10492, %v10493
        %v10495 = vrot.slane %v10493, 4
        %v10496 = vrot.slane %v10389, 5
        %v10497 = vsel %vm1555, %v10495, %v10496
        %v10498 = vrot.slane %v10390, 5
        %v10499 = vrot.slane %v10498, 4
        %v10500 = vrot.slane %v10391, 5
        %v10501 = vsel %vm1555, %v10499, %v10500
        %v10502 = vrot.slane %v10500, 4
        %v10503 = vrot.slane %v10392, 5
        %v10504 = vsel %vm1555, %v10502, %v10503
        %v10505 = vrot.slane %v10393, 5
        %v10506 = vrot.slane %v10505, 4
        %v10507 = vrot.slane %v10394, 5
        %v10508 = vsel %vm1555, %v10506, %v10507
        %v10509 = vrot.slane %v10507, 4
        %v10510 = vrot.slane %v10395, 5
        %v10511 = vsel %vm1555, %v10509, %v10510
        %v10512 = vrot.slane %v10396, 5
        %v10513 = vrot.slane %v10512, 4
        %v10514 = vrot.slane %v10397, 5
        %v10515 = vsel %vm1555, %v10513, %v10514
        %v10516 = vrot.slane %v10514, 4
        %v10517 = vrot.slane %v10398, 5
        %v10518 = vsel %vm1555, %v10516, %v10517
        %v10519 = vrot.slane %v10399, 5
        %v10520 = vrot.slane %v10519, 4
        %v10521 = vrot.slane %v10400, 5
        %v10522 = vsel %vm1555, %v10520, %v10521
        %v10523 = vrot.slane %v10521, 4
        %v10524 = vrot.slane %v10401, 5
        %v10525 = vsel %vm1555, %v10523, %v10524
        %v10526 = vrot.slane %v10402, 5
        %v10527 = vrot.slane %v10526, 4
        %v10528 = vrot.slane %v10403, 5
        %v10529 = vsel %vm1555, %v10527, %v10528
        %v10530 = vrot.slane %v10528, 4
        %v10531 = vrot.slane %v10404, 5
        %v10532 = vsel %vm1555, %v10530, %v10531
        %v10533 = vrot.slane %v10405, 5
        %v10534 = vrot.slane %v10533, 4
        %v10535 = vrot.slane %v10406, 5
        %v10536 = vsel %vm1555, %v10534, %v10535
        %v10537 = vrot.slane %v10535, 4
        %v10538 = vrot.slane %v10407, 5
        %v10539 = vsel %vm1555, %v10537, %v10538
        %v10540 = vrot.slane %v10408, 5
        %v10541 = vrot.slane %v10540, 4
        %v10542 = vrot.slane %v10409, 5
        %v10543 = vsel %vm1555, %v10541, %v10542
        %v10544 = vrot.slane %v10542, 4
        %v10545 = vrot.slane %v10410, 5
        %v10546 = vsel %vm1555, %v10544, %v10545
        %v10547 = vrot.slane %v10411, 5
        %v10548 = vrot.slane %v10547, 4
        %v10549 = vrot.slane %v10412, 5
        %v10550 = vsel %vm1555, %v10548, %v10549
        %v10551 = vrot.slane %v10549, 4
        %v10552 = vrot.slane %v10413, 5
        %v10553 = vsel %vm1555, %v10551, %v10552
        %v10554 = vrot.slane %v10414, 5
        %v10555 = vrot.slane %v10554, 4
        %v10556 = vrot.slane %v10415, 5
        %v10557 = vsel %vm1555, %v10555, %v10556
        %v10558 = vrot.slane %v10556, 4
        %v10559 = vrot.slane %v10416, 5
        %v10560 = vsel %vm1555, %v10558, %v10559
        %v10561 = vrot.slane %v10417, 5
        %v10562 = vrot.slane %v10561, 4
        %v10563 = vrot.slane %v10418, 5
        %v10564 = vsel %vm1555, %v10562, %v10563
        %v10565 = vrot.slane %v10563, 4
        %v10566 = vrot.slane %v10419, 5
        %v10567 = vsel %vm1555, %v10565, %v10566
        %v10568 = vrot.slane %v10420, 5
        %v10569 = vrot.slane %v10568, 4
        %v10570 = vrot.slane %v10421, 5
        %v10571 = vsel %vm1555, %v10569, %v10570
        %v10572 = vrot.slane %v10570, 4
        %v10573 = vrot.slane %v10422, 5
        %v10574 = vsel %vm1555, %v10572, %v10573
        %v10575 = vrot.slane %v10423, 5
        %v10576 = vrot.slane %v10575, 4
        %v10577 = vrot.slane %v10424, 5
        %v10578 = vsel %vm1555, %v10576, %v10577
        %v10579 = vrot.slane %v10577, 4
        %v10580 = vrot.slane %v10425, 5
        %v10581 = vsel %vm1555, %v10579, %v10580
        %v10582 = vrot.slane %v10426, 5
        %v10583 = vrot.slane %v10582, 4
        %v10584 = vrot.slane %v10427, 5
        %v10585 = vsel %vm1555, %v10583, %v10584
        %v10586 = vrot.slane %v10584, 4
        %v10587 = vrot.slane %v10428, 5
        %v10588 = vsel %vm1555, %v10586, %v10587
        %v10589 = vld [vmem:[#allocation2] sm:$0xff]
        %v10590 = vld [vmem:[#allocation2 + $0x8] sm:$0xff]
        %v10591 = vld [vmem:[#allocation2 + $0x10] sm:$0xff]
        %v10592 = vld [vmem:[#allocation2 + $0x18] sm:$0xff]
        %v10593 = vld [vmem:[#allocation2 + $0x20] sm:$0xff]
        %v10594 = vld [vmem:[#allocation2 + $0x28] sm:$0xff]
        %v10595 = vld [vmem:[#allocation2 + $0x30] sm:$0xff]
        %v10596 = vld [vmem:[#allocation2 + $0x38] sm:$0xff]
        %v10597 = vld [vmem:[#allocation2 + $0x40] sm:$0xff]
        %v10598 = vld [vmem:[#allocation2 + $0x48] sm:$0xff]
        %v10599 = vld [vmem:[#allocation2 + $0x50] sm:$0xff]
        %v10600 = vld [vmem:[#allocation2 + $0x58] sm:$0xff]
        %v10601 = vld [vmem:[#allocation2 + $0x60] sm:$0xff]
        %v10602 = vld [vmem:[#allocation2 + $0x68] sm:$0xff]
        %v10603 = vld [vmem:[#allocation2 + $0x70] sm:$0xff]
        %v10604 = vld [vmem:[#allocation2 + $0x78] sm:$0xff]
        %v10605 = vld [vmem:[#allocation2 + $0x80] sm:$0xff]
        %v10606 = vld [vmem:[#allocation2 + $0x88] sm:$0xff]
        %v10607 = vld [vmem:[#allocation2 + $0x90] sm:$0xff]
        %v10608 = vld [vmem:[#allocation2 + $0x98] sm:$0xff]
        %v10609 = vld [vmem:[#allocation2 + $0xa0] sm:$0xff]
        %v10610 = vld [vmem:[#allocation2 + $0xa8] sm:$0xff]
        %v10611 = vld [vmem:[#allocation2 + $0xb0] sm:$0xff]
        %v10612 = vld [vmem:[#allocation2 + $0xb8] sm:$0xff]
        %v10613 = vld [vmem:[#allocation2 + $0xc0] sm:$0xff]
        %v10614 = vld [vmem:[#allocation2 + $0xc8] sm:$0xff]
        %v10615 = vld [vmem:[#allocation2 + $0xd0] sm:$0xff]
        %v10616 = vld [vmem:[#allocation2 + $0xd8] sm:$0xff]
        %v10617 = vld [vmem:[#allocation2 + $0xe0] sm:$0xff]
        %v10618 = vld [vmem:[#allocation2 + $0xe8] sm:$0xff]
        %v10619 = vld [vmem:[#allocation2 + $0xf0] sm:$0xff]
        %v10620 = vld [vmem:[#allocation2 + $0xf8] sm:$0xff]
        %s10621 = scalar_lea.vmem [#allocation4], 512
        %v10622 = vld [vmem:[%s10621] sm:$0xf]
        %v10623 = vld [vmem:[%s10621 + $0x4] sm:$0xf]
        %v10624 = vld [vmem:[%s10621 + $0x8] sm:$0xf]
        %v10625 = vld [vmem:[%s10621 + $0xc] sm:$0xf]
        %v10626 = vld [vmem:[%s10621 + $0x10] sm:$0xf]
        %v10627 = vld [vmem:[%s10621 + $0x14] sm:$0xf]
        %v10628 = vld [vmem:[%s10621 + $0x18] sm:$0xf]
        %v10629 = vld [vmem:[%s10621 + $0x1c] sm:$0xf]
        %v10630 = vld [vmem:[%s10621 + $0x20] sm:$0xf]
        %v10631 = vld [vmem:[%s10621 + $0x24] sm:$0xf]
        %v10632 = vld [vmem:[%s10621 + $0x28] sm:$0xf]
        %v10633 = vld [vmem:[%s10621 + $0x2c] sm:$0xf]
        %v10634 = vld [vmem:[%s10621 + $0x30] sm:$0xf]
        %v10635 = vld [vmem:[%s10621 + $0x34] sm:$0xf]
        %v10636 = vld [vmem:[%s10621 + $0x38] sm:$0xf]
        %v10637 = vld [vmem:[%s10621 + $0x3c] sm:$0xf]
        %v10638 = vunpack.c.l.b16 %v10480
        %v10639 = vunpack.c.l.b16 %v10483
        %v10640 = vunpack.c.l.b16 %v10487
        %v10641 = vunpack.c.l.b16 %v10490
        %v10642 = vunpack.c.l.b16 %v10494
        %v10643 = vunpack.c.l.b16 %v10497
        %v10644 = vunpack.c.l.b16 %v10501
        %v10645 = vunpack.c.l.b16 %v10504
        %v10646 = vunpack.c.l.b16 %v10508
        %v10647 = vunpack.c.l.b16 %v10511
        %v10648 = vunpack.c.l.b16 %v10515
        %v10649 = vunpack.c.l.b16 %v10518
        %v10650 = vunpack.c.l.b16 %v10522
        %v10651 = vunpack.c.l.b16 %v10525
        %v10652 = vunpack.c.l.b16 %v10529
        %v10653 = vunpack.c.l.b16 %v10532
        %v10654 = vunpack.c.l.b16 %v10536
        %v10655 = vunpack.c.l.b16 %v10539
        %v10656 = vunpack.c.l.b16 %v10543
        %v10657 = vunpack.c.l.b16 %v10546
        %v10658 = vunpack.c.l.b16 %v10550
        %v10659 = vunpack.c.l.b16 %v10553
        %v10660 = vunpack.c.l.b16 %v10557
        %v10661 = vunpack.c.l.b16 %v10560
        %v10662 = vunpack.c.l.b16 %v10564
        %v10663 = vunpack.c.l.b16 %v10567
        %v10664 = vunpack.c.l.b16 %v10571
        %v10665 = vunpack.c.l.b16 %v10574
        %v10666 = vunpack.c.l.b16 %v10578
        %v10667 = vunpack.c.l.b16 %v10581
        %v10668 = vunpack.c.l.b16 %v10585
        %v10669 = vunpack.c.l.b16 %v10588
        %v10670 = vpack.c.b16 %v10639, %v10638
        %v10671 = vpack.c.b16 %v10641, %v10640
        %v10672 = vpack.c.b16 %v10643, %v10642
        %v10673 = vpack.c.b16 %v10645, %v10644
        %v10674 = vpack.c.b16 %v10647, %v10646
        %v10675 = vpack.c.b16 %v10649, %v10648
        %v10676 = vpack.c.b16 %v10651, %v10650
        %v10677 = vpack.c.b16 %v10653, %v10652
        %v10678 = vpack.c.b16 %v10655, %v10654
        %v10679 = vpack.c.b16 %v10657, %v10656
        %v10680 = vpack.c.b16 %v10659, %v10658
        %v10681 = vpack.c.b16 %v10661, %v10660
        %v10682 = vpack.c.b16 %v10663, %v10662
        %v10683 = vpack.c.b16 %v10665, %v10664
        %v10684 = vpack.c.b16 %v10667, %v10666
        %v10685 = vpack.c.b16 %v10669, %v10668
        %v10718 = vunpack.c.l.b16 %v10622
        %v10719 = vunpack.c.l.b16 %v10623
        %v10720 = vunpack.c.l.b16 %v10624
        %v10721 = vunpack.c.l.b16 %v10625
        %v10722 = vunpack.c.l.b16 %v10626
        %v10723 = vunpack.c.l.b16 %v10627
        %v10724 = vunpack.c.l.b16 %v10628
        %v10725 = vunpack.c.l.b16 %v10629
        %v10726 = vunpack.c.l.b16 %v10630
        %v10727 = vunpack.c.l.b16 %v10631
        %v10728 = vunpack.c.l.b16 %v10632
        %v10729 = vunpack.c.l.b16 %v10633
        %v10730 = vunpack.c.l.b16 %v10634
        %v10731 = vunpack.c.l.b16 %v10635
        %v10732 = vunpack.c.l.b16 %v10636
        %v10733 = vunpack.c.l.b16 %v10637
        %v10734 = vpack.c.b16 %v10719, %v10718
        %v10735 = vpack.c.b16 %v10721, %v10720
        %v10736 = vpack.c.b16 %v10723, %v10722
        %v10737 = vpack.c.b16 %v10725, %v10724
        %v10738 = vpack.c.b16 %v10727, %v10726
        %v10739 = vpack.c.b16 %v10729, %v10728
        %v10740 = vpack.c.b16 %v10731, %v10730
        %v10741 = vpack.c.b16 %v10733, %v10732
        %10750 = vmatpush.bf16.msra.mxu0 %v10741
        %10751 = vmatpush.bf16.msra.mxu0 %v10740
        %10752 = vmatpush.bf16.msra.mxu0 %v10739
        %10753 = vmatpush.bf16.msra.mxu0 %v10738
        %10754 = vmatpush.bf16.msra.mxu0 %v10737
        %10755 = vmatpush.bf16.msra.mxu0 %v10736
        %10756 = vmatpush.bf16.msra.mxu0 %v10735
        %10757 = vmatpush.bf16.msra.mxu0 %v10734
        %10758 = vmatmul.bf16.gmra.mxu0 %v10670
        %v10759 = vpop.f32.mrf.mxu0
        %v10760 = vadd.f32 0.0, %v10759
        %v10761 = vpop.f32.mrf.mxu0
        %v10762 = vadd.f32 0.0, %v10761
        %10763 = vmatmul.bf16.gmra.mxu0 %v10671
        %v10764 = vpop.f32.mrf.mxu0
        %v10765 = vadd.f32 0.0, %v10764
        %v10766 = vpop.f32.mrf.mxu0
        %v10767 = vadd.f32 0.0, %v10766
        %10768 = vmatmul.bf16.gmra.mxu0 %v10672
        %v10769 = vpop.f32.mrf.mxu0
        %v10770 = vadd.f32 0.0, %v10769
        %v10771 = vpop.f32.mrf.mxu0
        %v10772 = vadd.f32 0.0, %v10771
        %10773 = vmatmul.bf16.gmra.mxu0 %v10673
        %v10774 = vpop.f32.mrf.mxu0
        %v10775 = vadd.f32 0.0, %v10774
        %v10776 = vpop.f32.mrf.mxu0
        %v10777 = vadd.f32 0.0, %v10776
        %10778 = vmatmul.bf16.gmra.mxu0 %v10674
        %v10779 = vpop.f32.mrf.mxu0
        %v10780 = vadd.f32 0.0, %v10779
        %v10781 = vpop.f32.mrf.mxu0
        %v10782 = vadd.f32 0.0, %v10781
        %10783 = vmatmul.bf16.gmra.mxu0 %v10675
        %v10784 = vpop.f32.mrf.mxu0
        %v10785 = vadd.f32 0.0, %v10784
        %v10786 = vpop.f32.mrf.mxu0
        %v10787 = vadd.f32 0.0, %v10786
        %10788 = vmatmul.bf16.gmra.mxu0 %v10676
        %v10789 = vpop.f32.mrf.mxu0
        %v10790 = vadd.f32 0.0, %v10789
        %v10791 = vpop.f32.mrf.mxu0
        %v10792 = vadd.f32 0.0, %v10791
        %10793 = vmatmul.bf16.gmra.mxu0 %v10677
        %v10794 = vpop.f32.mrf.mxu0
        %v10795 = vadd.f32 0.0, %v10794
        %v10796 = vpop.f32.mrf.mxu0
        %v10797 = vadd.f32 0.0, %v10796
        %10798 = vmatmul.bf16.gmra.mxu0 %v10678
        %v10799 = vpop.f32.mrf.mxu0
        %v10800 = vadd.f32 0.0, %v10799
        %v10801 = vpop.f32.mrf.mxu0
        %v10802 = vadd.f32 0.0, %v10801
        %10803 = vmatmul.bf16.gmra.mxu0 %v10679
        %v10804 = vpop.f32.mrf.mxu0
        %v10805 = vadd.f32 0.0, %v10804
        %v10806 = vpop.f32.mrf.mxu0
        %v10807 = vadd.f32 0.0, %v10806
        %10808 = vmatmul.bf16.gmra.mxu0 %v10680
        %v10809 = vpop.f32.mrf.mxu0
        %v10810 = vadd.f32 0.0, %v10809
        %v10811 = vpop.f32.mrf.mxu0
        %v10812 = vadd.f32 0.0, %v10811
        %10813 = vmatmul.bf16.gmra.mxu0 %v10681
        %v10814 = vpop.f32.mrf.mxu0
        %v10815 = vadd.f32 0.0, %v10814
        %v10816 = vpop.f32.mrf.mxu0
        %v10817 = vadd.f32 0.0, %v10816
        %10818 = vmatmul.bf16.gmra.mxu0 %v10682
        %v10819 = vpop.f32.mrf.mxu0
        %v10820 = vadd.f32 0.0, %v10819
        %v10821 = vpop.f32.mrf.mxu0
        %v10822 = vadd.f32 0.0, %v10821
        %10823 = vmatmul.bf16.gmra.mxu0 %v10683
        %v10824 = vpop.f32.mrf.mxu0
        %v10825 = vadd.f32 0.0, %v10824
        %v10826 = vpop.f32.mrf.mxu0
        %v10827 = vadd.f32 0.0, %v10826
        %10828 = vmatmul.bf16.gmra.mxu0 %v10684
        %v10829 = vpop.f32.mrf.mxu0
        %v10830 = vadd.f32 0.0, %v10829
        %v10831 = vpop.f32.mrf.mxu0
        %v10832 = vadd.f32 0.0, %v10831
        %10833 = vmatmul.bf16.gmra.mxu0 %v10685
        %v10834 = vpop.f32.mrf.mxu0
        %v10835 = vadd.f32 0.0, %v10834
        %v10836 = vpop.f32.mrf.mxu0
        %v10837 = vadd.f32 0.0, %v10836
        %10838 = vdwg.mxu0
        %v10839 = vadd.f32 %v10589, %v10760
        %v10840 = vadd.f32 %v10590, %v10762
        %v10841 = vadd.f32 %v10591, %v10765
        %v10842 = vadd.f32 %v10592, %v10767
        %v10843 = vadd.f32 %v10593, %v10770
        %v10844 = vadd.f32 %v10594, %v10772
        %v10845 = vadd.f32 %v10595, %v10775
        %v10846 = vadd.f32 %v10596, %v10777
        %v10847 = vadd.f32 %v10597, %v10780
        %v10848 = vadd.f32 %v10598, %v10782
        %v10849 = vadd.f32 %v10599, %v10785
        %v10850 = vadd.f32 %v10600, %v10787
        %v10851 = vadd.f32 %v10601, %v10790
        %v10852 = vadd.f32 %v10602, %v10792
        %v10853 = vadd.f32 %v10603, %v10795
        %v10854 = vadd.f32 %v10604, %v10797
        %v10855 = vadd.f32 %v10605, %v10800
        %v10856 = vadd.f32 %v10606, %v10802
        %v10857 = vadd.f32 %v10607, %v10805
        %v10858 = vadd.f32 %v10608, %v10807
        %v10859 = vadd.f32 %v10609, %v10810
        %v10860 = vadd.f32 %v10610, %v10812
        %v10861 = vadd.f32 %v10611, %v10815
        %v10862 = vadd.f32 %v10612, %v10817
        %v10863 = vadd.f32 %v10613, %v10820
        %v10864 = vadd.f32 %v10614, %v10822
        %v10865 = vadd.f32 %v10615, %v10825
        %v10866 = vadd.f32 %v10616, %v10827
        %v10867 = vadd.f32 %v10617, %v10830
        %v10868 = vadd.f32 %v10618, %v10832
        %v10869 = vadd.f32 %v10619, %v10835
        %v10870 = vadd.f32 %v10620, %v10837
        %10871 = vst [vmem:[#allocation2] sm:$0xff] %v10839
        %10872 = vst [vmem:[#allocation2 + $0x8] sm:$0xff] %v10840
        %10873 = vst [vmem:[#allocation2 + $0x10] sm:$0xff] %v10841
        %10874 = vst [vmem:[#allocation2 + $0x18] sm:$0xff] %v10842
        %10875 = vst [vmem:[#allocation2 + $0x20] sm:$0xff] %v10843
        %10876 = vst [vmem:[#allocation2 + $0x28] sm:$0xff] %v10844
        %10877 = vst [vmem:[#allocation2 + $0x30] sm:$0xff] %v10845
        %10878 = vst [vmem:[#allocation2 + $0x38] sm:$0xff] %v10846
        %10879 = vst [vmem:[#allocation2 + $0x40] sm:$0xff] %v10847
        %10880 = vst [vmem:[#allocation2 + $0x48] sm:$0xff] %v10848
        %10881 = vst [vmem:[#allocation2 + $0x50] sm:$0xff] %v10849
        %10882 = vst [vmem:[#allocation2 + $0x58] sm:$0xff] %v10850
        %10883 = vst [vmem:[#allocation2 + $0x60] sm:$0xff] %v10851
        %10884 = vst [vmem:[#allocation2 + $0x68] sm:$0xff] %v10852
        %10885 = vst [vmem:[#allocation2 + $0x70] sm:$0xff] %v10853
        %10886 = vst [vmem:[#allocation2 + $0x78] sm:$0xff] %v10854
        %10887 = vst [vmem:[#allocation2 + $0x80] sm:$0xff] %v10855
        %10888 = vst [vmem:[#allocation2 + $0x88] sm:$0xff] %v10856
        %10889 = vst [vmem:[#allocation2 + $0x90] sm:$0xff] %v10857
        %10890 = vst [vmem:[#allocation2 + $0x98] sm:$0xff] %v10858
        %10891 = vst [vmem:[#allocation2 + $0xa0] sm:$0xff] %v10859
        %10892 = vst [vmem:[#allocation2 + $0xa8] sm:$0xff] %v10860
        %10893 = vst [vmem:[#allocation2 + $0xb0] sm:$0xff] %v10861
        %10894 = vst [vmem:[#allocation2 + $0xb8] sm:$0xff] %v10862
        %10895 = vst [vmem:[#allocation2 + $0xc0] sm:$0xff] %v10863
        %10896 = vst [vmem:[#allocation2 + $0xc8] sm:$0xff] %v10864
        %10897 = vst [vmem:[#allocation2 + $0xd0] sm:$0xff] %v10865
        %10898 = vst [vmem:[#allocation2 + $0xd8] sm:$0xff] %v10866
        %10899 = vst [vmem:[#allocation2 + $0xe0] sm:$0xff] %v10867
        %10900 = vst [vmem:[#allocation2 + $0xe8] sm:$0xff] %v10868
        %10901 = vst [vmem:[#allocation2 + $0xf0] sm:$0xff] %v10869
        %10902 = vst [vmem:[#allocation2 + $0xf8] sm:$0xff] %v10870
        %v10903 = vld [vmem:[%s1982] sm:$0xf]
        %v10904 = vld [vmem:[%s1982 + $0x4] sm:$0xf]
        %v10905 = vld [vmem:[%s1982 + $0x8] sm:$0x1]
        %v10906 = vld [vmem:[%s1982 + $0xc] sm:$0xf]
        %v10907 = vld [vmem:[%s1982 + $0x10] sm:$0xf]
        %v10908 = vld [vmem:[%s1982 + $0x14] sm:$0x1]
        %v10909 = vld [vmem:[%s1982 + $0x18] sm:$0xf]
        %v10910 = vld [vmem:[%s1982 + $0x1c] sm:$0xf]
        %v10911 = vld [vmem:[%s1982 + $0x20] sm:$0x1]
        %v10912 = vld [vmem:[%s1982 + $0x24] sm:$0xf]
        %v10913 = vld [vmem:[%s1982 + $0x28] sm:$0xf]
        %v10914 = vld [vmem:[%s1982 + $0x2c] sm:$0x1]
        %v10915 = vld [vmem:[%s1982 + $0x30] sm:$0xf]
        %v10916 = vld [vmem:[%s1982 + $0x34] sm:$0xf]
        %v10917 = vld [vmem:[%s1982 + $0x38] sm:$0x1]
        %v10918 = vld [vmem:[%s1982 + $0x3c] sm:$0xf]
        %v10919 = vld [vmem:[%s1982 + $0x40] sm:$0xf]
        %v10920 = vld [vmem:[%s1982 + $0x44] sm:$0x1]
        %v10921 = vld [vmem:[%s1982 + $0x48] sm:$0xf]
        %v10922 = vld [vmem:[%s1982 + $0x4c] sm:$0xf]
        %v10923 = vld [vmem:[%s1982 + $0x50] sm:$0x1]
        %v10924 = vld [vmem:[%s1982 + $0x54] sm:$0xf]
        %v10925 = vld [vmem:[%s1982 + $0x58] sm:$0xf]
        %v10926 = vld [vmem:[%s1982 + $0x5c] sm:$0x1]
        %v10927 = vld [vmem:[%s1982 + $0x60] sm:$0xf]
        %v10928 = vld [vmem:[%s1982 + $0x64] sm:$0xf]
        %v10929 = vld [vmem:[%s1982 + $0x68] sm:$0x1]
        %v10930 = vld [vmem:[%s1982 + $0x6c] sm:$0xf]
        %v10931 = vld [vmem:[%s1982 + $0x70] sm:$0xf]
        %v10932 = vld [vmem:[%s1982 + $0x74] sm:$0x1]
        %v10933 = vld [vmem:[%s1982 + $0x78] sm:$0xf]
        %v10934 = vld [vmem:[%s1982 + $0x7c] sm:$0xf]
        %v10935 = vld [vmem:[%s1982 + $0x80] sm:$0x1]
        %v10936 = vld [vmem:[%s1982 + $0x84] sm:$0xf]
        %v10937 = vld [vmem:[%s1982 + $0x88] sm:$0xf]
        %v10938 = vld [vmem:[%s1982 + $0x8c] sm:$0x1]
        %v10939 = vld [vmem:[%s1982 + $0x90] sm:$0xf]
        %v10940 = vld [vmem:[%s1982 + $0x94] sm:$0xf]
        %v10941 = vld [vmem:[%s1982 + $0x98] sm:$0x1]
        %v10942 = vld [vmem:[%s1982 + $0x9c] sm:$0xf]
        %v10943 = vld [vmem:[%s1982 + $0xa0] sm:$0xf]
        %v10944 = vld [vmem:[%s1982 + $0xa4] sm:$0x1]
        %v10945 = vld [vmem:[%s1982 + $0xa8] sm:$0xf]
        %v10946 = vld [vmem:[%s1982 + $0xac] sm:$0xf]
        %v10947 = vld [vmem:[%s1982 + $0xb0] sm:$0x1]
        %v10948 = vld [vmem:[%s1982 + $0xb4] sm:$0xf]
        %v10949 = vld [vmem:[%s1982 + $0xb8] sm:$0xf]
        %v10950 = vld [vmem:[%s1982 + $0xbc] sm:$0x1]
        %v10952 = vshrl.u32 %v10903, 16
        %v10954 = vrot.slane %v10952, 4
        %v10955 = vshll.u32 %v10903, 16
        %v10957 = vrot.slane %v10955, 5
        %v10958 = vor.u32 %v10954, %v10957
        %v10959 = vrot.slane %v10958, 4
        %v10961 = vshll.u32 %v10904, 16
        %v10963 = vrot.slane %v10961, 5
        %v10964 = vsel %vm758, %v10959, %v10963
        %v10965 = vshrl.u32 %v10904, 16
        %v10967 = vrot.slane %v10965, 4
        %v10968 = vor.u32 %v10967, %v10963
        %v10969 = vrot.slane %v10968, 4
        %v10971 = vshll.u32 %v10905, 16
        %v10973 = vrot.slane %v10971, 5
        %v10974 = vsel %vm758, %v10969, %v10973
        %v10976 = vshrl.u32 %v10906, 16
        %v10978 = vrot.slane %v10976, 4
        %v10979 = vshll.u32 %v10906, 16
        %v10981 = vrot.slane %v10979, 5
        %v10982 = vor.u32 %v10978, %v10981
        %v10983 = vrot.slane %v10982, 4
        %v10985 = vshll.u32 %v10907, 16
        %v10987 = vrot.slane %v10985, 5
        %v10988 = vsel %vm758, %v10983, %v10987
        %v10989 = vshrl.u32 %v10907, 16
        %v10991 = vrot.slane %v10989, 4
        %v10992 = vor.u32 %v10991, %v10987
        %v10993 = vrot.slane %v10992, 4
        %v10995 = vshll.u32 %v10908, 16
        %v10997 = vrot.slane %v10995, 5
        %v10998 = vsel %vm758, %v10993, %v10997
        %v11000 = vshrl.u32 %v10909, 16
        %v11002 = vrot.slane %v11000, 4
        %v11003 = vshll.u32 %v10909, 16
        %v11005 = vrot.slane %v11003, 5
        %v11006 = vor.u32 %v11002, %v11005
        %v11007 = vrot.slane %v11006, 4
        %v11009 = vshll.u32 %v10910, 16
        %v11011 = vrot.slane %v11009, 5
        %v11012 = vsel %vm758, %v11007, %v11011
        %v11013 = vshrl.u32 %v10910, 16
        %v11015 = vrot.slane %v11013, 4
        %v11016 = vor.u32 %v11015, %v11011
        %v11017 = vrot.slane %v11016, 4
        %v11019 = vshll.u32 %v10911, 16
        %v11021 = vrot.slane %v11019, 5
        %v11022 = vsel %vm758, %v11017, %v11021
        %v11024 = vshrl.u32 %v10912, 16
        %v11026 = vrot.slane %v11024, 4
        %v11027 = vshll.u32 %v10912, 16
        %v11029 = vrot.slane %v11027, 5
        %v11030 = vor.u32 %v11026, %v11029
        %v11031 = vrot.slane %v11030, 4
        %v11033 = vshll.u32 %v10913, 16
        %v11035 = vrot.slane %v11033, 5
        %v11036 = vsel %vm758, %v11031, %v11035
        %v11037 = vshrl.u32 %v10913, 16
        %v11039 = vrot.slane %v11037, 4
        %v11040 = vor.u32 %v11039, %v11035
        %v11041 = vrot.slane %v11040, 4
        %v11043 = vshll.u32 %v10914, 16
        %v11045 = vrot.slane %v11043, 5
        %v11046 = vsel %vm758, %v11041, %v11045
        %v11048 = vshrl.u32 %v10915, 16
        %v11050 = vrot.slane %v11048, 4
        %v11051 = vshll.u32 %v10915, 16
        %v11053 = vrot.slane %v11051, 5
        %v11054 = vor.u32 %v11050, %v11053
        %v11055 = vrot.slane %v11054, 4
        %v11057 = vshll.u32 %v10916, 16
        %v11059 = vrot.slane %v11057, 5
        %v11060 = vsel %vm758, %v11055, %v11059
        %v11061 = vshrl.u32 %v10916, 16
        %v11063 = vrot.slane %v11061, 4
        %v11064 = vor.u32 %v11063, %v11059
        %v11065 = vrot.slane %v11064, 4
        %v11067 = vshll.u32 %v10917, 16
        %v11069 = vrot.slane %v11067, 5
        %v11070 = vsel %vm758, %v11065, %v11069
        %v11072 = vshrl.u32 %v10918, 16
        %v11074 = vrot.slane %v11072, 4
        %v11075 = vshll.u32 %v10918, 16
        %v11077 = vrot.slane %v11075, 5
        %v11078 = vor.u32 %v11074, %v11077
        %v11079 = vrot.slane %v11078, 4
        %v11081 = vshll.u32 %v10919, 16
        %v11083 = vrot.slane %v11081, 5
        %v11084 = vsel %vm758, %v11079, %v11083
        %v11085 = vshrl.u32 %v10919, 16
        %v11087 = vrot.slane %v11085, 4
        %v11088 = vor.u32 %v11087, %v11083
        %v11089 = vrot.slane %v11088, 4
        %v11091 = vshll.u32 %v10920, 16
        %v11093 = vrot.slane %v11091, 5
        %v11094 = vsel %vm758, %v11089, %v11093
        %v11096 = vshrl.u32 %v10921, 16
        %v11098 = vrot.slane %v11096, 4
        %v11099 = vshll.u32 %v10921, 16
        %v11101 = vrot.slane %v11099, 5
        %v11102 = vor.u32 %v11098, %v11101
        %v11103 = vrot.slane %v11102, 4
        %v11105 = vshll.u32 %v10922, 16
        %v11107 = vrot.slane %v11105, 5
        %v11108 = vsel %vm758, %v11103, %v11107
        %v11109 = vshrl.u32 %v10922, 16
        %v11111 = vrot.slane %v11109, 4
        %v11112 = vor.u32 %v11111, %v11107
        %v11113 = vrot.slane %v11112, 4
        %v11115 = vshll.u32 %v10923, 16
        %v11117 = vrot.slane %v11115, 5
        %v11118 = vsel %vm758, %v11113, %v11117
        %v11120 = vshrl.u32 %v10924, 16
        %v11122 = vrot.slane %v11120, 4
        %v11123 = vshll.u32 %v10924, 16
        %v11125 = vrot.slane %v11123, 5
        %v11126 = vor.u32 %v11122, %v11125
        %v11127 = vrot.slane %v11126, 4
        %v11129 = vshll.u32 %v10925, 16
        %v11131 = vrot.slane %v11129, 5
        %v11132 = vsel %vm758, %v11127, %v11131
        %v11133 = vshrl.u32 %v10925, 16
        %v11135 = vrot.slane %v11133, 4
        %v11136 = vor.u32 %v11135, %v11131
        %v11137 = vrot.slane %v11136, 4
        %v11139 = vshll.u32 %v10926, 16
        %v11141 = vrot.slane %v11139, 5
        %v11142 = vsel %vm758, %v11137, %v11141
        %v11144 = vshrl.u32 %v10927, 16
        %v11146 = vrot.slane %v11144, 4
        %v11147 = vshll.u32 %v10927, 16
        %v11149 = vrot.slane %v11147, 5
        %v11150 = vor.u32 %v11146, %v11149
        %v11151 = vrot.slane %v11150, 4
        %v11153 = vshll.u32 %v10928, 16
        %v11155 = vrot.slane %v11153, 5
        %v11156 = vsel %vm758, %v11151, %v11155
        %v11157 = vshrl.u32 %v10928, 16
        %v11159 = vrot.slane %v11157, 4
        %v11160 = vor.u32 %v11159, %v11155
        %v11161 = vrot.slane %v11160, 4
        %v11163 = vshll.u32 %v10929, 16
        %v11165 = vrot.slane %v11163, 5
        %v11166 = vsel %vm758, %v11161, %v11165
        %v11168 = vshrl.u32 %v10930, 16
        %v11170 = vrot.slane %v11168, 4
        %v11171 = vshll.u32 %v10930, 16
        %v11173 = vrot.slane %v11171, 5
        %v11174 = vor.u32 %v11170, %v11173
        %v11175 = vrot.slane %v11174, 4
        %v11177 = vshll.u32 %v10931, 16
        %v11179 = vrot.slane %v11177, 5
        %v11180 = vsel %vm758, %v11175, %v11179
        %v11181 = vshrl.u32 %v10931, 16
        %v11183 = vrot.slane %v11181, 4
        %v11184 = vor.u32 %v11183, %v11179
        %v11185 = vrot.slane %v11184, 4
        %v11187 = vshll.u32 %v10932, 16
        %v11189 = vrot.slane %v11187, 5
        %v11190 = vsel %vm758, %v11185, %v11189
        %v11192 = vshrl.u32 %v10933, 16
        %v11194 = vrot.slane %v11192, 4
        %v11195 = vshll.u32 %v10933, 16
        %v11197 = vrot.slane %v11195, 5
        %v11198 = vor.u32 %v11194, %v11197
        %v11199 = vrot.slane %v11198, 4
        %v11201 = vshll.u32 %v10934, 16
        %v11203 = vrot.slane %v11201, 5
        %v11204 = vsel %vm758, %v11199, %v11203
        %v11205 = vshrl.u32 %v10934, 16
        %v11207 = vrot.slane %v11205, 4
        %v11208 = vor.u32 %v11207, %v11203
        %v11209 = vrot.slane %v11208, 4
        %v11211 = vshll.u32 %v10935, 16
        %v11213 = vrot.slane %v11211, 5
        %v11214 = vsel %vm758, %v11209, %v11213
        %v11216 = vshrl.u32 %v10936, 16
        %v11218 = vrot.slane %v11216, 4
        %v11219 = vshll.u32 %v10936, 16
        %v11221 = vrot.slane %v11219, 5
        %v11222 = vor.u32 %v11218, %v11221
        %v11223 = vrot.slane %v11222, 4
        %v11225 = vshll.u32 %v10937, 16
        %v11227 = vrot.slane %v11225, 5
        %v11228 = vsel %vm758, %v11223, %v11227
        %v11229 = vshrl.u32 %v10937, 16
        %v11231 = vrot.slane %v11229, 4
        %v11232 = vor.u32 %v11231, %v11227
        %v11233 = vrot.slane %v11232, 4
        %v11235 = vshll.u32 %v10938, 16
        %v11237 = vrot.slane %v11235, 5
        %v11238 = vsel %vm758, %v11233, %v11237
        %v11240 = vshrl.u32 %v10939, 16
        %v11242 = vrot.slane %v11240, 4
        %v11243 = vshll.u32 %v10939, 16
        %v11245 = vrot.slane %v11243, 5
        %v11246 = vor.u32 %v11242, %v11245
        %v11247 = vrot.slane %v11246, 4
        %v11249 = vshll.u32 %v10940, 16
        %v11251 = vrot.slane %v11249, 5
        %v11252 = vsel %vm758, %v11247, %v11251
        %v11253 = vshrl.u32 %v10940, 16
        %v11255 = vrot.slane %v11253, 4
        %v11256 = vor.u32 %v11255, %v11251
        %v11257 = vrot.slane %v11256, 4
        %v11259 = vshll.u32 %v10941, 16
        %v11261 = vrot.slane %v11259, 5
        %v11262 = vsel %vm758, %v11257, %v11261
        %v11264 = vshrl.u32 %v10942, 16
        %v11266 = vrot.slane %v11264, 4
        %v11267 = vshll.u32 %v10942, 16
        %v11269 = vrot.slane %v11267, 5
        %v11270 = vor.u32 %v11266, %v11269
        %v11271 = vrot.slane %v11270, 4
        %v11273 = vshll.u32 %v10943, 16
        %v11275 = vrot.slane %v11273, 5
        %v11276 = vsel %vm758, %v11271, %v11275
        %v11277 = vshrl.u32 %v10943, 16
        %v11279 = vrot.slane %v11277, 4
        %v11280 = vor.u32 %v11279, %v11275
        %v11281 = vrot.slane %v11280, 4
        %v11283 = vshll.u32 %v10944, 16
        %v11285 = vrot.slane %v11283, 5
        %v11286 = vsel %vm758, %v11281, %v11285
        %v11288 = vshrl.u32 %v10945, 16
        %v11290 = vrot.slane %v11288, 4
        %v11291 = vshll.u32 %v10945, 16
        %v11293 = vrot.slane %v11291, 5
        %v11294 = vor.u32 %v11290, %v11293
        %v11295 = vrot.slane %v11294, 4
        %v11297 = vshll.u32 %v10946, 16
        %v11299 = vrot.slane %v11297, 5
        %v11300 = vsel %vm758, %v11295, %v11299
        %v11301 = vshrl.u32 %v10946, 16
        %v11303 = vrot.slane %v11301, 4
        %v11304 = vor.u32 %v11303, %v11299
        %v11305 = vrot.slane %v11304, 4
        %v11307 = vshll.u32 %v10947, 16
        %v11309 = vrot.slane %v11307, 5
        %v11310 = vsel %vm758, %v11305, %v11309
        %v11312 = vshrl.u32 %v10948, 16
        %v11314 = vrot.slane %v11312, 4
        %v11315 = vshll.u32 %v10948, 16
        %v11317 = vrot.slane %v11315, 5
        %v11318 = vor.u32 %v11314, %v11317
        %v11319 = vrot.slane %v11318, 4
        %v11321 = vshll.u32 %v10949, 16
        %v11323 = vrot.slane %v11321, 5
        %v11324 = vsel %vm758, %v11319, %v11323
        %v11325 = vshrl.u32 %v10949, 16
        %v11327 = vrot.slane %v11325, 4
        %v11328 = vor.u32 %v11327, %v11323
        %v11329 = vrot.slane %v11328, 4
        %v11331 = vshll.u32 %v10950, 16
        %v11333 = vrot.slane %v11331, 5
        %v11334 = vsel %vm758, %v11329, %v11333
        %v11335 = vld [vmem:[%s5] sm:$0xf]
        %v11336 = vld [vmem:[%s5 + $0x4] sm:$0xf]
        %v11337 = vld [vmem:[%s5 + $0x8] sm:$0xf]
        %v11338 = vld [vmem:[%s5 + $0xc] sm:$0xf]
        %v11339 = vld [vmem:[%s5 + $0x10] sm:$0xf]
        %v11340 = vld [vmem:[%s5 + $0x14] sm:$0xf]
        %v11341 = vld [vmem:[%s5 + $0x18] sm:$0xf]
        %v11342 = vld [vmem:[%s5 + $0x1c] sm:$0xf]
        %v11343 = vld [vmem:[%s5 + $0x20] sm:$0xf]
        %v11344 = vld [vmem:[%s5 + $0x24] sm:$0xf]
        %v11345 = vld [vmem:[%s5 + $0x28] sm:$0xf]
        %v11346 = vld [vmem:[%s5 + $0x2c] sm:$0xf]
        %v11347 = vld [vmem:[%s5 + $0x30] sm:$0xf]
        %v11348 = vld [vmem:[%s5 + $0x34] sm:$0xf]
        %v11349 = vld [vmem:[%s5 + $0x38] sm:$0xf]
        %v11350 = vld [vmem:[%s5 + $0x3c] sm:$0xf]
        %v11351 = vld [vmem:[%s6] sm:$0x1]
        %v11353 = vperm.slane %v11351, 0
        %v11355 = vunpack.c.l.b16 %v10964
        %v11356 = vunpack.c.l.b16 %v10974
        %v11357 = vunpack.c.l.b16 %v10988
        %v11358 = vunpack.c.l.b16 %v10998
        %v11359 = vunpack.c.l.b16 %v11012
        %v11360 = vunpack.c.l.b16 %v11022
        %v11361 = vunpack.c.l.b16 %v11036
        %v11362 = vunpack.c.l.b16 %v11046
        %v11363 = vunpack.c.l.b16 %v11060
        %v11364 = vunpack.c.l.b16 %v11070
        %v11365 = vunpack.c.l.b16 %v11084
        %v11366 = vunpack.c.l.b16 %v11094
        %v11367 = vunpack.c.l.b16 %v11108
        %v11368 = vunpack.c.l.b16 %v11118
        %v11369 = vunpack.c.l.b16 %v11132
        %v11370 = vunpack.c.l.b16 %v11142
        %v11371 = vunpack.c.l.b16 %v11156
        %v11372 = vunpack.c.l.b16 %v11166
        %v11373 = vunpack.c.l.b16 %v11180
        %v11374 = vunpack.c.l.b16 %v11190
        %v11375 = vunpack.c.l.b16 %v11204
        %v11376 = vunpack.c.l.b16 %v11214
        %v11377 = vunpack.c.l.b16 %v11228
        %v11378 = vunpack.c.l.b16 %v11238
        %v11379 = vunpack.c.l.b16 %v11252
        %v11380 = vunpack.c.l.b16 %v11262
        %v11381 = vunpack.c.l.b16 %v11276
        %v11382 = vunpack.c.l.b16 %v11286
        %v11383 = vunpack.c.l.b16 %v11300
        %v11384 = vunpack.c.l.b16 %v11310
        %v11385 = vunpack.c.l.b16 %v11324
        %v11386 = vunpack.c.l.b16 %v11334
        %v11387 = vpack.c.b16 %v11356, %v11355
        %v11388 = vpack.c.b16 %v11358, %v11357
        %v11389 = vpack.c.b16 %v11360, %v11359
        %v11390 = vpack.c.b16 %v11362, %v11361
        %v11391 = vpack.c.b16 %v11364, %v11363
        %v11392 = vpack.c.b16 %v11366, %v11365
        %v11393 = vpack.c.b16 %v11368, %v11367
        %v11394 = vpack.c.b16 %v11370, %v11369
        %v11395 = vpack.c.b16 %v11372, %v11371
        %v11396 = vpack.c.b16 %v11374, %v11373
        %v11397 = vpack.c.b16 %v11376, %v11375
        %v11398 = vpack.c.b16 %v11378, %v11377
        %v11399 = vpack.c.b16 %v11380, %v11379
        %v11400 = vpack.c.b16 %v11382, %v11381
        %v11401 = vpack.c.b16 %v11384, %v11383
        %v11402 = vpack.c.b16 %v11386, %v11385
        %v11435 = vunpack.c.l.b16 %v11335
        %v11436 = vunpack.c.l.b16 %v11336
        %v11437 = vunpack.c.l.b16 %v11337
        %v11438 = vunpack.c.l.b16 %v11338
        %v11439 = vunpack.c.l.b16 %v11339
        %v11440 = vunpack.c.l.b16 %v11340
        %v11441 = vunpack.c.l.b16 %v11341
        %v11442 = vunpack.c.l.b16 %v11342
        %v11443 = vunpack.c.l.b16 %v11343
        %v11444 = vunpack.c.l.b16 %v11344
        %v11445 = vunpack.c.l.b16 %v11345
        %v11446 = vunpack.c.l.b16 %v11346
        %v11447 = vunpack.c.l.b16 %v11347
        %v11448 = vunpack.c.l.b16 %v11348
        %v11449 = vunpack.c.l.b16 %v11349
        %v11450 = vunpack.c.l.b16 %v11350
        %v11451 = vpack.c.b16 %v11436, %v11435
        %v11452 = vpack.c.b16 %v11438, %v11437
        %v11453 = vpack.c.b16 %v11440, %v11439
        %v11454 = vpack.c.b16 %v11442, %v11441
        %v11455 = vpack.c.b16 %v11444, %v11443
        %v11456 = vpack.c.b16 %v11446, %v11445
        %v11457 = vpack.c.b16 %v11448, %v11447
        %v11458 = vpack.c.b16 %v11450, %v11449
        %11467 = vmatpush.bf16.msra.mxu0 %v11458
        %11468 = vmatpush.bf16.msra.mxu0 %v11457
        %11469 = vmatpush.bf16.msra.mxu0 %v11456
        %11470 = vmatpush.bf16.msra.mxu0 %v11455
        %11471 = vmatpush.bf16.msra.mxu0 %v11454
        %11472 = vmatpush.bf16.msra.mxu0 %v11453
        %11473 = vmatpush.bf16.msra.mxu0 %v11452
        %11474 = vmatpush.bf16.msra.mxu0 %v11451
        %11475 = vmatmul.bf16.gmra.mxu0 %v11387
        %v11476 = vpop.f32.mrf.mxu0
        %v11477 = vadd.f32 %v11353, %v11476
        %v11478 = vpop.f32.mrf.mxu0
        %v11479 = vadd.f32 %v11353, %v11478
        %11480 = vmatmul.bf16.gmra.mxu0 %v11388
        %v11481 = vpop.f32.mrf.mxu0
        %v11482 = vadd.f32 %v11353, %v11481
        %v11483 = vpop.f32.mrf.mxu0
        %v11484 = vadd.f32 %v11353, %v11483
        %11485 = vmatmul.bf16.gmra.mxu0 %v11389
        %v11486 = vpop.f32.mrf.mxu0
        %v11487 = vadd.f32 %v11353, %v11486
        %v11488 = vpop.f32.mrf.mxu0
        %v11489 = vadd.f32 %v11353, %v11488
        %11490 = vmatmul.bf16.gmra.mxu0 %v11390
        %v11491 = vpop.f32.mrf.mxu0
        %v11492 = vadd.f32 %v11353, %v11491
        %v11493 = vpop.f32.mrf.mxu0
        %v11494 = vadd.f32 %v11353, %v11493
        %11495 = vmatmul.bf16.gmra.mxu0 %v11391
        %v11496 = vpop.f32.mrf.mxu0
        %v11497 = vadd.f32 %v11353, %v11496
        %v11498 = vpop.f32.mrf.mxu0
        %v11499 = vadd.f32 %v11353, %v11498
        %11500 = vmatmul.bf16.gmra.mxu0 %v11392
        %v11501 = vpop.f32.mrf.mxu0
        %v11502 = vadd.f32 %v11353, %v11501
        %v11503 = vpop.f32.mrf.mxu0
        %v11504 = vadd.f32 %v11353, %v11503
        %11505 = vmatmul.bf16.gmra.mxu0 %v11393
        %v11506 = vpop.f32.mrf.mxu0
        %v11507 = vadd.f32 %v11353, %v11506
        %v11508 = vpop.f32.mrf.mxu0
        %v11509 = vadd.f32 %v11353, %v11508
        %11510 = vmatmul.bf16.gmra.mxu0 %v11394
        %v11511 = vpop.f32.mrf.mxu0
        %v11512 = vadd.f32 %v11353, %v11511
        %v11513 = vpop.f32.mrf.mxu0
        %v11514 = vadd.f32 %v11353, %v11513
        %11515 = vmatmul.bf16.gmra.mxu0 %v11395
        %v11516 = vpop.f32.mrf.mxu0
        %v11517 = vadd.f32 %v11353, %v11516
        %v11518 = vpop.f32.mrf.mxu0
        %v11519 = vadd.f32 %v11353, %v11518
        %11520 = vmatmul.bf16.gmra.mxu0 %v11396
        %v11521 = vpop.f32.mrf.mxu0
        %v11522 = vadd.f32 %v11353, %v11521
        %v11523 = vpop.f32.mrf.mxu0
        %v11524 = vadd.f32 %v11353, %v11523
        %11525 = vmatmul.bf16.gmra.mxu0 %v11397
        %v11526 = vpop.f32.mrf.mxu0
        %v11527 = vadd.f32 %v11353, %v11526
        %v11528 = vpop.f32.mrf.mxu0
        %v11529 = vadd.f32 %v11353, %v11528
        %11530 = vmatmul.bf16.gmra.mxu0 %v11398
        %v11531 = vpop.f32.mrf.mxu0
        %v11532 = vadd.f32 %v11353, %v11531
        %v11533 = vpop.f32.mrf.mxu0
        %v11534 = vadd.f32 %v11353, %v11533
        %11535 = vmatmul.bf16.gmra.mxu0 %v11399
        %v11536 = vpop.f32.mrf.mxu0
        %v11537 = vadd.f32 %v11353, %v11536
        %v11538 = vpop.f32.mrf.mxu0
        %v11539 = vadd.f32 %v11353, %v11538
        %11540 = vmatmul.bf16.gmra.mxu0 %v11400
        %v11541 = vpop.f32.mrf.mxu0
        %v11542 = vadd.f32 %v11353, %v11541
        %v11543 = vpop.f32.mrf.mxu0
        %v11544 = vadd.f32 %v11353, %v11543
        %11545 = vmatmul.bf16.gmra.mxu0 %v11401
        %v11546 = vpop.f32.mrf.mxu0
        %v11547 = vadd.f32 %v11353, %v11546
        %v11548 = vpop.f32.mrf.mxu0
        %v11549 = vadd.f32 %v11353, %v11548
        %11550 = vmatmul.bf16.gmra.mxu0 %v11402
        %v11551 = vpop.f32.mrf.mxu0
        %v11552 = vadd.f32 %v11353, %v11551
        %v11553 = vpop.f32.mrf.mxu0
        %v11554 = vadd.f32 %v11353, %v11553
        %11555 = vdwg.mxu0
        %v11556 = vld [vmem:[#allocation2] sm:$0xff]
        %v11557 = vld [vmem:[#allocation2 + $0x8] sm:$0xff]
        %v11558 = vld [vmem:[#allocation2 + $0x10] sm:$0xff]
        %v11559 = vld [vmem:[#allocation2 + $0x18] sm:$0xff]
        %v11560 = vld [vmem:[#allocation2 + $0x20] sm:$0xff]
        %v11561 = vld [vmem:[#allocation2 + $0x28] sm:$0xff]
        %v11562 = vld [vmem:[#allocation2 + $0x30] sm:$0xff]
        %v11563 = vld [vmem:[#allocation2 + $0x38] sm:$0xff]
        %v11564 = vld [vmem:[#allocation2 + $0x40] sm:$0xff]
        %v11565 = vld [vmem:[#allocation2 + $0x48] sm:$0xff]
        %v11566 = vld [vmem:[#allocation2 + $0x50] sm:$0xff]
        %v11567 = vld [vmem:[#allocation2 + $0x58] sm:$0xff]
        %v11568 = vld [vmem:[#allocation2 + $0x60] sm:$0xff]
        %v11569 = vld [vmem:[#allocation2 + $0x68] sm:$0xff]
        %v11570 = vld [vmem:[#allocation2 + $0x70] sm:$0xff]
        %v11571 = vld [vmem:[#allocation2 + $0x78] sm:$0xff]
        %v11572 = vld [vmem:[#allocation2 + $0x80] sm:$0xff]
        %v11573 = vld [vmem:[#allocation2 + $0x88] sm:$0xff]
        %v11574 = vld [vmem:[#allocation2 + $0x90] sm:$0xff]
        %v11575 = vld [vmem:[#allocation2 + $0x98] sm:$0xff]
        %v11576 = vld [vmem:[#allocation2 + $0xa0] sm:$0xff]
        %v11577 = vld [vmem:[#allocation2 + $0xa8] sm:$0xff]
        %v11578 = vld [vmem:[#allocation2 + $0xb0] sm:$0xff]
        %v11579 = vld [vmem:[#allocation2 + $0xb8] sm:$0xff]
        %v11580 = vld [vmem:[#allocation2 + $0xc0] sm:$0xff]
        %v11581 = vld [vmem:[#allocation2 + $0xc8] sm:$0xff]
        %v11582 = vld [vmem:[#allocation2 + $0xd0] sm:$0xff]
        %v11583 = vld [vmem:[#allocation2 + $0xd8] sm:$0xff]
        %v11584 = vld [vmem:[#allocation2 + $0xe0] sm:$0xff]
        %v11585 = vld [vmem:[#allocation2 + $0xe8] sm:$0xff]
        %v11586 = vld [vmem:[#allocation2 + $0xf0] sm:$0xff]
        %v11587 = vld [vmem:[#allocation2 + $0xf8] sm:$0xff]
        %v11588 = vadd.f32 %v11556, %v11477
        %v11589 = vadd.f32 %v11557, %v11479
        %v11590 = vadd.f32 %v11558, %v11482
        %v11591 = vadd.f32 %v11559, %v11484
        %v11592 = vadd.f32 %v11560, %v11487
        %v11593 = vadd.f32 %v11561, %v11489
        %v11594 = vadd.f32 %v11562, %v11492
        %v11595 = vadd.f32 %v11563, %v11494
        %v11596 = vadd.f32 %v11564, %v11497
        %v11597 = vadd.f32 %v11565, %v11499
        %v11598 = vadd.f32 %v11566, %v11502
        %v11599 = vadd.f32 %v11567, %v11504
        %v11600 = vadd.f32 %v11568, %v11507
        %v11601 = vadd.f32 %v11569, %v11509
        %v11602 = vadd.f32 %v11570, %v11512
        %v11603 = vadd.f32 %v11571, %v11514
        %v11604 = vadd.f32 %v11572, %v11517
        %v11605 = vadd.f32 %v11573, %v11519
        %v11606 = vadd.f32 %v11574, %v11522
        %v11607 = vadd.f32 %v11575, %v11524
        %v11608 = vadd.f32 %v11576, %v11527
        %v11609 = vadd.f32 %v11577, %v11529
        %v11610 = vadd.f32 %v11578, %v11532
        %v11611 = vadd.f32 %v11579, %v11534
        %v11612 = vadd.f32 %v11580, %v11537
        %v11613 = vadd.f32 %v11581, %v11539
        %v11614 = vadd.f32 %v11582, %v11542
        %v11615 = vadd.f32 %v11583, %v11544
        %v11616 = vadd.f32 %v11584, %v11547
        %v11617 = vadd.f32 %v11585, %v11549
        %v11618 = vadd.f32 %v11586, %v11552
        %v11619 = vadd.f32 %v11587, %v11554
        %v11620 = vmax.f32 %v11588, 0.0
        %v11621 = vmax.f32 %v11589, 0.0
        %v11622 = vmax.f32 %v11590, 0.0
        %v11623 = vmax.f32 %v11591, 0.0
        %v11624 = vmax.f32 %v11592, 0.0
        %v11625 = vmax.f32 %v11593, 0.0
        %v11626 = vmax.f32 %v11594, 0.0
        %v11627 = vmax.f32 %v11595, 0.0
        %v11628 = vmax.f32 %v11596, 0.0
        %v11629 = vmax.f32 %v11597, 0.0
        %v11630 = vmax.f32 %v11598, 0.0
        %v11631 = vmax.f32 %v11599, 0.0
        %v11632 = vmax.f32 %v11600, 0.0
        %v11633 = vmax.f32 %v11601, 0.0
        %v11634 = vmax.f32 %v11602, 0.0
        %v11635 = vmax.f32 %v11603, 0.0
        %v11636 = vmax.f32 %v11604, 0.0
        %v11637 = vmax.f32 %v11605, 0.0
        %v11638 = vmax.f32 %v11606, 0.0
        %v11639 = vmax.f32 %v11607, 0.0
        %v11640 = vmax.f32 %v11608, 0.0
        %v11641 = vmax.f32 %v11609, 0.0
        %v11642 = vmax.f32 %v11610, 0.0
        %v11643 = vmax.f32 %v11611, 0.0
        %v11644 = vmax.f32 %v11612, 0.0
        %v11645 = vmax.f32 %v11613, 0.0
        %v11646 = vmax.f32 %v11614, 0.0
        %v11647 = vmax.f32 %v11615, 0.0
        %v11648 = vmax.f32 %v11616, 0.0
        %v11649 = vmax.f32 %v11617, 0.0
        %v11650 = vmax.f32 %v11618, 0.0
        %v11651 = vmax.f32 %v11619, 0.0
        %11652 = vst [vmem:[%s288] sm:$0xff] %v11620
        %11653 = vst [vmem:[%s288 + $0x8] sm:$0xff] %v11621
        %11654 = vst [vmem:[%s288 + $0x10] sm:$0xff] %v11622
        %11655 = vst [vmem:[%s288 + $0x18] sm:$0xff] %v11623
        %11656 = vst [vmem:[%s288 + $0x20] sm:$0xff] %v11624
        %11657 = vst [vmem:[%s288 + $0x28] sm:$0xff] %v11625
        %11658 = vst [vmem:[%s288 + $0x30] sm:$0xff] %v11626
        %11659 = vst [vmem:[%s288 + $0x38] sm:$0xff] %v11627
        %11660 = vst [vmem:[%s288 + $0x40] sm:$0xff] %v11628
        %11661 = vst [vmem:[%s288 + $0x48] sm:$0xff] %v11629
        %11662 = vst [vmem:[%s288 + $0x50] sm:$0xff] %v11630
        %11663 = vst [vmem:[%s288 + $0x58] sm:$0xff] %v11631
        %11664 = vst [vmem:[%s288 + $0x60] sm:$0xff] %v11632
        %11665 = vst [vmem:[%s288 + $0x68] sm:$0xff] %v11633
        %11666 = vst [vmem:[%s288 + $0x70] sm:$0xff] %v11634
        %11667 = vst [vmem:[%s288 + $0x78] sm:$0xff] %v11635
        %11668 = vst [vmem:[%s288 + $0x80] sm:$0xff] %v11636
        %11669 = vst [vmem:[%s288 + $0x88] sm:$0xff] %v11637
        %11670 = vst [vmem:[%s288 + $0x90] sm:$0xff] %v11638
        %11671 = vst [vmem:[%s288 + $0x98] sm:$0xff] %v11639
        %11672 = vst [vmem:[%s288 + $0xa0] sm:$0xff] %v11640
        %11673 = vst [vmem:[%s288 + $0xa8] sm:$0xff] %v11641
        %11674 = vst [vmem:[%s288 + $0xb0] sm:$0xff] %v11642
        %11675 = vst [vmem:[%s288 + $0xb8] sm:$0xff] %v11643
        %11676 = vst [vmem:[%s288 + $0xc0] sm:$0xff] %v11644
        %11677 = vst [vmem:[%s288 + $0xc8] sm:$0xff] %v11645
        %11678 = vst [vmem:[%s288 + $0xd0] sm:$0xff] %v11646
        %11679 = vst [vmem:[%s288 + $0xd8] sm:$0xff] %v11647
        %11680 = vst [vmem:[%s288 + $0xe0] sm:$0xff] %v11648
        %11681 = vst [vmem:[%s288 + $0xe8] sm:$0xff] %v11649
        %11682 = vst [vmem:[%s288 + $0xf0] sm:$0xff] %v11650
        %11683 = vst [vmem:[%s288 + $0xf8] sm:$0xff] %v11651
        %s11684 = sand.u32 %s182, 1
        %s11685 = scalar_lea.sflag [#allocation6], %s11684
        %s11686 = sand.u32 %s182, 1
        %s11687 = smul.addr %s11686, 256
        %s11688 = scalar_lea.vmem [#allocation7], %s11687
        // Predicated region
        $region53: #{tpu_custom_call.1} parent=47 // pred_check
          %p11689 = pneg %p192
        $region54: #{tpu_custom_call.1} parent=47 // pred_check_branch
          %11691 = sbr.rel (%p11689) target = $region56
        $region55: #{tpu_custom_call.1} parent=47 // pred_region
          %11693 = vsyncadd %s11685, 0
          %s11694 = smul.addr %s22, 32
          %s11695 = smul.addr %s11694, 8
          %s11696 = scalar_lea.hbm %s7, %s11695
          %s11697 = sshll.u32 %s11688, 4
          %s11698 = int_to_ptr.vmem [resolvable:$true] %s11697
          %s11699 = sshll.u32 %s11696, 4
          %s11700 = int_to_ptr.hbm [resolvable:$true] %s11699
          %11705 = dma.vmem_to_hbm [thread:$0]  %s11698, 4096, %s11700, %s11685, 128, 128, 8
        $region56: #{tpu_custom_call.1} parent=47 // pred_fallthru
          _
      $region48: #{tpu_custom_call.1} parent=5 // pred_fallthru
        _
      %p11706 = scmp.le.s32.totalorder 2, %s17
      // Predicated region
      $region57: #{tpu_custom_call.1} parent=5 // pred_check
        %p11707 = pneg %p11706
      $region58: #{tpu_custom_call.1} parent=5 // pred_check_branch
        %11709 = sbr.rel (%p11707) target = $region60
      $region59: #{tpu_custom_call.1} parent=5 // pred_region
        %s11710 = ssub.s32 %s17, 2
        // Predicated region
        $region61: #{tpu_custom_call.1} parent=59 // pred_check
          %p11711 = pneg %p198
        $region62: #{tpu_custom_call.1} parent=59 // pred_check_branch
          %11713 = sbr.rel (%p11711) target = $region64
        $region63: #{tpu_custom_call.1} parent=59 // pred_region
          %s11714 = sand.u32 %s183, 1
          %s11715 = scalar_lea.sflag [#allocation6], %s11714
          %s11716 = sand.u32 %s183, 1
          %s11717 = smul.addr %s11716, 256
          %s11718 = scalar_lea.vmem [#allocation7], %s11717
          %11720 = dma.done %s11715, 4096
        $region64: #{tpu_custom_call.1} parent=59 // pred_fallthru
          _
      $region60: #{tpu_custom_call.1} parent=5 // pred_fallthru
        _
    $region6: #{tpu_custom_call.1} parent=1 // loop_footer
      %s21 = sadd.s32 1, %s17
    $region7: #{tpu_custom_call.1} parent=1 // loop_footer_branch
      %16 = sbr.rel target = $region3
    $region8: #{tpu_custom_call.1} parent=1 // loop_exit
      _
    %11721 = vsyncpa [#allocation5], 1
    %s11722 = scalar_lea.sflag [#allocation5], 1
    %11723 = vsyncpa %s11722, 1
    %11724 = vsyncpa [#allocation6], 1
    %s11725 = scalar_lea.sflag [#allocation6], 1
    %11726 = vsyncpa %s11725, 1

</llo_original>
